<compile_context>
chip_gen: v7x
topology: tpu7x:2x2x1
jax: 0.10.0
libtpu: 0.0.40
codegen_flags: <defaults>
</compile_context>

<pallas_src>
import jax
import jax.numpy as jnp
from jax.experimental import pallas as pl
from jax.experimental.pallas import tpu as pltpu

LEAKY_RATE = 0.1


def pointconv_kernel(npts_ref, w1_ref, b1_ref, w2_ref, b2_ref, w3_ref, b3_ref,
                     wlr_ref, bl_ref, o_ref, wts_ref):
    # npts_ref: (1, K, Cin, TILE_N) grouped features, channel-first; channels 0..2 = centered xyz
    # w1_ref:   (H1, Cin) zero-padded WeightNet layer-1 weight; w2/w3: (H2, H1)/(W, H2)
    # b*_ref:   (*, 1) biases
    # wlr_ref:  (Cin, Cout, W) final linear weight, wlr[c, o, w] == wl[o, c*W + w]
    # bl_ref:   (Cout, 1)
    # o_ref:    (1, Cout, TILE_N) channel-first output tile
    # wts_ref:  (K, W, TILE_N) VMEM scratch holding per-neighbor WeightNet outputs
    K = npts_ref.shape[1]
    Cin = npts_ref.shape[2]
    TN = npts_ref.shape[3]
    W = wts_ref.shape[1]
    Cout = o_ref.shape[1]

    # Hoisted bias broadcasts (computed once per tile, reused in the k loop).
    b1 = jnp.broadcast_to(b1_ref[...], (b1_ref.shape[0], TN))
    b2 = jnp.broadcast_to(b2_ref[...], (b2_ref.shape[0], TN))
    b3 = jnp.broadcast_to(b3_ref[...], (W, TN))

    # --- Stage 1: WeightNet fused per neighbor (lane-dense (out,in)@(in,TILE_N) matmuls) ---
    for k in range(K):
        x_k = npts_ref[0, k]                                              # [Cin, TN]
        h = jnp.maximum(
            jnp.dot(w1_ref[...], x_k, preferred_element_type=jnp.float32) + b1, 0.0)
        h = jnp.maximum(
            jnp.dot(w2_ref[...], h, preferred_element_type=jnp.float32) + b2, 0.0)
        wts_ref[k] = jnp.maximum(
            jnp.dot(w3_ref[...], h, preferred_element_type=jnp.float32) + b3, 0.0)

    # --- Stage 2: chunked aggregation + final Linear with bounded accumulators ---
    # out[o, n] = bl[o] + sum_c  wl[o, c*W:(c+1)*W] @ ( sum_k npts[k, c, n] * wts[k, :, n] )
    out_acc = jnp.broadcast_to(bl_ref[...], (Cout, TN))                   # [Cout, TN]
    for c in range(Cin):
        feat0 = npts_ref[0, 0, pl.ds(c, 1), :]                            # [1, TN]
        m_c = feat0 * wts_ref[0]                                          # [W, TN]
        for k in range(1, K):
            feat = npts_ref[0, k, pl.ds(c, 1), :]                         # [1, TN]
            m_c = m_c + feat * wts_ref[k]
        out_acc = out_acc + jnp.dot(wlr_ref[c], m_c,
                                    preferred_element_type=jnp.float32)   # MXU, contraction = W

    out = jnp.where(out_acc >= 0.0, out_acc, LEAKY_RATE * out_acc)        # LeakyReLU(0.1)
    o_ref[0] = out.astype(o_ref.dtype)                                    # lane-dense store


def knn_indices(xyzt, nsample):
    """xyzt [B, N, 3] -> KNN indices [B, N, K] (plain JAX)."""
    # TODO(synk): O(N^2) distance matrix + top_k stay in plain JAX; a tiled/fused KNN would be
    # needed for very large point counts.
    sq = jnp.sum(xyzt * xyzt, axis=-1)                        # [B, N]
    inner = jnp.einsum("bnc,bmc->bnm", xyzt, xyzt)            # [B, N, N]
    sqrdists = sq[:, :, None] + sq[:, None, :] - 2.0 * inner
    _, idx = jax.lax.top_k(-sqrdists, nsample)                # [B, N, K]
    return idx


def make_params(key, in_channel, out_channel, weightnet=16, hidden=(8, 8)):
    ks = jax.random.split(key, 8)

    def init(k, shape, scale=0.2):
        return scale * jax.random.normal(k, shape, jnp.float32)

    return dict(
        w1=init(ks[0], (hidden[0], 3)),          b1=init(ks[1], (hidden[0],), 0.05),
        w2=init(ks[2], (hidden[1], hidden[0])),  b2=init(ks[3], (hidden[1],), 0.05),
        w3=init(ks[4], (weightnet, hidden[1])),  b3=init(ks[5], (weightnet,), 0.05),
        wl=init(ks[6], (out_channel, weightnet * in_channel), 0.05),
        bl=init(ks[7], (out_channel,), 0.05),
    )


def _vmem_budget_bytes():
    """Conservative per-kernel VMEM budget that fits every generation's default scoped limit."""
    budget = 12 * 1024 * 1024          # under v5e's 16 MiB scoped default, far under v7x 64 MiB
    try:
        cap = pltpu.get_tpu_info().vmem_capacity_bytes
        budget = min(budget, cap // 4)
    except Exception:
        pass
    return budget


def _pick_tile_n(N, K, Cin, Cout, W, budget_bytes, tile_cap):
    """Largest 128-multiple tile (<= tile_cap) whose estimated VMEM footprint fits the budget."""
    n_round = ((N + 127) // 128) * 128
    tile = max(128, (min(tile_cap, n_round) // 128) * 128)

    def est(t):
        feat = 2 * K * Cin * t * 4     # double-buffered feature stream
        outb = 2 * Cout * t * 4        # double-buffered output
        wts = K * W * t * 4            # WeightNet scratch
        return feat + outb + wts + (1 << 20)   # + headroom for resident weights / misc

    while tile > 128 and est(tile) > budget_bytes:
        tile -= 128
    return tile


def pointconv_forward(xyz, points, params, nsample, tile_n=None):
    B, _, N = xyz.shape
    D = points.shape[1]
    Cin = 3 + D
    K = nsample
    Cout = params["wl"].shape[0]
    W = params["w3"].shape[0]
    H1 = params["w1"].shape[0]

    # --- KNN neighbor selection (plain JAX) ---
    # TODO(synk): the neighbor gather could move in-kernel via scalar-prefetched indices + manual
    # DMA from an HBM-resident [B, Cin, N] tensor to avoid the K-expanded feature tensor in HBM.
    xyzt = jnp.transpose(xyz, (0, 2, 1))                      # [B, N, 3]
    idx = knn_indices(xyzt, K)                                # [B, N, K]

    # --- gather neighbors directly in channel-first [B, K, Cin, N] layout ---
    idx_t = jnp.transpose(idx, (0, 2, 1))                     # [B, K, N]
    b_ix = jnp.arange(B)[:, None, None, None]                 # [B,1,1,1]
    n_ix = idx_t[:, :, None, :]                               # [B,K,1,N]
    c3 = jnp.arange(3)[None, None, :, None]                   # [1,1,3,1]
    g_xyz = xyz[b_ix, c3, n_ix] - xyz[:, None, :, :]          # [B,K,3,N] centered grouped xyz
    if D > 0:
        cD = jnp.arange(D)[None, None, :, None]
        g_pts = points[b_ix, cD, n_ix]                        # [B,K,D,N]
        npts_cf = jnp.concatenate([g_xyz, g_pts], axis=2)     # [B,K,Cin,N]
    else:
        npts_cf = g_xyz
    npts_cf = npts_cf.astype(jnp.float32)

    # --- tile the point axis (lane axis) under a per-generation VMEM budget ---
    tile_cap = 512 if tile_n is None else max(128, (tile_n // 128) * 128)
    TILE_N = _pick_tile_n(N, K, Cin, Cout, W, _vmem_budget_bytes(), tile_cap)
    N_pad = ((N + TILE_N - 1) // TILE_N) * TILE_N
    if N_pad != N:
        npts_cf = jnp.pad(npts_cf, ((0, 0), (0, 0), (0, 0), (0, N_pad - N)))

    # --- weight prep ---
    w1p = jnp.zeros((H1, Cin), jnp.float32).at[:, :3].set(params["w1"])   # zero-pad to full Cin
    b1 = params["b1"][:, None]
    w2, b2 = params["w2"], params["b2"][:, None]
    w3, b3 = params["w3"], params["b3"][:, None]
    # wl[o, c*W + w]  ->  wlr[c, o, w]  (each chunk is a contiguous leading-dim slice)
    wlr = params["wl"].reshape(Cout, Cin, W).transpose(1, 0, 2)
    bl = params["bl"][:, None]

    def full_spec(arr):
        nd = arr.ndim
        return pl.BlockSpec(arr.shape, lambda b, n, _nd=nd: (0,) * _nd)

    grid = (B, N_pad // TILE_N)
    out = pl.pallas_call(
        pointconv_kernel,
        out_shape=jax.ShapeDtypeStruct((B, Cout, N_pad), jnp.float32),
        grid_spec=pltpu.PrefetchScalarGridSpec(
            num_scalar_prefetch=0,
            grid=grid,
            in_specs=[
                pl.BlockSpec((1, K, Cin, TILE_N), lambda b, n: (b, 0, 0, n)),
                full_spec(w1p), full_spec(b1),
                full_spec(w2), full_spec(b2),
                full_spec(w3), full_spec(b3),
                full_spec(wlr), full_spec(bl),
            ],
            out_specs=pl.BlockSpec((1, Cout, TILE_N), lambda b, n: (b, 0, n)),
            scratch_shapes=[pltpu.VMEM((K, W, TILE_N), jnp.float32)],
        ),
        compiler_params=pltpu.CompilerParams(
            dimension_semantics=("parallel", "parallel")),
    )(npts_cf, w1p, b1, w2, b2, w3, b3, wlr, bl)

    # module returns channel-first (B, Cout, N); kernel already emitted that layout
    return out[:, :, :N]


def ref_forward(xyz, points, params, nsample):
    """Pure-JAX reference mirroring the torch forward exactly."""
    B, _, N = xyz.shape
    xyzt = jnp.transpose(xyz, (0, 2, 1))
    ptst = jnp.transpose(points, (0, 2, 1))
    idx = knn_indices(xyzt, nsample)                          # same neighbor selection as the kernel path
    bidx = jnp.arange(B)[:, None, None]
    gxyz = xyzt[bidx, idx]                                    # [B,N,K,3]
    gxyz_norm = gxyz - xyzt[:, :, None, :]
    gpts = ptst[bidx, idx]                                    # [B,N,K,D]
    new_points = jnp.concatenate([gxyz_norm, gpts], axis=-1)  # [B,N,K,Cin]
    h = jnp.maximum(jnp.einsum("bnkc,oc->bnko", gxyz_norm, params["w1"]) + params["b1"], 0.0)
    h = jnp.maximum(jnp.einsum("bnkc,oc->bnko", h, params["w2"]) + params["b2"], 0.0)
    wts = jnp.maximum(jnp.einsum("bnkc,oc->bnko", h, params["w3"]) + params["b3"], 0.0)
    m = jnp.einsum("bnkc,bnkw->bncw", new_points, wts).reshape(B, N, -1)
    out = m @ params["wl"].T + params["bl"]
    out = jnp.where(out >= 0.0, out, LEAKY_RATE * out)
    return jnp.transpose(out, (0, 2, 1))


def _run_case(B, N, nsample, in_channel, out_channel, weightnet, tile_n, key):
    D = in_channel - 3
    kxyz, kpts, kparams = jax.random.split(key, 3)
    xyz = jax.random.normal(kxyz, (B, 3, N), jnp.float32)
    points = jax.random.normal(kpts, (B, D, N), jnp.float32)
    params = make_params(kparams, in_channel, out_channel, weightnet)

    out = pointconv_forward(xyz, points, params, nsample, tile_n=tile_n)
    out = jax.block_until_ready(out)

    with jax.default_matmul_precision("highest"):
        ref = ref_forward(xyz, points, params, nsample)
    assert out.shape == (B, out_channel, N), out.shape
    err = float(jnp.max(jnp.abs(out - ref)))
    assert jnp.allclose(out, ref, atol=1e-4, rtol=1e-4), f"max abs err {err}"


if __name__ == "__main__":
    # small single-tile case (matches the module's toy sizes)
    _run_case(B=2, N=16, nsample=8, in_channel=16, out_channel=32, weightnet=16,
              tile_n=None, key=jax.random.PRNGKey(0))
    # multi-tile case with N not a multiple of the tile: exercises index_map tiling,
    # padding of the lane axis and the tail slice-off.
    _run_case(B=2, N=300, nsample=8, in_channel=16, out_channel=32, weightnet=16,
              tile_n=128, key=jax.random.PRNGKey(1))
    print("KERNEL_OK")
</pallas_src>

<mosaic_0001>
module attributes {stable_mosaic.version = 11 : i64} {
  func.func @pointconv_kernel(%arg0: i32, %arg1: i32, %arg2: memref<1x8x16x128xf32, #tpu.memory_space<vmem>>, %arg3: memref<8x16xf32, #tpu.memory_space<vmem>>, %arg4: memref<8x1xf32, #tpu.memory_space<vmem>>, %arg5: memref<8x8xf32, #tpu.memory_space<vmem>>, %arg6: memref<8x1xf32, #tpu.memory_space<vmem>>, %arg7: memref<16x8xf32, #tpu.memory_space<vmem>>, %arg8: memref<16x1xf32, #tpu.memory_space<vmem>>, %arg9: memref<16x32x16xf32, #tpu.memory_space<vmem>>, %arg10: memref<32x1xf32, #tpu.memory_space<vmem>>, %arg11: memref<1x32x128xf32, #tpu.memory_space<vmem>>, %arg12: memref<8x16x128xf32, #tpu.memory_space<vmem>>) attributes {dimension_semantics = [#tpu.dimension_semantics<parallel>, #tpu.dimension_semantics<parallel>], iteration_bounds = array<i64: 2, 1>, scalar_prefetch = 0 : i64, scratch_operands = 1 : i64, tpu.core_type = #tpu.core_type<tc>, window_params = [{transform_indices = @transform_0, window_bounds = array<i64: 1, 8, 16, 128>}, {pipeline_mode = #tpu.pipeline_mode<synchronous>, transform_indices = @transform_1, window_bounds = array<i64: 8, 16>}, {pipeline_mode = #tpu.pipeline_mode<synchronous>, transform_indices = @transform_2, window_bounds = array<i64: 8, 1>}, {pipeline_mode = #tpu.pipeline_mode<synchronous>, transform_indices = @transform_3, window_bounds = array<i64: 8, 8>}, {pipeline_mode = #tpu.pipeline_mode<synchronous>, transform_indices = @transform_4, window_bounds = array<i64: 8, 1>}, {pipeline_mode = #tpu.pipeline_mode<synchronous>, transform_indices = @transform_5, window_bounds = array<i64: 16, 8>}, {pipeline_mode = #tpu.pipeline_mode<synchronous>, transform_indices = @transform_6, window_bounds = array<i64: 16, 1>}, {pipeline_mode = #tpu.pipeline_mode<synchronous>, transform_indices = @transform_7, window_bounds = array<i64: 16, 32, 16>}, {pipeline_mode = #tpu.pipeline_mode<synchronous>, transform_indices = @transform_8, window_bounds = array<i64: 32, 1>}, {transform_indices = @transform_9, window_bounds = array<i64: 1, 32, 128>}]} {
    %c0 = arith.constant 0 : index
    %c0_0 = arith.constant 0 : index
    %0 = vector.load %arg4[%c0, %c0_0] : memref<8x1xf32, #tpu.memory_space<vmem>>, vector<8x1xf32>
    %1 = vector.shape_cast %0 : vector<8x1xf32> to vector<8x1xf32>
    %2 = vector.broadcast %1 : vector<8x1xf32> to vector<8x128xf32>
    %c0_1 = arith.constant 0 : index
    %c0_2 = arith.constant 0 : index
    %3 = vector.load %arg6[%c0_1, %c0_2] : memref<8x1xf32, #tpu.memory_space<vmem>>, vector<8x1xf32>
    %4 = vector.shape_cast %3 : vector<8x1xf32> to vector<8x1xf32>
    %5 = vector.broadcast %4 : vector<8x1xf32> to vector<8x128xf32>
    %c0_3 = arith.constant 0 : index
    %c0_4 = arith.constant 0 : index
    %6 = vector.load %arg8[%c0_3, %c0_4] : memref<16x1xf32, #tpu.memory_space<vmem>>, vector<16x1xf32>
    %7 = vector.shape_cast %6 : vector<16x1xf32> to vector<16x1xf32>
    %8 = vector.broadcast %7 : vector<16x1xf32> to vector<16x128xf32>
    %c0_5 = arith.constant 0 : index
    %c0_6 = arith.constant 0 : index
    %c0_7 = arith.constant 0 : index
    %c0_8 = arith.constant 0 : index
    %9 = vector.load %arg2[%c0_5, %c0_6, %c0_7, %c0_8] : memref<1x8x16x128xf32, #tpu.memory_space<vmem>>, vector<1x1x16x128xf32>
    %10 = vector.shape_cast %9 : vector<1x1x16x128xf32> to vector<16x128xf32>
    %c0_9 = arith.constant 0 : index
    %c0_10 = arith.constant 0 : index
    %11 = vector.load %arg3[%c0_9, %c0_10] : memref<8x16xf32, #tpu.memory_space<vmem>>, vector<8x16xf32>
    %cst = arith.constant dense<0.000000e+00> : vector<8x128xf32>
    %12 = tpu.matmul %11, %10, %cst {dimension_numbers = #tpu.dot_dimension_numbers<[1], [0], [0], [1], [0, 0, 1, 1], [], []>} : vector<8x16xf32>, vector<16x128xf32>, vector<8x128xf32> -> vector<8x128xf32>
    %13 = arith.addf %12, %2 : vector<8x128xf32>
    %cst_11 = arith.constant 0.000000e+00 : f32
    %14 = vector.broadcast %cst_11 : f32 to vector<8x128xf32>
    %15 = arith.maximumf %13, %14 : vector<8x128xf32>
    %c0_12 = arith.constant 0 : index
    %c0_13 = arith.constant 0 : index
    %16 = vector.load %arg5[%c0_12, %c0_13] : memref<8x8xf32, #tpu.memory_space<vmem>>, vector<8x8xf32>
    %cst_14 = arith.constant dense<0.000000e+00> : vector<8x128xf32>
    %17 = tpu.matmul %16, %15, %cst_14 {dimension_numbers = #tpu.dot_dimension_numbers<[1], [0], [0], [1], [0, 0, 1, 1], [], []>} : vector<8x8xf32>, vector<8x128xf32>, vector<8x128xf32> -> vector<8x128xf32>
    %18 = arith.addf %17, %5 : vector<8x128xf32>
    %cst_15 = arith.constant 0.000000e+00 : f32
    %19 = vector.broadcast %cst_15 : f32 to vector<8x128xf32>
    %20 = arith.maximumf %18, %19 : vector<8x128xf32>
    %c0_16 = arith.constant 0 : index
    %c0_17 = arith.constant 0 : index
    %21 = vector.load %arg7[%c0_16, %c0_17] : memref<16x8xf32, #tpu.memory_space<vmem>>, vector<16x8xf32>
    %cst_18 = arith.constant dense<0.000000e+00> : vector<16x128xf32>
    %22 = tpu.matmul %21, %20, %cst_18 {dimension_numbers = #tpu.dot_dimension_numbers<[1], [0], [0], [1], [0, 0, 1, 1], [], []>} : vector<16x8xf32>, vector<8x128xf32>, vector<16x128xf32> -> vector<16x128xf32>
    %23 = arith.addf %22, %8 : vector<16x128xf32>
    %cst_19 = arith.constant 0.000000e+00 : f32
    %24 = vector.broadcast %cst_19 : f32 to vector<16x128xf32>
    %25 = arith.maximumf %23, %24 : vector<16x128xf32>
    %c0_20 = arith.constant 0 : index
    %c0_21 = arith.constant 0 : index
    %c0_22 = arith.constant 0 : index
    %26 = vector.load %arg12[%c0_20, %c0_21, %c0_22] : memref<8x16x128xf32, #tpu.memory_space<vmem>>, vector<1x16x128xf32>
    %27 = vector.shape_cast %26 : vector<1x16x128xf32> to vector<16x128xf32>
    %28 = vector.shape_cast %25 : vector<16x128xf32> to vector<1x16x128xf32>
    tpu.vector_store %arg12[%c0_20, %c0_21, %c0_22], %28 {strides = array<i32>} : memref<8x16x128xf32, #tpu.memory_space<vmem>>, vector<1x16x128xf32>,
    %c0_23 = arith.constant 0 : index
    %c1 = arith.constant 1 : index
    %c0_24 = arith.constant 0 : index
    %c0_25 = arith.constant 0 : index
    %29 = vector.load %arg2[%c0_23, %c1, %c0_24, %c0_25] : memref<1x8x16x128xf32, #tpu.memory_space<vmem>>, vector<1x1x16x128xf32>
    %30 = vector.shape_cast %29 : vector<1x1x16x128xf32> to vector<16x128xf32>
    %c0_26 = arith.constant 0 : index
    %c0_27 = arith.constant 0 : index
    %31 = vector.load %arg3[%c0_26, %c0_27] : memref<8x16xf32, #tpu.memory_space<vmem>>, vector<8x16xf32>
    %cst_28 = arith.constant dense<0.000000e+00> : vector<8x128xf32>
    %32 = tpu.matmul %31, %30, %cst_28 {dimension_numbers = #tpu.dot_dimension_numbers<[1], [0], [0], [1], [0, 0, 1, 1], [], []>} : vector<8x16xf32>, vector<16x128xf32>, vector<8x128xf32> -> vector<8x128xf32>
    %33 = arith.addf %32, %2 : vector<8x128xf32>
    %cst_29 = arith.constant 0.000000e+00 : f32
    %34 = vector.broadcast %cst_29 : f32 to vector<8x128xf32>
    %35 = arith.maximumf %33, %34 : vector<8x128xf32>
    %c0_30 = arith.constant 0 : index
    %c0_31 = arith.constant 0 : index
    %36 = vector.load %arg5[%c0_30, %c0_31] : memref<8x8xf32, #tpu.memory_space<vmem>>, vector<8x8xf32>
    %cst_32 = arith.constant dense<0.000000e+00> : vector<8x128xf32>
    %37 = tpu.matmul %36, %35, %cst_32 {dimension_numbers = #tpu.dot_dimension_numbers<[1], [0], [0], [1], [0, 0, 1, 1], [], []>} : vector<8x8xf32>, vector<8x128xf32>, vector<8x128xf32> -> vector<8x128xf32>
    %38 = arith.addf %37, %5 : vector<8x128xf32>
    %cst_33 = arith.constant 0.000000e+00 : f32
    %39 = vector.broadcast %cst_33 : f32 to vector<8x128xf32>
    %40 = arith.maximumf %38, %39 : vector<8x128xf32>
    %c0_34 = arith.constant 0 : index
    %c0_35 = arith.constant 0 : index
    %41 = vector.load %arg7[%c0_34, %c0_35] : memref<16x8xf32, #tpu.memory_space<vmem>>, vector<16x8xf32>
    %cst_36 = arith.constant dense<0.000000e+00> : vector<16x128xf32>
    %42 = tpu.matmul %41, %40, %cst_36 {dimension_numbers = #tpu.dot_dimension_numbers<[1], [0], [0], [1], [0, 0, 1, 1], [], []>} : vector<16x8xf32>, vector<8x128xf32>, vector<16x128xf32> -> vector<16x128xf32>
    %43 = arith.addf %42, %8 : vector<16x128xf32>
    %cst_37 = arith.constant 0.000000e+00 : f32
    %44 = vector.broadcast %cst_37 : f32 to vector<16x128xf32>
    %45 = arith.maximumf %43, %44 : vector<16x128xf32>
    %c1_38 = arith.constant 1 : index
    %c0_39 = arith.constant 0 : index
    %c0_40 = arith.constant 0 : index
    %46 = vector.load %arg12[%c1_38, %c0_39, %c0_40] : memref<8x16x128xf32, #tpu.memory_space<vmem>>, vector<1x16x128xf32>
    %47 = vector.shape_cast %46 : vector<1x16x128xf32> to vector<16x128xf32>
    %48 = vector.shape_cast %45 : vector<16x128xf32> to vector<1x16x128xf32>
    tpu.vector_store %arg12[%c1_38, %c0_39, %c0_40], %48 {strides = array<i32>} : memref<8x16x128xf32, #tpu.memory_space<vmem>>, vector<1x16x128xf32>,
    %c0_41 = arith.constant 0 : index
    %c2 = arith.constant 2 : index
    %c0_42 = arith.constant 0 : index
    %c0_43 = arith.constant 0 : index
    %49 = vector.load %arg2[%c0_41, %c2, %c0_42, %c0_43] : memref<1x8x16x128xf32, #tpu.memory_space<vmem>>, vector<1x1x16x128xf32>
    %50 = vector.shape_cast %49 : vector<1x1x16x128xf32> to vector<16x128xf32>
    %c0_44 = arith.constant 0 : index
    %c0_45 = arith.constant 0 : index
    %51 = vector.load %arg3[%c0_44, %c0_45] : memref<8x16xf32, #tpu.memory_space<vmem>>, vector<8x16xf32>
    %cst_46 = arith.constant dense<0.000000e+00> : vector<8x128xf32>
    %52 = tpu.matmul %51, %50, %cst_46 {dimension_numbers = #tpu.dot_dimension_numbers<[1], [0], [0], [1], [0, 0, 1, 1], [], []>} : vector<8x16xf32>, vector<16x128xf32>, vector<8x128xf32> -> vector<8x128xf32>
    %53 = arith.addf %52, %2 : vector<8x128xf32>
    %cst_47 = arith.constant 0.000000e+00 : f32
    %54 = vector.broadcast %cst_47 : f32 to vector<8x128xf32>
    %55 = arith.maximumf %53, %54 : vector<8x128xf32>
    %c0_48 = arith.constant 0 : index
    %c0_49 = arith.constant 0 : index
    %56 = vector.load %arg5[%c0_48, %c0_49] : memref<8x8xf32, #tpu.memory_space<vmem>>, vector<8x8xf32>
    %cst_50 = arith.constant dense<0.000000e+00> : vector<8x128xf32>
    %57 = tpu.matmul %56, %55, %cst_50 {dimension_numbers = #tpu.dot_dimension_numbers<[1], [0], [0], [1], [0, 0, 1, 1], [], []>} : vector<8x8xf32>, vector<8x128xf32>, vector<8x128xf32> -> vector<8x128xf32>
    %58 = arith.addf %57, %5 : vector<8x128xf32>
    %cst_51 = arith.constant 0.000000e+00 : f32
    %59 = vector.broadcast %cst_51 : f32 to vector<8x128xf32>
    %60 = arith.maximumf %58, %59 : vector<8x128xf32>
    %c0_52 = arith.constant 0 : index
    %c0_53 = arith.constant 0 : index
    %61 = vector.load %arg7[%c0_52, %c0_53] : memref<16x8xf32, #tpu.memory_space<vmem>>, vector<16x8xf32>
    %cst_54 = arith.constant dense<0.000000e+00> : vector<16x128xf32>
    %62 = tpu.matmul %61, %60, %cst_54 {dimension_numbers = #tpu.dot_dimension_numbers<[1], [0], [0], [1], [0, 0, 1, 1], [], []>} : vector<16x8xf32>, vector<8x128xf32>, vector<16x128xf32> -> vector<16x128xf32>
    %63 = arith.addf %62, %8 : vector<16x128xf32>
    %cst_55 = arith.constant 0.000000e+00 : f32
    %64 = vector.broadcast %cst_55 : f32 to vector<16x128xf32>
    %65 = arith.maximumf %63, %64 : vector<16x128xf32>
    %c2_56 = arith.constant 2 : index
    %c0_57 = arith.constant 0 : index
    %c0_58 = arith.constant 0 : index
    %66 = vector.load %arg12[%c2_56, %c0_57, %c0_58] : memref<8x16x128xf32, #tpu.memory_space<vmem>>, vector<1x16x128xf32>
    %67 = vector.shape_cast %66 : vector<1x16x128xf32> to vector<16x128xf32>
    %68 = vector.shape_cast %65 : vector<16x128xf32> to vector<1x16x128xf32>
    tpu.vector_store %arg12[%c2_56, %c0_57, %c0_58], %68 {strides = array<i32>} : memref<8x16x128xf32, #tpu.memory_space<vmem>>, vector<1x16x128xf32>,
    %c0_59 = arith.constant 0 : index
    %c3 = arith.constant 3 : index
    %c0_60 = arith.constant 0 : index
    %c0_61 = arith.constant 0 : index
    %69 = vector.load %arg2[%c0_59, %c3, %c0_60, %c0_61] : memref<1x8x16x128xf32, #tpu.memory_space<vmem>>, vector<1x1x16x128xf32>
    %70 = vector.shape_cast %69 : vector<1x1x16x128xf32> to vector<16x128xf32>
    %c0_62 = arith.constant 0 : index
    %c0_63 = arith.constant 0 : index
    %71 = vector.load %arg3[%c0_62, %c0_63] : memref<8x16xf32, #tpu.memory_space<vmem>>, vector<8x16xf32>
    %cst_64 = arith.constant dense<0.000000e+00> : vector<8x128xf32>
    %72 = tpu.matmul %71, %70, %cst_64 {dimension_numbers = #tpu.dot_dimension_numbers<[1], [0], [0], [1], [0, 0, 1, 1], [], []>} : vector<8x16xf32>, vector<16x128xf32>, vector<8x128xf32> -> vector<8x128xf32>
    %73 = arith.addf %72, %2 : vector<8x128xf32>
    %cst_65 = arith.constant 0.000000e+00 : f32
    %74 = vector.broadcast %cst_65 : f32 to vector<8x128xf32>
    %75 = arith.maximumf %73, %74 : vector<8x128xf32>
    %c0_66 = arith.constant 0 : index
    %c0_67 = arith.constant 0 : index
    %76 = vector.load %arg5[%c0_66, %c0_67] : memref<8x8xf32, #tpu.memory_space<vmem>>, vector<8x8xf32>
    %cst_68 = arith.constant dense<0.000000e+00> : vector<8x128xf32>
    %77 = tpu.matmul %76, %75, %cst_68 {dimension_numbers = #tpu.dot_dimension_numbers<[1], [0], [0], [1], [0, 0, 1, 1], [], []>} : vector<8x8xf32>, vector<8x128xf32>, vector<8x128xf32> -> vector<8x128xf32>
    %78 = arith.addf %77, %5 : vector<8x128xf32>
    %cst_69 = arith.constant 0.000000e+00 : f32
    %79 = vector.broadcast %cst_69 : f32 to vector<8x128xf32>
    %80 = arith.maximumf %78, %79 : vector<8x128xf32>
    %c0_70 = arith.constant 0 : index
    %c0_71 = arith.constant 0 : index
    %81 = vector.load %arg7[%c0_70, %c0_71] : memref<16x8xf32, #tpu.memory_space<vmem>>, vector<16x8xf32>
    %cst_72 = arith.constant dense<0.000000e+00> : vector<16x128xf32>
    %82 = tpu.matmul %81, %80, %cst_72 {dimension_numbers = #tpu.dot_dimension_numbers<[1], [0], [0], [1], [0, 0, 1, 1], [], []>} : vector<16x8xf32>, vector<8x128xf32>, vector<16x128xf32> -> vector<16x128xf32>
    %83 = arith.addf %82, %8 : vector<16x128xf32>
    %cst_73 = arith.constant 0.000000e+00 : f32
    %84 = vector.broadcast %cst_73 : f32 to vector<16x128xf32>
    %85 = arith.maximumf %83, %84 : vector<16x128xf32>
    %c3_74 = arith.constant 3 : index
    %c0_75 = arith.constant 0 : index
    %c0_76 = arith.constant 0 : index
    %86 = vector.load %arg12[%c3_74, %c0_75, %c0_76] : memref<8x16x128xf32, #tpu.memory_space<vmem>>, vector<1x16x128xf32>
    %87 = vector.shape_cast %86 : vector<1x16x128xf32> to vector<16x128xf32>
    %88 = vector.shape_cast %85 : vector<16x128xf32> to vector<1x16x128xf32>
    tpu.vector_store %arg12[%c3_74, %c0_75, %c0_76], %88 {strides = array<i32>} : memref<8x16x128xf32, #tpu.memory_space<vmem>>, vector<1x16x128xf32>,
    %c0_77 = arith.constant 0 : index
    %c4 = arith.constant 4 : index
    %c0_78 = arith.constant 0 : index
    %c0_79 = arith.constant 0 : index
    %89 = vector.load %arg2[%c0_77, %c4, %c0_78, %c0_79] : memref<1x8x16x128xf32, #tpu.memory_space<vmem>>, vector<1x1x16x128xf32>
    %90 = vector.shape_cast %89 : vector<1x1x16x128xf32> to vector<16x128xf32>
    %c0_80 = arith.constant 0 : index
    %c0_81 = arith.constant 0 : index
    %91 = vector.load %arg3[%c0_80, %c0_81] : memref<8x16xf32, #tpu.memory_space<vmem>>, vector<8x16xf32>
    %cst_82 = arith.constant dense<0.000000e+00> : vector<8x128xf32>
    %92 = tpu.matmul %91, %90, %cst_82 {dimension_numbers = #tpu.dot_dimension_numbers<[1], [0], [0], [1], [0, 0, 1, 1], [], []>} : vector<8x16xf32>, vector<16x128xf32>, vector<8x128xf32> -> vector<8x128xf32>
    %93 = arith.addf %92, %2 : vector<8x128xf32>
    %cst_83 = arith.constant 0.000000e+00 : f32
    %94 = vector.broadcast %cst_83 : f32 to vector<8x128xf32>
    %95 = arith.maximumf %93, %94 : vector<8x128xf32>
    %c0_84 = arith.constant 0 : index
    %c0_85 = arith.constant 0 : index
    %96 = vector.load %arg5[%c0_84, %c0_85] : memref<8x8xf32, #tpu.memory_space<vmem>>, vector<8x8xf32>
    %cst_86 = arith.constant dense<0.000000e+00> : vector<8x128xf32>
    %97 = tpu.matmul %96, %95, %cst_86 {dimension_numbers = #tpu.dot_dimension_numbers<[1], [0], [0], [1], [0, 0, 1, 1], [], []>} : vector<8x8xf32>, vector<8x128xf32>, vector<8x128xf32> -> vector<8x128xf32>
    %98 = arith.addf %97, %5 : vector<8x128xf32>
    %cst_87 = arith.constant 0.000000e+00 : f32
    %99 = vector.broadcast %cst_87 : f32 to vector<8x128xf32>
    %100 = arith.maximumf %98, %99 : vector<8x128xf32>
    %c0_88 = arith.constant 0 : index
    %c0_89 = arith.constant 0 : index
    %101 = vector.load %arg7[%c0_88, %c0_89] : memref<16x8xf32, #tpu.memory_space<vmem>>, vector<16x8xf32>
    %cst_90 = arith.constant dense<0.000000e+00> : vector<16x128xf32>
    %102 = tpu.matmul %101, %100, %cst_90 {dimension_numbers = #tpu.dot_dimension_numbers<[1], [0], [0], [1], [0, 0, 1, 1], [], []>} : vector<16x8xf32>, vector<8x128xf32>, vector<16x128xf32> -> vector<16x128xf32>
    %103 = arith.addf %102, %8 : vector<16x128xf32>
    %cst_91 = arith.constant 0.000000e+00 : f32
    %104 = vector.broadcast %cst_91 : f32 to vector<16x128xf32>
    %105 = arith.maximumf %103, %104 : vector<16x128xf32>
    %c4_92 = arith.constant 4 : index
    %c0_93 = arith.constant 0 : index
    %c0_94 = arith.constant 0 : index
    %106 = vector.load %arg12[%c4_92, %c0_93, %c0_94] : memref<8x16x128xf32, #tpu.memory_space<vmem>>, vector<1x16x128xf32>
    %107 = vector.shape_cast %106 : vector<1x16x128xf32> to vector<16x128xf32>
    %108 = vector.shape_cast %105 : vector<16x128xf32> to vector<1x16x128xf32>
    tpu.vector_store %arg12[%c4_92, %c0_93, %c0_94], %108 {strides = array<i32>} : memref<8x16x128xf32, #tpu.memory_space<vmem>>, vector<1x16x128xf32>,
    %c0_95 = arith.constant 0 : index
    %c5 = arith.constant 5 : index
    %c0_96 = arith.constant 0 : index
    %c0_97 = arith.constant 0 : index
    %109 = vector.load %arg2[%c0_95, %c5, %c0_96, %c0_97] : memref<1x8x16x128xf32, #tpu.memory_space<vmem>>, vector<1x1x16x128xf32>
    %110 = vector.shape_cast %109 : vector<1x1x16x128xf32> to vector<16x128xf32>
    %c0_98 = arith.constant 0 : index
    %c0_99 = arith.constant 0 : index
    %111 = vector.load %arg3[%c0_98, %c0_99] : memref<8x16xf32, #tpu.memory_space<vmem>>, vector<8x16xf32>
    %cst_100 = arith.constant dense<0.000000e+00> : vector<8x128xf32>
    %112 = tpu.matmul %111, %110, %cst_100 {dimension_numbers = #tpu.dot_dimension_numbers<[1], [0], [0], [1], [0, 0, 1, 1], [], []>} : vector<8x16xf32>, vector<16x128xf32>, vector<8x128xf32> -> vector<8x128xf32>
    %113 = arith.addf %112, %2 : vector<8x128xf32>
    %cst_101 = arith.constant 0.000000e+00 : f32
    %114 = vector.broadcast %cst_101 : f32 to vector<8x128xf32>
    %115 = arith.maximumf %113, %114 : vector<8x128xf32>
    %c0_102 = arith.constant 0 : index
    %c0_103 = arith.constant 0 : index
    %116 = vector.load %arg5[%c0_102, %c0_103] : memref<8x8xf32, #tpu.memory_space<vmem>>, vector<8x8xf32>
    %cst_104 = arith.constant dense<0.000000e+00> : vector<8x128xf32>
    %117 = tpu.matmul %116, %115, %cst_104 {dimension_numbers = #tpu.dot_dimension_numbers<[1], [0], [0], [1], [0, 0, 1, 1], [], []>} : vector<8x8xf32>, vector<8x128xf32>, vector<8x128xf32> -> vector<8x128xf32>
    %118 = arith.addf %117, %5 : vector<8x128xf32>
    %cst_105 = arith.constant 0.000000e+00 : f32
    %119 = vector.broadcast %cst_105 : f32 to vector<8x128xf32>
    %120 = arith.maximumf %118, %119 : vector<8x128xf32>
    %c0_106 = arith.constant 0 : index
    %c0_107 = arith.constant 0 : index
    %121 = vector.load %arg7[%c0_106, %c0_107] : memref<16x8xf32, #tpu.memory_space<vmem>>, vector<16x8xf32>
    %cst_108 = arith.constant dense<0.000000e+00> : vector<16x128xf32>
    %122 = tpu.matmul %121, %120, %cst_108 {dimension_numbers = #tpu.dot_dimension_numbers<[1], [0], [0], [1], [0, 0, 1, 1], [], []>} : vector<16x8xf32>, vector<8x128xf32>, vector<16x128xf32> -> vector<16x128xf32>
    %123 = arith.addf %122, %8 : vector<16x128xf32>
    %cst_109 = arith.constant 0.000000e+00 : f32
    %124 = vector.broadcast %cst_109 : f32 to vector<16x128xf32>
    %125 = arith.maximumf %123, %124 : vector<16x128xf32>
    %c5_110 = arith.constant 5 : index
    %c0_111 = arith.constant 0 : index
    %c0_112 = arith.constant 0 : index
    %126 = vector.load %arg12[%c5_110, %c0_111, %c0_112] : memref<8x16x128xf32, #tpu.memory_space<vmem>>, vector<1x16x128xf32>
    %127 = vector.shape_cast %126 : vector<1x16x128xf32> to vector<16x128xf32>
    %128 = vector.shape_cast %125 : vector<16x128xf32> to vector<1x16x128xf32>
    tpu.vector_store %arg12[%c5_110, %c0_111, %c0_112], %128 {strides = array<i32>} : memref<8x16x128xf32, #tpu.memory_space<vmem>>, vector<1x16x128xf32>,
    %c0_113 = arith.constant 0 : index
    %c6 = arith.constant 6 : index
    %c0_114 = arith.constant 0 : index
    %c0_115 = arith.constant 0 : index
    %129 = vector.load %arg2[%c0_113, %c6, %c0_114, %c0_115] : memref<1x8x16x128xf32, #tpu.memory_space<vmem>>, vector<1x1x16x128xf32>
    %130 = vector.shape_cast %129 : vector<1x1x16x128xf32> to vector<16x128xf32>
    %c0_116 = arith.constant 0 : index
    %c0_117 = arith.constant 0 : index
    %131 = vector.load %arg3[%c0_116, %c0_117] : memref<8x16xf32, #tpu.memory_space<vmem>>, vector<8x16xf32>
    %cst_118 = arith.constant dense<0.000000e+00> : vector<8x128xf32>
    %132 = tpu.matmul %131, %130, %cst_118 {dimension_numbers = #tpu.dot_dimension_numbers<[1], [0], [0], [1], [0, 0, 1, 1], [], []>} : vector<8x16xf32>, vector<16x128xf32>, vector<8x128xf32> -> vector<8x128xf32>
    %133 = arith.addf %132, %2 : vector<8x128xf32>
    %cst_119 = arith.constant 0.000000e+00 : f32
    %134 = vector.broadcast %cst_119 : f32 to vector<8x128xf32>
    %135 = arith.maximumf %133, %134 : vector<8x128xf32>
    %c0_120 = arith.constant 0 : index
    %c0_121 = arith.constant 0 : index
    %136 = vector.load %arg5[%c0_120, %c0_121] : memref<8x8xf32, #tpu.memory_space<vmem>>, vector<8x8xf32>
    %cst_122 = arith.constant dense<0.000000e+00> : vector<8x128xf32>
    %137 = tpu.matmul %136, %135, %cst_122 {dimension_numbers = #tpu.dot_dimension_numbers<[1], [0], [0], [1], [0, 0, 1, 1], [], []>} : vector<8x8xf32>, vector<8x128xf32>, vector<8x128xf32> -> vector<8x128xf32>
    %138 = arith.addf %137, %5 : vector<8x128xf32>
    %cst_123 = arith.constant 0.000000e+00 : f32
    %139 = vector.broadcast %cst_123 : f32 to vector<8x128xf32>
    %140 = arith.maximumf %138, %139 : vector<8x128xf32>
    %c0_124 = arith.constant 0 : index
    %c0_125 = arith.constant 0 : index
    %141 = vector.load %arg7[%c0_124, %c0_125] : memref<16x8xf32, #tpu.memory_space<vmem>>, vector<16x8xf32>
    %cst_126 = arith.constant dense<0.000000e+00> : vector<16x128xf32>
    %142 = tpu.matmul %141, %140, %cst_126 {dimension_numbers = #tpu.dot_dimension_numbers<[1], [0], [0], [1], [0, 0, 1, 1], [], []>} : vector<16x8xf32>, vector<8x128xf32>, vector<16x128xf32> -> vector<16x128xf32>
    %143 = arith.addf %142, %8 : vector<16x128xf32>
    %cst_127 = arith.constant 0.000000e+00 : f32
    %144 = vector.broadcast %cst_127 : f32 to vector<16x128xf32>
    %145 = arith.maximumf %143, %144 : vector<16x128xf32>
    %c6_128 = arith.constant 6 : index
    %c0_129 = arith.constant 0 : index
    %c0_130 = arith.constant 0 : index
    %146 = vector.load %arg12[%c6_128, %c0_129, %c0_130] : memref<8x16x128xf32, #tpu.memory_space<vmem>>, vector<1x16x128xf32>
    %147 = vector.shape_cast %146 : vector<1x16x128xf32> to vector<16x128xf32>
    %148 = vector.shape_cast %145 : vector<16x128xf32> to vector<1x16x128xf32>
    tpu.vector_store %arg12[%c6_128, %c0_129, %c0_130], %148 {strides = array<i32>} : memref<8x16x128xf32, #tpu.memory_space<vmem>>, vector<1x16x128xf32>,
    %c0_131 = arith.constant 0 : index
    %c7 = arith.constant 7 : index
    %c0_132 = arith.constant 0 : index
    %c0_133 = arith.constant 0 : index
    %149 = vector.load %arg2[%c0_131, %c7, %c0_132, %c0_133] : memref<1x8x16x128xf32, #tpu.memory_space<vmem>>, vector<1x1x16x128xf32>
    %150 = vector.shape_cast %149 : vector<1x1x16x128xf32> to vector<16x128xf32>
    %c0_134 = arith.constant 0 : index
    %c0_135 = arith.constant 0 : index
    %151 = vector.load %arg3[%c0_134, %c0_135] : memref<8x16xf32, #tpu.memory_space<vmem>>, vector<8x16xf32>
    %cst_136 = arith.constant dense<0.000000e+00> : vector<8x128xf32>
    %152 = tpu.matmul %151, %150, %cst_136 {dimension_numbers = #tpu.dot_dimension_numbers<[1], [0], [0], [1], [0, 0, 1, 1], [], []>} : vector<8x16xf32>, vector<16x128xf32>, vector<8x128xf32> -> vector<8x128xf32>
    %153 = arith.addf %152, %2 : vector<8x128xf32>
    %cst_137 = arith.constant 0.000000e+00 : f32
    %154 = vector.broadcast %cst_137 : f32 to vector<8x128xf32>
    %155 = arith.maximumf %153, %154 : vector<8x128xf32>
    %c0_138 = arith.constant 0 : index
    %c0_139 = arith.constant 0 : index
    %156 = vector.load %arg5[%c0_138, %c0_139] : memref<8x8xf32, #tpu.memory_space<vmem>>, vector<8x8xf32>
    %cst_140 = arith.constant dense<0.000000e+00> : vector<8x128xf32>
    %157 = tpu.matmul %156, %155, %cst_140 {dimension_numbers = #tpu.dot_dimension_numbers<[1], [0], [0], [1], [0, 0, 1, 1], [], []>} : vector<8x8xf32>, vector<8x128xf32>, vector<8x128xf32> -> vector<8x128xf32>
    %158 = arith.addf %157, %5 : vector<8x128xf32>
    %cst_141 = arith.constant 0.000000e+00 : f32
    %159 = vector.broadcast %cst_141 : f32 to vector<8x128xf32>
    %160 = arith.maximumf %158, %159 : vector<8x128xf32>
    %c0_142 = arith.constant 0 : index
    %c0_143 = arith.constant 0 : index
    %161 = vector.load %arg7[%c0_142, %c0_143] : memref<16x8xf32, #tpu.memory_space<vmem>>, vector<16x8xf32>
    %cst_144 = arith.constant dense<0.000000e+00> : vector<16x128xf32>
    %162 = tpu.matmul %161, %160, %cst_144 {dimension_numbers = #tpu.dot_dimension_numbers<[1], [0], [0], [1], [0, 0, 1, 1], [], []>} : vector<16x8xf32>, vector<8x128xf32>, vector<16x128xf32> -> vector<16x128xf32>
    %163 = arith.addf %162, %8 : vector<16x128xf32>
    %cst_145 = arith.constant 0.000000e+00 : f32
    %164 = vector.broadcast %cst_145 : f32 to vector<16x128xf32>
    %165 = arith.maximumf %163, %164 : vector<16x128xf32>
    %c7_146 = arith.constant 7 : index
    %c0_147 = arith.constant 0 : index
    %c0_148 = arith.constant 0 : index
    %166 = vector.load %arg12[%c7_146, %c0_147, %c0_148] : memref<8x16x128xf32, #tpu.memory_space<vmem>>, vector<1x16x128xf32>
    %167 = vector.shape_cast %166 : vector<1x16x128xf32> to vector<16x128xf32>
    %168 = vector.shape_cast %165 : vector<16x128xf32> to vector<1x16x128xf32>
    tpu.vector_store %arg12[%c7_146, %c0_147, %c0_148], %168 {strides = array<i32>} : memref<8x16x128xf32, #tpu.memory_space<vmem>>, vector<1x16x128xf32>,
    %c0_149 = arith.constant 0 : index
    %c0_150 = arith.constant 0 : index
    %169 = vector.load %arg10[%c0_149, %c0_150] : memref<32x1xf32, #tpu.memory_space<vmem>>, vector<32x1xf32>
    %170 = vector.shape_cast %169 : vector<32x1xf32> to vector<32x1xf32>
    %171 = vector.broadcast %170 : vector<32x1xf32> to vector<32x128xf32>
    %c0_151 = arith.constant 0 : index
    %c0_152 = arith.constant 0 : index
    %c0_153 = arith.constant 0 : index
    %c0_154 = arith.constant 0 : index
    %172 = vector.load %arg2[%c0_151, %c0_152, %c0_153, %c0_154] : memref<1x8x16x128xf32, #tpu.memory_space<vmem>>, vector<1x1x1x128xf32>
    %173 = vector.shape_cast %172 : vector<1x1x1x128xf32> to vector<1x128xf32>
    %c0_155 = arith.constant 0 : index
    %c0_156 = arith.constant 0 : index
    %c0_157 = arith.constant 0 : index
    %174 = vector.load %arg12[%c0_155, %c0_156, %c0_157] : memref<8x16x128xf32, #tpu.memory_space<vmem>>, vector<1x16x128xf32>
    %175 = vector.shape_cast %174 : vector<1x16x128xf32> to vector<16x128xf32>
    %176 = vector.broadcast %173 : vector<1x128xf32> to vector<16x128xf32>
    %177 = arith.mulf %176, %175 : vector<16x128xf32>
    %c0_158 = arith.constant 0 : index
    %c1_159 = arith.constant 1 : index
    %c0_160 = arith.constant 0 : index
    %c0_161 = arith.constant 0 : index
    %178 = vector.load %arg2[%c0_158, %c1_159, %c0_160, %c0_161] : memref<1x8x16x128xf32, #tpu.memory_space<vmem>>, vector<1x1x1x128xf32>
    %179 = vector.shape_cast %178 : vector<1x1x1x128xf32> to vector<1x128xf32>
    %c1_162 = arith.constant 1 : index
    %c0_163 = arith.constant 0 : index
    %c0_164 = arith.constant 0 : index
    %180 = vector.load %arg12[%c1_162, %c0_163, %c0_164] : memref<8x16x128xf32, #tpu.memory_space<vmem>>, vector<1x16x128xf32>
    %181 = vector.shape_cast %180 : vector<1x16x128xf32> to vector<16x128xf32>
    %182 = vector.broadcast %179 : vector<1x128xf32> to vector<16x128xf32>
    %183 = arith.mulf %182, %181 : vector<16x128xf32>
    %184 = arith.addf %177, %183 : vector<16x128xf32>
    %c0_165 = arith.constant 0 : index
    %c2_166 = arith.constant 2 : index
    %c0_167 = arith.constant 0 : index
    %c0_168 = arith.constant 0 : index
    %185 = vector.load %arg2[%c0_165, %c2_166, %c0_167, %c0_168] : memref<1x8x16x128xf32, #tpu.memory_space<vmem>>, vector<1x1x1x128xf32>
    %186 = vector.shape_cast %185 : vector<1x1x1x128xf32> to vector<1x128xf32>
    %c2_169 = arith.constant 2 : index
    %c0_170 = arith.constant 0 : index
    %c0_171 = arith.constant 0 : index
    %187 = vector.load %arg12[%c2_169, %c0_170, %c0_171] : memref<8x16x128xf32, #tpu.memory_space<vmem>>, vector<1x16x128xf32>
    %188 = vector.shape_cast %187 : vector<1x16x128xf32> to vector<16x128xf32>
    %189 = vector.broadcast %186 : vector<1x128xf32> to vector<16x128xf32>
    %190 = arith.mulf %189, %188 : vector<16x128xf32>
    %191 = arith.addf %184, %190 : vector<16x128xf32>
    %c0_172 = arith.constant 0 : index
    %c3_173 = arith.constant 3 : index
    %c0_174 = arith.constant 0 : index
    %c0_175 = arith.constant 0 : index
    %192 = vector.load %arg2[%c0_172, %c3_173, %c0_174, %c0_175] : memref<1x8x16x128xf32, #tpu.memory_space<vmem>>, vector<1x1x1x128xf32>
    %193 = vector.shape_cast %192 : vector<1x1x1x128xf32> to vector<1x128xf32>
    %c3_176 = arith.constant 3 : index
    %c0_177 = arith.constant 0 : index
    %c0_178 = arith.constant 0 : index
    %194 = vector.load %arg12[%c3_176, %c0_177, %c0_178] : memref<8x16x128xf32, #tpu.memory_space<vmem>>, vector<1x16x128xf32>
    %195 = vector.shape_cast %194 : vector<1x16x128xf32> to vector<16x128xf32>
    %196 = vector.broadcast %193 : vector<1x128xf32> to vector<16x128xf32>
    %197 = arith.mulf %196, %195 : vector<16x128xf32>
    %198 = arith.addf %191, %197 : vector<16x128xf32>
    %c0_179 = arith.constant 0 : index
    %c4_180 = arith.constant 4 : index
    %c0_181 = arith.constant 0 : index
    %c0_182 = arith.constant 0 : index
    %199 = vector.load %arg2[%c0_179, %c4_180, %c0_181, %c0_182] : memref<1x8x16x128xf32, #tpu.memory_space<vmem>>, vector<1x1x1x128xf32>
    %200 = vector.shape_cast %199 : vector<1x1x1x128xf32> to vector<1x128xf32>
    %c4_183 = arith.constant 4 : index
    %c0_184 = arith.constant 0 : index
    %c0_185 = arith.constant 0 : index
    %201 = vector.load %arg12[%c4_183, %c0_184, %c0_185] : memref<8x16x128xf32, #tpu.memory_space<vmem>>, vector<1x16x128xf32>
    %202 = vector.shape_cast %201 : vector<1x16x128xf32> to vector<16x128xf32>
    %203 = vector.broadcast %200 : vector<1x128xf32> to vector<16x128xf32>
    %204 = arith.mulf %203, %202 : vector<16x128xf32>
    %205 = arith.addf %198, %204 : vector<16x128xf32>
    %c0_186 = arith.constant 0 : index
    %c5_187 = arith.constant 5 : index
    %c0_188 = arith.constant 0 : index
    %c0_189 = arith.constant 0 : index
    %206 = vector.load %arg2[%c0_186, %c5_187, %c0_188, %c0_189] : memref<1x8x16x128xf32, #tpu.memory_space<vmem>>, vector<1x1x1x128xf32>
    %207 = vector.shape_cast %206 : vector<1x1x1x128xf32> to vector<1x128xf32>
    %c5_190 = arith.constant 5 : index
    %c0_191 = arith.constant 0 : index
    %c0_192 = arith.constant 0 : index
    %208 = vector.load %arg12[%c5_190, %c0_191, %c0_192] : memref<8x16x128xf32, #tpu.memory_space<vmem>>, vector<1x16x128xf32>
    %209 = vector.shape_cast %208 : vector<1x16x128xf32> to vector<16x128xf32>
    %210 = vector.broadcast %207 : vector<1x128xf32> to vector<16x128xf32>
    %211 = arith.mulf %210, %209 : vector<16x128xf32>
    %212 = arith.addf %205, %211 : vector<16x128xf32>
    %c0_193 = arith.constant 0 : index
    %c6_194 = arith.constant 6 : index
    %c0_195 = arith.constant 0 : index
    %c0_196 = arith.constant 0 : index
    %213 = vector.load %arg2[%c0_193, %c6_194, %c0_195, %c0_196] : memref<1x8x16x128xf32, #tpu.memory_space<vmem>>, vector<1x1x1x128xf32>
    %214 = vector.shape_cast %213 : vector<1x1x1x128xf32> to vector<1x128xf32>
    %c6_197 = arith.constant 6 : index
    %c0_198 = arith.constant 0 : index
    %c0_199 = arith.constant 0 : index
    %215 = vector.load %arg12[%c6_197, %c0_198, %c0_199] : memref<8x16x128xf32, #tpu.memory_space<vmem>>, vector<1x16x128xf32>
    %216 = vector.shape_cast %215 : vector<1x16x128xf32> to vector<16x128xf32>
    %217 = vector.broadcast %214 : vector<1x128xf32> to vector<16x128xf32>
    %218 = arith.mulf %217, %216 : vector<16x128xf32>
    %219 = arith.addf %212, %218 : vector<16x128xf32>
    %c0_200 = arith.constant 0 : index
    %c7_201 = arith.constant 7 : index
    %c0_202 = arith.constant 0 : index
    %c0_203 = arith.constant 0 : index
    %220 = vector.load %arg2[%c0_200, %c7_201, %c0_202, %c0_203] : memref<1x8x16x128xf32, #tpu.memory_space<vmem>>, vector<1x1x1x128xf32>
    %221 = vector.shape_cast %220 : vector<1x1x1x128xf32> to vector<1x128xf32>
    %c7_204 = arith.constant 7 : index
    %c0_205 = arith.constant 0 : index
    %c0_206 = arith.constant 0 : index
    %222 = vector.load %arg12[%c7_204, %c0_205, %c0_206] : memref<8x16x128xf32, #tpu.memory_space<vmem>>, vector<1x16x128xf32>
    %223 = vector.shape_cast %222 : vector<1x16x128xf32> to vector<16x128xf32>
    %224 = vector.broadcast %221 : vector<1x128xf32> to vector<16x128xf32>
    %225 = arith.mulf %224, %223 : vector<16x128xf32>
    %226 = arith.addf %219, %225 : vector<16x128xf32>
    %c0_207 = arith.constant 0 : index
    %c0_208 = arith.constant 0 : index
    %c0_209 = arith.constant 0 : index
    %227 = vector.load %arg9[%c0_207, %c0_208, %c0_209] : memref<16x32x16xf32, #tpu.memory_space<vmem>>, vector<1x32x16xf32>
    %228 = vector.shape_cast %227 : vector<1x32x16xf32> to vector<32x16xf32>
    %cst_210 = arith.constant dense<0.000000e+00> : vector<32x128xf32>
    %229 = tpu.matmul %228, %226, %cst_210 {dimension_numbers = #tpu.dot_dimension_numbers<[1], [0], [0], [1], [0, 0, 1, 1], [], []>} : vector<32x16xf32>, vector<16x128xf32>, vector<32x128xf32> -> vector<32x128xf32>
    %230 = arith.addf %171, %229 : vector<32x128xf32>
    %c0_211 = arith.constant 0 : index
    %c0_212 = arith.constant 0 : index
    %c1_213 = arith.constant 1 : index
    %c0_214 = arith.constant 0 : index
    %231 = vector.load %arg2[%c0_211, %c0_212, %c1_213, %c0_214] : memref<1x8x16x128xf32, #tpu.memory_space<vmem>>, vector<1x1x1x128xf32>
    %232 = vector.shape_cast %231 : vector<1x1x1x128xf32> to vector<1x128xf32>
    %c0_215 = arith.constant 0 : index
    %c0_216 = arith.constant 0 : index
    %c0_217 = arith.constant 0 : index
    %233 = vector.load %arg12[%c0_215, %c0_216, %c0_217] : memref<8x16x128xf32, #tpu.memory_space<vmem>>, vector<1x16x128xf32>
    %234 = vector.shape_cast %233 : vector<1x16x128xf32> to vector<16x128xf32>
    %235 = vector.broadcast %232 : vector<1x128xf32> to vector<16x128xf32>
    %236 = arith.mulf %235, %234 : vector<16x128xf32>
    %c0_218 = arith.constant 0 : index
    %c1_219 = arith.constant 1 : index
    %c1_220 = arith.constant 1 : index
    %c0_221 = arith.constant 0 : index
    %237 = vector.load %arg2[%c0_218, %c1_219, %c1_220, %c0_221] : memref<1x8x16x128xf32, #tpu.memory_space<vmem>>, vector<1x1x1x128xf32>
    %238 = vector.shape_cast %237 : vector<1x1x1x128xf32> to vector<1x128xf32>
    %c1_222 = arith.constant 1 : index
    %c0_223 = arith.constant 0 : index
    %c0_224 = arith.constant 0 : index
    %239 = vector.load %arg12[%c1_222, %c0_223, %c0_224] : memref<8x16x128xf32, #tpu.memory_space<vmem>>, vector<1x16x128xf32>
    %240 = vector.shape_cast %239 : vector<1x16x128xf32> to vector<16x128xf32>
    %241 = vector.broadcast %238 : vector<1x128xf32> to vector<16x128xf32>
    %242 = arith.mulf %241, %240 : vector<16x128xf32>
    %243 = arith.addf %236, %242 : vector<16x128xf32>
    %c0_225 = arith.constant 0 : index
    %c2_226 = arith.constant 2 : index
    %c1_227 = arith.constant 1 : index
    %c0_228 = arith.constant 0 : index
    %244 = vector.load %arg2[%c0_225, %c2_226, %c1_227, %c0_228] : memref<1x8x16x128xf32, #tpu.memory_space<vmem>>, vector<1x1x1x128xf32>
    %245 = vector.shape_cast %244 : vector<1x1x1x128xf32> to vector<1x128xf32>
    %c2_229 = arith.constant 2 : index
    %c0_230 = arith.constant 0 : index
    %c0_231 = arith.constant 0 : index
    %246 = vector.load %arg12[%c2_229, %c0_230, %c0_231] : memref<8x16x128xf32, #tpu.memory_space<vmem>>, vector<1x16x128xf32>
    %247 = vector.shape_cast %246 : vector<1x16x128xf32> to vector<16x128xf32>
    %248 = vector.broadcast %245 : vector<1x128xf32> to vector<16x128xf32>
    %249 = arith.mulf %248, %247 : vector<16x128xf32>
    %250 = arith.addf %243, %249 : vector<16x128xf32>
    %c0_232 = arith.constant 0 : index
    %c3_233 = arith.constant 3 : index
    %c1_234 = arith.constant 1 : index
    %c0_235 = arith.constant 0 : index
    %251 = vector.load %arg2[%c0_232, %c3_233, %c1_234, %c0_235] : memref<1x8x16x128xf32, #tpu.memory_space<vmem>>, vector<1x1x1x128xf32>
    %252 = vector.shape_cast %251 : vector<1x1x1x128xf32> to vector<1x128xf32>
    %c3_236 = arith.constant 3 : index
    %c0_237 = arith.constant 0 : index
    %c0_238 = arith.constant 0 : index
    %253 = vector.load %arg12[%c3_236, %c0_237, %c0_238] : memref<8x16x128xf32, #tpu.memory_space<vmem>>, vector<1x16x128xf32>
    %254 = vector.shape_cast %253 : vector<1x16x128xf32> to vector<16x128xf32>
    %255 = vector.broadcast %252 : vector<1x128xf32> to vector<16x128xf32>
    %256 = arith.mulf %255, %254 : vector<16x128xf32>
    %257 = arith.addf %250, %256 : vector<16x128xf32>
    %c0_239 = arith.constant 0 : index
    %c4_240 = arith.constant 4 : index
    %c1_241 = arith.constant 1 : index
    %c0_242 = arith.constant 0 : index
    %258 = vector.load %arg2[%c0_239, %c4_240, %c1_241, %c0_242] : memref<1x8x16x128xf32, #tpu.memory_space<vmem>>, vector<1x1x1x128xf32>
    %259 = vector.shape_cast %258 : vector<1x1x1x128xf32> to vector<1x128xf32>
    %c4_243 = arith.constant 4 : index
    %c0_244 = arith.constant 0 : index
    %c0_245 = arith.constant 0 : index
    %260 = vector.load %arg12[%c4_243, %c0_244, %c0_245] : memref<8x16x128xf32, #tpu.memory_space<vmem>>, vector<1x16x128xf32>
    %261 = vector.shape_cast %260 : vector<1x16x128xf32> to vector<16x128xf32>
    %262 = vector.broadcast %259 : vector<1x128xf32> to vector<16x128xf32>
    %263 = arith.mulf %262, %261 : vector<16x128xf32>
    %264 = arith.addf %257, %263 : vector<16x128xf32>
    %c0_246 = arith.constant 0 : index
    %c5_247 = arith.constant 5 : index
    %c1_248 = arith.constant 1 : index
    %c0_249 = arith.constant 0 : index
    %265 = vector.load %arg2[%c0_246, %c5_247, %c1_248, %c0_249] : memref<1x8x16x128xf32, #tpu.memory_space<vmem>>, vector<1x1x1x128xf32>
    %266 = vector.shape_cast %265 : vector<1x1x1x128xf32> to vector<1x128xf32>
    %c5_250 = arith.constant 5 : index
    %c0_251 = arith.constant 0 : index
    %c0_252 = arith.constant 0 : index
    %267 = vector.load %arg12[%c5_250, %c0_251, %c0_252] : memref<8x16x128xf32, #tpu.memory_space<vmem>>, vector<1x16x128xf32>
    %268 = vector.shape_cast %267 : vector<1x16x128xf32> to vector<16x128xf32>
    %269 = vector.broadcast %266 : vector<1x128xf32> to vector<16x128xf32>
    %270 = arith.mulf %269, %268 : vector<16x128xf32>
    %271 = arith.addf %264, %270 : vector<16x128xf32>
    %c0_253 = arith.constant 0 : index
    %c6_254 = arith.constant 6 : index
    %c1_255 = arith.constant 1 : index
    %c0_256 = arith.constant 0 : index
    %272 = vector.load %arg2[%c0_253, %c6_254, %c1_255, %c0_256] : memref<1x8x16x128xf32, #tpu.memory_space<vmem>>, vector<1x1x1x128xf32>
    %273 = vector.shape_cast %272 : vector<1x1x1x128xf32> to vector<1x128xf32>
    %c6_257 = arith.constant 6 : index
    %c0_258 = arith.constant 0 : index
    %c0_259 = arith.constant 0 : index
    %274 = vector.load %arg12[%c6_257, %c0_258, %c0_259] : memref<8x16x128xf32, #tpu.memory_space<vmem>>, vector<1x16x128xf32>
    %275 = vector.shape_cast %274 : vector<1x16x128xf32> to vector<16x128xf32>
    %276 = vector.broadcast %273 : vector<1x128xf32> to vector<16x128xf32>
    %277 = arith.mulf %276, %275 : vector<16x128xf32>
    %278 = arith.addf %271, %277 : vector<16x128xf32>
    %c0_260 = arith.constant 0 : index
    %c7_261 = arith.constant 7 : index
    %c1_262 = arith.constant 1 : index
    %c0_263 = arith.constant 0 : index
    %279 = vector.load %arg2[%c0_260, %c7_261, %c1_262, %c0_263] : memref<1x8x16x128xf32, #tpu.memory_space<vmem>>, vector<1x1x1x128xf32>
    %280 = vector.shape_cast %279 : vector<1x1x1x128xf32> to vector<1x128xf32>
    %c7_264 = arith.constant 7 : index
    %c0_265 = arith.constant 0 : index
    %c0_266 = arith.constant 0 : index
    %281 = vector.load %arg12[%c7_264, %c0_265, %c0_266] : memref<8x16x128xf32, #tpu.memory_space<vmem>>, vector<1x16x128xf32>
    %282 = vector.shape_cast %281 : vector<1x16x128xf32> to vector<16x128xf32>
    %283 = vector.broadcast %280 : vector<1x128xf32> to vector<16x128xf32>
    %284 = arith.mulf %283, %282 : vector<16x128xf32>
    %285 = arith.addf %278, %284 : vector<16x128xf32>
    %c1_267 = arith.constant 1 : index
    %c0_268 = arith.constant 0 : index
    %c0_269 = arith.constant 0 : index
    %286 = vector.load %arg9[%c1_267, %c0_268, %c0_269] : memref<16x32x16xf32, #tpu.memory_space<vmem>>, vector<1x32x16xf32>
    %287 = vector.shape_cast %286 : vector<1x32x16xf32> to vector<32x16xf32>
    %cst_270 = arith.constant dense<0.000000e+00> : vector<32x128xf32>
    %288 = tpu.matmul %287, %285, %cst_270 {dimension_numbers = #tpu.dot_dimension_numbers<[1], [0], [0], [1], [0, 0, 1, 1], [], []>} : vector<32x16xf32>, vector<16x128xf32>, vector<32x128xf32> -> vector<32x128xf32>
    %289 = arith.addf %230, %288 : vector<32x128xf32>
    %c0_271 = arith.constant 0 : index
    %c0_272 = arith.constant 0 : index
    %c2_273 = arith.constant 2 : index
    %c0_274 = arith.constant 0 : index
    %290 = vector.load %arg2[%c0_271, %c0_272, %c2_273, %c0_274] : memref<1x8x16x128xf32, #tpu.memory_space<vmem>>, vector<1x1x1x128xf32>
    %291 = vector.shape_cast %290 : vector<1x1x1x128xf32> to vector<1x128xf32>
    %c0_275 = arith.constant 0 : index
    %c0_276 = arith.constant 0 : index
    %c0_277 = arith.constant 0 : index
    %292 = vector.load %arg12[%c0_275, %c0_276, %c0_277] : memref<8x16x128xf32, #tpu.memory_space<vmem>>, vector<1x16x128xf32>
    %293 = vector.shape_cast %292 : vector<1x16x128xf32> to vector<16x128xf32>
    %294 = vector.broadcast %291 : vector<1x128xf32> to vector<16x128xf32>
    %295 = arith.mulf %294, %293 : vector<16x128xf32>
    %c0_278 = arith.constant 0 : index
    %c1_279 = arith.constant 1 : index
    %c2_280 = arith.constant 2 : index
    %c0_281 = arith.constant 0 : index
    %296 = vector.load %arg2[%c0_278, %c1_279, %c2_280, %c0_281] : memref<1x8x16x128xf32, #tpu.memory_space<vmem>>, vector<1x1x1x128xf32>
    %297 = vector.shape_cast %296 : vector<1x1x1x128xf32> to vector<1x128xf32>
    %c1_282 = arith.constant 1 : index
    %c0_283 = arith.constant 0 : index
    %c0_284 = arith.constant 0 : index
    %298 = vector.load %arg12[%c1_282, %c0_283, %c0_284] : memref<8x16x128xf32, #tpu.memory_space<vmem>>, vector<1x16x128xf32>
    %299 = vector.shape_cast %298 : vector<1x16x128xf32> to vector<16x128xf32>
    %300 = vector.broadcast %297 : vector<1x128xf32> to vector<16x128xf32>
    %301 = arith.mulf %300, %299 : vector<16x128xf32>
    %302 = arith.addf %295, %301 : vector<16x128xf32>
    %c0_285 = arith.constant 0 : index
    %c2_286 = arith.constant 2 : index
    %c2_287 = arith.constant 2 : index
    %c0_288 = arith.constant 0 : index
    %303 = vector.load %arg2[%c0_285, %c2_286, %c2_287, %c0_288] : memref<1x8x16x128xf32, #tpu.memory_space<vmem>>, vector<1x1x1x128xf32>
    %304 = vector.shape_cast %303 : vector<1x1x1x128xf32> to vector<1x128xf32>
    %c2_289 = arith.constant 2 : index
    %c0_290 = arith.constant 0 : index
    %c0_291 = arith.constant 0 : index
    %305 = vector.load %arg12[%c2_289, %c0_290, %c0_291] : memref<8x16x128xf32, #tpu.memory_space<vmem>>, vector<1x16x128xf32>
    %306 = vector.shape_cast %305 : vector<1x16x128xf32> to vector<16x128xf32>
    %307 = vector.broadcast %304 : vector<1x128xf32> to vector<16x128xf32>
    %308 = arith.mulf %307, %306 : vector<16x128xf32>
    %309 = arith.addf %302, %308 : vector<16x128xf32>
    %c0_292 = arith.constant 0 : index
    %c3_293 = arith.constant 3 : index
    %c2_294 = arith.constant 2 : index
    %c0_295 = arith.constant 0 : index
    %310 = vector.load %arg2[%c0_292, %c3_293, %c2_294, %c0_295] : memref<1x8x16x128xf32, #tpu.memory_space<vmem>>, vector<1x1x1x128xf32>
    %311 = vector.shape_cast %310 : vector<1x1x1x128xf32> to vector<1x128xf32>
    %c3_296 = arith.constant 3 : index
    %c0_297 = arith.constant 0 : index
    %c0_298 = arith.constant 0 : index
    %312 = vector.load %arg12[%c3_296, %c0_297, %c0_298] : memref<8x16x128xf32, #tpu.memory_space<vmem>>, vector<1x16x128xf32>
    %313 = vector.shape_cast %312 : vector<1x16x128xf32> to vector<16x128xf32>
    %314 = vector.broadcast %311 : vector<1x128xf32> to vector<16x128xf32>
    %315 = arith.mulf %314, %313 : vector<16x128xf32>
    %316 = arith.addf %309, %315 : vector<16x128xf32>
    %c0_299 = arith.constant 0 : index
    %c4_300 = arith.constant 4 : index
    %c2_301 = arith.constant 2 : index
    %c0_302 = arith.constant 0 : index
    %317 = vector.load %arg2[%c0_299, %c4_300, %c2_301, %c0_302] : memref<1x8x16x128xf32, #tpu.memory_space<vmem>>, vector<1x1x1x128xf32>
    %318 = vector.shape_cast %317 : vector<1x1x1x128xf32> to vector<1x128xf32>
    %c4_303 = arith.constant 4 : index
    %c0_304 = arith.constant 0 : index
    %c0_305 = arith.constant 0 : index
    %319 = vector.load %arg12[%c4_303, %c0_304, %c0_305] : memref<8x16x128xf32, #tpu.memory_space<vmem>>, vector<1x16x128xf32>
    %320 = vector.shape_cast %319 : vector<1x16x128xf32> to vector<16x128xf32>
    %321 = vector.broadcast %318 : vector<1x128xf32> to vector<16x128xf32>
    %322 = arith.mulf %321, %320 : vector<16x128xf32>
    %323 = arith.addf %316, %322 : vector<16x128xf32>
    %c0_306 = arith.constant 0 : index
    %c5_307 = arith.constant 5 : index
    %c2_308 = arith.constant 2 : index
    %c0_309 = arith.constant 0 : index
    %324 = vector.load %arg2[%c0_306, %c5_307, %c2_308, %c0_309] : memref<1x8x16x128xf32, #tpu.memory_space<vmem>>, vector<1x1x1x128xf32>
    %325 = vector.shape_cast %324 : vector<1x1x1x128xf32> to vector<1x128xf32>
    %c5_310 = arith.constant 5 : index
    %c0_311 = arith.constant 0 : index
    %c0_312 = arith.constant 0 : index
    %326 = vector.load %arg12[%c5_310, %c0_311, %c0_312] : memref<8x16x128xf32, #tpu.memory_space<vmem>>, vector<1x16x128xf32>
    %327 = vector.shape_cast %326 : vector<1x16x128xf32> to vector<16x128xf32>
    %328 = vector.broadcast %325 : vector<1x128xf32> to vector<16x128xf32>
    %329 = arith.mulf %328, %327 : vector<16x128xf32>
    %330 = arith.addf %323, %329 : vector<16x128xf32>
    %c0_313 = arith.constant 0 : index
    %c6_314 = arith.constant 6 : index
    %c2_315 = arith.constant 2 : index
    %c0_316 = arith.constant 0 : index
    %331 = vector.load %arg2[%c0_313, %c6_314, %c2_315, %c0_316] : memref<1x8x16x128xf32, #tpu.memory_space<vmem>>, vector<1x1x1x128xf32>
    %332 = vector.shape_cast %331 : vector<1x1x1x128xf32> to vector<1x128xf32>
    %c6_317 = arith.constant 6 : index
    %c0_318 = arith.constant 0 : index
    %c0_319 = arith.constant 0 : index
    %333 = vector.load %arg12[%c6_317, %c0_318, %c0_319] : memref<8x16x128xf32, #tpu.memory_space<vmem>>, vector<1x16x128xf32>
    %334 = vector.shape_cast %333 : vector<1x16x128xf32> to vector<16x128xf32>
    %335 = vector.broadcast %332 : vector<1x128xf32> to vector<16x128xf32>
    %336 = arith.mulf %335, %334 : vector<16x128xf32>
    %337 = arith.addf %330, %336 : vector<16x128xf32>
    %c0_320 = arith.constant 0 : index
    %c7_321 = arith.constant 7 : index
    %c2_322 = arith.constant 2 : index
    %c0_323 = arith.constant 0 : index
    %338 = vector.load %arg2[%c0_320, %c7_321, %c2_322, %c0_323] : memref<1x8x16x128xf32, #tpu.memory_space<vmem>>, vector<1x1x1x128xf32>
    %339 = vector.shape_cast %338 : vector<1x1x1x128xf32> to vector<1x128xf32>
    %c7_324 = arith.constant 7 : index
    %c0_325 = arith.constant 0 : index
    %c0_326 = arith.constant 0 : index
    %340 = vector.load %arg12[%c7_324, %c0_325, %c0_326] : memref<8x16x128xf32, #tpu.memory_space<vmem>>, vector<1x16x128xf32>
    %341 = vector.shape_cast %340 : vector<1x16x128xf32> to vector<16x128xf32>
    %342 = vector.broadcast %339 : vector<1x128xf32> to vector<16x128xf32>
    %343 = arith.mulf %342, %341 : vector<16x128xf32>
    %344 = arith.addf %337, %343 : vector<16x128xf32>
    %c2_327 = arith.constant 2 : index
    %c0_328 = arith.constant 0 : index
    %c0_329 = arith.constant 0 : index
    %345 = vector.load %arg9[%c2_327, %c0_328, %c0_329] : memref<16x32x16xf32, #tpu.memory_space<vmem>>, vector<1x32x16xf32>
    %346 = vector.shape_cast %345 : vector<1x32x16xf32> to vector<32x16xf32>
    %cst_330 = arith.constant dense<0.000000e+00> : vector<32x128xf32>
    %347 = tpu.matmul %346, %344, %cst_330 {dimension_numbers = #tpu.dot_dimension_numbers<[1], [0], [0], [1], [0, 0, 1, 1], [], []>} : vector<32x16xf32>, vector<16x128xf32>, vector<32x128xf32> -> vector<32x128xf32>
    %348 = arith.addf %289, %347 : vector<32x128xf32>
    %c0_331 = arith.constant 0 : index
    %c0_332 = arith.constant 0 : index
    %c3_333 = arith.constant 3 : index
    %c0_334 = arith.constant 0 : index
    %349 = vector.load %arg2[%c0_331, %c0_332, %c3_333, %c0_334] : memref<1x8x16x128xf32, #tpu.memory_space<vmem>>, vector<1x1x1x128xf32>
    %350 = vector.shape_cast %349 : vector<1x1x1x128xf32> to vector<1x128xf32>
    %c0_335 = arith.constant 0 : index
    %c0_336 = arith.constant 0 : index
    %c0_337 = arith.constant 0 : index
    %351 = vector.load %arg12[%c0_335, %c0_336, %c0_337] : memref<8x16x128xf32, #tpu.memory_space<vmem>>, vector<1x16x128xf32>
    %352 = vector.shape_cast %351 : vector<1x16x128xf32> to vector<16x128xf32>
    %353 = vector.broadcast %350 : vector<1x128xf32> to vector<16x128xf32>
    %354 = arith.mulf %353, %352 : vector<16x128xf32>
    %c0_338 = arith.constant 0 : index
    %c1_339 = arith.constant 1 : index
    %c3_340 = arith.constant 3 : index
    %c0_341 = arith.constant 0 : index
    %355 = vector.load %arg2[%c0_338, %c1_339, %c3_340, %c0_341] : memref<1x8x16x128xf32, #tpu.memory_space<vmem>>, vector<1x1x1x128xf32>
    %356 = vector.shape_cast %355 : vector<1x1x1x128xf32> to vector<1x128xf32>
    %c1_342 = arith.constant 1 : index
    %c0_343 = arith.constant 0 : index
    %c0_344 = arith.constant 0 : index
    %357 = vector.load %arg12[%c1_342, %c0_343, %c0_344] : memref<8x16x128xf32, #tpu.memory_space<vmem>>, vector<1x16x128xf32>
    %358 = vector.shape_cast %357 : vector<1x16x128xf32> to vector<16x128xf32>
    %359 = vector.broadcast %356 : vector<1x128xf32> to vector<16x128xf32>
    %360 = arith.mulf %359, %358 : vector<16x128xf32>
    %361 = arith.addf %354, %360 : vector<16x128xf32>
    %c0_345 = arith.constant 0 : index
    %c2_346 = arith.constant 2 : index
    %c3_347 = arith.constant 3 : index
    %c0_348 = arith.constant 0 : index
    %362 = vector.load %arg2[%c0_345, %c2_346, %c3_347, %c0_348] : memref<1x8x16x128xf32, #tpu.memory_space<vmem>>, vector<1x1x1x128xf32>
    %363 = vector.shape_cast %362 : vector<1x1x1x128xf32> to vector<1x128xf32>
    %c2_349 = arith.constant 2 : index
    %c0_350 = arith.constant 0 : index
    %c0_351 = arith.constant 0 : index
    %364 = vector.load %arg12[%c2_349, %c0_350, %c0_351] : memref<8x16x128xf32, #tpu.memory_space<vmem>>, vector<1x16x128xf32>
    %365 = vector.shape_cast %364 : vector<1x16x128xf32> to vector<16x128xf32>
    %366 = vector.broadcast %363 : vector<1x128xf32> to vector<16x128xf32>
    %367 = arith.mulf %366, %365 : vector<16x128xf32>
    %368 = arith.addf %361, %367 : vector<16x128xf32>
    %c0_352 = arith.constant 0 : index
    %c3_353 = arith.constant 3 : index
    %c3_354 = arith.constant 3 : index
    %c0_355 = arith.constant 0 : index
    %369 = vector.load %arg2[%c0_352, %c3_353, %c3_354, %c0_355] : memref<1x8x16x128xf32, #tpu.memory_space<vmem>>, vector<1x1x1x128xf32>
    %370 = vector.shape_cast %369 : vector<1x1x1x128xf32> to vector<1x128xf32>
    %c3_356 = arith.constant 3 : index
    %c0_357 = arith.constant 0 : index
    %c0_358 = arith.constant 0 : index
    %371 = vector.load %arg12[%c3_356, %c0_357, %c0_358] : memref<8x16x128xf32, #tpu.memory_space<vmem>>, vector<1x16x128xf32>
    %372 = vector.shape_cast %371 : vector<1x16x128xf32> to vector<16x128xf32>
    %373 = vector.broadcast %370 : vector<1x128xf32> to vector<16x128xf32>
    %374 = arith.mulf %373, %372 : vector<16x128xf32>
    %375 = arith.addf %368, %374 : vector<16x128xf32>
    %c0_359 = arith.constant 0 : index
    %c4_360 = arith.constant 4 : index
    %c3_361 = arith.constant 3 : index
    %c0_362 = arith.constant 0 : index
    %376 = vector.load %arg2[%c0_359, %c4_360, %c3_361, %c0_362] : memref<1x8x16x128xf32, #tpu.memory_space<vmem>>, vector<1x1x1x128xf32>
    %377 = vector.shape_cast %376 : vector<1x1x1x128xf32> to vector<1x128xf32>
    %c4_363 = arith.constant 4 : index
    %c0_364 = arith.constant 0 : index
    %c0_365 = arith.constant 0 : index
    %378 = vector.load %arg12[%c4_363, %c0_364, %c0_365] : memref<8x16x128xf32, #tpu.memory_space<vmem>>, vector<1x16x128xf32>
    %379 = vector.shape_cast %378 : vector<1x16x128xf32> to vector<16x128xf32>
    %380 = vector.broadcast %377 : vector<1x128xf32> to vector<16x128xf32>
    %381 = arith.mulf %380, %379 : vector<16x128xf32>
    %382 = arith.addf %375, %381 : vector<16x128xf32>
    %c0_366 = arith.constant 0 : index
    %c5_367 = arith.constant 5 : index
    %c3_368 = arith.constant 3 : index
    %c0_369 = arith.constant 0 : index
    %383 = vector.load %arg2[%c0_366, %c5_367, %c3_368, %c0_369] : memref<1x8x16x128xf32, #tpu.memory_space<vmem>>, vector<1x1x1x128xf32>
    %384 = vector.shape_cast %383 : vector<1x1x1x128xf32> to vector<1x128xf32>
    %c5_370 = arith.constant 5 : index
    %c0_371 = arith.constant 0 : index
    %c0_372 = arith.constant 0 : index
    %385 = vector.load %arg12[%c5_370, %c0_371, %c0_372] : memref<8x16x128xf32, #tpu.memory_space<vmem>>, vector<1x16x128xf32>
    %386 = vector.shape_cast %385 : vector<1x16x128xf32> to vector<16x128xf32>
    %387 = vector.broadcast %384 : vector<1x128xf32> to vector<16x128xf32>
    %388 = arith.mulf %387, %386 : vector<16x128xf32>
    %389 = arith.addf %382, %388 : vector<16x128xf32>
    %c0_373 = arith.constant 0 : index
    %c6_374 = arith.constant 6 : index
    %c3_375 = arith.constant 3 : index
    %c0_376 = arith.constant 0 : index
    %390 = vector.load %arg2[%c0_373, %c6_374, %c3_375, %c0_376] : memref<1x8x16x128xf32, #tpu.memory_space<vmem>>, vector<1x1x1x128xf32>
    %391 = vector.shape_cast %390 : vector<1x1x1x128xf32> to vector<1x128xf32>
    %c6_377 = arith.constant 6 : index
    %c0_378 = arith.constant 0 : index
    %c0_379 = arith.constant 0 : index
    %392 = vector.load %arg12[%c6_377, %c0_378, %c0_379] : memref<8x16x128xf32, #tpu.memory_space<vmem>>, vector<1x16x128xf32>
    %393 = vector.shape_cast %392 : vector<1x16x128xf32> to vector<16x128xf32>
    %394 = vector.broadcast %391 : vector<1x128xf32> to vector<16x128xf32>
    %395 = arith.mulf %394, %393 : vector<16x128xf32>
    %396 = arith.addf %389, %395 : vector<16x128xf32>
    %c0_380 = arith.constant 0 : index
    %c7_381 = arith.constant 7 : index
    %c3_382 = arith.constant 3 : index
    %c0_383 = arith.constant 0 : index
    %397 = vector.load %arg2[%c0_380, %c7_381, %c3_382, %c0_383] : memref<1x8x16x128xf32, #tpu.memory_space<vmem>>, vector<1x1x1x128xf32>
    %398 = vector.shape_cast %397 : vector<1x1x1x128xf32> to vector<1x128xf32>
    %c7_384 = arith.constant 7 : index
    %c0_385 = arith.constant 0 : index
    %c0_386 = arith.constant 0 : index
    %399 = vector.load %arg12[%c7_384, %c0_385, %c0_386] : memref<8x16x128xf32, #tpu.memory_space<vmem>>, vector<1x16x128xf32>
    %400 = vector.shape_cast %399 : vector<1x16x128xf32> to vector<16x128xf32>
    %401 = vector.broadcast %398 : vector<1x128xf32> to vector<16x128xf32>
    %402 = arith.mulf %401, %400 : vector<16x128xf32>
    %403 = arith.addf %396, %402 : vector<16x128xf32>
    %c3_387 = arith.constant 3 : index
    %c0_388 = arith.constant 0 : index
    %c0_389 = arith.constant 0 : index
    %404 = vector.load %arg9[%c3_387, %c0_388, %c0_389] : memref<16x32x16xf32, #tpu.memory_space<vmem>>, vector<1x32x16xf32>
    %405 = vector.shape_cast %404 : vector<1x32x16xf32> to vector<32x16xf32>
    %cst_390 = arith.constant dense<0.000000e+00> : vector<32x128xf32>
    %406 = tpu.matmul %405, %403, %cst_390 {dimension_numbers = #tpu.dot_dimension_numbers<[1], [0], [0], [1], [0, 0, 1, 1], [], []>} : vector<32x16xf32>, vector<16x128xf32>, vector<32x128xf32> -> vector<32x128xf32>
    %407 = arith.addf %348, %406 : vector<32x128xf32>
    %c0_391 = arith.constant 0 : index
    %c0_392 = arith.constant 0 : index
    %c4_393 = arith.constant 4 : index
    %c0_394 = arith.constant 0 : index
    %408 = vector.load %arg2[%c0_391, %c0_392, %c4_393, %c0_394] : memref<1x8x16x128xf32, #tpu.memory_space<vmem>>, vector<1x1x1x128xf32>
    %409 = vector.shape_cast %408 : vector<1x1x1x128xf32> to vector<1x128xf32>
    %c0_395 = arith.constant 0 : index
    %c0_396 = arith.constant 0 : index
    %c0_397 = arith.constant 0 : index
    %410 = vector.load %arg12[%c0_395, %c0_396, %c0_397] : memref<8x16x128xf32, #tpu.memory_space<vmem>>, vector<1x16x128xf32>
    %411 = vector.shape_cast %410 : vector<1x16x128xf32> to vector<16x128xf32>
    %412 = vector.broadcast %409 : vector<1x128xf32> to vector<16x128xf32>
    %413 = arith.mulf %412, %411 : vector<16x128xf32>
    %c0_398 = arith.constant 0 : index
    %c1_399 = arith.constant 1 : index
    %c4_400 = arith.constant 4 : index
    %c0_401 = arith.constant 0 : index
    %414 = vector.load %arg2[%c0_398, %c1_399, %c4_400, %c0_401] : memref<1x8x16x128xf32, #tpu.memory_space<vmem>>, vector<1x1x1x128xf32>
    %415 = vector.shape_cast %414 : vector<1x1x1x128xf32> to vector<1x128xf32>
    %c1_402 = arith.constant 1 : index
    %c0_403 = arith.constant 0 : index
    %c0_404 = arith.constant 0 : index
    %416 = vector.load %arg12[%c1_402, %c0_403, %c0_404] : memref<8x16x128xf32, #tpu.memory_space<vmem>>, vector<1x16x128xf32>
    %417 = vector.shape_cast %416 : vector<1x16x128xf32> to vector<16x128xf32>
    %418 = vector.broadcast %415 : vector<1x128xf32> to vector<16x128xf32>
    %419 = arith.mulf %418, %417 : vector<16x128xf32>
    %420 = arith.addf %413, %419 : vector<16x128xf32>
    %c0_405 = arith.constant 0 : index
    %c2_406 = arith.constant 2 : index
    %c4_407 = arith.constant 4 : index
    %c0_408 = arith.constant 0 : index
    %421 = vector.load %arg2[%c0_405, %c2_406, %c4_407, %c0_408] : memref<1x8x16x128xf32, #tpu.memory_space<vmem>>, vector<1x1x1x128xf32>
    %422 = vector.shape_cast %421 : vector<1x1x1x128xf32> to vector<1x128xf32>
    %c2_409 = arith.constant 2 : index
    %c0_410 = arith.constant 0 : index
    %c0_411 = arith.constant 0 : index
    %423 = vector.load %arg12[%c2_409, %c0_410, %c0_411] : memref<8x16x128xf32, #tpu.memory_space<vmem>>, vector<1x16x128xf32>
    %424 = vector.shape_cast %423 : vector<1x16x128xf32> to vector<16x128xf32>
    %425 = vector.broadcast %422 : vector<1x128xf32> to vector<16x128xf32>
    %426 = arith.mulf %425, %424 : vector<16x128xf32>
    %427 = arith.addf %420, %426 : vector<16x128xf32>
    %c0_412 = arith.constant 0 : index
    %c3_413 = arith.constant 3 : index
    %c4_414 = arith.constant 4 : index
    %c0_415 = arith.constant 0 : index
    %428 = vector.load %arg2[%c0_412, %c3_413, %c4_414, %c0_415] : memref<1x8x16x128xf32, #tpu.memory_space<vmem>>, vector<1x1x1x128xf32>
    %429 = vector.shape_cast %428 : vector<1x1x1x128xf32> to vector<1x128xf32>
    %c3_416 = arith.constant 3 : index
    %c0_417 = arith.constant 0 : index
    %c0_418 = arith.constant 0 : index
    %430 = vector.load %arg12[%c3_416, %c0_417, %c0_418] : memref<8x16x128xf32, #tpu.memory_space<vmem>>, vector<1x16x128xf32>
    %431 = vector.shape_cast %430 : vector<1x16x128xf32> to vector<16x128xf32>
    %432 = vector.broadcast %429 : vector<1x128xf32> to vector<16x128xf32>
    %433 = arith.mulf %432, %431 : vector<16x128xf32>
    %434 = arith.addf %427, %433 : vector<16x128xf32>
    %c0_419 = arith.constant 0 : index
    %c4_420 = arith.constant 4 : index
    %c4_421 = arith.constant 4 : index
    %c0_422 = arith.constant 0 : index
    %435 = vector.load %arg2[%c0_419, %c4_420, %c4_421, %c0_422] : memref<1x8x16x128xf32, #tpu.memory_space<vmem>>, vector<1x1x1x128xf32>
    %436 = vector.shape_cast %435 : vector<1x1x1x128xf32> to vector<1x128xf32>
    %c4_423 = arith.constant 4 : index
    %c0_424 = arith.constant 0 : index
    %c0_425 = arith.constant 0 : index
    %437 = vector.load %arg12[%c4_423, %c0_424, %c0_425] : memref<8x16x128xf32, #tpu.memory_space<vmem>>, vector<1x16x128xf32>
    %438 = vector.shape_cast %437 : vector<1x16x128xf32> to vector<16x128xf32>
    %439 = vector.broadcast %436 : vector<1x128xf32> to vector<16x128xf32>
    %440 = arith.mulf %439, %438 : vector<16x128xf32>
    %441 = arith.addf %434, %440 : vector<16x128xf32>
    %c0_426 = arith.constant 0 : index
    %c5_427 = arith.constant 5 : index
    %c4_428 = arith.constant 4 : index
    %c0_429 = arith.constant 0 : index
    %442 = vector.load %arg2[%c0_426, %c5_427, %c4_428, %c0_429] : memref<1x8x16x128xf32, #tpu.memory_space<vmem>>, vector<1x1x1x128xf32>
    %443 = vector.shape_cast %442 : vector<1x1x1x128xf32> to vector<1x128xf32>
    %c5_430 = arith.constant 5 : index
    %c0_431 = arith.constant 0 : index
    %c0_432 = arith.constant 0 : index
    %444 = vector.load %arg12[%c5_430, %c0_431, %c0_432] : memref<8x16x128xf32, #tpu.memory_space<vmem>>, vector<1x16x128xf32>
    %445 = vector.shape_cast %444 : vector<1x16x128xf32> to vector<16x128xf32>
    %446 = vector.broadcast %443 : vector<1x128xf32> to vector<16x128xf32>
    %447 = arith.mulf %446, %445 : vector<16x128xf32>
    %448 = arith.addf %441, %447 : vector<16x128xf32>
    %c0_433 = arith.constant 0 : index
    %c6_434 = arith.constant 6 : index
    %c4_435 = arith.constant 4 : index
    %c0_436 = arith.constant 0 : index
    %449 = vector.load %arg2[%c0_433, %c6_434, %c4_435, %c0_436] : memref<1x8x16x128xf32, #tpu.memory_space<vmem>>, vector<1x1x1x128xf32>
    %450 = vector.shape_cast %449 : vector<1x1x1x128xf32> to vector<1x128xf32>
    %c6_437 = arith.constant 6 : index
    %c0_438 = arith.constant 0 : index
    %c0_439 = arith.constant 0 : index
    %451 = vector.load %arg12[%c6_437, %c0_438, %c0_439] : memref<8x16x128xf32, #tpu.memory_space<vmem>>, vector<1x16x128xf32>
    %452 = vector.shape_cast %451 : vector<1x16x128xf32> to vector<16x128xf32>
    %453 = vector.broadcast %450 : vector<1x128xf32> to vector<16x128xf32>
    %454 = arith.mulf %453, %452 : vector<16x128xf32>
    %455 = arith.addf %448, %454 : vector<16x128xf32>
    %c0_440 = arith.constant 0 : index
    %c7_441 = arith.constant 7 : index
    %c4_442 = arith.constant 4 : index
    %c0_443 = arith.constant 0 : index
    %456 = vector.load %arg2[%c0_440, %c7_441, %c4_442, %c0_443] : memref<1x8x16x128xf32, #tpu.memory_space<vmem>>, vector<1x1x1x128xf32>
    %457 = vector.shape_cast %456 : vector<1x1x1x128xf32> to vector<1x128xf32>
    %c7_444 = arith.constant 7 : index
    %c0_445 = arith.constant 0 : index
    %c0_446 = arith.constant 0 : index
    %458 = vector.load %arg12[%c7_444, %c0_445, %c0_446] : memref<8x16x128xf32, #tpu.memory_space<vmem>>, vector<1x16x128xf32>
    %459 = vector.shape_cast %458 : vector<1x16x128xf32> to vector<16x128xf32>
    %460 = vector.broadcast %457 : vector<1x128xf32> to vector<16x128xf32>
    %461 = arith.mulf %460, %459 : vector<16x128xf32>
    %462 = arith.addf %455, %461 : vector<16x128xf32>
    %c4_447 = arith.constant 4 : index
    %c0_448 = arith.constant 0 : index
    %c0_449 = arith.constant 0 : index
    %463 = vector.load %arg9[%c4_447, %c0_448, %c0_449] : memref<16x32x16xf32, #tpu.memory_space<vmem>>, vector<1x32x16xf32>
    %464 = vector.shape_cast %463 : vector<1x32x16xf32> to vector<32x16xf32>
    %cst_450 = arith.constant dense<0.000000e+00> : vector<32x128xf32>
    %465 = tpu.matmul %464, %462, %cst_450 {dimension_numbers = #tpu.dot_dimension_numbers<[1], [0], [0], [1], [0, 0, 1, 1], [], []>} : vector<32x16xf32>, vector<16x128xf32>, vector<32x128xf32> -> vector<32x128xf32>
    %466 = arith.addf %407, %465 : vector<32x128xf32>
    %c0_451 = arith.constant 0 : index
    %c0_452 = arith.constant 0 : index
    %c5_453 = arith.constant 5 : index
    %c0_454 = arith.constant 0 : index
    %467 = vector.load %arg2[%c0_451, %c0_452, %c5_453, %c0_454] : memref<1x8x16x128xf32, #tpu.memory_space<vmem>>, vector<1x1x1x128xf32>
    %468 = vector.shape_cast %467 : vector<1x1x1x128xf32> to vector<1x128xf32>
    %c0_455 = arith.constant 0 : index
    %c0_456 = arith.constant 0 : index
    %c0_457 = arith.constant 0 : index
    %469 = vector.load %arg12[%c0_455, %c0_456, %c0_457] : memref<8x16x128xf32, #tpu.memory_space<vmem>>, vector<1x16x128xf32>
    %470 = vector.shape_cast %469 : vector<1x16x128xf32> to vector<16x128xf32>
    %471 = vector.broadcast %468 : vector<1x128xf32> to vector<16x128xf32>
    %472 = arith.mulf %471, %470 : vector<16x128xf32>
    %c0_458 = arith.constant 0 : index
    %c1_459 = arith.constant 1 : index
    %c5_460 = arith.constant 5 : index
    %c0_461 = arith.constant 0 : index
    %473 = vector.load %arg2[%c0_458, %c1_459, %c5_460, %c0_461] : memref<1x8x16x128xf32, #tpu.memory_space<vmem>>, vector<1x1x1x128xf32>
    %474 = vector.shape_cast %473 : vector<1x1x1x128xf32> to vector<1x128xf32>
    %c1_462 = arith.constant 1 : index
    %c0_463 = arith.constant 0 : index
    %c0_464 = arith.constant 0 : index
    %475 = vector.load %arg12[%c1_462, %c0_463, %c0_464] : memref<8x16x128xf32, #tpu.memory_space<vmem>>, vector<1x16x128xf32>
    %476 = vector.shape_cast %475 : vector<1x16x128xf32> to vector<16x128xf32>
    %477 = vector.broadcast %474 : vector<1x128xf32> to vector<16x128xf32>
    %478 = arith.mulf %477, %476 : vector<16x128xf32>
    %479 = arith.addf %472, %478 : vector<16x128xf32>
    %c0_465 = arith.constant 0 : index
    %c2_466 = arith.constant 2 : index
    %c5_467 = arith.constant 5 : index
    %c0_468 = arith.constant 0 : index
    %480 = vector.load %arg2[%c0_465, %c2_466, %c5_467, %c0_468] : memref<1x8x16x128xf32, #tpu.memory_space<vmem>>, vector<1x1x1x128xf32>
    %481 = vector.shape_cast %480 : vector<1x1x1x128xf32> to vector<1x128xf32>
    %c2_469 = arith.constant 2 : index
    %c0_470 = arith.constant 0 : index
    %c0_471 = arith.constant 0 : index
    %482 = vector.load %arg12[%c2_469, %c0_470, %c0_471] : memref<8x16x128xf32, #tpu.memory_space<vmem>>, vector<1x16x128xf32>
    %483 = vector.shape_cast %482 : vector<1x16x128xf32> to vector<16x128xf32>
    %484 = vector.broadcast %481 : vector<1x128xf32> to vector<16x128xf32>
    %485 = arith.mulf %484, %483 : vector<16x128xf32>
    %486 = arith.addf %479, %485 : vector<16x128xf32>
    %c0_472 = arith.constant 0 : index
    %c3_473 = arith.constant 3 : index
    %c5_474 = arith.constant 5 : index
    %c0_475 = arith.constant 0 : index
    %487 = vector.load %arg2[%c0_472, %c3_473, %c5_474, %c0_475] : memref<1x8x16x128xf32, #tpu.memory_space<vmem>>, vector<1x1x1x128xf32>
    %488 = vector.shape_cast %487 : vector<1x1x1x128xf32> to vector<1x128xf32>
    %c3_476 = arith.constant 3 : index
    %c0_477 = arith.constant 0 : index
    %c0_478 = arith.constant 0 : index
    %489 = vector.load %arg12[%c3_476, %c0_477, %c0_478] : memref<8x16x128xf32, #tpu.memory_space<vmem>>, vector<1x16x128xf32>
    %490 = vector.shape_cast %489 : vector<1x16x128xf32> to vector<16x128xf32>
    %491 = vector.broadcast %488 : vector<1x128xf32> to vector<16x128xf32>
    %492 = arith.mulf %491, %490 : vector<16x128xf32>
    %493 = arith.addf %486, %492 : vector<16x128xf32>
    %c0_479 = arith.constant 0 : index
    %c4_480 = arith.constant 4 : index
    %c5_481 = arith.constant 5 : index
    %c0_482 = arith.constant 0 : index
    %494 = vector.load %arg2[%c0_479, %c4_480, %c5_481, %c0_482] : memref<1x8x16x128xf32, #tpu.memory_space<vmem>>, vector<1x1x1x128xf32>
    %495 = vector.shape_cast %494 : vector<1x1x1x128xf32> to vector<1x128xf32>
    %c4_483 = arith.constant 4 : index
    %c0_484 = arith.constant 0 : index
    %c0_485 = arith.constant 0 : index
    %496 = vector.load %arg12[%c4_483, %c0_484, %c0_485] : memref<8x16x128xf32, #tpu.memory_space<vmem>>, vector<1x16x128xf32>
    %497 = vector.shape_cast %496 : vector<1x16x128xf32> to vector<16x128xf32>
    %498 = vector.broadcast %495 : vector<1x128xf32> to vector<16x128xf32>
    %499 = arith.mulf %498, %497 : vector<16x128xf32>
    %500 = arith.addf %493, %499 : vector<16x128xf32>
    %c0_486 = arith.constant 0 : index
    %c5_487 = arith.constant 5 : index
    %c5_488 = arith.constant 5 : index
    %c0_489 = arith.constant 0 : index
    %501 = vector.load %arg2[%c0_486, %c5_487, %c5_488, %c0_489] : memref<1x8x16x128xf32, #tpu.memory_space<vmem>>, vector<1x1x1x128xf32>
    %502 = vector.shape_cast %501 : vector<1x1x1x128xf32> to vector<1x128xf32>
    %c5_490 = arith.constant 5 : index
    %c0_491 = arith.constant 0 : index
    %c0_492 = arith.constant 0 : index
    %503 = vector.load %arg12[%c5_490, %c0_491, %c0_492] : memref<8x16x128xf32, #tpu.memory_space<vmem>>, vector<1x16x128xf32>
    %504 = vector.shape_cast %503 : vector<1x16x128xf32> to vector<16x128xf32>
    %505 = vector.broadcast %502 : vector<1x128xf32> to vector<16x128xf32>
    %506 = arith.mulf %505, %504 : vector<16x128xf32>
    %507 = arith.addf %500, %506 : vector<16x128xf32>
    %c0_493 = arith.constant 0 : index
    %c6_494 = arith.constant 6 : index
    %c5_495 = arith.constant 5 : index
    %c0_496 = arith.constant 0 : index
    %508 = vector.load %arg2[%c0_493, %c6_494, %c5_495, %c0_496] : memref<1x8x16x128xf32, #tpu.memory_space<vmem>>, vector<1x1x1x128xf32>
    %509 = vector.shape_cast %508 : vector<1x1x1x128xf32> to vector<1x128xf32>
    %c6_497 = arith.constant 6 : index
    %c0_498 = arith.constant 0 : index
    %c0_499 = arith.constant 0 : index
    %510 = vector.load %arg12[%c6_497, %c0_498, %c0_499] : memref<8x16x128xf32, #tpu.memory_space<vmem>>, vector<1x16x128xf32>
    %511 = vector.shape_cast %510 : vector<1x16x128xf32> to vector<16x128xf32>
    %512 = vector.broadcast %509 : vector<1x128xf32> to vector<16x128xf32>
    %513 = arith.mulf %512, %511 : vector<16x128xf32>
    %514 = arith.addf %507, %513 : vector<16x128xf32>
    %c0_500 = arith.constant 0 : index
    %c7_501 = arith.constant 7 : index
    %c5_502 = arith.constant 5 : index
    %c0_503 = arith.constant 0 : index
    %515 = vector.load %arg2[%c0_500, %c7_501, %c5_502, %c0_503] : memref<1x8x16x128xf32, #tpu.memory_space<vmem>>, vector<1x1x1x128xf32>
    %516 = vector.shape_cast %515 : vector<1x1x1x128xf32> to vector<1x128xf32>
    %c7_504 = arith.constant 7 : index
    %c0_505 = arith.constant 0 : index
    %c0_506 = arith.constant 0 : index
    %517 = vector.load %arg12[%c7_504, %c0_505, %c0_506] : memref<8x16x128xf32, #tpu.memory_space<vmem>>, vector<1x16x128xf32>
    %518 = vector.shape_cast %517 : vector<1x16x128xf32> to vector<16x128xf32>
    %519 = vector.broadcast %516 : vector<1x128xf32> to vector<16x128xf32>
    %520 = arith.mulf %519, %518 : vector<16x128xf32>
    %521 = arith.addf %514, %520 : vector<16x128xf32>
    %c5_507 = arith.constant 5 : index
    %c0_508 = arith.constant 0 : index
    %c0_509 = arith.constant 0 : index
    %522 = vector.load %arg9[%c5_507, %c0_508, %c0_509] : memref<16x32x16xf32, #tpu.memory_space<vmem>>, vector<1x32x16xf32>
    %523 = vector.shape_cast %522 : vector<1x32x16xf32> to vector<32x16xf32>
    %cst_510 = arith.constant dense<0.000000e+00> : vector<32x128xf32>
    %524 = tpu.matmul %523, %521, %cst_510 {dimension_numbers = #tpu.dot_dimension_numbers<[1], [0], [0], [1], [0, 0, 1, 1], [], []>} : vector<32x16xf32>, vector<16x128xf32>, vector<32x128xf32> -> vector<32x128xf32>
    %525 = arith.addf %466, %524 : vector<32x128xf32>
    %c0_511 = arith.constant 0 : index
    %c0_512 = arith.constant 0 : index
    %c6_513 = arith.constant 6 : index
    %c0_514 = arith.constant 0 : index
    %526 = vector.load %arg2[%c0_511, %c0_512, %c6_513, %c0_514] : memref<1x8x16x128xf32, #tpu.memory_space<vmem>>, vector<1x1x1x128xf32>
    %527 = vector.shape_cast %526 : vector<1x1x1x128xf32> to vector<1x128xf32>
    %c0_515 = arith.constant 0 : index
    %c0_516 = arith.constant 0 : index
    %c0_517 = arith.constant 0 : index
    %528 = vector.load %arg12[%c0_515, %c0_516, %c0_517] : memref<8x16x128xf32, #tpu.memory_space<vmem>>, vector<1x16x128xf32>
    %529 = vector.shape_cast %528 : vector<1x16x128xf32> to vector<16x128xf32>
    %530 = vector.broadcast %527 : vector<1x128xf32> to vector<16x128xf32>
    %531 = arith.mulf %530, %529 : vector<16x128xf32>
    %c0_518 = arith.constant 0 : index
    %c1_519 = arith.constant 1 : index
    %c6_520 = arith.constant 6 : index
    %c0_521 = arith.constant 0 : index
    %532 = vector.load %arg2[%c0_518, %c1_519, %c6_520, %c0_521] : memref<1x8x16x128xf32, #tpu.memory_space<vmem>>, vector<1x1x1x128xf32>
    %533 = vector.shape_cast %532 : vector<1x1x1x128xf32> to vector<1x128xf32>
    %c1_522 = arith.constant 1 : index
    %c0_523 = arith.constant 0 : index
    %c0_524 = arith.constant 0 : index
    %534 = vector.load %arg12[%c1_522, %c0_523, %c0_524] : memref<8x16x128xf32, #tpu.memory_space<vmem>>, vector<1x16x128xf32>
    %535 = vector.shape_cast %534 : vector<1x16x128xf32> to vector<16x128xf32>
    %536 = vector.broadcast %533 : vector<1x128xf32> to vector<16x128xf32>
    %537 = arith.mulf %536, %535 : vector<16x128xf32>
    %538 = arith.addf %531, %537 : vector<16x128xf32>
    %c0_525 = arith.constant 0 : index
    %c2_526 = arith.constant 2 : index
    %c6_527 = arith.constant 6 : index
    %c0_528 = arith.constant 0 : index
    %539 = vector.load %arg2[%c0_525, %c2_526, %c6_527, %c0_528] : memref<1x8x16x128xf32, #tpu.memory_space<vmem>>, vector<1x1x1x128xf32>
    %540 = vector.shape_cast %539 : vector<1x1x1x128xf32> to vector<1x128xf32>
    %c2_529 = arith.constant 2 : index
    %c0_530 = arith.constant 0 : index
    %c0_531 = arith.constant 0 : index
    %541 = vector.load %arg12[%c2_529, %c0_530, %c0_531] : memref<8x16x128xf32, #tpu.memory_space<vmem>>, vector<1x16x128xf32>
    %542 = vector.shape_cast %541 : vector<1x16x128xf32> to vector<16x128xf32>
    %543 = vector.broadcast %540 : vector<1x128xf32> to vector<16x128xf32>
    %544 = arith.mulf %543, %542 : vector<16x128xf32>
    %545 = arith.addf %538, %544 : vector<16x128xf32>
    %c0_532 = arith.constant 0 : index
    %c3_533 = arith.constant 3 : index
    %c6_534 = arith.constant 6 : index
    %c0_535 = arith.constant 0 : index
    %546 = vector.load %arg2[%c0_532, %c3_533, %c6_534, %c0_535] : memref<1x8x16x128xf32, #tpu.memory_space<vmem>>, vector<1x1x1x128xf32>
    %547 = vector.shape_cast %546 : vector<1x1x1x128xf32> to vector<1x128xf32>
    %c3_536 = arith.constant 3 : index
    %c0_537 = arith.constant 0 : index
    %c0_538 = arith.constant 0 : index
    %548 = vector.load %arg12[%c3_536, %c0_537, %c0_538] : memref<8x16x128xf32, #tpu.memory_space<vmem>>, vector<1x16x128xf32>
    %549 = vector.shape_cast %548 : vector<1x16x128xf32> to vector<16x128xf32>
    %550 = vector.broadcast %547 : vector<1x128xf32> to vector<16x128xf32>
    %551 = arith.mulf %550, %549 : vector<16x128xf32>
    %552 = arith.addf %545, %551 : vector<16x128xf32>
    %c0_539 = arith.constant 0 : index
    %c4_540 = arith.constant 4 : index
    %c6_541 = arith.constant 6 : index
    %c0_542 = arith.constant 0 : index
    %553 = vector.load %arg2[%c0_539, %c4_540, %c6_541, %c0_542] : memref<1x8x16x128xf32, #tpu.memory_space<vmem>>, vector<1x1x1x128xf32>
    %554 = vector.shape_cast %553 : vector<1x1x1x128xf32> to vector<1x128xf32>
    %c4_543 = arith.constant 4 : index
    %c0_544 = arith.constant 0 : index
    %c0_545 = arith.constant 0 : index
    %555 = vector.load %arg12[%c4_543, %c0_544, %c0_545] : memref<8x16x128xf32, #tpu.memory_space<vmem>>, vector<1x16x128xf32>
    %556 = vector.shape_cast %555 : vector<1x16x128xf32> to vector<16x128xf32>
    %557 = vector.broadcast %554 : vector<1x128xf32> to vector<16x128xf32>
    %558 = arith.mulf %557, %556 : vector<16x128xf32>
    %559 = arith.addf %552, %558 : vector<16x128xf32>
    %c0_546 = arith.constant 0 : index
    %c5_547 = arith.constant 5 : index
    %c6_548 = arith.constant 6 : index
    %c0_549 = arith.constant 0 : index
    %560 = vector.load %arg2[%c0_546, %c5_547, %c6_548, %c0_549] : memref<1x8x16x128xf32, #tpu.memory_space<vmem>>, vector<1x1x1x128xf32>
    %561 = vector.shape_cast %560 : vector<1x1x1x128xf32> to vector<1x128xf32>
    %c5_550 = arith.constant 5 : index
    %c0_551 = arith.constant 0 : index
    %c0_552 = arith.constant 0 : index
    %562 = vector.load %arg12[%c5_550, %c0_551, %c0_552] : memref<8x16x128xf32, #tpu.memory_space<vmem>>, vector<1x16x128xf32>
    %563 = vector.shape_cast %562 : vector<1x16x128xf32> to vector<16x128xf32>
    %564 = vector.broadcast %561 : vector<1x128xf32> to vector<16x128xf32>
    %565 = arith.mulf %564, %563 : vector<16x128xf32>
    %566 = arith.addf %559, %565 : vector<16x128xf32>
    %c0_553 = arith.constant 0 : index
    %c6_554 = arith.constant 6 : index
    %c6_555 = arith.constant 6 : index
    %c0_556 = arith.constant 0 : index
    %567 = vector.load %arg2[%c0_553, %c6_554, %c6_555, %c0_556] : memref<1x8x16x128xf32, #tpu.memory_space<vmem>>, vector<1x1x1x128xf32>
    %568 = vector.shape_cast %567 : vector<1x1x1x128xf32> to vector<1x128xf32>
    %c6_557 = arith.constant 6 : index
    %c0_558 = arith.constant 0 : index
    %c0_559 = arith.constant 0 : index
    %569 = vector.load %arg12[%c6_557, %c0_558, %c0_559] : memref<8x16x128xf32, #tpu.memory_space<vmem>>, vector<1x16x128xf32>
    %570 = vector.shape_cast %569 : vector<1x16x128xf32> to vector<16x128xf32>
    %571 = vector.broadcast %568 : vector<1x128xf32> to vector<16x128xf32>
    %572 = arith.mulf %571, %570 : vector<16x128xf32>
    %573 = arith.addf %566, %572 : vector<16x128xf32>
    %c0_560 = arith.constant 0 : index
    %c7_561 = arith.constant 7 : index
    %c6_562 = arith.constant 6 : index
    %c0_563 = arith.constant 0 : index
    %574 = vector.load %arg2[%c0_560, %c7_561, %c6_562, %c0_563] : memref<1x8x16x128xf32, #tpu.memory_space<vmem>>, vector<1x1x1x128xf32>
    %575 = vector.shape_cast %574 : vector<1x1x1x128xf32> to vector<1x128xf32>
    %c7_564 = arith.constant 7 : index
    %c0_565 = arith.constant 0 : index
    %c0_566 = arith.constant 0 : index
    %576 = vector.load %arg12[%c7_564, %c0_565, %c0_566] : memref<8x16x128xf32, #tpu.memory_space<vmem>>, vector<1x16x128xf32>
    %577 = vector.shape_cast %576 : vector<1x16x128xf32> to vector<16x128xf32>
    %578 = vector.broadcast %575 : vector<1x128xf32> to vector<16x128xf32>
    %579 = arith.mulf %578, %577 : vector<16x128xf32>
    %580 = arith.addf %573, %579 : vector<16x128xf32>
    %c6_567 = arith.constant 6 : index
    %c0_568 = arith.constant 0 : index
    %c0_569 = arith.constant 0 : index
    %581 = vector.load %arg9[%c6_567, %c0_568, %c0_569] : memref<16x32x16xf32, #tpu.memory_space<vmem>>, vector<1x32x16xf32>
    %582 = vector.shape_cast %581 : vector<1x32x16xf32> to vector<32x16xf32>
    %cst_570 = arith.constant dense<0.000000e+00> : vector<32x128xf32>
    %583 = tpu.matmul %582, %580, %cst_570 {dimension_numbers = #tpu.dot_dimension_numbers<[1], [0], [0], [1], [0, 0, 1, 1], [], []>} : vector<32x16xf32>, vector<16x128xf32>, vector<32x128xf32> -> vector<32x128xf32>
    %584 = arith.addf %525, %583 : vector<32x128xf32>
    %c0_571 = arith.constant 0 : index
    %c0_572 = arith.constant 0 : index
    %c7_573 = arith.constant 7 : index
    %c0_574 = arith.constant 0 : index
    %585 = vector.load %arg2[%c0_571, %c0_572, %c7_573, %c0_574] : memref<1x8x16x128xf32, #tpu.memory_space<vmem>>, vector<1x1x1x128xf32>
    %586 = vector.shape_cast %585 : vector<1x1x1x128xf32> to vector<1x128xf32>
    %c0_575 = arith.constant 0 : index
    %c0_576 = arith.constant 0 : index
    %c0_577 = arith.constant 0 : index
    %587 = vector.load %arg12[%c0_575, %c0_576, %c0_577] : memref<8x16x128xf32, #tpu.memory_space<vmem>>, vector<1x16x128xf32>
    %588 = vector.shape_cast %587 : vector<1x16x128xf32> to vector<16x128xf32>
    %589 = vector.broadcast %586 : vector<1x128xf32> to vector<16x128xf32>
    %590 = arith.mulf %589, %588 : vector<16x128xf32>
    %c0_578 = arith.constant 0 : index
    %c1_579 = arith.constant 1 : index
    %c7_580 = arith.constant 7 : index
    %c0_581 = arith.constant 0 : index
    %591 = vector.load %arg2[%c0_578, %c1_579, %c7_580, %c0_581] : memref<1x8x16x128xf32, #tpu.memory_space<vmem>>, vector<1x1x1x128xf32>
    %592 = vector.shape_cast %591 : vector<1x1x1x128xf32> to vector<1x128xf32>
    %c1_582 = arith.constant 1 : index
    %c0_583 = arith.constant 0 : index
    %c0_584 = arith.constant 0 : index
    %593 = vector.load %arg12[%c1_582, %c0_583, %c0_584] : memref<8x16x128xf32, #tpu.memory_space<vmem>>, vector<1x16x128xf32>
    %594 = vector.shape_cast %593 : vector<1x16x128xf32> to vector<16x128xf32>
    %595 = vector.broadcast %592 : vector<1x128xf32> to vector<16x128xf32>
    %596 = arith.mulf %595, %594 : vector<16x128xf32>
    %597 = arith.addf %590, %596 : vector<16x128xf32>
    %c0_585 = arith.constant 0 : index
    %c2_586 = arith.constant 2 : index
    %c7_587 = arith.constant 7 : index
    %c0_588 = arith.constant 0 : index
    %598 = vector.load %arg2[%c0_585, %c2_586, %c7_587, %c0_588] : memref<1x8x16x128xf32, #tpu.memory_space<vmem>>, vector<1x1x1x128xf32>
    %599 = vector.shape_cast %598 : vector<1x1x1x128xf32> to vector<1x128xf32>
    %c2_589 = arith.constant 2 : index
    %c0_590 = arith.constant 0 : index
    %c0_591 = arith.constant 0 : index
    %600 = vector.load %arg12[%c2_589, %c0_590, %c0_591] : memref<8x16x128xf32, #tpu.memory_space<vmem>>, vector<1x16x128xf32>
    %601 = vector.shape_cast %600 : vector<1x16x128xf32> to vector<16x128xf32>
    %602 = vector.broadcast %599 : vector<1x128xf32> to vector<16x128xf32>
    %603 = arith.mulf %602, %601 : vector<16x128xf32>
    %604 = arith.addf %597, %603 : vector<16x128xf32>
    %c0_592 = arith.constant 0 : index
    %c3_593 = arith.constant 3 : index
    %c7_594 = arith.constant 7 : index
    %c0_595 = arith.constant 0 : index
    %605 = vector.load %arg2[%c0_592, %c3_593, %c7_594, %c0_595] : memref<1x8x16x128xf32, #tpu.memory_space<vmem>>, vector<1x1x1x128xf32>
    %606 = vector.shape_cast %605 : vector<1x1x1x128xf32> to vector<1x128xf32>
    %c3_596 = arith.constant 3 : index
    %c0_597 = arith.constant 0 : index
    %c0_598 = arith.constant 0 : index
    %607 = vector.load %arg12[%c3_596, %c0_597, %c0_598] : memref<8x16x128xf32, #tpu.memory_space<vmem>>, vector<1x16x128xf32>
    %608 = vector.shape_cast %607 : vector<1x16x128xf32> to vector<16x128xf32>
    %609 = vector.broadcast %606 : vector<1x128xf32> to vector<16x128xf32>
    %610 = arith.mulf %609, %608 : vector<16x128xf32>
    %611 = arith.addf %604, %610 : vector<16x128xf32>
    %c0_599 = arith.constant 0 : index
    %c4_600 = arith.constant 4 : index
    %c7_601 = arith.constant 7 : index
    %c0_602 = arith.constant 0 : index
    %612 = vector.load %arg2[%c0_599, %c4_600, %c7_601, %c0_602] : memref<1x8x16x128xf32, #tpu.memory_space<vmem>>, vector<1x1x1x128xf32>
    %613 = vector.shape_cast %612 : vector<1x1x1x128xf32> to vector<1x128xf32>
    %c4_603 = arith.constant 4 : index
    %c0_604 = arith.constant 0 : index
    %c0_605 = arith.constant 0 : index
    %614 = vector.load %arg12[%c4_603, %c0_604, %c0_605] : memref<8x16x128xf32, #tpu.memory_space<vmem>>, vector<1x16x128xf32>
    %615 = vector.shape_cast %614 : vector<1x16x128xf32> to vector<16x128xf32>
    %616 = vector.broadcast %613 : vector<1x128xf32> to vector<16x128xf32>
    %617 = arith.mulf %616, %615 : vector<16x128xf32>
    %618 = arith.addf %611, %617 : vector<16x128xf32>
    %c0_606 = arith.constant 0 : index
    %c5_607 = arith.constant 5 : index
    %c7_608 = arith.constant 7 : index
    %c0_609 = arith.constant 0 : index
    %619 = vector.load %arg2[%c0_606, %c5_607, %c7_608, %c0_609] : memref<1x8x16x128xf32, #tpu.memory_space<vmem>>, vector<1x1x1x128xf32>
    %620 = vector.shape_cast %619 : vector<1x1x1x128xf32> to vector<1x128xf32>
    %c5_610 = arith.constant 5 : index
    %c0_611 = arith.constant 0 : index
    %c0_612 = arith.constant 0 : index
    %621 = vector.load %arg12[%c5_610, %c0_611, %c0_612] : memref<8x16x128xf32, #tpu.memory_space<vmem>>, vector<1x16x128xf32>
    %622 = vector.shape_cast %621 : vector<1x16x128xf32> to vector<16x128xf32>
    %623 = vector.broadcast %620 : vector<1x128xf32> to vector<16x128xf32>
    %624 = arith.mulf %623, %622 : vector<16x128xf32>
    %625 = arith.addf %618, %624 : vector<16x128xf32>
    %c0_613 = arith.constant 0 : index
    %c6_614 = arith.constant 6 : index
    %c7_615 = arith.constant 7 : index
    %c0_616 = arith.constant 0 : index
    %626 = vector.load %arg2[%c0_613, %c6_614, %c7_615, %c0_616] : memref<1x8x16x128xf32, #tpu.memory_space<vmem>>, vector<1x1x1x128xf32>
    %627 = vector.shape_cast %626 : vector<1x1x1x128xf32> to vector<1x128xf32>
    %c6_617 = arith.constant 6 : index
    %c0_618 = arith.constant 0 : index
    %c0_619 = arith.constant 0 : index
    %628 = vector.load %arg12[%c6_617, %c0_618, %c0_619] : memref<8x16x128xf32, #tpu.memory_space<vmem>>, vector<1x16x128xf32>
    %629 = vector.shape_cast %628 : vector<1x16x128xf32> to vector<16x128xf32>
    %630 = vector.broadcast %627 : vector<1x128xf32> to vector<16x128xf32>
    %631 = arith.mulf %630, %629 : vector<16x128xf32>
    %632 = arith.addf %625, %631 : vector<16x128xf32>
    %c0_620 = arith.constant 0 : index
    %c7_621 = arith.constant 7 : index
    %c7_622 = arith.constant 7 : index
    %c0_623 = arith.constant 0 : index
    %633 = vector.load %arg2[%c0_620, %c7_621, %c7_622, %c0_623] : memref<1x8x16x128xf32, #tpu.memory_space<vmem>>, vector<1x1x1x128xf32>
    %634 = vector.shape_cast %633 : vector<1x1x1x128xf32> to vector<1x128xf32>
    %c7_624 = arith.constant 7 : index
    %c0_625 = arith.constant 0 : index
    %c0_626 = arith.constant 0 : index
    %635 = vector.load %arg12[%c7_624, %c0_625, %c0_626] : memref<8x16x128xf32, #tpu.memory_space<vmem>>, vector<1x16x128xf32>
    %636 = vector.shape_cast %635 : vector<1x16x128xf32> to vector<16x128xf32>
    %637 = vector.broadcast %634 : vector<1x128xf32> to vector<16x128xf32>
    %638 = arith.mulf %637, %636 : vector<16x128xf32>
    %639 = arith.addf %632, %638 : vector<16x128xf32>
    %c7_627 = arith.constant 7 : index
    %c0_628 = arith.constant 0 : index
    %c0_629 = arith.constant 0 : index
    %640 = vector.load %arg9[%c7_627, %c0_628, %c0_629] : memref<16x32x16xf32, #tpu.memory_space<vmem>>, vector<1x32x16xf32>
    %641 = vector.shape_cast %640 : vector<1x32x16xf32> to vector<32x16xf32>
    %cst_630 = arith.constant dense<0.000000e+00> : vector<32x128xf32>
    %642 = tpu.matmul %641, %639, %cst_630 {dimension_numbers = #tpu.dot_dimension_numbers<[1], [0], [0], [1], [0, 0, 1, 1], [], []>} : vector<32x16xf32>, vector<16x128xf32>, vector<32x128xf32> -> vector<32x128xf32>
    %643 = arith.addf %584, %642 : vector<32x128xf32>
    %c0_631 = arith.constant 0 : index
    %c0_632 = arith.constant 0 : index
    %c8 = arith.constant 8 : index
    %c0_633 = arith.constant 0 : index
    %644 = vector.load %arg2[%c0_631, %c0_632, %c8, %c0_633] : memref<1x8x16x128xf32, #tpu.memory_space<vmem>>, vector<1x1x1x128xf32>
    %645 = vector.shape_cast %644 : vector<1x1x1x128xf32> to vector<1x128xf32>
    %c0_634 = arith.constant 0 : index
    %c0_635 = arith.constant 0 : index
    %c0_636 = arith.constant 0 : index
    %646 = vector.load %arg12[%c0_634, %c0_635, %c0_636] : memref<8x16x128xf32, #tpu.memory_space<vmem>>, vector<1x16x128xf32>
    %647 = vector.shape_cast %646 : vector<1x16x128xf32> to vector<16x128xf32>
    %648 = vector.broadcast %645 : vector<1x128xf32> to vector<16x128xf32>
    %649 = arith.mulf %648, %647 : vector<16x128xf32>
    %c0_637 = arith.constant 0 : index
    %c1_638 = arith.constant 1 : index
    %c8_639 = arith.constant 8 : index
    %c0_640 = arith.constant 0 : index
    %650 = vector.load %arg2[%c0_637, %c1_638, %c8_639, %c0_640] : memref<1x8x16x128xf32, #tpu.memory_space<vmem>>, vector<1x1x1x128xf32>
    %651 = vector.shape_cast %650 : vector<1x1x1x128xf32> to vector<1x128xf32>
    %c1_641 = arith.constant 1 : index
    %c0_642 = arith.constant 0 : index
    %c0_643 = arith.constant 0 : index
    %652 = vector.load %arg12[%c1_641, %c0_642, %c0_643] : memref<8x16x128xf32, #tpu.memory_space<vmem>>, vector<1x16x128xf32>
    %653 = vector.shape_cast %652 : vector<1x16x128xf32> to vector<16x128xf32>
    %654 = vector.broadcast %651 : vector<1x128xf32> to vector<16x128xf32>
    %655 = arith.mulf %654, %653 : vector<16x128xf32>
    %656 = arith.addf %649, %655 : vector<16x128xf32>
    %c0_644 = arith.constant 0 : index
    %c2_645 = arith.constant 2 : index
    %c8_646 = arith.constant 8 : index
    %c0_647 = arith.constant 0 : index
    %657 = vector.load %arg2[%c0_644, %c2_645, %c8_646, %c0_647] : memref<1x8x16x128xf32, #tpu.memory_space<vmem>>, vector<1x1x1x128xf32>
    %658 = vector.shape_cast %657 : vector<1x1x1x128xf32> to vector<1x128xf32>
    %c2_648 = arith.constant 2 : index
    %c0_649 = arith.constant 0 : index
    %c0_650 = arith.constant 0 : index
    %659 = vector.load %arg12[%c2_648, %c0_649, %c0_650] : memref<8x16x128xf32, #tpu.memory_space<vmem>>, vector<1x16x128xf32>
    %660 = vector.shape_cast %659 : vector<1x16x128xf32> to vector<16x128xf32>
    %661 = vector.broadcast %658 : vector<1x128xf32> to vector<16x128xf32>
    %662 = arith.mulf %661, %660 : vector<16x128xf32>
    %663 = arith.addf %656, %662 : vector<16x128xf32>
    %c0_651 = arith.constant 0 : index
    %c3_652 = arith.constant 3 : index
    %c8_653 = arith.constant 8 : index
    %c0_654 = arith.constant 0 : index
    %664 = vector.load %arg2[%c0_651, %c3_652, %c8_653, %c0_654] : memref<1x8x16x128xf32, #tpu.memory_space<vmem>>, vector<1x1x1x128xf32>
    %665 = vector.shape_cast %664 : vector<1x1x1x128xf32> to vector<1x128xf32>
    %c3_655 = arith.constant 3 : index
    %c0_656 = arith.constant 0 : index
    %c0_657 = arith.constant 0 : index
    %666 = vector.load %arg12[%c3_655, %c0_656, %c0_657] : memref<8x16x128xf32, #tpu.memory_space<vmem>>, vector<1x16x128xf32>
    %667 = vector.shape_cast %666 : vector<1x16x128xf32> to vector<16x128xf32>
    %668 = vector.broadcast %665 : vector<1x128xf32> to vector<16x128xf32>
    %669 = arith.mulf %668, %667 : vector<16x128xf32>
    %670 = arith.addf %663, %669 : vector<16x128xf32>
    %c0_658 = arith.constant 0 : index
    %c4_659 = arith.constant 4 : index
    %c8_660 = arith.constant 8 : index
    %c0_661 = arith.constant 0 : index
    %671 = vector.load %arg2[%c0_658, %c4_659, %c8_660, %c0_661] : memref<1x8x16x128xf32, #tpu.memory_space<vmem>>, vector<1x1x1x128xf32>
    %672 = vector.shape_cast %671 : vector<1x1x1x128xf32> to vector<1x128xf32>
    %c4_662 = arith.constant 4 : index
    %c0_663 = arith.constant 0 : index
    %c0_664 = arith.constant 0 : index
    %673 = vector.load %arg12[%c4_662, %c0_663, %c0_664] : memref<8x16x128xf32, #tpu.memory_space<vmem>>, vector<1x16x128xf32>
    %674 = vector.shape_cast %673 : vector<1x16x128xf32> to vector<16x128xf32>
    %675 = vector.broadcast %672 : vector<1x128xf32> to vector<16x128xf32>
    %676 = arith.mulf %675, %674 : vector<16x128xf32>
    %677 = arith.addf %670, %676 : vector<16x128xf32>
    %c0_665 = arith.constant 0 : index
    %c5_666 = arith.constant 5 : index
    %c8_667 = arith.constant 8 : index
    %c0_668 = arith.constant 0 : index
    %678 = vector.load %arg2[%c0_665, %c5_666, %c8_667, %c0_668] : memref<1x8x16x128xf32, #tpu.memory_space<vmem>>, vector<1x1x1x128xf32>
    %679 = vector.shape_cast %678 : vector<1x1x1x128xf32> to vector<1x128xf32>
    %c5_669 = arith.constant 5 : index
    %c0_670 = arith.constant 0 : index
    %c0_671 = arith.constant 0 : index
    %680 = vector.load %arg12[%c5_669, %c0_670, %c0_671] : memref<8x16x128xf32, #tpu.memory_space<vmem>>, vector<1x16x128xf32>
    %681 = vector.shape_cast %680 : vector<1x16x128xf32> to vector<16x128xf32>
    %682 = vector.broadcast %679 : vector<1x128xf32> to vector<16x128xf32>
    %683 = arith.mulf %682, %681 : vector<16x128xf32>
    %684 = arith.addf %677, %683 : vector<16x128xf32>
    %c0_672 = arith.constant 0 : index
    %c6_673 = arith.constant 6 : index
    %c8_674 = arith.constant 8 : index
    %c0_675 = arith.constant 0 : index
    %685 = vector.load %arg2[%c0_672, %c6_673, %c8_674, %c0_675] : memref<1x8x16x128xf32, #tpu.memory_space<vmem>>, vector<1x1x1x128xf32>
    %686 = vector.shape_cast %685 : vector<1x1x1x128xf32> to vector<1x128xf32>
    %c6_676 = arith.constant 6 : index
    %c0_677 = arith.constant 0 : index
    %c0_678 = arith.constant 0 : index
    %687 = vector.load %arg12[%c6_676, %c0_677, %c0_678] : memref<8x16x128xf32, #tpu.memory_space<vmem>>, vector<1x16x128xf32>
    %688 = vector.shape_cast %687 : vector<1x16x128xf32> to vector<16x128xf32>
    %689 = vector.broadcast %686 : vector<1x128xf32> to vector<16x128xf32>
    %690 = arith.mulf %689, %688 : vector<16x128xf32>
    %691 = arith.addf %684, %690 : vector<16x128xf32>
    %c0_679 = arith.constant 0 : index
    %c7_680 = arith.constant 7 : index
    %c8_681 = arith.constant 8 : index
    %c0_682 = arith.constant 0 : index
    %692 = vector.load %arg2[%c0_679, %c7_680, %c8_681, %c0_682] : memref<1x8x16x128xf32, #tpu.memory_space<vmem>>, vector<1x1x1x128xf32>
    %693 = vector.shape_cast %692 : vector<1x1x1x128xf32> to vector<1x128xf32>
    %c7_683 = arith.constant 7 : index
    %c0_684 = arith.constant 0 : index
    %c0_685 = arith.constant 0 : index
    %694 = vector.load %arg12[%c7_683, %c0_684, %c0_685] : memref<8x16x128xf32, #tpu.memory_space<vmem>>, vector<1x16x128xf32>
    %695 = vector.shape_cast %694 : vector<1x16x128xf32> to vector<16x128xf32>
    %696 = vector.broadcast %693 : vector<1x128xf32> to vector<16x128xf32>
    %697 = arith.mulf %696, %695 : vector<16x128xf32>
    %698 = arith.addf %691, %697 : vector<16x128xf32>
    %c8_686 = arith.constant 8 : index
    %c0_687 = arith.constant 0 : index
    %c0_688 = arith.constant 0 : index
    %699 = vector.load %arg9[%c8_686, %c0_687, %c0_688] : memref<16x32x16xf32, #tpu.memory_space<vmem>>, vector<1x32x16xf32>
    %700 = vector.shape_cast %699 : vector<1x32x16xf32> to vector<32x16xf32>
    %cst_689 = arith.constant dense<0.000000e+00> : vector<32x128xf32>
    %701 = tpu.matmul %700, %698, %cst_689 {dimension_numbers = #tpu.dot_dimension_numbers<[1], [0], [0], [1], [0, 0, 1, 1], [], []>} : vector<32x16xf32>, vector<16x128xf32>, vector<32x128xf32> -> vector<32x128xf32>
    %702 = arith.addf %643, %701 : vector<32x128xf32>
    %c0_690 = arith.constant 0 : index
    %c0_691 = arith.constant 0 : index
    %c9 = arith.constant 9 : index
    %c0_692 = arith.constant 0 : index
    %703 = vector.load %arg2[%c0_690, %c0_691, %c9, %c0_692] : memref<1x8x16x128xf32, #tpu.memory_space<vmem>>, vector<1x1x1x128xf32>
    %704 = vector.shape_cast %703 : vector<1x1x1x128xf32> to vector<1x128xf32>
    %c0_693 = arith.constant 0 : index
    %c0_694 = arith.constant 0 : index
    %c0_695 = arith.constant 0 : index
    %705 = vector.load %arg12[%c0_693, %c0_694, %c0_695] : memref<8x16x128xf32, #tpu.memory_space<vmem>>, vector<1x16x128xf32>
    %706 = vector.shape_cast %705 : vector<1x16x128xf32> to vector<16x128xf32>
    %707 = vector.broadcast %704 : vector<1x128xf32> to vector<16x128xf32>
    %708 = arith.mulf %707, %706 : vector<16x128xf32>
    %c0_696 = arith.constant 0 : index
    %c1_697 = arith.constant 1 : index
    %c9_698 = arith.constant 9 : index
    %c0_699 = arith.constant 0 : index
    %709 = vector.load %arg2[%c0_696, %c1_697, %c9_698, %c0_699] : memref<1x8x16x128xf32, #tpu.memory_space<vmem>>, vector<1x1x1x128xf32>
    %710 = vector.shape_cast %709 : vector<1x1x1x128xf32> to vector<1x128xf32>
    %c1_700 = arith.constant 1 : index
    %c0_701 = arith.constant 0 : index
    %c0_702 = arith.constant 0 : index
    %711 = vector.load %arg12[%c1_700, %c0_701, %c0_702] : memref<8x16x128xf32, #tpu.memory_space<vmem>>, vector<1x16x128xf32>
    %712 = vector.shape_cast %711 : vector<1x16x128xf32> to vector<16x128xf32>
    %713 = vector.broadcast %710 : vector<1x128xf32> to vector<16x128xf32>
    %714 = arith.mulf %713, %712 : vector<16x128xf32>
    %715 = arith.addf %708, %714 : vector<16x128xf32>
    %c0_703 = arith.constant 0 : index
    %c2_704 = arith.constant 2 : index
    %c9_705 = arith.constant 9 : index
    %c0_706 = arith.constant 0 : index
    %716 = vector.load %arg2[%c0_703, %c2_704, %c9_705, %c0_706] : memref<1x8x16x128xf32, #tpu.memory_space<vmem>>, vector<1x1x1x128xf32>
    %717 = vector.shape_cast %716 : vector<1x1x1x128xf32> to vector<1x128xf32>
    %c2_707 = arith.constant 2 : index
    %c0_708 = arith.constant 0 : index
    %c0_709 = arith.constant 0 : index
    %718 = vector.load %arg12[%c2_707, %c0_708, %c0_709] : memref<8x16x128xf32, #tpu.memory_space<vmem>>, vector<1x16x128xf32>
    %719 = vector.shape_cast %718 : vector<1x16x128xf32> to vector<16x128xf32>
    %720 = vector.broadcast %717 : vector<1x128xf32> to vector<16x128xf32>
    %721 = arith.mulf %720, %719 : vector<16x128xf32>
    %722 = arith.addf %715, %721 : vector<16x128xf32>
    %c0_710 = arith.constant 0 : index
    %c3_711 = arith.constant 3 : index
    %c9_712 = arith.constant 9 : index
    %c0_713 = arith.constant 0 : index
    %723 = vector.load %arg2[%c0_710, %c3_711, %c9_712, %c0_713] : memref<1x8x16x128xf32, #tpu.memory_space<vmem>>, vector<1x1x1x128xf32>
    %724 = vector.shape_cast %723 : vector<1x1x1x128xf32> to vector<1x128xf32>
    %c3_714 = arith.constant 3 : index
    %c0_715 = arith.constant 0 : index
    %c0_716 = arith.constant 0 : index
    %725 = vector.load %arg12[%c3_714, %c0_715, %c0_716] : memref<8x16x128xf32, #tpu.memory_space<vmem>>, vector<1x16x128xf32>
    %726 = vector.shape_cast %725 : vector<1x16x128xf32> to vector<16x128xf32>
    %727 = vector.broadcast %724 : vector<1x128xf32> to vector<16x128xf32>
    %728 = arith.mulf %727, %726 : vector<16x128xf32>
    %729 = arith.addf %722, %728 : vector<16x128xf32>
    %c0_717 = arith.constant 0 : index
    %c4_718 = arith.constant 4 : index
    %c9_719 = arith.constant 9 : index
    %c0_720 = arith.constant 0 : index
    %730 = vector.load %arg2[%c0_717, %c4_718, %c9_719, %c0_720] : memref<1x8x16x128xf32, #tpu.memory_space<vmem>>, vector<1x1x1x128xf32>
    %731 = vector.shape_cast %730 : vector<1x1x1x128xf32> to vector<1x128xf32>
    %c4_721 = arith.constant 4 : index
    %c0_722 = arith.constant 0 : index
    %c0_723 = arith.constant 0 : index
    %732 = vector.load %arg12[%c4_721, %c0_722, %c0_723] : memref<8x16x128xf32, #tpu.memory_space<vmem>>, vector<1x16x128xf32>
    %733 = vector.shape_cast %732 : vector<1x16x128xf32> to vector<16x128xf32>
    %734 = vector.broadcast %731 : vector<1x128xf32> to vector<16x128xf32>
    %735 = arith.mulf %734, %733 : vector<16x128xf32>
    %736 = arith.addf %729, %735 : vector<16x128xf32>
    %c0_724 = arith.constant 0 : index
    %c5_725 = arith.constant 5 : index
    %c9_726 = arith.constant 9 : index
    %c0_727 = arith.constant 0 : index
    %737 = vector.load %arg2[%c0_724, %c5_725, %c9_726, %c0_727] : memref<1x8x16x128xf32, #tpu.memory_space<vmem>>, vector<1x1x1x128xf32>
    %738 = vector.shape_cast %737 : vector<1x1x1x128xf32> to vector<1x128xf32>
    %c5_728 = arith.constant 5 : index
    %c0_729 = arith.constant 0 : index
    %c0_730 = arith.constant 0 : index
    %739 = vector.load %arg12[%c5_728, %c0_729, %c0_730] : memref<8x16x128xf32, #tpu.memory_space<vmem>>, vector<1x16x128xf32>
    %740 = vector.shape_cast %739 : vector<1x16x128xf32> to vector<16x128xf32>
    %741 = vector.broadcast %738 : vector<1x128xf32> to vector<16x128xf32>
    %742 = arith.mulf %741, %740 : vector<16x128xf32>
    %743 = arith.addf %736, %742 : vector<16x128xf32>
    %c0_731 = arith.constant 0 : index
    %c6_732 = arith.constant 6 : index
    %c9_733 = arith.constant 9 : index
    %c0_734 = arith.constant 0 : index
    %744 = vector.load %arg2[%c0_731, %c6_732, %c9_733, %c0_734] : memref<1x8x16x128xf32, #tpu.memory_space<vmem>>, vector<1x1x1x128xf32>
    %745 = vector.shape_cast %744 : vector<1x1x1x128xf32> to vector<1x128xf32>
    %c6_735 = arith.constant 6 : index
    %c0_736 = arith.constant 0 : index
    %c0_737 = arith.constant 0 : index
    %746 = vector.load %arg12[%c6_735, %c0_736, %c0_737] : memref<8x16x128xf32, #tpu.memory_space<vmem>>, vector<1x16x128xf32>
    %747 = vector.shape_cast %746 : vector<1x16x128xf32> to vector<16x128xf32>
    %748 = vector.broadcast %745 : vector<1x128xf32> to vector<16x128xf32>
    %749 = arith.mulf %748, %747 : vector<16x128xf32>
    %750 = arith.addf %743, %749 : vector<16x128xf32>
    %c0_738 = arith.constant 0 : index
    %c7_739 = arith.constant 7 : index
    %c9_740 = arith.constant 9 : index
    %c0_741 = arith.constant 0 : index
    %751 = vector.load %arg2[%c0_738, %c7_739, %c9_740, %c0_741] : memref<1x8x16x128xf32, #tpu.memory_space<vmem>>, vector<1x1x1x128xf32>
    %752 = vector.shape_cast %751 : vector<1x1x1x128xf32> to vector<1x128xf32>
    %c7_742 = arith.constant 7 : index
    %c0_743 = arith.constant 0 : index
    %c0_744 = arith.constant 0 : index
    %753 = vector.load %arg12[%c7_742, %c0_743, %c0_744] : memref<8x16x128xf32, #tpu.memory_space<vmem>>, vector<1x16x128xf32>
    %754 = vector.shape_cast %753 : vector<1x16x128xf32> to vector<16x128xf32>
    %755 = vector.broadcast %752 : vector<1x128xf32> to vector<16x128xf32>
    %756 = arith.mulf %755, %754 : vector<16x128xf32>
    %757 = arith.addf %750, %756 : vector<16x128xf32>
    %c9_745 = arith.constant 9 : index
    %c0_746 = arith.constant 0 : index
    %c0_747 = arith.constant 0 : index
    %758 = vector.load %arg9[%c9_745, %c0_746, %c0_747] : memref<16x32x16xf32, #tpu.memory_space<vmem>>, vector<1x32x16xf32>
    %759 = vector.shape_cast %758 : vector<1x32x16xf32> to vector<32x16xf32>
    %cst_748 = arith.constant dense<0.000000e+00> : vector<32x128xf32>
    %760 = tpu.matmul %759, %757, %cst_748 {dimension_numbers = #tpu.dot_dimension_numbers<[1], [0], [0], [1], [0, 0, 1, 1], [], []>} : vector<32x16xf32>, vector<16x128xf32>, vector<32x128xf32> -> vector<32x128xf32>
    %761 = arith.addf %702, %760 : vector<32x128xf32>
    %c0_749 = arith.constant 0 : index
    %c0_750 = arith.constant 0 : index
    %c10 = arith.constant 10 : index
    %c0_751 = arith.constant 0 : index
    %762 = vector.load %arg2[%c0_749, %c0_750, %c10, %c0_751] : memref<1x8x16x128xf32, #tpu.memory_space<vmem>>, vector<1x1x1x128xf32>
    %763 = vector.shape_cast %762 : vector<1x1x1x128xf32> to vector<1x128xf32>
    %c0_752 = arith.constant 0 : index
    %c0_753 = arith.constant 0 : index
    %c0_754 = arith.constant 0 : index
    %764 = vector.load %arg12[%c0_752, %c0_753, %c0_754] : memref<8x16x128xf32, #tpu.memory_space<vmem>>, vector<1x16x128xf32>
    %765 = vector.shape_cast %764 : vector<1x16x128xf32> to vector<16x128xf32>
    %766 = vector.broadcast %763 : vector<1x128xf32> to vector<16x128xf32>
    %767 = arith.mulf %766, %765 : vector<16x128xf32>
    %c0_755 = arith.constant 0 : index
    %c1_756 = arith.constant 1 : index
    %c10_757 = arith.constant 10 : index
    %c0_758 = arith.constant 0 : index
    %768 = vector.load %arg2[%c0_755, %c1_756, %c10_757, %c0_758] : memref<1x8x16x128xf32, #tpu.memory_space<vmem>>, vector<1x1x1x128xf32>
    %769 = vector.shape_cast %768 : vector<1x1x1x128xf32> to vector<1x128xf32>
    %c1_759 = arith.constant 1 : index
    %c0_760 = arith.constant 0 : index
    %c0_761 = arith.constant 0 : index
    %770 = vector.load %arg12[%c1_759, %c0_760, %c0_761] : memref<8x16x128xf32, #tpu.memory_space<vmem>>, vector<1x16x128xf32>
    %771 = vector.shape_cast %770 : vector<1x16x128xf32> to vector<16x128xf32>
    %772 = vector.broadcast %769 : vector<1x128xf32> to vector<16x128xf32>
    %773 = arith.mulf %772, %771 : vector<16x128xf32>
    %774 = arith.addf %767, %773 : vector<16x128xf32>
    %c0_762 = arith.constant 0 : index
    %c2_763 = arith.constant 2 : index
    %c10_764 = arith.constant 10 : index
    %c0_765 = arith.constant 0 : index
    %775 = vector.load %arg2[%c0_762, %c2_763, %c10_764, %c0_765] : memref<1x8x16x128xf32, #tpu.memory_space<vmem>>, vector<1x1x1x128xf32>
    %776 = vector.shape_cast %775 : vector<1x1x1x128xf32> to vector<1x128xf32>
    %c2_766 = arith.constant 2 : index
    %c0_767 = arith.constant 0 : index
    %c0_768 = arith.constant 0 : index
    %777 = vector.load %arg12[%c2_766, %c0_767, %c0_768] : memref<8x16x128xf32, #tpu.memory_space<vmem>>, vector<1x16x128xf32>
    %778 = vector.shape_cast %777 : vector<1x16x128xf32> to vector<16x128xf32>
    %779 = vector.broadcast %776 : vector<1x128xf32> to vector<16x128xf32>
    %780 = arith.mulf %779, %778 : vector<16x128xf32>
    %781 = arith.addf %774, %780 : vector<16x128xf32>
    %c0_769 = arith.constant 0 : index
    %c3_770 = arith.constant 3 : index
    %c10_771 = arith.constant 10 : index
    %c0_772 = arith.constant 0 : index
    %782 = vector.load %arg2[%c0_769, %c3_770, %c10_771, %c0_772] : memref<1x8x16x128xf32, #tpu.memory_space<vmem>>, vector<1x1x1x128xf32>
    %783 = vector.shape_cast %782 : vector<1x1x1x128xf32> to vector<1x128xf32>
    %c3_773 = arith.constant 3 : index
    %c0_774 = arith.constant 0 : index
    %c0_775 = arith.constant 0 : index
    %784 = vector.load %arg12[%c3_773, %c0_774, %c0_775] : memref<8x16x128xf32, #tpu.memory_space<vmem>>, vector<1x16x128xf32>
    %785 = vector.shape_cast %784 : vector<1x16x128xf32> to vector<16x128xf32>
    %786 = vector.broadcast %783 : vector<1x128xf32> to vector<16x128xf32>
    %787 = arith.mulf %786, %785 : vector<16x128xf32>
    %788 = arith.addf %781, %787 : vector<16x128xf32>
    %c0_776 = arith.constant 0 : index
    %c4_777 = arith.constant 4 : index
    %c10_778 = arith.constant 10 : index
    %c0_779 = arith.constant 0 : index
    %789 = vector.load %arg2[%c0_776, %c4_777, %c10_778, %c0_779] : memref<1x8x16x128xf32, #tpu.memory_space<vmem>>, vector<1x1x1x128xf32>
    %790 = vector.shape_cast %789 : vector<1x1x1x128xf32> to vector<1x128xf32>
    %c4_780 = arith.constant 4 : index
    %c0_781 = arith.constant 0 : index
    %c0_782 = arith.constant 0 : index
    %791 = vector.load %arg12[%c4_780, %c0_781, %c0_782] : memref<8x16x128xf32, #tpu.memory_space<vmem>>, vector<1x16x128xf32>
    %792 = vector.shape_cast %791 : vector<1x16x128xf32> to vector<16x128xf32>
    %793 = vector.broadcast %790 : vector<1x128xf32> to vector<16x128xf32>
    %794 = arith.mulf %793, %792 : vector<16x128xf32>
    %795 = arith.addf %788, %794 : vector<16x128xf32>
    %c0_783 = arith.constant 0 : index
    %c5_784 = arith.constant 5 : index
    %c10_785 = arith.constant 10 : index
    %c0_786 = arith.constant 0 : index
    %796 = vector.load %arg2[%c0_783, %c5_784, %c10_785, %c0_786] : memref<1x8x16x128xf32, #tpu.memory_space<vmem>>, vector<1x1x1x128xf32>
    %797 = vector.shape_cast %796 : vector<1x1x1x128xf32> to vector<1x128xf32>
    %c5_787 = arith.constant 5 : index
    %c0_788 = arith.constant 0 : index
    %c0_789 = arith.constant 0 : index
    %798 = vector.load %arg12[%c5_787, %c0_788, %c0_789] : memref<8x16x128xf32, #tpu.memory_space<vmem>>, vector<1x16x128xf32>
    %799 = vector.shape_cast %798 : vector<1x16x128xf32> to vector<16x128xf32>
    %800 = vector.broadcast %797 : vector<1x128xf32> to vector<16x128xf32>
    %801 = arith.mulf %800, %799 : vector<16x128xf32>
    %802 = arith.addf %795, %801 : vector<16x128xf32>
    %c0_790 = arith.constant 0 : index
    %c6_791 = arith.constant 6 : index
    %c10_792 = arith.constant 10 : index
    %c0_793 = arith.constant 0 : index
    %803 = vector.load %arg2[%c0_790, %c6_791, %c10_792, %c0_793] : memref<1x8x16x128xf32, #tpu.memory_space<vmem>>, vector<1x1x1x128xf32>
    %804 = vector.shape_cast %803 : vector<1x1x1x128xf32> to vector<1x128xf32>
    %c6_794 = arith.constant 6 : index
    %c0_795 = arith.constant 0 : index
    %c0_796 = arith.constant 0 : index
    %805 = vector.load %arg12[%c6_794, %c0_795, %c0_796] : memref<8x16x128xf32, #tpu.memory_space<vmem>>, vector<1x16x128xf32>
    %806 = vector.shape_cast %805 : vector<1x16x128xf32> to vector<16x128xf32>
    %807 = vector.broadcast %804 : vector<1x128xf32> to vector<16x128xf32>
    %808 = arith.mulf %807, %806 : vector<16x128xf32>
    %809 = arith.addf %802, %808 : vector<16x128xf32>
    %c0_797 = arith.constant 0 : index
    %c7_798 = arith.constant 7 : index
    %c10_799 = arith.constant 10 : index
    %c0_800 = arith.constant 0 : index
    %810 = vector.load %arg2[%c0_797, %c7_798, %c10_799, %c0_800] : memref<1x8x16x128xf32, #tpu.memory_space<vmem>>, vector<1x1x1x128xf32>
    %811 = vector.shape_cast %810 : vector<1x1x1x128xf32> to vector<1x128xf32>
    %c7_801 = arith.constant 7 : index
    %c0_802 = arith.constant 0 : index
    %c0_803 = arith.constant 0 : index
    %812 = vector.load %arg12[%c7_801, %c0_802, %c0_803] : memref<8x16x128xf32, #tpu.memory_space<vmem>>, vector<1x16x128xf32>
    %813 = vector.shape_cast %812 : vector<1x16x128xf32> to vector<16x128xf32>
    %814 = vector.broadcast %811 : vector<1x128xf32> to vector<16x128xf32>
    %815 = arith.mulf %814, %813 : vector<16x128xf32>
    %816 = arith.addf %809, %815 : vector<16x128xf32>
    %c10_804 = arith.constant 10 : index
    %c0_805 = arith.constant 0 : index
    %c0_806 = arith.constant 0 : index
    %817 = vector.load %arg9[%c10_804, %c0_805, %c0_806] : memref<16x32x16xf32, #tpu.memory_space<vmem>>, vector<1x32x16xf32>
    %818 = vector.shape_cast %817 : vector<1x32x16xf32> to vector<32x16xf32>
    %cst_807 = arith.constant dense<0.000000e+00> : vector<32x128xf32>
    %819 = tpu.matmul %818, %816, %cst_807 {dimension_numbers = #tpu.dot_dimension_numbers<[1], [0], [0], [1], [0, 0, 1, 1], [], []>} : vector<32x16xf32>, vector<16x128xf32>, vector<32x128xf32> -> vector<32x128xf32>
    %820 = arith.addf %761, %819 : vector<32x128xf32>
    %c0_808 = arith.constant 0 : index
    %c0_809 = arith.constant 0 : index
    %c11 = arith.constant 11 : index
    %c0_810 = arith.constant 0 : index
    %821 = vector.load %arg2[%c0_808, %c0_809, %c11, %c0_810] : memref<1x8x16x128xf32, #tpu.memory_space<vmem>>, vector<1x1x1x128xf32>
    %822 = vector.shape_cast %821 : vector<1x1x1x128xf32> to vector<1x128xf32>
    %c0_811 = arith.constant 0 : index
    %c0_812 = arith.constant 0 : index
    %c0_813 = arith.constant 0 : index
    %823 = vector.load %arg12[%c0_811, %c0_812, %c0_813] : memref<8x16x128xf32, #tpu.memory_space<vmem>>, vector<1x16x128xf32>
    %824 = vector.shape_cast %823 : vector<1x16x128xf32> to vector<16x128xf32>
    %825 = vector.broadcast %822 : vector<1x128xf32> to vector<16x128xf32>
    %826 = arith.mulf %825, %824 : vector<16x128xf32>
    %c0_814 = arith.constant 0 : index
    %c1_815 = arith.constant 1 : index
    %c11_816 = arith.constant 11 : index
    %c0_817 = arith.constant 0 : index
    %827 = vector.load %arg2[%c0_814, %c1_815, %c11_816, %c0_817] : memref<1x8x16x128xf32, #tpu.memory_space<vmem>>, vector<1x1x1x128xf32>
    %828 = vector.shape_cast %827 : vector<1x1x1x128xf32> to vector<1x128xf32>
    %c1_818 = arith.constant 1 : index
    %c0_819 = arith.constant 0 : index
    %c0_820 = arith.constant 0 : index
    %829 = vector.load %arg12[%c1_818, %c0_819, %c0_820] : memref<8x16x128xf32, #tpu.memory_space<vmem>>, vector<1x16x128xf32>
    %830 = vector.shape_cast %829 : vector<1x16x128xf32> to vector<16x128xf32>
    %831 = vector.broadcast %828 : vector<1x128xf32> to vector<16x128xf32>
    %832 = arith.mulf %831, %830 : vector<16x128xf32>
    %833 = arith.addf %826, %832 : vector<16x128xf32>
    %c0_821 = arith.constant 0 : index
    %c2_822 = arith.constant 2 : index
    %c11_823 = arith.constant 11 : index
    %c0_824 = arith.constant 0 : index
    %834 = vector.load %arg2[%c0_821, %c2_822, %c11_823, %c0_824] : memref<1x8x16x128xf32, #tpu.memory_space<vmem>>, vector<1x1x1x128xf32>
    %835 = vector.shape_cast %834 : vector<1x1x1x128xf32> to vector<1x128xf32>
    %c2_825 = arith.constant 2 : index
    %c0_826 = arith.constant 0 : index
    %c0_827 = arith.constant 0 : index
    %836 = vector.load %arg12[%c2_825, %c0_826, %c0_827] : memref<8x16x128xf32, #tpu.memory_space<vmem>>, vector<1x16x128xf32>
    %837 = vector.shape_cast %836 : vector<1x16x128xf32> to vector<16x128xf32>
    %838 = vector.broadcast %835 : vector<1x128xf32> to vector<16x128xf32>
    %839 = arith.mulf %838, %837 : vector<16x128xf32>
    %840 = arith.addf %833, %839 : vector<16x128xf32>
    %c0_828 = arith.constant 0 : index
    %c3_829 = arith.constant 3 : index
    %c11_830 = arith.constant 11 : index
    %c0_831 = arith.constant 0 : index
    %841 = vector.load %arg2[%c0_828, %c3_829, %c11_830, %c0_831] : memref<1x8x16x128xf32, #tpu.memory_space<vmem>>, vector<1x1x1x128xf32>
    %842 = vector.shape_cast %841 : vector<1x1x1x128xf32> to vector<1x128xf32>
    %c3_832 = arith.constant 3 : index
    %c0_833 = arith.constant 0 : index
    %c0_834 = arith.constant 0 : index
    %843 = vector.load %arg12[%c3_832, %c0_833, %c0_834] : memref<8x16x128xf32, #tpu.memory_space<vmem>>, vector<1x16x128xf32>
    %844 = vector.shape_cast %843 : vector<1x16x128xf32> to vector<16x128xf32>
    %845 = vector.broadcast %842 : vector<1x128xf32> to vector<16x128xf32>
    %846 = arith.mulf %845, %844 : vector<16x128xf32>
    %847 = arith.addf %840, %846 : vector<16x128xf32>
    %c0_835 = arith.constant 0 : index
    %c4_836 = arith.constant 4 : index
    %c11_837 = arith.constant 11 : index
    %c0_838 = arith.constant 0 : index
    %848 = vector.load %arg2[%c0_835, %c4_836, %c11_837, %c0_838] : memref<1x8x16x128xf32, #tpu.memory_space<vmem>>, vector<1x1x1x128xf32>
    %849 = vector.shape_cast %848 : vector<1x1x1x128xf32> to vector<1x128xf32>
    %c4_839 = arith.constant 4 : index
    %c0_840 = arith.constant 0 : index
    %c0_841 = arith.constant 0 : index
    %850 = vector.load %arg12[%c4_839, %c0_840, %c0_841] : memref<8x16x128xf32, #tpu.memory_space<vmem>>, vector<1x16x128xf32>
    %851 = vector.shape_cast %850 : vector<1x16x128xf32> to vector<16x128xf32>
    %852 = vector.broadcast %849 : vector<1x128xf32> to vector<16x128xf32>
    %853 = arith.mulf %852, %851 : vector<16x128xf32>
    %854 = arith.addf %847, %853 : vector<16x128xf32>
    %c0_842 = arith.constant 0 : index
    %c5_843 = arith.constant 5 : index
    %c11_844 = arith.constant 11 : index
    %c0_845 = arith.constant 0 : index
    %855 = vector.load %arg2[%c0_842, %c5_843, %c11_844, %c0_845] : memref<1x8x16x128xf32, #tpu.memory_space<vmem>>, vector<1x1x1x128xf32>
    %856 = vector.shape_cast %855 : vector<1x1x1x128xf32> to vector<1x128xf32>
    %c5_846 = arith.constant 5 : index
    %c0_847 = arith.constant 0 : index
    %c0_848 = arith.constant 0 : index
    %857 = vector.load %arg12[%c5_846, %c0_847, %c0_848] : memref<8x16x128xf32, #tpu.memory_space<vmem>>, vector<1x16x128xf32>
    %858 = vector.shape_cast %857 : vector<1x16x128xf32> to vector<16x128xf32>
    %859 = vector.broadcast %856 : vector<1x128xf32> to vector<16x128xf32>
    %860 = arith.mulf %859, %858 : vector<16x128xf32>
    %861 = arith.addf %854, %860 : vector<16x128xf32>
    %c0_849 = arith.constant 0 : index
    %c6_850 = arith.constant 6 : index
    %c11_851 = arith.constant 11 : index
    %c0_852 = arith.constant 0 : index
    %862 = vector.load %arg2[%c0_849, %c6_850, %c11_851, %c0_852] : memref<1x8x16x128xf32, #tpu.memory_space<vmem>>, vector<1x1x1x128xf32>
    %863 = vector.shape_cast %862 : vector<1x1x1x128xf32> to vector<1x128xf32>
    %c6_853 = arith.constant 6 : index
    %c0_854 = arith.constant 0 : index
    %c0_855 = arith.constant 0 : index
    %864 = vector.load %arg12[%c6_853, %c0_854, %c0_855] : memref<8x16x128xf32, #tpu.memory_space<vmem>>, vector<1x16x128xf32>
    %865 = vector.shape_cast %864 : vector<1x16x128xf32> to vector<16x128xf32>
    %866 = vector.broadcast %863 : vector<1x128xf32> to vector<16x128xf32>
    %867 = arith.mulf %866, %865 : vector<16x128xf32>
    %868 = arith.addf %861, %867 : vector<16x128xf32>
    %c0_856 = arith.constant 0 : index
    %c7_857 = arith.constant 7 : index
    %c11_858 = arith.constant 11 : index
    %c0_859 = arith.constant 0 : index
    %869 = vector.load %arg2[%c0_856, %c7_857, %c11_858, %c0_859] : memref<1x8x16x128xf32, #tpu.memory_space<vmem>>, vector<1x1x1x128xf32>
    %870 = vector.shape_cast %869 : vector<1x1x1x128xf32> to vector<1x128xf32>
    %c7_860 = arith.constant 7 : index
    %c0_861 = arith.constant 0 : index
    %c0_862 = arith.constant 0 : index
    %871 = vector.load %arg12[%c7_860, %c0_861, %c0_862] : memref<8x16x128xf32, #tpu.memory_space<vmem>>, vector<1x16x128xf32>
    %872 = vector.shape_cast %871 : vector<1x16x128xf32> to vector<16x128xf32>
    %873 = vector.broadcast %870 : vector<1x128xf32> to vector<16x128xf32>
    %874 = arith.mulf %873, %872 : vector<16x128xf32>
    %875 = arith.addf %868, %874 : vector<16x128xf32>
    %c11_863 = arith.constant 11 : index
    %c0_864 = arith.constant 0 : index
    %c0_865 = arith.constant 0 : index
    %876 = vector.load %arg9[%c11_863, %c0_864, %c0_865] : memref<16x32x16xf32, #tpu.memory_space<vmem>>, vector<1x32x16xf32>
    %877 = vector.shape_cast %876 : vector<1x32x16xf32> to vector<32x16xf32>
    %cst_866 = arith.constant dense<0.000000e+00> : vector<32x128xf32>
    %878 = tpu.matmul %877, %875, %cst_866 {dimension_numbers = #tpu.dot_dimension_numbers<[1], [0], [0], [1], [0, 0, 1, 1], [], []>} : vector<32x16xf32>, vector<16x128xf32>, vector<32x128xf32> -> vector<32x128xf32>
    %879 = arith.addf %820, %878 : vector<32x128xf32>
    %c0_867 = arith.constant 0 : index
    %c0_868 = arith.constant 0 : index
    %c12 = arith.constant 12 : index
    %c0_869 = arith.constant 0 : index
    %880 = vector.load %arg2[%c0_867, %c0_868, %c12, %c0_869] : memref<1x8x16x128xf32, #tpu.memory_space<vmem>>, vector<1x1x1x128xf32>
    %881 = vector.shape_cast %880 : vector<1x1x1x128xf32> to vector<1x128xf32>
    %c0_870 = arith.constant 0 : index
    %c0_871 = arith.constant 0 : index
    %c0_872 = arith.constant 0 : index
    %882 = vector.load %arg12[%c0_870, %c0_871, %c0_872] : memref<8x16x128xf32, #tpu.memory_space<vmem>>, vector<1x16x128xf32>
    %883 = vector.shape_cast %882 : vector<1x16x128xf32> to vector<16x128xf32>
    %884 = vector.broadcast %881 : vector<1x128xf32> to vector<16x128xf32>
    %885 = arith.mulf %884, %883 : vector<16x128xf32>
    %c0_873 = arith.constant 0 : index
    %c1_874 = arith.constant 1 : index
    %c12_875 = arith.constant 12 : index
    %c0_876 = arith.constant 0 : index
    %886 = vector.load %arg2[%c0_873, %c1_874, %c12_875, %c0_876] : memref<1x8x16x128xf32, #tpu.memory_space<vmem>>, vector<1x1x1x128xf32>
    %887 = vector.shape_cast %886 : vector<1x1x1x128xf32> to vector<1x128xf32>
    %c1_877 = arith.constant 1 : index
    %c0_878 = arith.constant 0 : index
    %c0_879 = arith.constant 0 : index
    %888 = vector.load %arg12[%c1_877, %c0_878, %c0_879] : memref<8x16x128xf32, #tpu.memory_space<vmem>>, vector<1x16x128xf32>
    %889 = vector.shape_cast %888 : vector<1x16x128xf32> to vector<16x128xf32>
    %890 = vector.broadcast %887 : vector<1x128xf32> to vector<16x128xf32>
    %891 = arith.mulf %890, %889 : vector<16x128xf32>
    %892 = arith.addf %885, %891 : vector<16x128xf32>
    %c0_880 = arith.constant 0 : index
    %c2_881 = arith.constant 2 : index
    %c12_882 = arith.constant 12 : index
    %c0_883 = arith.constant 0 : index
    %893 = vector.load %arg2[%c0_880, %c2_881, %c12_882, %c0_883] : memref<1x8x16x128xf32, #tpu.memory_space<vmem>>, vector<1x1x1x128xf32>
    %894 = vector.shape_cast %893 : vector<1x1x1x128xf32> to vector<1x128xf32>
    %c2_884 = arith.constant 2 : index
    %c0_885 = arith.constant 0 : index
    %c0_886 = arith.constant 0 : index
    %895 = vector.load %arg12[%c2_884, %c0_885, %c0_886] : memref<8x16x128xf32, #tpu.memory_space<vmem>>, vector<1x16x128xf32>
    %896 = vector.shape_cast %895 : vector<1x16x128xf32> to vector<16x128xf32>
    %897 = vector.broadcast %894 : vector<1x128xf32> to vector<16x128xf32>
    %898 = arith.mulf %897, %896 : vector<16x128xf32>
    %899 = arith.addf %892, %898 : vector<16x128xf32>
    %c0_887 = arith.constant 0 : index
    %c3_888 = arith.constant 3 : index
    %c12_889 = arith.constant 12 : index
    %c0_890 = arith.constant 0 : index
    %900 = vector.load %arg2[%c0_887, %c3_888, %c12_889, %c0_890] : memref<1x8x16x128xf32, #tpu.memory_space<vmem>>, vector<1x1x1x128xf32>
    %901 = vector.shape_cast %900 : vector<1x1x1x128xf32> to vector<1x128xf32>
    %c3_891 = arith.constant 3 : index
    %c0_892 = arith.constant 0 : index
    %c0_893 = arith.constant 0 : index
    %902 = vector.load %arg12[%c3_891, %c0_892, %c0_893] : memref<8x16x128xf32, #tpu.memory_space<vmem>>, vector<1x16x128xf32>
    %903 = vector.shape_cast %902 : vector<1x16x128xf32> to vector<16x128xf32>
    %904 = vector.broadcast %901 : vector<1x128xf32> to vector<16x128xf32>
    %905 = arith.mulf %904, %903 : vector<16x128xf32>
    %906 = arith.addf %899, %905 : vector<16x128xf32>
    %c0_894 = arith.constant 0 : index
    %c4_895 = arith.constant 4 : index
    %c12_896 = arith.constant 12 : index
    %c0_897 = arith.constant 0 : index
    %907 = vector.load %arg2[%c0_894, %c4_895, %c12_896, %c0_897] : memref<1x8x16x128xf32, #tpu.memory_space<vmem>>, vector<1x1x1x128xf32>
    %908 = vector.shape_cast %907 : vector<1x1x1x128xf32> to vector<1x128xf32>
    %c4_898 = arith.constant 4 : index
    %c0_899 = arith.constant 0 : index
    %c0_900 = arith.constant 0 : index
    %909 = vector.load %arg12[%c4_898, %c0_899, %c0_900] : memref<8x16x128xf32, #tpu.memory_space<vmem>>, vector<1x16x128xf32>
    %910 = vector.shape_cast %909 : vector<1x16x128xf32> to vector<16x128xf32>
    %911 = vector.broadcast %908 : vector<1x128xf32> to vector<16x128xf32>
    %912 = arith.mulf %911, %910 : vector<16x128xf32>
    %913 = arith.addf %906, %912 : vector<16x128xf32>
    %c0_901 = arith.constant 0 : index
    %c5_902 = arith.constant 5 : index
    %c12_903 = arith.constant 12 : index
    %c0_904 = arith.constant 0 : index
    %914 = vector.load %arg2[%c0_901, %c5_902, %c12_903, %c0_904] : memref<1x8x16x128xf32, #tpu.memory_space<vmem>>, vector<1x1x1x128xf32>
    %915 = vector.shape_cast %914 : vector<1x1x1x128xf32> to vector<1x128xf32>
    %c5_905 = arith.constant 5 : index
    %c0_906 = arith.constant 0 : index
    %c0_907 = arith.constant 0 : index
    %916 = vector.load %arg12[%c5_905, %c0_906, %c0_907] : memref<8x16x128xf32, #tpu.memory_space<vmem>>, vector<1x16x128xf32>
    %917 = vector.shape_cast %916 : vector<1x16x128xf32> to vector<16x128xf32>
    %918 = vector.broadcast %915 : vector<1x128xf32> to vector<16x128xf32>
    %919 = arith.mulf %918, %917 : vector<16x128xf32>
    %920 = arith.addf %913, %919 : vector<16x128xf32>
    %c0_908 = arith.constant 0 : index
    %c6_909 = arith.constant 6 : index
    %c12_910 = arith.constant 12 : index
    %c0_911 = arith.constant 0 : index
    %921 = vector.load %arg2[%c0_908, %c6_909, %c12_910, %c0_911] : memref<1x8x16x128xf32, #tpu.memory_space<vmem>>, vector<1x1x1x128xf32>
    %922 = vector.shape_cast %921 : vector<1x1x1x128xf32> to vector<1x128xf32>
    %c6_912 = arith.constant 6 : index
    %c0_913 = arith.constant 0 : index
    %c0_914 = arith.constant 0 : index
    %923 = vector.load %arg12[%c6_912, %c0_913, %c0_914] : memref<8x16x128xf32, #tpu.memory_space<vmem>>, vector<1x16x128xf32>
    %924 = vector.shape_cast %923 : vector<1x16x128xf32> to vector<16x128xf32>
    %925 = vector.broadcast %922 : vector<1x128xf32> to vector<16x128xf32>
    %926 = arith.mulf %925, %924 : vector<16x128xf32>
    %927 = arith.addf %920, %926 : vector<16x128xf32>
    %c0_915 = arith.constant 0 : index
    %c7_916 = arith.constant 7 : index
    %c12_917 = arith.constant 12 : index
    %c0_918 = arith.constant 0 : index
    %928 = vector.load %arg2[%c0_915, %c7_916, %c12_917, %c0_918] : memref<1x8x16x128xf32, #tpu.memory_space<vmem>>, vector<1x1x1x128xf32>
    %929 = vector.shape_cast %928 : vector<1x1x1x128xf32> to vector<1x128xf32>
    %c7_919 = arith.constant 7 : index
    %c0_920 = arith.constant 0 : index
    %c0_921 = arith.constant 0 : index
    %930 = vector.load %arg12[%c7_919, %c0_920, %c0_921] : memref<8x16x128xf32, #tpu.memory_space<vmem>>, vector<1x16x128xf32>
    %931 = vector.shape_cast %930 : vector<1x16x128xf32> to vector<16x128xf32>
    %932 = vector.broadcast %929 : vector<1x128xf32> to vector<16x128xf32>
    %933 = arith.mulf %932, %931 : vector<16x128xf32>
    %934 = arith.addf %927, %933 : vector<16x128xf32>
    %c12_922 = arith.constant 12 : index
    %c0_923 = arith.constant 0 : index
    %c0_924 = arith.constant 0 : index
    %935 = vector.load %arg9[%c12_922, %c0_923, %c0_924] : memref<16x32x16xf32, #tpu.memory_space<vmem>>, vector<1x32x16xf32>
    %936 = vector.shape_cast %935 : vector<1x32x16xf32> to vector<32x16xf32>
    %cst_925 = arith.constant dense<0.000000e+00> : vector<32x128xf32>
    %937 = tpu.matmul %936, %934, %cst_925 {dimension_numbers = #tpu.dot_dimension_numbers<[1], [0], [0], [1], [0, 0, 1, 1], [], []>} : vector<32x16xf32>, vector<16x128xf32>, vector<32x128xf32> -> vector<32x128xf32>
    %938 = arith.addf %879, %937 : vector<32x128xf32>
    %c0_926 = arith.constant 0 : index
    %c0_927 = arith.constant 0 : index
    %c13 = arith.constant 13 : index
    %c0_928 = arith.constant 0 : index
    %939 = vector.load %arg2[%c0_926, %c0_927, %c13, %c0_928] : memref<1x8x16x128xf32, #tpu.memory_space<vmem>>, vector<1x1x1x128xf32>
    %940 = vector.shape_cast %939 : vector<1x1x1x128xf32> to vector<1x128xf32>
    %c0_929 = arith.constant 0 : index
    %c0_930 = arith.constant 0 : index
    %c0_931 = arith.constant 0 : index
    %941 = vector.load %arg12[%c0_929, %c0_930, %c0_931] : memref<8x16x128xf32, #tpu.memory_space<vmem>>, vector<1x16x128xf32>
    %942 = vector.shape_cast %941 : vector<1x16x128xf32> to vector<16x128xf32>
    %943 = vector.broadcast %940 : vector<1x128xf32> to vector<16x128xf32>
    %944 = arith.mulf %943, %942 : vector<16x128xf32>
    %c0_932 = arith.constant 0 : index
    %c1_933 = arith.constant 1 : index
    %c13_934 = arith.constant 13 : index
    %c0_935 = arith.constant 0 : index
    %945 = vector.load %arg2[%c0_932, %c1_933, %c13_934, %c0_935] : memref<1x8x16x128xf32, #tpu.memory_space<vmem>>, vector<1x1x1x128xf32>
    %946 = vector.shape_cast %945 : vector<1x1x1x128xf32> to vector<1x128xf32>
    %c1_936 = arith.constant 1 : index
    %c0_937 = arith.constant 0 : index
    %c0_938 = arith.constant 0 : index
    %947 = vector.load %arg12[%c1_936, %c0_937, %c0_938] : memref<8x16x128xf32, #tpu.memory_space<vmem>>, vector<1x16x128xf32>
    %948 = vector.shape_cast %947 : vector<1x16x128xf32> to vector<16x128xf32>
    %949 = vector.broadcast %946 : vector<1x128xf32> to vector<16x128xf32>
    %950 = arith.mulf %949, %948 : vector<16x128xf32>
    %951 = arith.addf %944, %950 : vector<16x128xf32>
    %c0_939 = arith.constant 0 : index
    %c2_940 = arith.constant 2 : index
    %c13_941 = arith.constant 13 : index
    %c0_942 = arith.constant 0 : index
    %952 = vector.load %arg2[%c0_939, %c2_940, %c13_941, %c0_942] : memref<1x8x16x128xf32, #tpu.memory_space<vmem>>, vector<1x1x1x128xf32>
    %953 = vector.shape_cast %952 : vector<1x1x1x128xf32> to vector<1x128xf32>
    %c2_943 = arith.constant 2 : index
    %c0_944 = arith.constant 0 : index
    %c0_945 = arith.constant 0 : index
    %954 = vector.load %arg12[%c2_943, %c0_944, %c0_945] : memref<8x16x128xf32, #tpu.memory_space<vmem>>, vector<1x16x128xf32>
    %955 = vector.shape_cast %954 : vector<1x16x128xf32> to vector<16x128xf32>
    %956 = vector.broadcast %953 : vector<1x128xf32> to vector<16x128xf32>
    %957 = arith.mulf %956, %955 : vector<16x128xf32>
    %958 = arith.addf %951, %957 : vector<16x128xf32>
    %c0_946 = arith.constant 0 : index
    %c3_947 = arith.constant 3 : index
    %c13_948 = arith.constant 13 : index
    %c0_949 = arith.constant 0 : index
    %959 = vector.load %arg2[%c0_946, %c3_947, %c13_948, %c0_949] : memref<1x8x16x128xf32, #tpu.memory_space<vmem>>, vector<1x1x1x128xf32>
    %960 = vector.shape_cast %959 : vector<1x1x1x128xf32> to vector<1x128xf32>
    %c3_950 = arith.constant 3 : index
    %c0_951 = arith.constant 0 : index
    %c0_952 = arith.constant 0 : index
    %961 = vector.load %arg12[%c3_950, %c0_951, %c0_952] : memref<8x16x128xf32, #tpu.memory_space<vmem>>, vector<1x16x128xf32>
    %962 = vector.shape_cast %961 : vector<1x16x128xf32> to vector<16x128xf32>
    %963 = vector.broadcast %960 : vector<1x128xf32> to vector<16x128xf32>
    %964 = arith.mulf %963, %962 : vector<16x128xf32>
    %965 = arith.addf %958, %964 : vector<16x128xf32>
    %c0_953 = arith.constant 0 : index
    %c4_954 = arith.constant 4 : index
    %c13_955 = arith.constant 13 : index
    %c0_956 = arith.constant 0 : index
    %966 = vector.load %arg2[%c0_953, %c4_954, %c13_955, %c0_956] : memref<1x8x16x128xf32, #tpu.memory_space<vmem>>, vector<1x1x1x128xf32>
    %967 = vector.shape_cast %966 : vector<1x1x1x128xf32> to vector<1x128xf32>
    %c4_957 = arith.constant 4 : index
    %c0_958 = arith.constant 0 : index
    %c0_959 = arith.constant 0 : index
    %968 = vector.load %arg12[%c4_957, %c0_958, %c0_959] : memref<8x16x128xf32, #tpu.memory_space<vmem>>, vector<1x16x128xf32>
    %969 = vector.shape_cast %968 : vector<1x16x128xf32> to vector<16x128xf32>
    %970 = vector.broadcast %967 : vector<1x128xf32> to vector<16x128xf32>
    %971 = arith.mulf %970, %969 : vector<16x128xf32>
    %972 = arith.addf %965, %971 : vector<16x128xf32>
    %c0_960 = arith.constant 0 : index
    %c5_961 = arith.constant 5 : index
    %c13_962 = arith.constant 13 : index
    %c0_963 = arith.constant 0 : index
    %973 = vector.load %arg2[%c0_960, %c5_961, %c13_962, %c0_963] : memref<1x8x16x128xf32, #tpu.memory_space<vmem>>, vector<1x1x1x128xf32>
    %974 = vector.shape_cast %973 : vector<1x1x1x128xf32> to vector<1x128xf32>
    %c5_964 = arith.constant 5 : index
    %c0_965 = arith.constant 0 : index
    %c0_966 = arith.constant 0 : index
    %975 = vector.load %arg12[%c5_964, %c0_965, %c0_966] : memref<8x16x128xf32, #tpu.memory_space<vmem>>, vector<1x16x128xf32>
    %976 = vector.shape_cast %975 : vector<1x16x128xf32> to vector<16x128xf32>
    %977 = vector.broadcast %974 : vector<1x128xf32> to vector<16x128xf32>
    %978 = arith.mulf %977, %976 : vector<16x128xf32>
    %979 = arith.addf %972, %978 : vector<16x128xf32>
    %c0_967 = arith.constant 0 : index
    %c6_968 = arith.constant 6 : index
    %c13_969 = arith.constant 13 : index
    %c0_970 = arith.constant 0 : index
    %980 = vector.load %arg2[%c0_967, %c6_968, %c13_969, %c0_970] : memref<1x8x16x128xf32, #tpu.memory_space<vmem>>, vector<1x1x1x128xf32>
    %981 = vector.shape_cast %980 : vector<1x1x1x128xf32> to vector<1x128xf32>
    %c6_971 = arith.constant 6 : index
    %c0_972 = arith.constant 0 : index
    %c0_973 = arith.constant 0 : index
    %982 = vector.load %arg12[%c6_971, %c0_972, %c0_973] : memref<8x16x128xf32, #tpu.memory_space<vmem>>, vector<1x16x128xf32>
    %983 = vector.shape_cast %982 : vector<1x16x128xf32> to vector<16x128xf32>
    %984 = vector.broadcast %981 : vector<1x128xf32> to vector<16x128xf32>
    %985 = arith.mulf %984, %983 : vector<16x128xf32>
    %986 = arith.addf %979, %985 : vector<16x128xf32>
    %c0_974 = arith.constant 0 : index
    %c7_975 = arith.constant 7 : index
    %c13_976 = arith.constant 13 : index
    %c0_977 = arith.constant 0 : index
    %987 = vector.load %arg2[%c0_974, %c7_975, %c13_976, %c0_977] : memref<1x8x16x128xf32, #tpu.memory_space<vmem>>, vector<1x1x1x128xf32>
    %988 = vector.shape_cast %987 : vector<1x1x1x128xf32> to vector<1x128xf32>
    %c7_978 = arith.constant 7 : index
    %c0_979 = arith.constant 0 : index
    %c0_980 = arith.constant 0 : index
    %989 = vector.load %arg12[%c7_978, %c0_979, %c0_980] : memref<8x16x128xf32, #tpu.memory_space<vmem>>, vector<1x16x128xf32>
    %990 = vector.shape_cast %989 : vector<1x16x128xf32> to vector<16x128xf32>
    %991 = vector.broadcast %988 : vector<1x128xf32> to vector<16x128xf32>
    %992 = arith.mulf %991, %990 : vector<16x128xf32>
    %993 = arith.addf %986, %992 : vector<16x128xf32>
    %c13_981 = arith.constant 13 : index
    %c0_982 = arith.constant 0 : index
    %c0_983 = arith.constant 0 : index
    %994 = vector.load %arg9[%c13_981, %c0_982, %c0_983] : memref<16x32x16xf32, #tpu.memory_space<vmem>>, vector<1x32x16xf32>
    %995 = vector.shape_cast %994 : vector<1x32x16xf32> to vector<32x16xf32>
    %cst_984 = arith.constant dense<0.000000e+00> : vector<32x128xf32>
    %996 = tpu.matmul %995, %993, %cst_984 {dimension_numbers = #tpu.dot_dimension_numbers<[1], [0], [0], [1], [0, 0, 1, 1], [], []>} : vector<32x16xf32>, vector<16x128xf32>, vector<32x128xf32> -> vector<32x128xf32>
    %997 = arith.addf %938, %996 : vector<32x128xf32>
    %c0_985 = arith.constant 0 : index
    %c0_986 = arith.constant 0 : index
    %c14 = arith.constant 14 : index
    %c0_987 = arith.constant 0 : index
    %998 = vector.load %arg2[%c0_985, %c0_986, %c14, %c0_987] : memref<1x8x16x128xf32, #tpu.memory_space<vmem>>, vector<1x1x1x128xf32>
    %999 = vector.shape_cast %998 : vector<1x1x1x128xf32> to vector<1x128xf32>
    %c0_988 = arith.constant 0 : index
    %c0_989 = arith.constant 0 : index
    %c0_990 = arith.constant 0 : index
    %1000 = vector.load %arg12[%c0_988, %c0_989, %c0_990] : memref<8x16x128xf32, #tpu.memory_space<vmem>>, vector<1x16x128xf32>
    %1001 = vector.shape_cast %1000 : vector<1x16x128xf32> to vector<16x128xf32>
    %1002 = vector.broadcast %999 : vector<1x128xf32> to vector<16x128xf32>
    %1003 = arith.mulf %1002, %1001 : vector<16x128xf32>
    %c0_991 = arith.constant 0 : index
    %c1_992 = arith.constant 1 : index
    %c14_993 = arith.constant 14 : index
    %c0_994 = arith.constant 0 : index
    %1004 = vector.load %arg2[%c0_991, %c1_992, %c14_993, %c0_994] : memref<1x8x16x128xf32, #tpu.memory_space<vmem>>, vector<1x1x1x128xf32>
    %1005 = vector.shape_cast %1004 : vector<1x1x1x128xf32> to vector<1x128xf32>
    %c1_995 = arith.constant 1 : index
    %c0_996 = arith.constant 0 : index
    %c0_997 = arith.constant 0 : index
    %1006 = vector.load %arg12[%c1_995, %c0_996, %c0_997] : memref<8x16x128xf32, #tpu.memory_space<vmem>>, vector<1x16x128xf32>
    %1007 = vector.shape_cast %1006 : vector<1x16x128xf32> to vector<16x128xf32>
    %1008 = vector.broadcast %1005 : vector<1x128xf32> to vector<16x128xf32>
    %1009 = arith.mulf %1008, %1007 : vector<16x128xf32>
    %1010 = arith.addf %1003, %1009 : vector<16x128xf32>
    %c0_998 = arith.constant 0 : index
    %c2_999 = arith.constant 2 : index
    %c14_1000 = arith.constant 14 : index
    %c0_1001 = arith.constant 0 : index
    %1011 = vector.load %arg2[%c0_998, %c2_999, %c14_1000, %c0_1001] : memref<1x8x16x128xf32, #tpu.memory_space<vmem>>, vector<1x1x1x128xf32>
    %1012 = vector.shape_cast %1011 : vector<1x1x1x128xf32> to vector<1x128xf32>
    %c2_1002 = arith.constant 2 : index
    %c0_1003 = arith.constant 0 : index
    %c0_1004 = arith.constant 0 : index
    %1013 = vector.load %arg12[%c2_1002, %c0_1003, %c0_1004] : memref<8x16x128xf32, #tpu.memory_space<vmem>>, vector<1x16x128xf32>
    %1014 = vector.shape_cast %1013 : vector<1x16x128xf32> to vector<16x128xf32>
    %1015 = vector.broadcast %1012 : vector<1x128xf32> to vector<16x128xf32>
    %1016 = arith.mulf %1015, %1014 : vector<16x128xf32>
    %1017 = arith.addf %1010, %1016 : vector<16x128xf32>
    %c0_1005 = arith.constant 0 : index
    %c3_1006 = arith.constant 3 : index
    %c14_1007 = arith.constant 14 : index
    %c0_1008 = arith.constant 0 : index
    %1018 = vector.load %arg2[%c0_1005, %c3_1006, %c14_1007, %c0_1008] : memref<1x8x16x128xf32, #tpu.memory_space<vmem>>, vector<1x1x1x128xf32>
    %1019 = vector.shape_cast %1018 : vector<1x1x1x128xf32> to vector<1x128xf32>
    %c3_1009 = arith.constant 3 : index
    %c0_1010 = arith.constant 0 : index
    %c0_1011 = arith.constant 0 : index
    %1020 = vector.load %arg12[%c3_1009, %c0_1010, %c0_1011] : memref<8x16x128xf32, #tpu.memory_space<vmem>>, vector<1x16x128xf32>
    %1021 = vector.shape_cast %1020 : vector<1x16x128xf32> to vector<16x128xf32>
    %1022 = vector.broadcast %1019 : vector<1x128xf32> to vector<16x128xf32>
    %1023 = arith.mulf %1022, %1021 : vector<16x128xf32>
    %1024 = arith.addf %1017, %1023 : vector<16x128xf32>
    %c0_1012 = arith.constant 0 : index
    %c4_1013 = arith.constant 4 : index
    %c14_1014 = arith.constant 14 : index
    %c0_1015 = arith.constant 0 : index
    %1025 = vector.load %arg2[%c0_1012, %c4_1013, %c14_1014, %c0_1015] : memref<1x8x16x128xf32, #tpu.memory_space<vmem>>, vector<1x1x1x128xf32>
    %1026 = vector.shape_cast %1025 : vector<1x1x1x128xf32> to vector<1x128xf32>
    %c4_1016 = arith.constant 4 : index
    %c0_1017 = arith.constant 0 : index
    %c0_1018 = arith.constant 0 : index
    %1027 = vector.load %arg12[%c4_1016, %c0_1017, %c0_1018] : memref<8x16x128xf32, #tpu.memory_space<vmem>>, vector<1x16x128xf32>
    %1028 = vector.shape_cast %1027 : vector<1x16x128xf32> to vector<16x128xf32>
    %1029 = vector.broadcast %1026 : vector<1x128xf32> to vector<16x128xf32>
    %1030 = arith.mulf %1029, %1028 : vector<16x128xf32>
    %1031 = arith.addf %1024, %1030 : vector<16x128xf32>
    %c0_1019 = arith.constant 0 : index
    %c5_1020 = arith.constant 5 : index
    %c14_1021 = arith.constant 14 : index
    %c0_1022 = arith.constant 0 : index
    %1032 = vector.load %arg2[%c0_1019, %c5_1020, %c14_1021, %c0_1022] : memref<1x8x16x128xf32, #tpu.memory_space<vmem>>, vector<1x1x1x128xf32>
    %1033 = vector.shape_cast %1032 : vector<1x1x1x128xf32> to vector<1x128xf32>
    %c5_1023 = arith.constant 5 : index
    %c0_1024 = arith.constant 0 : index
    %c0_1025 = arith.constant 0 : index
    %1034 = vector.load %arg12[%c5_1023, %c0_1024, %c0_1025] : memref<8x16x128xf32, #tpu.memory_space<vmem>>, vector<1x16x128xf32>
    %1035 = vector.shape_cast %1034 : vector<1x16x128xf32> to vector<16x128xf32>
    %1036 = vector.broadcast %1033 : vector<1x128xf32> to vector<16x128xf32>
    %1037 = arith.mulf %1036, %1035 : vector<16x128xf32>
    %1038 = arith.addf %1031, %1037 : vector<16x128xf32>
    %c0_1026 = arith.constant 0 : index
    %c6_1027 = arith.constant 6 : index
    %c14_1028 = arith.constant 14 : index
    %c0_1029 = arith.constant 0 : index
    %1039 = vector.load %arg2[%c0_1026, %c6_1027, %c14_1028, %c0_1029] : memref<1x8x16x128xf32, #tpu.memory_space<vmem>>, vector<1x1x1x128xf32>
    %1040 = vector.shape_cast %1039 : vector<1x1x1x128xf32> to vector<1x128xf32>
    %c6_1030 = arith.constant 6 : index
    %c0_1031 = arith.constant 0 : index
    %c0_1032 = arith.constant 0 : index
    %1041 = vector.load %arg12[%c6_1030, %c0_1031, %c0_1032] : memref<8x16x128xf32, #tpu.memory_space<vmem>>, vector<1x16x128xf32>
    %1042 = vector.shape_cast %1041 : vector<1x16x128xf32> to vector<16x128xf32>
    %1043 = vector.broadcast %1040 : vector<1x128xf32> to vector<16x128xf32>
    %1044 = arith.mulf %1043, %1042 : vector<16x128xf32>
    %1045 = arith.addf %1038, %1044 : vector<16x128xf32>
    %c0_1033 = arith.constant 0 : index
    %c7_1034 = arith.constant 7 : index
    %c14_1035 = arith.constant 14 : index
    %c0_1036 = arith.constant 0 : index
    %1046 = vector.load %arg2[%c0_1033, %c7_1034, %c14_1035, %c0_1036] : memref<1x8x16x128xf32, #tpu.memory_space<vmem>>, vector<1x1x1x128xf32>
    %1047 = vector.shape_cast %1046 : vector<1x1x1x128xf32> to vector<1x128xf32>
    %c7_1037 = arith.constant 7 : index
    %c0_1038 = arith.constant 0 : index
    %c0_1039 = arith.constant 0 : index
    %1048 = vector.load %arg12[%c7_1037, %c0_1038, %c0_1039] : memref<8x16x128xf32, #tpu.memory_space<vmem>>, vector<1x16x128xf32>
    %1049 = vector.shape_cast %1048 : vector<1x16x128xf32> to vector<16x128xf32>
    %1050 = vector.broadcast %1047 : vector<1x128xf32> to vector<16x128xf32>
    %1051 = arith.mulf %1050, %1049 : vector<16x128xf32>
    %1052 = arith.addf %1045, %1051 : vector<16x128xf32>
    %c14_1040 = arith.constant 14 : index
    %c0_1041 = arith.constant 0 : index
    %c0_1042 = arith.constant 0 : index
    %1053 = vector.load %arg9[%c14_1040, %c0_1041, %c0_1042] : memref<16x32x16xf32, #tpu.memory_space<vmem>>, vector<1x32x16xf32>
    %1054 = vector.shape_cast %1053 : vector<1x32x16xf32> to vector<32x16xf32>
    %cst_1043 = arith.constant dense<0.000000e+00> : vector<32x128xf32>
    %1055 = tpu.matmul %1054, %1052, %cst_1043 {dimension_numbers = #tpu.dot_dimension_numbers<[1], [0], [0], [1], [0, 0, 1, 1], [], []>} : vector<32x16xf32>, vector<16x128xf32>, vector<32x128xf32> -> vector<32x128xf32>
    %1056 = arith.addf %997, %1055 : vector<32x128xf32>
    %c0_1044 = arith.constant 0 : index
    %c0_1045 = arith.constant 0 : index
    %c15 = arith.constant 15 : index
    %c0_1046 = arith.constant 0 : index
    %1057 = vector.load %arg2[%c0_1044, %c0_1045, %c15, %c0_1046] : memref<1x8x16x128xf32, #tpu.memory_space<vmem>>, vector<1x1x1x128xf32>
    %1058 = vector.shape_cast %1057 : vector<1x1x1x128xf32> to vector<1x128xf32>
    %c0_1047 = arith.constant 0 : index
    %c0_1048 = arith.constant 0 : index
    %c0_1049 = arith.constant 0 : index
    %1059 = vector.load %arg12[%c0_1047, %c0_1048, %c0_1049] : memref<8x16x128xf32, #tpu.memory_space<vmem>>, vector<1x16x128xf32>
    %1060 = vector.shape_cast %1059 : vector<1x16x128xf32> to vector<16x128xf32>
    %1061 = vector.broadcast %1058 : vector<1x128xf32> to vector<16x128xf32>
    %1062 = arith.mulf %1061, %1060 : vector<16x128xf32>
    %c0_1050 = arith.constant 0 : index
    %c1_1051 = arith.constant 1 : index
    %c15_1052 = arith.constant 15 : index
    %c0_1053 = arith.constant 0 : index
    %1063 = vector.load %arg2[%c0_1050, %c1_1051, %c15_1052, %c0_1053] : memref<1x8x16x128xf32, #tpu.memory_space<vmem>>, vector<1x1x1x128xf32>
    %1064 = vector.shape_cast %1063 : vector<1x1x1x128xf32> to vector<1x128xf32>
    %c1_1054 = arith.constant 1 : index
    %c0_1055 = arith.constant 0 : index
    %c0_1056 = arith.constant 0 : index
    %1065 = vector.load %arg12[%c1_1054, %c0_1055, %c0_1056] : memref<8x16x128xf32, #tpu.memory_space<vmem>>, vector<1x16x128xf32>
    %1066 = vector.shape_cast %1065 : vector<1x16x128xf32> to vector<16x128xf32>
    %1067 = vector.broadcast %1064 : vector<1x128xf32> to vector<16x128xf32>
    %1068 = arith.mulf %1067, %1066 : vector<16x128xf32>
    %1069 = arith.addf %1062, %1068 : vector<16x128xf32>
    %c0_1057 = arith.constant 0 : index
    %c2_1058 = arith.constant 2 : index
    %c15_1059 = arith.constant 15 : index
    %c0_1060 = arith.constant 0 : index
    %1070 = vector.load %arg2[%c0_1057, %c2_1058, %c15_1059, %c0_1060] : memref<1x8x16x128xf32, #tpu.memory_space<vmem>>, vector<1x1x1x128xf32>
    %1071 = vector.shape_cast %1070 : vector<1x1x1x128xf32> to vector<1x128xf32>
    %c2_1061 = arith.constant 2 : index
    %c0_1062 = arith.constant 0 : index
    %c0_1063 = arith.constant 0 : index
    %1072 = vector.load %arg12[%c2_1061, %c0_1062, %c0_1063] : memref<8x16x128xf32, #tpu.memory_space<vmem>>, vector<1x16x128xf32>
    %1073 = vector.shape_cast %1072 : vector<1x16x128xf32> to vector<16x128xf32>
    %1074 = vector.broadcast %1071 : vector<1x128xf32> to vector<16x128xf32>
    %1075 = arith.mulf %1074, %1073 : vector<16x128xf32>
    %1076 = arith.addf %1069, %1075 : vector<16x128xf32>
    %c0_1064 = arith.constant 0 : index
    %c3_1065 = arith.constant 3 : index
    %c15_1066 = arith.constant 15 : index
    %c0_1067 = arith.constant 0 : index
    %1077 = vector.load %arg2[%c0_1064, %c3_1065, %c15_1066, %c0_1067] : memref<1x8x16x128xf32, #tpu.memory_space<vmem>>, vector<1x1x1x128xf32>
    %1078 = vector.shape_cast %1077 : vector<1x1x1x128xf32> to vector<1x128xf32>
    %c3_1068 = arith.constant 3 : index
    %c0_1069 = arith.constant 0 : index
    %c0_1070 = arith.constant 0 : index
    %1079 = vector.load %arg12[%c3_1068, %c0_1069, %c0_1070] : memref<8x16x128xf32, #tpu.memory_space<vmem>>, vector<1x16x128xf32>
    %1080 = vector.shape_cast %1079 : vector<1x16x128xf32> to vector<16x128xf32>
    %1081 = vector.broadcast %1078 : vector<1x128xf32> to vector<16x128xf32>
    %1082 = arith.mulf %1081, %1080 : vector<16x128xf32>
    %1083 = arith.addf %1076, %1082 : vector<16x128xf32>
    %c0_1071 = arith.constant 0 : index
    %c4_1072 = arith.constant 4 : index
    %c15_1073 = arith.constant 15 : index
    %c0_1074 = arith.constant 0 : index
    %1084 = vector.load %arg2[%c0_1071, %c4_1072, %c15_1073, %c0_1074] : memref<1x8x16x128xf32, #tpu.memory_space<vmem>>, vector<1x1x1x128xf32>
    %1085 = vector.shape_cast %1084 : vector<1x1x1x128xf32> to vector<1x128xf32>
    %c4_1075 = arith.constant 4 : index
    %c0_1076 = arith.constant 0 : index
    %c0_1077 = arith.constant 0 : index
    %1086 = vector.load %arg12[%c4_1075, %c0_1076, %c0_1077] : memref<8x16x128xf32, #tpu.memory_space<vmem>>, vector<1x16x128xf32>
    %1087 = vector.shape_cast %1086 : vector<1x16x128xf32> to vector<16x128xf32>
    %1088 = vector.broadcast %1085 : vector<1x128xf32> to vector<16x128xf32>
    %1089 = arith.mulf %1088, %1087 : vector<16x128xf32>
    %1090 = arith.addf %1083, %1089 : vector<16x128xf32>
    %c0_1078 = arith.constant 0 : index
    %c5_1079 = arith.constant 5 : index
    %c15_1080 = arith.constant 15 : index
    %c0_1081 = arith.constant 0 : index
    %1091 = vector.load %arg2[%c0_1078, %c5_1079, %c15_1080, %c0_1081] : memref<1x8x16x128xf32, #tpu.memory_space<vmem>>, vector<1x1x1x128xf32>
    %1092 = vector.shape_cast %1091 : vector<1x1x1x128xf32> to vector<1x128xf32>
    %c5_1082 = arith.constant 5 : index
    %c0_1083 = arith.constant 0 : index
    %c0_1084 = arith.constant 0 : index
    %1093 = vector.load %arg12[%c5_1082, %c0_1083, %c0_1084] : memref<8x16x128xf32, #tpu.memory_space<vmem>>, vector<1x16x128xf32>
    %1094 = vector.shape_cast %1093 : vector<1x16x128xf32> to vector<16x128xf32>
    %1095 = vector.broadcast %1092 : vector<1x128xf32> to vector<16x128xf32>
    %1096 = arith.mulf %1095, %1094 : vector<16x128xf32>
    %1097 = arith.addf %1090, %1096 : vector<16x128xf32>
    %c0_1085 = arith.constant 0 : index
    %c6_1086 = arith.constant 6 : index
    %c15_1087 = arith.constant 15 : index
    %c0_1088 = arith.constant 0 : index
    %1098 = vector.load %arg2[%c0_1085, %c6_1086, %c15_1087, %c0_1088] : memref<1x8x16x128xf32, #tpu.memory_space<vmem>>, vector<1x1x1x128xf32>
    %1099 = vector.shape_cast %1098 : vector<1x1x1x128xf32> to vector<1x128xf32>
    %c6_1089 = arith.constant 6 : index
    %c0_1090 = arith.constant 0 : index
    %c0_1091 = arith.constant 0 : index
    %1100 = vector.load %arg12[%c6_1089, %c0_1090, %c0_1091] : memref<8x16x128xf32, #tpu.memory_space<vmem>>, vector<1x16x128xf32>
    %1101 = vector.shape_cast %1100 : vector<1x16x128xf32> to vector<16x128xf32>
    %1102 = vector.broadcast %1099 : vector<1x128xf32> to vector<16x128xf32>
    %1103 = arith.mulf %1102, %1101 : vector<16x128xf32>
    %1104 = arith.addf %1097, %1103 : vector<16x128xf32>
    %c0_1092 = arith.constant 0 : index
    %c7_1093 = arith.constant 7 : index
    %c15_1094 = arith.constant 15 : index
    %c0_1095 = arith.constant 0 : index
    %1105 = vector.load %arg2[%c0_1092, %c7_1093, %c15_1094, %c0_1095] : memref<1x8x16x128xf32, #tpu.memory_space<vmem>>, vector<1x1x1x128xf32>
    %1106 = vector.shape_cast %1105 : vector<1x1x1x128xf32> to vector<1x128xf32>
    %c7_1096 = arith.constant 7 : index
    %c0_1097 = arith.constant 0 : index
    %c0_1098 = arith.constant 0 : index
    %1107 = vector.load %arg12[%c7_1096, %c0_1097, %c0_1098] : memref<8x16x128xf32, #tpu.memory_space<vmem>>, vector<1x16x128xf32>
    %1108 = vector.shape_cast %1107 : vector<1x16x128xf32> to vector<16x128xf32>
    %1109 = vector.broadcast %1106 : vector<1x128xf32> to vector<16x128xf32>
    %1110 = arith.mulf %1109, %1108 : vector<16x128xf32>
    %1111 = arith.addf %1104, %1110 : vector<16x128xf32>
    %c15_1099 = arith.constant 15 : index
    %c0_1100 = arith.constant 0 : index
    %c0_1101 = arith.constant 0 : index
    %1112 = vector.load %arg9[%c15_1099, %c0_1100, %c0_1101] : memref<16x32x16xf32, #tpu.memory_space<vmem>>, vector<1x32x16xf32>
    %1113 = vector.shape_cast %1112 : vector<1x32x16xf32> to vector<32x16xf32>
    %cst_1102 = arith.constant dense<0.000000e+00> : vector<32x128xf32>
    %1114 = tpu.matmul %1113, %1111, %cst_1102 {dimension_numbers = #tpu.dot_dimension_numbers<[1], [0], [0], [1], [0, 0, 1, 1], [], []>} : vector<32x16xf32>, vector<16x128xf32>, vector<32x128xf32> -> vector<32x128xf32>
    %1115 = arith.addf %1056, %1114 : vector<32x128xf32>
    %cst_1103 = arith.constant 0.000000e+00 : f32
    %1116 = vector.broadcast %cst_1103 : f32 to vector<32x128xf32>
    %1117 = arith.cmpf oge, %1115, %1116 : vector<32x128xf32>
    %cst_1104 = arith.constant 1.000000e-01 : f32
    %1118 = vector.broadcast %cst_1104 : f32 to vector<32x128xf32>
    %1119 = arith.mulf %1118, %1115 : vector<32x128xf32>
    %1120 = arith.select %1117, %1115, %1119 : vector<32x128xi1>, vector<32x128xf32>
    %c0_1105 = arith.constant 0 : index
    %c0_1106 = arith.constant 0 : index
    %c0_1107 = arith.constant 0 : index
    %1121 = vector.load %arg11[%c0_1105, %c0_1106, %c0_1107] : memref<1x32x128xf32, #tpu.memory_space<vmem>>, vector<1x32x128xf32>
    %1122 = vector.shape_cast %1121 : vector<1x32x128xf32> to vector<32x128xf32>
    %1123 = vector.shape_cast %1120 : vector<32x128xf32> to vector<1x32x128xf32>
    tpu.vector_store %arg11[%c0_1105, %c0_1106, %c0_1107], %1123 {strides = array<i32>} : memref<1x32x128xf32, #tpu.memory_space<vmem>>, vector<1x32x128xf32>,
    return
  }
  func.func @transform_0(%arg0: i32, %arg1: i32) -> (i32, i32, i32, i32) {
    %c0_i32 = arith.constant 0 : i32
    %c0_i32_0 = arith.constant 0 : i32
    %c0_i32_1 = arith.constant 0 : i32
    return %arg0, %c0_i32, %c0_i32_0, %arg1 : i32, i32, i32, i32
  }
  func.func @transform_1(%arg0: i32, %arg1: i32) -> (i32, i32) {
    %c0_i32 = arith.constant 0 : i32
    %c0_i32_0 = arith.constant 0 : i32
    %c0_i32_1 = arith.constant 0 : i32
    return %c0_i32, %c0_i32_0 : i32, i32
  }
  func.func @transform_2(%arg0: i32, %arg1: i32) -> (i32, i32) {
    %c0_i32 = arith.constant 0 : i32
    %c0_i32_0 = arith.constant 0 : i32
    %c0_i32_1 = arith.constant 0 : i32
    return %c0_i32, %c0_i32_0 : i32, i32
  }
  func.func @transform_3(%arg0: i32, %arg1: i32) -> (i32, i32) {
    %c0_i32 = arith.constant 0 : i32
    %c0_i32_0 = arith.constant 0 : i32
    %c0_i32_1 = arith.constant 0 : i32
    return %c0_i32, %c0_i32_0 : i32, i32
  }
  func.func @transform_4(%arg0: i32, %arg1: i32) -> (i32, i32) {
    %c0_i32 = arith.constant 0 : i32
    %c0_i32_0 = arith.constant 0 : i32
    %c0_i32_1 = arith.constant 0 : i32
    return %c0_i32, %c0_i32_0 : i32, i32
  }
  func.func @transform_5(%arg0: i32, %arg1: i32) -> (i32, i32) {
    %c0_i32 = arith.constant 0 : i32
    %c0_i32_0 = arith.constant 0 : i32
    %c0_i32_1 = arith.constant 0 : i32
    return %c0_i32, %c0_i32_0 : i32, i32
  }
  func.func @transform_6(%arg0: i32, %arg1: i32) -> (i32, i32) {
    %c0_i32 = arith.constant 0 : i32
    %c0_i32_0 = arith.constant 0 : i32
    %c0_i32_1 = arith.constant 0 : i32
    return %c0_i32, %c0_i32_0 : i32, i32
  }
  func.func @transform_7(%arg0: i32, %arg1: i32) -> (i32, i32, i32) {
    %c0_i32 = arith.constant 0 : i32
    %c0_i32_0 = arith.constant 0 : i32
    %c0_i32_1 = arith.constant 0 : i32
    %c0_i32_2 = arith.constant 0 : i32
    return %c0_i32, %c0_i32_0, %c0_i32_1 : i32, i32, i32
  }
  func.func @transform_8(%arg0: i32, %arg1: i32) -> (i32, i32) {
    %c0_i32 = arith.constant 0 : i32
    %c0_i32_0 = arith.constant 0 : i32
    %c0_i32_1 = arith.constant 0 : i32
    return %c0_i32, %c0_i32_0 : i32, i32
  }
  func.func @transform_9(%arg0: i32, %arg1: i32) -> (i32, i32, i32) {
    %c0_i32 = arith.constant 0 : i32
    %c0_i32_0 = arith.constant 0 : i32
    return %arg0, %c0_i32, %arg1 : i32, i32, i32
  }
}

</mosaic_0001>

<llo_original>
// kernel: tpu_custom_call.1
$region0: #{tpu_custom_call.1}
  #allocation0 [shape = 'u32[]', space=smem, size = 0x4, offset = 0x4, fixed_abs, tag = 'smem constant byte address 0x4 - core index']
  #allocation1 [shape = 'u32[144,128]{1,0:T(1,128)}', space=vmem, size = 0x12000, scoped, tag = 'internal scratch']
  #allocation2 [shape = 'f32[8,16,128]{2,1,0:T(8,128)}', space=vmem, size = 0x10000, scoped, tag = 'scratch operand']
  %s0 = inlined_call_operand.vmem [shape: f32[2,8,16,128], index: 0, kind: input, shape index: {}]
  %s1 = inlined_call_operand.vmem [shape: f32[8,16], index: 1, kind: input, shape index: {}]
  %s2 = inlined_call_operand.vmem [shape: f32[8,1], index: 2, kind: input, shape index: {}]
  %s3 = inlined_call_operand.vmem [shape: f32[8,8], index: 3, kind: input, shape index: {}]
  %s4 = inlined_call_operand.vmem [shape: f32[8,1], index: 4, kind: input, shape index: {}]
  %s5 = inlined_call_operand.vmem [shape: f32[16,8], index: 5, kind: input, shape index: {}]
  %s6 = inlined_call_operand.vmem [shape: f32[16,1], index: 6, kind: input, shape index: {}]
  %s7 = inlined_call_operand.vmem [shape: f32[16,32,16], index: 7, kind: input, shape index: {}]
  %s8 = inlined_call_operand.vmem [shape: f32[32,1], index: 8, kind: input, shape index: {}]
  %s9 = inlined_call_operand.hbm [shape: f32[2,32,128], index: 9, kind: output, shape index: {}]
  %s10 = sld [smem:[#allocation0]]
  $region69: #{tpu_custom_call.1} parent=0
    _
  %s12 = ssub.s32 1, %s10
  %s13 = scalar_select 0, %s12, %s10
  $region1: #{tpu_custom_call.1} parent=0
    #allocation3 [shape = 'u8[32768]{0}', space=vmem, size = 0x8000, scoped, tag = 'output window, operand 0']
    #allocation4 [shape = 's32[2]{0}', space=sflag, size = 0x8, scoped, tag = 'scoped memory for tpu_custom_call.1']
    %14 = vsyncpa [#allocation4], 0
    %s15 = scalar_lea.sflag [#allocation4], 1
    %16 = vsyncpa %s15, 0
    loop: start=0, step=1, limit=4
    $region2: #{tpu_custom_call.1} parent=1 // loop_pre_header
      _
    $region3: #{tpu_custom_call.1} parent=1 // loop_header
      %s18 = sphi 0, %s22
      %p19 = scmp.ge.s32.totalorder %s18, 4
      %s25 = sphi 0, %s37
      %s26 = sphi 0, %s33
      %s27 = sphi 0, %s25
      %s28 = sphi 0, %s26
      %s29 = sphi 0, %s27
      %s30 = sphi 0, %s28
      %s42 = sphi 0, %s44
      %s45 = sphi 0, %s42
      %s46 = sphi 0, %s45
      %s62 = sphi 0, %s46
      %s66 = sphi 0, %s66
      %s68 = sphi 0, %s66
      %s69 = sphi 0, %s68
      %s83 = sphi 0, %s69
      %s87 = sphi 0, %s87
      %s89 = sphi 0, %s87
      %s90 = sphi 0, %s89
      %s104 = sphi 0, %s90
      %s108 = sphi 0, %s108
      %s110 = sphi 0, %s108
      %s111 = sphi 0, %s110
      %s125 = sphi 0, %s111
      %s129 = sphi 0, %s129
      %s131 = sphi 0, %s129
      %s132 = sphi 0, %s131
      %s146 = sphi 0, %s132
      %s150 = sphi 0, %s150
      %s152 = sphi 0, %s150
      %s153 = sphi 0, %s152
      %s167 = sphi 0, %s153
      %s171 = sphi 0, %s171
      %s173 = sphi 0, %s171
      %s174 = sphi 0, %s173
      %s188 = sphi 0, %s174
      %s192 = sphi 0, %s192
      %s194 = sphi 0, %s192
      %s195 = sphi 0, %s194
      %s209 = sphi 0, %s195
      %s213 = sphi 0, %s213
      %s215 = sphi 0, %s213
      %s216 = sphi 0, %s215
      %s230 = sphi 0, %s216
      %s238 = sphi 0, %s240
      %s241 = sphi 0, %s238
      %s242 = sphi 0, %s241
      %s258 = sphi 0, %s242
    $region4: #{tpu_custom_call.1} parent=1 // loop_header_branch
      %21 = sbr.rel (%p19) target = $region8
    $region5: #{tpu_custom_call.1} parent=1 // loop_body
      %s23 = ssub.s32 %s18, 1
      %s24 = ssub.s32 %s18, 2
      %s31 = sadd.s32 1, %s26
      %p32 = scmp.ge.s32.totalorder %s31, 1
      %s33 = scalar_select %p32, 0, %s31
      %s34 = sadd.s32 1, %s25
      %s35 = scalar_select %p32, %s34, %s25
      %p36 = scmp.ge.s32.totalorder %s35, 2
      %s37 = scalar_select %p36, 0, %s35
      %s38 = ssub.s32 %s25, %s37
      %s39 = ssub.s32 %s26, %s33
      %s40 = sor.u32 %s38, %s39
      %p41 = scmp.eq.s32.totalorder %s40, 0
      %s43 = sadd.s32 %s42, 1
      %s44 = scalar_select %p41, %s42, %s43
      %p47 = pneg %p41
      %p48 = scmp.eq.s32.totalorder %s18, 1
      %p49 = por %p47, %p48
      %p50 = scmp.ne.s32.totalorder %s42, %s45
      %p51 = scmp.eq.s32.totalorder %s18, 0
      %p52 = por %p50, %p51
      %p53 = scmp.ne.s32.totalorder %s42, %s45
      %p54 = scmp.eq.s32.totalorder %s23, 1
      %p55 = por %p53, %p54
      %p56 = scmp.ne.s32.totalorder %s45, %s46
      %p57 = scmp.eq.s32.totalorder %s23, 0
      %p58 = por %p56, %p57
      %p59 = scmp.ne.s32.totalorder %s45, %s46
      %p60 = scmp.eq.s32.totalorder %s24, 1
      %p61 = por %p59, %p60
      %p63 = scmp.ne.s32.totalorder %s46, %s62
      %p64 = scmp.eq.s32.totalorder %s24, 0
      %p65 = por %p63, %p64
      %s67 = sadd.s32 %s66, 1
      %p70 = scmp.eq.s32.totalorder %s18, 1
      %p71 = scmp.ne.s32.totalorder %s66, %s68
      %p72 = scmp.eq.s32.totalorder %s18, 0
      %p73 = por %p71, %p72
      %p74 = scmp.ne.s32.totalorder %s66, %s68
      %p75 = scmp.eq.s32.totalorder %s23, 1
      %p76 = por %p74, %p75
      %p77 = scmp.ne.s32.totalorder %s68, %s69
      %p78 = scmp.eq.s32.totalorder %s23, 0
      %p79 = por %p77, %p78
      %p80 = scmp.ne.s32.totalorder %s68, %s69
      %p81 = scmp.eq.s32.totalorder %s24, 1
      %p82 = por %p80, %p81
      %p84 = scmp.ne.s32.totalorder %s69, %s83
      %p85 = scmp.eq.s32.totalorder %s24, 0
      %p86 = por %p84, %p85
      %s88 = sadd.s32 %s87, 1
      %p91 = scmp.eq.s32.totalorder %s18, 1
      %p92 = scmp.ne.s32.totalorder %s87, %s89
      %p93 = scmp.eq.s32.totalorder %s18, 0
      %p94 = por %p92, %p93
      %p95 = scmp.ne.s32.totalorder %s87, %s89
      %p96 = scmp.eq.s32.totalorder %s23, 1
      %p97 = por %p95, %p96
      %p98 = scmp.ne.s32.totalorder %s89, %s90
      %p99 = scmp.eq.s32.totalorder %s23, 0
      %p100 = por %p98, %p99
      %p101 = scmp.ne.s32.totalorder %s89, %s90
      %p102 = scmp.eq.s32.totalorder %s24, 1
      %p103 = por %p101, %p102
      %p105 = scmp.ne.s32.totalorder %s90, %s104
      %p106 = scmp.eq.s32.totalorder %s24, 0
      %p107 = por %p105, %p106
      %s109 = sadd.s32 %s108, 1
      %p112 = scmp.eq.s32.totalorder %s18, 1
      %p113 = scmp.ne.s32.totalorder %s108, %s110
      %p114 = scmp.eq.s32.totalorder %s18, 0
      %p115 = por %p113, %p114
      %p116 = scmp.ne.s32.totalorder %s108, %s110
      %p117 = scmp.eq.s32.totalorder %s23, 1
      %p118 = por %p116, %p117
      %p119 = scmp.ne.s32.totalorder %s110, %s111
      %p120 = scmp.eq.s32.totalorder %s23, 0
      %p121 = por %p119, %p120
      %p122 = scmp.ne.s32.totalorder %s110, %s111
      %p123 = scmp.eq.s32.totalorder %s24, 1
      %p124 = por %p122, %p123
      %p126 = scmp.ne.s32.totalorder %s111, %s125
      %p127 = scmp.eq.s32.totalorder %s24, 0
      %p128 = por %p126, %p127
      %s130 = sadd.s32 %s129, 1
      %p133 = scmp.eq.s32.totalorder %s18, 1
      %p134 = scmp.ne.s32.totalorder %s129, %s131
      %p135 = scmp.eq.s32.totalorder %s18, 0
      %p136 = por %p134, %p135
      %p137 = scmp.ne.s32.totalorder %s129, %s131
      %p138 = scmp.eq.s32.totalorder %s23, 1
      %p139 = por %p137, %p138
      %p140 = scmp.ne.s32.totalorder %s131, %s132
      %p141 = scmp.eq.s32.totalorder %s23, 0
      %p142 = por %p140, %p141
      %p143 = scmp.ne.s32.totalorder %s131, %s132
      %p144 = scmp.eq.s32.totalorder %s24, 1
      %p145 = por %p143, %p144
      %p147 = scmp.ne.s32.totalorder %s132, %s146
      %p148 = scmp.eq.s32.totalorder %s24, 0
      %p149 = por %p147, %p148
      %s151 = sadd.s32 %s150, 1
      %p154 = scmp.eq.s32.totalorder %s18, 1
      %p155 = scmp.ne.s32.totalorder %s150, %s152
      %p156 = scmp.eq.s32.totalorder %s18, 0
      %p157 = por %p155, %p156
      %p158 = scmp.ne.s32.totalorder %s150, %s152
      %p159 = scmp.eq.s32.totalorder %s23, 1
      %p160 = por %p158, %p159
      %p161 = scmp.ne.s32.totalorder %s152, %s153
      %p162 = scmp.eq.s32.totalorder %s23, 0
      %p163 = por %p161, %p162
      %p164 = scmp.ne.s32.totalorder %s152, %s153
      %p165 = scmp.eq.s32.totalorder %s24, 1
      %p166 = por %p164, %p165
      %p168 = scmp.ne.s32.totalorder %s153, %s167
      %p169 = scmp.eq.s32.totalorder %s24, 0
      %p170 = por %p168, %p169
      %s172 = sadd.s32 %s171, 1
      %p175 = scmp.eq.s32.totalorder %s18, 1
      %p176 = scmp.ne.s32.totalorder %s171, %s173
      %p177 = scmp.eq.s32.totalorder %s18, 0
      %p178 = por %p176, %p177
      %p179 = scmp.ne.s32.totalorder %s171, %s173
      %p180 = scmp.eq.s32.totalorder %s23, 1
      %p181 = por %p179, %p180
      %p182 = scmp.ne.s32.totalorder %s173, %s174
      %p183 = scmp.eq.s32.totalorder %s23, 0
      %p184 = por %p182, %p183
      %p185 = scmp.ne.s32.totalorder %s173, %s174
      %p186 = scmp.eq.s32.totalorder %s24, 1
      %p187 = por %p185, %p186
      %p189 = scmp.ne.s32.totalorder %s174, %s188
      %p190 = scmp.eq.s32.totalorder %s24, 0
      %p191 = por %p189, %p190
      %s193 = sadd.s32 %s192, 1
      %p196 = scmp.eq.s32.totalorder %s18, 1
      %p197 = scmp.ne.s32.totalorder %s192, %s194
      %p198 = scmp.eq.s32.totalorder %s18, 0
      %p199 = por %p197, %p198
      %p200 = scmp.ne.s32.totalorder %s192, %s194
      %p201 = scmp.eq.s32.totalorder %s23, 1
      %p202 = por %p200, %p201
      %p203 = scmp.ne.s32.totalorder %s194, %s195
      %p204 = scmp.eq.s32.totalorder %s23, 0
      %p205 = por %p203, %p204
      %p206 = scmp.ne.s32.totalorder %s194, %s195
      %p207 = scmp.eq.s32.totalorder %s24, 1
      %p208 = por %p206, %p207
      %p210 = scmp.ne.s32.totalorder %s195, %s209
      %p211 = scmp.eq.s32.totalorder %s24, 0
      %p212 = por %p210, %p211
      %s214 = sadd.s32 %s213, 1
      %p217 = scmp.eq.s32.totalorder %s18, 1
      %p218 = scmp.ne.s32.totalorder %s213, %s215
      %p219 = scmp.eq.s32.totalorder %s18, 0
      %p220 = por %p218, %p219
      %p221 = scmp.ne.s32.totalorder %s213, %s215
      %p222 = scmp.eq.s32.totalorder %s23, 1
      %p223 = por %p221, %p222
      %p224 = scmp.ne.s32.totalorder %s215, %s216
      %p225 = scmp.eq.s32.totalorder %s23, 0
      %p226 = por %p224, %p225
      %p227 = scmp.ne.s32.totalorder %s215, %s216
      %p228 = scmp.eq.s32.totalorder %s24, 1
      %p229 = por %p227, %p228
      %p231 = scmp.ne.s32.totalorder %s216, %s230
      %p232 = scmp.eq.s32.totalorder %s24, 0
      %p233 = por %p231, %p232
      %s234 = ssub.s32 %s25, %s37
      %s235 = ssub.s32 %s26, %s33
      %s236 = sor.u32 %s234, %s235
      %p237 = scmp.eq.s32.totalorder %s236, 0
      %s239 = sadd.s32 %s238, 1
      %s240 = scalar_select %p237, %s238, %s239
      %p243 = pneg %p237
      %p244 = scmp.eq.s32.totalorder %s18, 1
      %p245 = por %p243, %p244
      %p246 = scmp.ne.s32.totalorder %s238, %s241
      %p247 = scmp.eq.s32.totalorder %s18, 0
      %p248 = por %p246, %p247
      %p249 = scmp.ne.s32.totalorder %s238, %s241
      %p250 = scmp.eq.s32.totalorder %s23, 1
      %p251 = por %p249, %p250
      %p252 = scmp.ne.s32.totalorder %s241, %s242
      %p253 = scmp.eq.s32.totalorder %s23, 0
      %p254 = por %p252, %p253
      %p255 = scmp.ne.s32.totalorder %s241, %s242
      %p256 = scmp.eq.s32.totalorder %s24, 1
      %p257 = por %p255, %p256
      %p259 = scmp.ne.s32.totalorder %s242, %s258
      %p260 = scmp.eq.s32.totalorder %s24, 0
      %p261 = por %p259, %p260
      %p262 = scmp.le.s32.totalorder 1, %s18
      %p263 = scmp.lt.s32.totalorder %s18, 3
      %p264 = pnand %p262, %p263
      %p265 = pneg %p264
      // Predicated region
      $region9: #{tpu_custom_call.1} parent=5 // pred_check
        _
      $region10: #{tpu_custom_call.1} parent=5 // pred_check_branch
        %267 = sbr.rel (%p264) target = $region12
      $region11: #{tpu_custom_call.1} parent=5 // pred_region
        %s268 = ssub.s32 %s18, 1
        // Predicated region
        $region13: #{tpu_custom_call.1} parent=11 // pred_check
          %p269 = pneg %p79
        $region14: #{tpu_custom_call.1} parent=11 // pred_check_branch
          %271 = sbr.rel (%p269) target = $region16
        $region15: #{tpu_custom_call.1} parent=11 // pred_region
          _
        $region16: #{tpu_custom_call.1} parent=11 // pred_fallthru
          _
        // Predicated region
        $region17: #{tpu_custom_call.1} parent=11 // pred_check
          %p272 = pneg %p100
        $region18: #{tpu_custom_call.1} parent=11 // pred_check_branch
          %274 = sbr.rel (%p272) target = $region20
        $region19: #{tpu_custom_call.1} parent=11 // pred_region
          _
        $region20: #{tpu_custom_call.1} parent=11 // pred_fallthru
          _
        // Predicated region
        $region21: #{tpu_custom_call.1} parent=11 // pred_check
          %p275 = pneg %p121
        $region22: #{tpu_custom_call.1} parent=11 // pred_check_branch
          %277 = sbr.rel (%p275) target = $region24
        $region23: #{tpu_custom_call.1} parent=11 // pred_region
          _
        $region24: #{tpu_custom_call.1} parent=11 // pred_fallthru
          _
        // Predicated region
        $region25: #{tpu_custom_call.1} parent=11 // pred_check
          %p278 = pneg %p142
        $region26: #{tpu_custom_call.1} parent=11 // pred_check_branch
          %280 = sbr.rel (%p278) target = $region28
        $region27: #{tpu_custom_call.1} parent=11 // pred_region
          _
        $region28: #{tpu_custom_call.1} parent=11 // pred_fallthru
          _
        // Predicated region
        $region29: #{tpu_custom_call.1} parent=11 // pred_check
          %p281 = pneg %p163
        $region30: #{tpu_custom_call.1} parent=11 // pred_check_branch
          %283 = sbr.rel (%p281) target = $region32
        $region31: #{tpu_custom_call.1} parent=11 // pred_region
          _
        $region32: #{tpu_custom_call.1} parent=11 // pred_fallthru
          _
        // Predicated region
        $region33: #{tpu_custom_call.1} parent=11 // pred_check
          %p284 = pneg %p184
        $region34: #{tpu_custom_call.1} parent=11 // pred_check_branch
          %286 = sbr.rel (%p284) target = $region36
        $region35: #{tpu_custom_call.1} parent=11 // pred_region
          _
        $region36: #{tpu_custom_call.1} parent=11 // pred_fallthru
          _
        // Predicated region
        $region37: #{tpu_custom_call.1} parent=11 // pred_check
          %p287 = pneg %p205
        $region38: #{tpu_custom_call.1} parent=11 // pred_check_branch
          %289 = sbr.rel (%p287) target = $region40
        $region39: #{tpu_custom_call.1} parent=11 // pred_region
          _
        $region40: #{tpu_custom_call.1} parent=11 // pred_fallthru
          _
        // Predicated region
        $region41: #{tpu_custom_call.1} parent=11 // pred_check
          %p290 = pneg %p226
        $region42: #{tpu_custom_call.1} parent=11 // pred_check_branch
          %292 = sbr.rel (%p290) target = $region44
        $region43: #{tpu_custom_call.1} parent=11 // pred_region
          _
        $region44: #{tpu_custom_call.1} parent=11 // pred_fallthru
          _
      $region12: #{tpu_custom_call.1} parent=5 // pred_fallthru
        _
      %p293 = scmp.lt.s32.totalorder %s18, 2
      // Predicated region
      $region45: #{tpu_custom_call.1} parent=5 // pred_check
        %p294 = pneg %p293
      $region46: #{tpu_custom_call.1} parent=5 // pred_check_branch
        %296 = sbr.rel (%p294) target = $region48
      $region47: #{tpu_custom_call.1} parent=5 // pred_region
        // Predicated region
        $region49: #{tpu_custom_call.1} parent=47 // pred_check
          %p297 = pneg %p52
        $region50: #{tpu_custom_call.1} parent=47 // pred_check_branch
          %299 = sbr.rel (%p297) target = $region52
        $region51: #{tpu_custom_call.1} parent=47 // pred_region
          %p300 = scmp.lt.s32.totalorder %s25, 1
          %s301 = scalar_select %p300, %s25, 1
          %p302 = scmp.lt.s32.totalorder %s26, 0
          %s303 = scalar_select %p302, %s26, 0
          %s304 = smul.addr %s301, 16
          %s305 = sadd.s32 %s303, %s304
          %s306 = smul.addr %s305, 8
          %s307 = scalar_lea.vmem %s0, %s306
        $region52: #{tpu_custom_call.1} parent=47 // pred_fallthru
          _
      $region48: #{tpu_custom_call.1} parent=5 // pred_fallthru
        _
      %p308 = scmp.le.s32.totalorder 1, %s18
      %p309 = scmp.lt.s32.totalorder %s18, 3
      %p310 = pnand %p308, %p309
      %p311 = pneg %p310
      // Predicated region
      $region53: #{tpu_custom_call.1} parent=5 // pred_check
        _
      $region54: #{tpu_custom_call.1} parent=5 // pred_check_branch
        %313 = sbr.rel (%p310) target = $region56
      $region55: #{tpu_custom_call.1} parent=5 // pred_region
        %s314 = ssub.s32 %s18, 1
        %p315 = scmp.lt.s32.totalorder %s27, 1
        %s316 = scalar_select %p315, %s27, 1
        %p317 = scmp.lt.s32.totalorder %s28, 0
        %s318 = scalar_select %p317, %s28, 0
        %s319 = smul.addr %s316, 16
        %s320 = sadd.s32 %s318, %s319
        %s321 = smul.addr %s320, 8
        %s322 = scalar_lea.vmem %s0, %s321
        %p323 = pneg %p58
        %p324 = pneg %p55
        %p325 = pneg %p79
        %p326 = pneg %p76
        %p327 = pneg %p100
        %p328 = pneg %p97
        %p329 = pneg %p121
        %p330 = pneg %p118
        %p331 = pneg %p142
        %p332 = pneg %p139
        %p333 = pneg %p163
        %p334 = pneg %p160
        %p335 = pneg %p184
        %p336 = pneg %p181
        %p337 = pneg %p205
        %p338 = pneg %p202
        %p339 = pneg %p226
        %p340 = pneg %p223
        %p341 = pneg %p254
        %p342 = pneg %p251
        %s343 = sand.u32 %s241, 1
        %s344 = scalar_lea.sflag [#allocation4], %s343
        %s345 = sand.u32 %s241, 1
        %s346 = smul.addr %s345, 32
        %s347 = scalar_lea.vmem [#allocation3], %s346
        %p348 = scmp.lt.s32.totalorder %s27, 1
        %s349 = scalar_select %p348, %s27, 1
        %p350 = scmp.lt.s32.totalorder %s28, 0
        %s351 = scalar_select %p350, %s28, 0
        %s352 = smul.addr %s349, 16
        %s353 = sadd.s32 %s351, %s352
        %s354 = smul.addr %s353, 8
        %s355 = scalar_lea.vmem %s0, %s354
        %v356 = vld [vmem:[%s2] sm:$0xff]
        %358 = vset.pattern.permute.xlu0 0
        %359 = vperm.xlu0 %358, %v356
        %v360 = vpop.permute.xlu0 %359
        %v362 = vld [vmem:[%s4] sm:$0xff]
        %364 = vset.pattern.permute.xlu0 0
        %365 = vperm.xlu0 %364, %v362
        %v366 = vpop.permute.xlu0 %365
        %v368 = vld [vmem:[%s6] sm:$0xff]
        %v369 = vld [vmem:[%s6 + $0x8] sm:$0xff]
        %371 = vset.pattern.permute.xlu0 0
        %372 = vperm.xlu0 %371, %v368
        %v373 = vpop.permute.xlu0 %372
        %376 = vset.pattern.permute.xlu0 0
        %377 = vperm.xlu0 %376, %v369
        %v378 = vpop.permute.xlu0 %377
        %v380 = vld [vmem:[%s355] sm:$0xff]
        %v381 = vld [vmem:[%s355 + $0x8] sm:$0xff]
        %v382 = vld [vmem:[%s1] sm:$0xff]
        %vm383 = vcmask 130048
        %v385 = vsel %vm383, %v382, 0
        %387 = vmatprep.subr.mxu0 0.0
        %388 = vmatpush1.msra.mxu0 %v380
        %389 = vmatprep.subr.mxu0 0.0
        %390 = vmatpush1.msra.mxu0 %v381
        %391 = vmatprep.subr.mxu0 0.0
        %392 = vmatpush1.msra.mxu0 0.0
        %393 = vmatprep.subr.mxu0 0.0
        %394 = vmatpush1.msra.mxu0 0.0
        %395 = vmatprep.subr.mxu0 0.0
        %396 = vmatpush1.msra.mxu0 0.0
        %397 = vmatprep.subr.mxu0 0.0
        %398 = vmatpush1.msra.mxu0 0.0
        %399 = vmatprep.subr.mxu0 0.0
        %400 = vmatpush1.msra.mxu0 0.0
        %401 = vmatprep.subr.mxu0 0.0
        %402 = vmatpush1.msra.mxu0 0.0
        %403 = vmatprep.subr.mxu0 0.0
        %404 = vmatpush1.msra.mxu0 0.0
        %405 = vmatprep.subr.mxu0 0.0
        %406 = vmatpush1.msra.mxu0 0.0
        %407 = vmatprep.subr.mxu0 0.0
        %408 = vmatpush1.msra.mxu0 0.0
        %409 = vmatprep.subr.mxu0 0.0
        %410 = vmatpush1.msra.mxu0 0.0
        %411 = vmatprep.subr.mxu0 0.0
        %412 = vmatpush1.msra.mxu0 0.0
        %413 = vmatprep.subr.mxu0 0.0
        %414 = vmatpush1.msra.mxu0 0.0
        %415 = vmatprep.subr.mxu0 0.0
        %416 = vmatpush1.msra.mxu0 0.0
        %417 = vmatprep.subr.mxu0 0.0
        %418 = vmatpush1.msra.mxu0 0.0
        %419 = vmatprep.subr.mxu0 0.0
        %420 = vmatpush1.msra.mxu0 0.0
        %421 = vmatprep.subr.mxu0 0.0
        %422 = vmatpush1.msra.mxu0 0.0
        %423 = vmatprep.subr.mxu0 0.0
        %424 = vmatpush1.msra.mxu0 0.0
        %425 = vmatprep.subr.mxu0 0.0
        %426 = vmatpush1.msra.mxu0 0.0
        %427 = vmatprep.subr.mxu0 0.0
        %428 = vmatpush1.msra.mxu0 0.0
        %429 = vmatprep.subr.mxu0 0.0
        %430 = vmatpush1.msra.mxu0 0.0
        %431 = vmatprep.subr.mxu0 0.0
        %432 = vmatpush1.msra.mxu0 0.0
        %433 = vmatprep.subr.mxu0 0.0
        %434 = vmatpush1.msra.mxu0 0.0
        %435 = vmatprep.subr.mxu0 0.0
        %436 = vmatpush1.msra.mxu0 0.0
        %437 = vmatprep.subr.mxu0 0.0
        %438 = vmatpush1.msra.mxu0 0.0
        %439 = vmatprep.subr.mxu0 0.0
        %440 = vmatpush1.msra.mxu0 0.0
        %441 = vmatprep.subr.mxu0 0.0
        %442 = vmatpush1.msra.mxu0 0.0
        %443 = vmatprep.subr.mxu0 0.0
        %444 = vmatpush1.msra.mxu0 0.0
        %445 = vmatprep.subr.mxu0 0.0
        %446 = vmatpush1.msra.mxu0 0.0
        %447 = vmatprep.subr.mxu0 0.0
        %448 = vmatpush1.msra.mxu0 0.0
        %449 = vmatprep.subr.mxu0 0.0
        %450 = vmatpush1.msra.mxu0 0.0
        %451 = vmatprep.mubr.f32.mxu0 0.0
        %452 = vmatmul.mubr.f32.gmra.mrb[0].mxu0 %v385
        %v453 = vpop.f32.mrb[0].mxu0
        %v454 = vadd.f32 %v360, %v453
        %v455 = vpop.f32.mrb[0].mxu0
        %456 = vdwg.mxu0
        %v457 = vmax.f32 %v454, 0.0
        %v458 = vld [vmem:[%s3] sm:$0xff]
        %vm459 = vcmask 64512
        %v461 = vsel %vm459, %v458, 0
        %463 = vmatprep.subr.mxu0 0.0
        %464 = vmatpush1.msra.mxu0 %v457
        %465 = vmatprep.subr.mxu0 0.0
        %466 = vmatpush1.msra.mxu0 0.0
        %467 = vmatprep.subr.mxu0 0.0
        %468 = vmatpush1.msra.mxu0 0.0
        %469 = vmatprep.subr.mxu0 0.0
        %470 = vmatpush1.msra.mxu0 0.0
        %471 = vmatprep.subr.mxu0 0.0
        %472 = vmatpush1.msra.mxu0 0.0
        %473 = vmatprep.subr.mxu0 0.0
        %474 = vmatpush1.msra.mxu0 0.0
        %475 = vmatprep.subr.mxu0 0.0
        %476 = vmatpush1.msra.mxu0 0.0
        %477 = vmatprep.subr.mxu0 0.0
        %478 = vmatpush1.msra.mxu0 0.0
        %479 = vmatprep.subr.mxu0 0.0
        %480 = vmatpush1.msra.mxu0 0.0
        %481 = vmatprep.subr.mxu0 0.0
        %482 = vmatpush1.msra.mxu0 0.0
        %483 = vmatprep.subr.mxu0 0.0
        %484 = vmatpush1.msra.mxu0 0.0
        %485 = vmatprep.subr.mxu0 0.0
        %486 = vmatpush1.msra.mxu0 0.0
        %487 = vmatprep.subr.mxu0 0.0
        %488 = vmatpush1.msra.mxu0 0.0
        %489 = vmatprep.subr.mxu0 0.0
        %490 = vmatpush1.msra.mxu0 0.0
        %491 = vmatprep.subr.mxu0 0.0
        %492 = vmatpush1.msra.mxu0 0.0
        %493 = vmatprep.subr.mxu0 0.0
        %494 = vmatpush1.msra.mxu0 0.0
        %495 = vmatprep.subr.mxu0 0.0
        %496 = vmatpush1.msra.mxu0 0.0
        %497 = vmatprep.subr.mxu0 0.0
        %498 = vmatpush1.msra.mxu0 0.0
        %499 = vmatprep.subr.mxu0 0.0
        %500 = vmatpush1.msra.mxu0 0.0
        %501 = vmatprep.subr.mxu0 0.0
        %502 = vmatpush1.msra.mxu0 0.0
        %503 = vmatprep.subr.mxu0 0.0
        %504 = vmatpush1.msra.mxu0 0.0
        %505 = vmatprep.subr.mxu0 0.0
        %506 = vmatpush1.msra.mxu0 0.0
        %507 = vmatprep.subr.mxu0 0.0
        %508 = vmatpush1.msra.mxu0 0.0
        %509 = vmatprep.subr.mxu0 0.0
        %510 = vmatpush1.msra.mxu0 0.0
        %511 = vmatprep.subr.mxu0 0.0
        %512 = vmatpush1.msra.mxu0 0.0
        %513 = vmatprep.subr.mxu0 0.0
        %514 = vmatpush1.msra.mxu0 0.0
        %515 = vmatprep.subr.mxu0 0.0
        %516 = vmatpush1.msra.mxu0 0.0
        %517 = vmatprep.subr.mxu0 0.0
        %518 = vmatpush1.msra.mxu0 0.0
        %519 = vmatprep.subr.mxu0 0.0
        %520 = vmatpush1.msra.mxu0 0.0
        %521 = vmatprep.subr.mxu0 0.0
        %522 = vmatpush1.msra.mxu0 0.0
        %523 = vmatprep.subr.mxu0 0.0
        %524 = vmatpush1.msra.mxu0 0.0
        %525 = vmatprep.subr.mxu0 0.0
        %526 = vmatpush1.msra.mxu0 0.0
        %527 = vmatprep.mubr.f32.mxu0 0.0
        %528 = vmatmul.mubr.f32.gmra.mrb[0].mxu0 %v461
        %v529 = vpop.f32.mrb[0].mxu0
        %v530 = vadd.f32 %v366, %v529
        %v531 = vpop.f32.mrb[0].mxu0
        %532 = vdwg.mxu0
        %v533 = vmax.f32 %v530, 0.0
        %v534 = vld [vmem:[%s5] sm:$0xff]
        %v535 = vld [vmem:[%s5 + $0x8] sm:$0xff]
        %v537 = vsel %vm459, %v534, 0
        %v540 = vsel %vm459, %v535, 0
        %542 = vmatprep.subr.mxu0 0.0
        %543 = vmatpush1.msra.mxu0 %v533
        %544 = vmatprep.subr.mxu0 0.0
        %545 = vmatpush1.msra.mxu0 0.0
        %546 = vmatprep.subr.mxu0 0.0
        %547 = vmatpush1.msra.mxu0 0.0
        %548 = vmatprep.subr.mxu0 0.0
        %549 = vmatpush1.msra.mxu0 0.0
        %550 = vmatprep.subr.mxu0 0.0
        %551 = vmatpush1.msra.mxu0 0.0
        %552 = vmatprep.subr.mxu0 0.0
        %553 = vmatpush1.msra.mxu0 0.0
        %554 = vmatprep.subr.mxu0 0.0
        %555 = vmatpush1.msra.mxu0 0.0
        %556 = vmatprep.subr.mxu0 0.0
        %557 = vmatpush1.msra.mxu0 0.0
        %558 = vmatprep.subr.mxu0 0.0
        %559 = vmatpush1.msra.mxu0 0.0
        %560 = vmatprep.subr.mxu0 0.0
        %561 = vmatpush1.msra.mxu0 0.0
        %562 = vmatprep.subr.mxu0 0.0
        %563 = vmatpush1.msra.mxu0 0.0
        %564 = vmatprep.subr.mxu0 0.0
        %565 = vmatpush1.msra.mxu0 0.0
        %566 = vmatprep.subr.mxu0 0.0
        %567 = vmatpush1.msra.mxu0 0.0
        %568 = vmatprep.subr.mxu0 0.0
        %569 = vmatpush1.msra.mxu0 0.0
        %570 = vmatprep.subr.mxu0 0.0
        %571 = vmatpush1.msra.mxu0 0.0
        %572 = vmatprep.subr.mxu0 0.0
        %573 = vmatpush1.msra.mxu0 0.0
        %574 = vmatprep.subr.mxu0 0.0
        %575 = vmatpush1.msra.mxu0 0.0
        %576 = vmatprep.subr.mxu0 0.0
        %577 = vmatpush1.msra.mxu0 0.0
        %578 = vmatprep.subr.mxu0 0.0
        %579 = vmatpush1.msra.mxu0 0.0
        %580 = vmatprep.subr.mxu0 0.0
        %581 = vmatpush1.msra.mxu0 0.0
        %582 = vmatprep.subr.mxu0 0.0
        %583 = vmatpush1.msra.mxu0 0.0
        %584 = vmatprep.subr.mxu0 0.0
        %585 = vmatpush1.msra.mxu0 0.0
        %586 = vmatprep.subr.mxu0 0.0
        %587 = vmatpush1.msra.mxu0 0.0
        %588 = vmatprep.subr.mxu0 0.0
        %589 = vmatpush1.msra.mxu0 0.0
        %590 = vmatprep.subr.mxu0 0.0
        %591 = vmatpush1.msra.mxu0 0.0
        %592 = vmatprep.subr.mxu0 0.0
        %593 = vmatpush1.msra.mxu0 0.0
        %594 = vmatprep.subr.mxu0 0.0
        %595 = vmatpush1.msra.mxu0 0.0
        %596 = vmatprep.subr.mxu0 0.0
        %597 = vmatpush1.msra.mxu0 0.0
        %598 = vmatprep.subr.mxu0 0.0
        %599 = vmatpush1.msra.mxu0 0.0
        %600 = vmatprep.subr.mxu0 0.0
        %601 = vmatpush1.msra.mxu0 0.0
        %602 = vmatprep.subr.mxu0 0.0
        %603 = vmatpush1.msra.mxu0 0.0
        %604 = vmatprep.subr.mxu0 0.0
        %605 = vmatpush1.msra.mxu0 0.0
        %606 = vmatprep.mubr.f32.mxu0 0.0
        %607 = vmatmul.mubr.f32.gmra.mrb[0].mxu0 %v537
        %v608 = vpop.f32.mrb[0].mxu0
        %v609 = vadd.f32 %v373, %v608
        %v610 = vpop.f32.mrb[0].mxu0
        %611 = vmatprep.mubr.f32.mxu0 0.0
        %612 = vmatmul.mubr.f32.gmra.mrb[0].mxu0 %v540
        %v613 = vpop.f32.mrb[0].mxu0
        %v614 = vadd.f32 %v378, %v613
        %v615 = vpop.f32.mrb[0].mxu0
        %616 = vdwg.mxu0
        %v617 = vmax.f32 %v609, 0.0
        %v618 = vmax.f32 %v614, 0.0
        %619 = vst [vmem:[#allocation2] sm:$0xff] %v617
        %620 = vst [vmem:[#allocation2 + $0x8] sm:$0xff] %v618
        %s621 = scalar_lea.vmem %s355, 16
        %v622 = vld [vmem:[%s621] sm:$0xff]
        %v623 = vld [vmem:[%s621 + $0x8] sm:$0xff]
        %v624 = vld [vmem:[%s1] sm:$0xff]
        %v626 = vsel %vm383, %v624, 0
        %628 = vmatprep.subr.mxu0 0.0
        %629 = vmatpush1.msra.mxu0 %v622
        %630 = vmatprep.subr.mxu0 0.0
        %631 = vmatpush1.msra.mxu0 %v623
        %632 = vmatprep.subr.mxu0 0.0
        %633 = vmatpush1.msra.mxu0 0.0
        %634 = vmatprep.subr.mxu0 0.0
        %635 = vmatpush1.msra.mxu0 0.0
        %636 = vmatprep.subr.mxu0 0.0
        %637 = vmatpush1.msra.mxu0 0.0
        %638 = vmatprep.subr.mxu0 0.0
        %639 = vmatpush1.msra.mxu0 0.0
        %640 = vmatprep.subr.mxu0 0.0
        %641 = vmatpush1.msra.mxu0 0.0
        %642 = vmatprep.subr.mxu0 0.0
        %643 = vmatpush1.msra.mxu0 0.0
        %644 = vmatprep.subr.mxu0 0.0
        %645 = vmatpush1.msra.mxu0 0.0
        %646 = vmatprep.subr.mxu0 0.0
        %647 = vmatpush1.msra.mxu0 0.0
        %648 = vmatprep.subr.mxu0 0.0
        %649 = vmatpush1.msra.mxu0 0.0
        %650 = vmatprep.subr.mxu0 0.0
        %651 = vmatpush1.msra.mxu0 0.0
        %652 = vmatprep.subr.mxu0 0.0
        %653 = vmatpush1.msra.mxu0 0.0
        %654 = vmatprep.subr.mxu0 0.0
        %655 = vmatpush1.msra.mxu0 0.0
        %656 = vmatprep.subr.mxu0 0.0
        %657 = vmatpush1.msra.mxu0 0.0
        %658 = vmatprep.subr.mxu0 0.0
        %659 = vmatpush1.msra.mxu0 0.0
        %660 = vmatprep.subr.mxu0 0.0
        %661 = vmatpush1.msra.mxu0 0.0
        %662 = vmatprep.subr.mxu0 0.0
        %663 = vmatpush1.msra.mxu0 0.0
        %664 = vmatprep.subr.mxu0 0.0
        %665 = vmatpush1.msra.mxu0 0.0
        %666 = vmatprep.subr.mxu0 0.0
        %667 = vmatpush1.msra.mxu0 0.0
        %668 = vmatprep.subr.mxu0 0.0
        %669 = vmatpush1.msra.mxu0 0.0
        %670 = vmatprep.subr.mxu0 0.0
        %671 = vmatpush1.msra.mxu0 0.0
        %672 = vmatprep.subr.mxu0 0.0
        %673 = vmatpush1.msra.mxu0 0.0
        %674 = vmatprep.subr.mxu0 0.0
        %675 = vmatpush1.msra.mxu0 0.0
        %676 = vmatprep.subr.mxu0 0.0
        %677 = vmatpush1.msra.mxu0 0.0
        %678 = vmatprep.subr.mxu0 0.0
        %679 = vmatpush1.msra.mxu0 0.0
        %680 = vmatprep.subr.mxu0 0.0
        %681 = vmatpush1.msra.mxu0 0.0
        %682 = vmatprep.subr.mxu0 0.0
        %683 = vmatpush1.msra.mxu0 0.0
        %684 = vmatprep.subr.mxu0 0.0
        %685 = vmatpush1.msra.mxu0 0.0
        %686 = vmatprep.subr.mxu0 0.0
        %687 = vmatpush1.msra.mxu0 0.0
        %688 = vmatprep.subr.mxu0 0.0
        %689 = vmatpush1.msra.mxu0 0.0
        %690 = vmatprep.subr.mxu0 0.0
        %691 = vmatpush1.msra.mxu0 0.0
        %692 = vmatprep.mubr.f32.mxu0 0.0
        %693 = vmatmul.mubr.f32.gmra.mrb[0].mxu0 %v626
        %v694 = vpop.f32.mrb[0].mxu0
        %v695 = vadd.f32 %v360, %v694
        %v696 = vpop.f32.mrb[0].mxu0
        %697 = vdwg.mxu0
        %v698 = vmax.f32 %v695, 0.0
        %v699 = vld [vmem:[%s3] sm:$0xff]
        %v701 = vsel %vm459, %v699, 0
        %703 = vmatprep.subr.mxu0 0.0
        %704 = vmatpush1.msra.mxu0 %v698
        %705 = vmatprep.subr.mxu0 0.0
        %706 = vmatpush1.msra.mxu0 0.0
        %707 = vmatprep.subr.mxu0 0.0
        %708 = vmatpush1.msra.mxu0 0.0
        %709 = vmatprep.subr.mxu0 0.0
        %710 = vmatpush1.msra.mxu0 0.0
        %711 = vmatprep.subr.mxu0 0.0
        %712 = vmatpush1.msra.mxu0 0.0
        %713 = vmatprep.subr.mxu0 0.0
        %714 = vmatpush1.msra.mxu0 0.0
        %715 = vmatprep.subr.mxu0 0.0
        %716 = vmatpush1.msra.mxu0 0.0
        %717 = vmatprep.subr.mxu0 0.0
        %718 = vmatpush1.msra.mxu0 0.0
        %719 = vmatprep.subr.mxu0 0.0
        %720 = vmatpush1.msra.mxu0 0.0
        %721 = vmatprep.subr.mxu0 0.0
        %722 = vmatpush1.msra.mxu0 0.0
        %723 = vmatprep.subr.mxu0 0.0
        %724 = vmatpush1.msra.mxu0 0.0
        %725 = vmatprep.subr.mxu0 0.0
        %726 = vmatpush1.msra.mxu0 0.0
        %727 = vmatprep.subr.mxu0 0.0
        %728 = vmatpush1.msra.mxu0 0.0
        %729 = vmatprep.subr.mxu0 0.0
        %730 = vmatpush1.msra.mxu0 0.0
        %731 = vmatprep.subr.mxu0 0.0
        %732 = vmatpush1.msra.mxu0 0.0
        %733 = vmatprep.subr.mxu0 0.0
        %734 = vmatpush1.msra.mxu0 0.0
        %735 = vmatprep.subr.mxu0 0.0
        %736 = vmatpush1.msra.mxu0 0.0
        %737 = vmatprep.subr.mxu0 0.0
        %738 = vmatpush1.msra.mxu0 0.0
        %739 = vmatprep.subr.mxu0 0.0
        %740 = vmatpush1.msra.mxu0 0.0
        %741 = vmatprep.subr.mxu0 0.0
        %742 = vmatpush1.msra.mxu0 0.0
        %743 = vmatprep.subr.mxu0 0.0
        %744 = vmatpush1.msra.mxu0 0.0
        %745 = vmatprep.subr.mxu0 0.0
        %746 = vmatpush1.msra.mxu0 0.0
        %747 = vmatprep.subr.mxu0 0.0
        %748 = vmatpush1.msra.mxu0 0.0
        %749 = vmatprep.subr.mxu0 0.0
        %750 = vmatpush1.msra.mxu0 0.0
        %751 = vmatprep.subr.mxu0 0.0
        %752 = vmatpush1.msra.mxu0 0.0
        %753 = vmatprep.subr.mxu0 0.0
        %754 = vmatpush1.msra.mxu0 0.0
        %755 = vmatprep.subr.mxu0 0.0
        %756 = vmatpush1.msra.mxu0 0.0
        %757 = vmatprep.subr.mxu0 0.0
        %758 = vmatpush1.msra.mxu0 0.0
        %759 = vmatprep.subr.mxu0 0.0
        %760 = vmatpush1.msra.mxu0 0.0
        %761 = vmatprep.subr.mxu0 0.0
        %762 = vmatpush1.msra.mxu0 0.0
        %763 = vmatprep.subr.mxu0 0.0
        %764 = vmatpush1.msra.mxu0 0.0
        %765 = vmatprep.subr.mxu0 0.0
        %766 = vmatpush1.msra.mxu0 0.0
        %767 = vmatprep.mubr.f32.mxu0 0.0
        %768 = vmatmul.mubr.f32.gmra.mrb[0].mxu0 %v701
        %v769 = vpop.f32.mrb[0].mxu0
        %v770 = vadd.f32 %v366, %v769
        %v771 = vpop.f32.mrb[0].mxu0
        %772 = vdwg.mxu0
        %v773 = vmax.f32 %v770, 0.0
        %v774 = vld [vmem:[%s5] sm:$0xff]
        %v775 = vld [vmem:[%s5 + $0x8] sm:$0xff]
        %v777 = vsel %vm459, %v774, 0
        %v780 = vsel %vm459, %v775, 0
        %782 = vmatprep.subr.mxu0 0.0
        %783 = vmatpush1.msra.mxu0 %v773
        %784 = vmatprep.subr.mxu0 0.0
        %785 = vmatpush1.msra.mxu0 0.0
        %786 = vmatprep.subr.mxu0 0.0
        %787 = vmatpush1.msra.mxu0 0.0
        %788 = vmatprep.subr.mxu0 0.0
        %789 = vmatpush1.msra.mxu0 0.0
        %790 = vmatprep.subr.mxu0 0.0
        %791 = vmatpush1.msra.mxu0 0.0
        %792 = vmatprep.subr.mxu0 0.0
        %793 = vmatpush1.msra.mxu0 0.0
        %794 = vmatprep.subr.mxu0 0.0
        %795 = vmatpush1.msra.mxu0 0.0
        %796 = vmatprep.subr.mxu0 0.0
        %797 = vmatpush1.msra.mxu0 0.0
        %798 = vmatprep.subr.mxu0 0.0
        %799 = vmatpush1.msra.mxu0 0.0
        %800 = vmatprep.subr.mxu0 0.0
        %801 = vmatpush1.msra.mxu0 0.0
        %802 = vmatprep.subr.mxu0 0.0
        %803 = vmatpush1.msra.mxu0 0.0
        %804 = vmatprep.subr.mxu0 0.0
        %805 = vmatpush1.msra.mxu0 0.0
        %806 = vmatprep.subr.mxu0 0.0
        %807 = vmatpush1.msra.mxu0 0.0
        %808 = vmatprep.subr.mxu0 0.0
        %809 = vmatpush1.msra.mxu0 0.0
        %810 = vmatprep.subr.mxu0 0.0
        %811 = vmatpush1.msra.mxu0 0.0
        %812 = vmatprep.subr.mxu0 0.0
        %813 = vmatpush1.msra.mxu0 0.0
        %814 = vmatprep.subr.mxu0 0.0
        %815 = vmatpush1.msra.mxu0 0.0
        %816 = vmatprep.subr.mxu0 0.0
        %817 = vmatpush1.msra.mxu0 0.0
        %818 = vmatprep.subr.mxu0 0.0
        %819 = vmatpush1.msra.mxu0 0.0
        %820 = vmatprep.subr.mxu0 0.0
        %821 = vmatpush1.msra.mxu0 0.0
        %822 = vmatprep.subr.mxu0 0.0
        %823 = vmatpush1.msra.mxu0 0.0
        %824 = vmatprep.subr.mxu0 0.0
        %825 = vmatpush1.msra.mxu0 0.0
        %826 = vmatprep.subr.mxu0 0.0
        %827 = vmatpush1.msra.mxu0 0.0
        %828 = vmatprep.subr.mxu0 0.0
        %829 = vmatpush1.msra.mxu0 0.0
        %830 = vmatprep.subr.mxu0 0.0
        %831 = vmatpush1.msra.mxu0 0.0
        %832 = vmatprep.subr.mxu0 0.0
        %833 = vmatpush1.msra.mxu0 0.0
        %834 = vmatprep.subr.mxu0 0.0
        %835 = vmatpush1.msra.mxu0 0.0
        %836 = vmatprep.subr.mxu0 0.0
        %837 = vmatpush1.msra.mxu0 0.0
        %838 = vmatprep.subr.mxu0 0.0
        %839 = vmatpush1.msra.mxu0 0.0
        %840 = vmatprep.subr.mxu0 0.0
        %841 = vmatpush1.msra.mxu0 0.0
        %842 = vmatprep.subr.mxu0 0.0
        %843 = vmatpush1.msra.mxu0 0.0
        %844 = vmatprep.subr.mxu0 0.0
        %845 = vmatpush1.msra.mxu0 0.0
        %846 = vmatprep.mubr.f32.mxu0 0.0
        %847 = vmatmul.mubr.f32.gmra.mrb[0].mxu0 %v777
        %v848 = vpop.f32.mrb[0].mxu0
        %v849 = vadd.f32 %v373, %v848
        %v850 = vpop.f32.mrb[0].mxu0
        %851 = vmatprep.mubr.f32.mxu0 0.0
        %852 = vmatmul.mubr.f32.gmra.mrb[0].mxu0 %v780
        %v853 = vpop.f32.mrb[0].mxu0
        %v854 = vadd.f32 %v378, %v853
        %v855 = vpop.f32.mrb[0].mxu0
        %856 = vdwg.mxu0
        %v857 = vmax.f32 %v849, 0.0
        %v858 = vmax.f32 %v854, 0.0
        %s859 = scalar_lea.vmem [#allocation2], 16
        %860 = vst [vmem:[%s859] sm:$0xff] %v857
        %861 = vst [vmem:[%s859 + $0x8] sm:$0xff] %v858
        %s862 = scalar_lea.vmem %s355, 32
        %v863 = vld [vmem:[%s862] sm:$0xff]
        %v864 = vld [vmem:[%s862 + $0x8] sm:$0xff]
        %v865 = vld [vmem:[%s1] sm:$0xff]
        %v867 = vsel %vm383, %v865, 0
        %869 = vmatprep.subr.mxu0 0.0
        %870 = vmatpush1.msra.mxu0 %v863
        %871 = vmatprep.subr.mxu0 0.0
        %872 = vmatpush1.msra.mxu0 %v864
        %873 = vmatprep.subr.mxu0 0.0
        %874 = vmatpush1.msra.mxu0 0.0
        %875 = vmatprep.subr.mxu0 0.0
        %876 = vmatpush1.msra.mxu0 0.0
        %877 = vmatprep.subr.mxu0 0.0
        %878 = vmatpush1.msra.mxu0 0.0
        %879 = vmatprep.subr.mxu0 0.0
        %880 = vmatpush1.msra.mxu0 0.0
        %881 = vmatprep.subr.mxu0 0.0
        %882 = vmatpush1.msra.mxu0 0.0
        %883 = vmatprep.subr.mxu0 0.0
        %884 = vmatpush1.msra.mxu0 0.0
        %885 = vmatprep.subr.mxu0 0.0
        %886 = vmatpush1.msra.mxu0 0.0
        %887 = vmatprep.subr.mxu0 0.0
        %888 = vmatpush1.msra.mxu0 0.0
        %889 = vmatprep.subr.mxu0 0.0
        %890 = vmatpush1.msra.mxu0 0.0
        %891 = vmatprep.subr.mxu0 0.0
        %892 = vmatpush1.msra.mxu0 0.0
        %893 = vmatprep.subr.mxu0 0.0
        %894 = vmatpush1.msra.mxu0 0.0
        %895 = vmatprep.subr.mxu0 0.0
        %896 = vmatpush1.msra.mxu0 0.0
        %897 = vmatprep.subr.mxu0 0.0
        %898 = vmatpush1.msra.mxu0 0.0
        %899 = vmatprep.subr.mxu0 0.0
        %900 = vmatpush1.msra.mxu0 0.0
        %901 = vmatprep.subr.mxu0 0.0
        %902 = vmatpush1.msra.mxu0 0.0
        %903 = vmatprep.subr.mxu0 0.0
        %904 = vmatpush1.msra.mxu0 0.0
        %905 = vmatprep.subr.mxu0 0.0
        %906 = vmatpush1.msra.mxu0 0.0
        %907 = vmatprep.subr.mxu0 0.0
        %908 = vmatpush1.msra.mxu0 0.0
        %909 = vmatprep.subr.mxu0 0.0
        %910 = vmatpush1.msra.mxu0 0.0
        %911 = vmatprep.subr.mxu0 0.0
        %912 = vmatpush1.msra.mxu0 0.0
        %913 = vmatprep.subr.mxu0 0.0
        %914 = vmatpush1.msra.mxu0 0.0
        %915 = vmatprep.subr.mxu0 0.0
        %916 = vmatpush1.msra.mxu0 0.0
        %917 = vmatprep.subr.mxu0 0.0
        %918 = vmatpush1.msra.mxu0 0.0
        %919 = vmatprep.subr.mxu0 0.0
        %920 = vmatpush1.msra.mxu0 0.0
        %921 = vmatprep.subr.mxu0 0.0
        %922 = vmatpush1.msra.mxu0 0.0
        %923 = vmatprep.subr.mxu0 0.0
        %924 = vmatpush1.msra.mxu0 0.0
        %925 = vmatprep.subr.mxu0 0.0
        %926 = vmatpush1.msra.mxu0 0.0
        %927 = vmatprep.subr.mxu0 0.0
        %928 = vmatpush1.msra.mxu0 0.0
        %929 = vmatprep.subr.mxu0 0.0
        %930 = vmatpush1.msra.mxu0 0.0
        %931 = vmatprep.subr.mxu0 0.0
        %932 = vmatpush1.msra.mxu0 0.0
        %933 = vmatprep.mubr.f32.mxu0 0.0
        %934 = vmatmul.mubr.f32.gmra.mrb[0].mxu0 %v867
        %v935 = vpop.f32.mrb[0].mxu0
        %v936 = vadd.f32 %v360, %v935
        %v937 = vpop.f32.mrb[0].mxu0
        %938 = vdwg.mxu0
        %v939 = vmax.f32 %v936, 0.0
        %v940 = vld [vmem:[%s3] sm:$0xff]
        %v942 = vsel %vm459, %v940, 0
        %944 = vmatprep.subr.mxu0 0.0
        %945 = vmatpush1.msra.mxu0 %v939
        %946 = vmatprep.subr.mxu0 0.0
        %947 = vmatpush1.msra.mxu0 0.0
        %948 = vmatprep.subr.mxu0 0.0
        %949 = vmatpush1.msra.mxu0 0.0
        %950 = vmatprep.subr.mxu0 0.0
        %951 = vmatpush1.msra.mxu0 0.0
        %952 = vmatprep.subr.mxu0 0.0
        %953 = vmatpush1.msra.mxu0 0.0
        %954 = vmatprep.subr.mxu0 0.0
        %955 = vmatpush1.msra.mxu0 0.0
        %956 = vmatprep.subr.mxu0 0.0
        %957 = vmatpush1.msra.mxu0 0.0
        %958 = vmatprep.subr.mxu0 0.0
        %959 = vmatpush1.msra.mxu0 0.0
        %960 = vmatprep.subr.mxu0 0.0
        %961 = vmatpush1.msra.mxu0 0.0
        %962 = vmatprep.subr.mxu0 0.0
        %963 = vmatpush1.msra.mxu0 0.0
        %964 = vmatprep.subr.mxu0 0.0
        %965 = vmatpush1.msra.mxu0 0.0
        %966 = vmatprep.subr.mxu0 0.0
        %967 = vmatpush1.msra.mxu0 0.0
        %968 = vmatprep.subr.mxu0 0.0
        %969 = vmatpush1.msra.mxu0 0.0
        %970 = vmatprep.subr.mxu0 0.0
        %971 = vmatpush1.msra.mxu0 0.0
        %972 = vmatprep.subr.mxu0 0.0
        %973 = vmatpush1.msra.mxu0 0.0
        %974 = vmatprep.subr.mxu0 0.0
        %975 = vmatpush1.msra.mxu0 0.0
        %976 = vmatprep.subr.mxu0 0.0
        %977 = vmatpush1.msra.mxu0 0.0
        %978 = vmatprep.subr.mxu0 0.0
        %979 = vmatpush1.msra.mxu0 0.0
        %980 = vmatprep.subr.mxu0 0.0
        %981 = vmatpush1.msra.mxu0 0.0
        %982 = vmatprep.subr.mxu0 0.0
        %983 = vmatpush1.msra.mxu0 0.0
        %984 = vmatprep.subr.mxu0 0.0
        %985 = vmatpush1.msra.mxu0 0.0
        %986 = vmatprep.subr.mxu0 0.0
        %987 = vmatpush1.msra.mxu0 0.0
        %988 = vmatprep.subr.mxu0 0.0
        %989 = vmatpush1.msra.mxu0 0.0
        %990 = vmatprep.subr.mxu0 0.0
        %991 = vmatpush1.msra.mxu0 0.0
        %992 = vmatprep.subr.mxu0 0.0
        %993 = vmatpush1.msra.mxu0 0.0
        %994 = vmatprep.subr.mxu0 0.0
        %995 = vmatpush1.msra.mxu0 0.0
        %996 = vmatprep.subr.mxu0 0.0
        %997 = vmatpush1.msra.mxu0 0.0
        %998 = vmatprep.subr.mxu0 0.0
        %999 = vmatpush1.msra.mxu0 0.0
        %1000 = vmatprep.subr.mxu0 0.0
        %1001 = vmatpush1.msra.mxu0 0.0
        %1002 = vmatprep.subr.mxu0 0.0
        %1003 = vmatpush1.msra.mxu0 0.0
        %1004 = vmatprep.subr.mxu0 0.0
        %1005 = vmatpush1.msra.mxu0 0.0
        %1006 = vmatprep.subr.mxu0 0.0
        %1007 = vmatpush1.msra.mxu0 0.0
        %1008 = vmatprep.mubr.f32.mxu0 0.0
        %1009 = vmatmul.mubr.f32.gmra.mrb[0].mxu0 %v942
        %v1010 = vpop.f32.mrb[0].mxu0
        %v1011 = vadd.f32 %v366, %v1010
        %v1012 = vpop.f32.mrb[0].mxu0
        %1013 = vdwg.mxu0
        %v1014 = vmax.f32 %v1011, 0.0
        %v1015 = vld [vmem:[%s5] sm:$0xff]
        %v1016 = vld [vmem:[%s5 + $0x8] sm:$0xff]
        %v1018 = vsel %vm459, %v1015, 0
        %v1021 = vsel %vm459, %v1016, 0
        %1023 = vmatprep.subr.mxu0 0.0
        %1024 = vmatpush1.msra.mxu0 %v1014
        %1025 = vmatprep.subr.mxu0 0.0
        %1026 = vmatpush1.msra.mxu0 0.0
        %1027 = vmatprep.subr.mxu0 0.0
        %1028 = vmatpush1.msra.mxu0 0.0
        %1029 = vmatprep.subr.mxu0 0.0
        %1030 = vmatpush1.msra.mxu0 0.0
        %1031 = vmatprep.subr.mxu0 0.0
        %1032 = vmatpush1.msra.mxu0 0.0
        %1033 = vmatprep.subr.mxu0 0.0
        %1034 = vmatpush1.msra.mxu0 0.0
        %1035 = vmatprep.subr.mxu0 0.0
        %1036 = vmatpush1.msra.mxu0 0.0
        %1037 = vmatprep.subr.mxu0 0.0
        %1038 = vmatpush1.msra.mxu0 0.0
        %1039 = vmatprep.subr.mxu0 0.0
        %1040 = vmatpush1.msra.mxu0 0.0
        %1041 = vmatprep.subr.mxu0 0.0
        %1042 = vmatpush1.msra.mxu0 0.0
        %1043 = vmatprep.subr.mxu0 0.0
        %1044 = vmatpush1.msra.mxu0 0.0
        %1045 = vmatprep.subr.mxu0 0.0
        %1046 = vmatpush1.msra.mxu0 0.0
        %1047 = vmatprep.subr.mxu0 0.0
        %1048 = vmatpush1.msra.mxu0 0.0
        %1049 = vmatprep.subr.mxu0 0.0
        %1050 = vmatpush1.msra.mxu0 0.0
        %1051 = vmatprep.subr.mxu0 0.0
        %1052 = vmatpush1.msra.mxu0 0.0
        %1053 = vmatprep.subr.mxu0 0.0
        %1054 = vmatpush1.msra.mxu0 0.0
        %1055 = vmatprep.subr.mxu0 0.0
        %1056 = vmatpush1.msra.mxu0 0.0
        %1057 = vmatprep.subr.mxu0 0.0
        %1058 = vmatpush1.msra.mxu0 0.0
        %1059 = vmatprep.subr.mxu0 0.0
        %1060 = vmatpush1.msra.mxu0 0.0
        %1061 = vmatprep.subr.mxu0 0.0
        %1062 = vmatpush1.msra.mxu0 0.0
        %1063 = vmatprep.subr.mxu0 0.0
        %1064 = vmatpush1.msra.mxu0 0.0
        %1065 = vmatprep.subr.mxu0 0.0
        %1066 = vmatpush1.msra.mxu0 0.0
        %1067 = vmatprep.subr.mxu0 0.0
        %1068 = vmatpush1.msra.mxu0 0.0
        %1069 = vmatprep.subr.mxu0 0.0
        %1070 = vmatpush1.msra.mxu0 0.0
        %1071 = vmatprep.subr.mxu0 0.0
        %1072 = vmatpush1.msra.mxu0 0.0
        %1073 = vmatprep.subr.mxu0 0.0
        %1074 = vmatpush1.msra.mxu0 0.0
        %1075 = vmatprep.subr.mxu0 0.0
        %1076 = vmatpush1.msra.mxu0 0.0
        %1077 = vmatprep.subr.mxu0 0.0
        %1078 = vmatpush1.msra.mxu0 0.0
        %1079 = vmatprep.subr.mxu0 0.0
        %1080 = vmatpush1.msra.mxu0 0.0
        %1081 = vmatprep.subr.mxu0 0.0
        %1082 = vmatpush1.msra.mxu0 0.0
        %1083 = vmatprep.subr.mxu0 0.0
        %1084 = vmatpush1.msra.mxu0 0.0
        %1085 = vmatprep.subr.mxu0 0.0
        %1086 = vmatpush1.msra.mxu0 0.0
        %1087 = vmatprep.mubr.f32.mxu0 0.0
        %1088 = vmatmul.mubr.f32.gmra.mrb[0].mxu0 %v1018
        %v1089 = vpop.f32.mrb[0].mxu0
        %v1090 = vadd.f32 %v373, %v1089
        %v1091 = vpop.f32.mrb[0].mxu0
        %1092 = vmatprep.mubr.f32.mxu0 0.0
        %1093 = vmatmul.mubr.f32.gmra.mrb[0].mxu0 %v1021
        %v1094 = vpop.f32.mrb[0].mxu0
        %v1095 = vadd.f32 %v378, %v1094
        %v1096 = vpop.f32.mrb[0].mxu0
        %1097 = vdwg.mxu0
        %v1098 = vmax.f32 %v1090, 0.0
        %v1099 = vmax.f32 %v1095, 0.0
        %s1100 = scalar_lea.vmem [#allocation2], 32
        %1101 = vst [vmem:[%s1100] sm:$0xff] %v1098
        %1102 = vst [vmem:[%s1100 + $0x8] sm:$0xff] %v1099
        %s1103 = scalar_lea.vmem %s355, 48
        %v1104 = vld [vmem:[%s1103] sm:$0xff]
        %v1105 = vld [vmem:[%s1103 + $0x8] sm:$0xff]
        %v1106 = vld [vmem:[%s1] sm:$0xff]
        %v1108 = vsel %vm383, %v1106, 0
        %1110 = vmatprep.subr.mxu0 0.0
        %1111 = vmatpush1.msra.mxu0 %v1104
        %1112 = vmatprep.subr.mxu0 0.0
        %1113 = vmatpush1.msra.mxu0 %v1105
        %1114 = vmatprep.subr.mxu0 0.0
        %1115 = vmatpush1.msra.mxu0 0.0
        %1116 = vmatprep.subr.mxu0 0.0
        %1117 = vmatpush1.msra.mxu0 0.0
        %1118 = vmatprep.subr.mxu0 0.0
        %1119 = vmatpush1.msra.mxu0 0.0
        %1120 = vmatprep.subr.mxu0 0.0
        %1121 = vmatpush1.msra.mxu0 0.0
        %1122 = vmatprep.subr.mxu0 0.0
        %1123 = vmatpush1.msra.mxu0 0.0
        %1124 = vmatprep.subr.mxu0 0.0
        %1125 = vmatpush1.msra.mxu0 0.0
        %1126 = vmatprep.subr.mxu0 0.0
        %1127 = vmatpush1.msra.mxu0 0.0
        %1128 = vmatprep.subr.mxu0 0.0
        %1129 = vmatpush1.msra.mxu0 0.0
        %1130 = vmatprep.subr.mxu0 0.0
        %1131 = vmatpush1.msra.mxu0 0.0
        %1132 = vmatprep.subr.mxu0 0.0
        %1133 = vmatpush1.msra.mxu0 0.0
        %1134 = vmatprep.subr.mxu0 0.0
        %1135 = vmatpush1.msra.mxu0 0.0
        %1136 = vmatprep.subr.mxu0 0.0
        %1137 = vmatpush1.msra.mxu0 0.0
        %1138 = vmatprep.subr.mxu0 0.0
        %1139 = vmatpush1.msra.mxu0 0.0
        %1140 = vmatprep.subr.mxu0 0.0
        %1141 = vmatpush1.msra.mxu0 0.0
        %1142 = vmatprep.subr.mxu0 0.0
        %1143 = vmatpush1.msra.mxu0 0.0
        %1144 = vmatprep.subr.mxu0 0.0
        %1145 = vmatpush1.msra.mxu0 0.0
        %1146 = vmatprep.subr.mxu0 0.0
        %1147 = vmatpush1.msra.mxu0 0.0
        %1148 = vmatprep.subr.mxu0 0.0
        %1149 = vmatpush1.msra.mxu0 0.0
        %1150 = vmatprep.subr.mxu0 0.0
        %1151 = vmatpush1.msra.mxu0 0.0
        %1152 = vmatprep.subr.mxu0 0.0
        %1153 = vmatpush1.msra.mxu0 0.0
        %1154 = vmatprep.subr.mxu0 0.0
        %1155 = vmatpush1.msra.mxu0 0.0
        %1156 = vmatprep.subr.mxu0 0.0
        %1157 = vmatpush1.msra.mxu0 0.0
        %1158 = vmatprep.subr.mxu0 0.0
        %1159 = vmatpush1.msra.mxu0 0.0
        %1160 = vmatprep.subr.mxu0 0.0
        %1161 = vmatpush1.msra.mxu0 0.0
        %1162 = vmatprep.subr.mxu0 0.0
        %1163 = vmatpush1.msra.mxu0 0.0
        %1164 = vmatprep.subr.mxu0 0.0
        %1165 = vmatpush1.msra.mxu0 0.0
        %1166 = vmatprep.subr.mxu0 0.0
        %1167 = vmatpush1.msra.mxu0 0.0
        %1168 = vmatprep.subr.mxu0 0.0
        %1169 = vmatpush1.msra.mxu0 0.0
        %1170 = vmatprep.subr.mxu0 0.0
        %1171 = vmatpush1.msra.mxu0 0.0
        %1172 = vmatprep.subr.mxu0 0.0
        %1173 = vmatpush1.msra.mxu0 0.0
        %1174 = vmatprep.mubr.f32.mxu0 0.0
        %1175 = vmatmul.mubr.f32.gmra.mrb[0].mxu0 %v1108
        %v1176 = vpop.f32.mrb[0].mxu0
        %v1177 = vadd.f32 %v360, %v1176
        %v1178 = vpop.f32.mrb[0].mxu0
        %1179 = vdwg.mxu0
        %v1180 = vmax.f32 %v1177, 0.0
        %v1181 = vld [vmem:[%s3] sm:$0xff]
        %v1183 = vsel %vm459, %v1181, 0
        %1185 = vmatprep.subr.mxu0 0.0
        %1186 = vmatpush1.msra.mxu0 %v1180
        %1187 = vmatprep.subr.mxu0 0.0
        %1188 = vmatpush1.msra.mxu0 0.0
        %1189 = vmatprep.subr.mxu0 0.0
        %1190 = vmatpush1.msra.mxu0 0.0
        %1191 = vmatprep.subr.mxu0 0.0
        %1192 = vmatpush1.msra.mxu0 0.0
        %1193 = vmatprep.subr.mxu0 0.0
        %1194 = vmatpush1.msra.mxu0 0.0
        %1195 = vmatprep.subr.mxu0 0.0
        %1196 = vmatpush1.msra.mxu0 0.0
        %1197 = vmatprep.subr.mxu0 0.0
        %1198 = vmatpush1.msra.mxu0 0.0
        %1199 = vmatprep.subr.mxu0 0.0
        %1200 = vmatpush1.msra.mxu0 0.0
        %1201 = vmatprep.subr.mxu0 0.0
        %1202 = vmatpush1.msra.mxu0 0.0
        %1203 = vmatprep.subr.mxu0 0.0
        %1204 = vmatpush1.msra.mxu0 0.0
        %1205 = vmatprep.subr.mxu0 0.0
        %1206 = vmatpush1.msra.mxu0 0.0
        %1207 = vmatprep.subr.mxu0 0.0
        %1208 = vmatpush1.msra.mxu0 0.0
        %1209 = vmatprep.subr.mxu0 0.0
        %1210 = vmatpush1.msra.mxu0 0.0
        %1211 = vmatprep.subr.mxu0 0.0
        %1212 = vmatpush1.msra.mxu0 0.0
        %1213 = vmatprep.subr.mxu0 0.0
        %1214 = vmatpush1.msra.mxu0 0.0
        %1215 = vmatprep.subr.mxu0 0.0
        %1216 = vmatpush1.msra.mxu0 0.0
        %1217 = vmatprep.subr.mxu0 0.0
        %1218 = vmatpush1.msra.mxu0 0.0
        %1219 = vmatprep.subr.mxu0 0.0
        %1220 = vmatpush1.msra.mxu0 0.0
        %1221 = vmatprep.subr.mxu0 0.0
        %1222 = vmatpush1.msra.mxu0 0.0
        %1223 = vmatprep.subr.mxu0 0.0
        %1224 = vmatpush1.msra.mxu0 0.0
        %1225 = vmatprep.subr.mxu0 0.0
        %1226 = vmatpush1.msra.mxu0 0.0
        %1227 = vmatprep.subr.mxu0 0.0
        %1228 = vmatpush1.msra.mxu0 0.0
        %1229 = vmatprep.subr.mxu0 0.0
        %1230 = vmatpush1.msra.mxu0 0.0
        %1231 = vmatprep.subr.mxu0 0.0
        %1232 = vmatpush1.msra.mxu0 0.0
        %1233 = vmatprep.subr.mxu0 0.0
        %1234 = vmatpush1.msra.mxu0 0.0
        %1235 = vmatprep.subr.mxu0 0.0
        %1236 = vmatpush1.msra.mxu0 0.0
        %1237 = vmatprep.subr.mxu0 0.0
        %1238 = vmatpush1.msra.mxu0 0.0
        %1239 = vmatprep.subr.mxu0 0.0
        %1240 = vmatpush1.msra.mxu0 0.0
        %1241 = vmatprep.subr.mxu0 0.0
        %1242 = vmatpush1.msra.mxu0 0.0
        %1243 = vmatprep.subr.mxu0 0.0
        %1244 = vmatpush1.msra.mxu0 0.0
        %1245 = vmatprep.subr.mxu0 0.0
        %1246 = vmatpush1.msra.mxu0 0.0
        %1247 = vmatprep.subr.mxu0 0.0
        %1248 = vmatpush1.msra.mxu0 0.0
        %1249 = vmatprep.mubr.f32.mxu0 0.0
        %1250 = vmatmul.mubr.f32.gmra.mrb[0].mxu0 %v1183
        %v1251 = vpop.f32.mrb[0].mxu0
        %v1252 = vadd.f32 %v366, %v1251
        %v1253 = vpop.f32.mrb[0].mxu0
        %1254 = vdwg.mxu0
        %v1255 = vmax.f32 %v1252, 0.0
        %v1256 = vld [vmem:[%s5] sm:$0xff]
        %v1257 = vld [vmem:[%s5 + $0x8] sm:$0xff]
        %v1259 = vsel %vm459, %v1256, 0
        %v1262 = vsel %vm459, %v1257, 0
        %1264 = vmatprep.subr.mxu0 0.0
        %1265 = vmatpush1.msra.mxu0 %v1255
        %1266 = vmatprep.subr.mxu0 0.0
        %1267 = vmatpush1.msra.mxu0 0.0
        %1268 = vmatprep.subr.mxu0 0.0
        %1269 = vmatpush1.msra.mxu0 0.0
        %1270 = vmatprep.subr.mxu0 0.0
        %1271 = vmatpush1.msra.mxu0 0.0
        %1272 = vmatprep.subr.mxu0 0.0
        %1273 = vmatpush1.msra.mxu0 0.0
        %1274 = vmatprep.subr.mxu0 0.0
        %1275 = vmatpush1.msra.mxu0 0.0
        %1276 = vmatprep.subr.mxu0 0.0
        %1277 = vmatpush1.msra.mxu0 0.0
        %1278 = vmatprep.subr.mxu0 0.0
        %1279 = vmatpush1.msra.mxu0 0.0
        %1280 = vmatprep.subr.mxu0 0.0
        %1281 = vmatpush1.msra.mxu0 0.0
        %1282 = vmatprep.subr.mxu0 0.0
        %1283 = vmatpush1.msra.mxu0 0.0
        %1284 = vmatprep.subr.mxu0 0.0
        %1285 = vmatpush1.msra.mxu0 0.0
        %1286 = vmatprep.subr.mxu0 0.0
        %1287 = vmatpush1.msra.mxu0 0.0
        %1288 = vmatprep.subr.mxu0 0.0
        %1289 = vmatpush1.msra.mxu0 0.0
        %1290 = vmatprep.subr.mxu0 0.0
        %1291 = vmatpush1.msra.mxu0 0.0
        %1292 = vmatprep.subr.mxu0 0.0
        %1293 = vmatpush1.msra.mxu0 0.0
        %1294 = vmatprep.subr.mxu0 0.0
        %1295 = vmatpush1.msra.mxu0 0.0
        %1296 = vmatprep.subr.mxu0 0.0
        %1297 = vmatpush1.msra.mxu0 0.0
        %1298 = vmatprep.subr.mxu0 0.0
        %1299 = vmatpush1.msra.mxu0 0.0
        %1300 = vmatprep.subr.mxu0 0.0
        %1301 = vmatpush1.msra.mxu0 0.0
        %1302 = vmatprep.subr.mxu0 0.0
        %1303 = vmatpush1.msra.mxu0 0.0
        %1304 = vmatprep.subr.mxu0 0.0
        %1305 = vmatpush1.msra.mxu0 0.0
        %1306 = vmatprep.subr.mxu0 0.0
        %1307 = vmatpush1.msra.mxu0 0.0
        %1308 = vmatprep.subr.mxu0 0.0
        %1309 = vmatpush1.msra.mxu0 0.0
        %1310 = vmatprep.subr.mxu0 0.0
        %1311 = vmatpush1.msra.mxu0 0.0
        %1312 = vmatprep.subr.mxu0 0.0
        %1313 = vmatpush1.msra.mxu0 0.0
        %1314 = vmatprep.subr.mxu0 0.0
        %1315 = vmatpush1.msra.mxu0 0.0
        %1316 = vmatprep.subr.mxu0 0.0
        %1317 = vmatpush1.msra.mxu0 0.0
        %1318 = vmatprep.subr.mxu0 0.0
        %1319 = vmatpush1.msra.mxu0 0.0
        %1320 = vmatprep.subr.mxu0 0.0
        %1321 = vmatpush1.msra.mxu0 0.0
        %1322 = vmatprep.subr.mxu0 0.0
        %1323 = vmatpush1.msra.mxu0 0.0
        %1324 = vmatprep.subr.mxu0 0.0
        %1325 = vmatpush1.msra.mxu0 0.0
        %1326 = vmatprep.subr.mxu0 0.0
        %1327 = vmatpush1.msra.mxu0 0.0
        %1328 = vmatprep.mubr.f32.mxu0 0.0
        %1329 = vmatmul.mubr.f32.gmra.mrb[0].mxu0 %v1259
        %v1330 = vpop.f32.mrb[0].mxu0
        %v1331 = vadd.f32 %v373, %v1330
        %v1332 = vpop.f32.mrb[0].mxu0
        %1333 = vmatprep.mubr.f32.mxu0 0.0
        %1334 = vmatmul.mubr.f32.gmra.mrb[0].mxu0 %v1262
        %v1335 = vpop.f32.mrb[0].mxu0
        %v1336 = vadd.f32 %v378, %v1335
        %v1337 = vpop.f32.mrb[0].mxu0
        %1338 = vdwg.mxu0
        %v1339 = vmax.f32 %v1331, 0.0
        %v1340 = vmax.f32 %v1336, 0.0
        %s1341 = scalar_lea.vmem [#allocation2], 48
        %1342 = vst [vmem:[%s1341] sm:$0xff] %v1339
        %1343 = vst [vmem:[%s1341 + $0x8] sm:$0xff] %v1340
        %s1344 = scalar_lea.vmem %s355, 64
        %v1345 = vld [vmem:[%s1344] sm:$0xff]
        %v1346 = vld [vmem:[%s1344 + $0x8] sm:$0xff]
        %v1347 = vld [vmem:[%s1] sm:$0xff]
        %v1349 = vsel %vm383, %v1347, 0
        %1351 = vmatprep.subr.mxu0 0.0
        %1352 = vmatpush1.msra.mxu0 %v1345
        %1353 = vmatprep.subr.mxu0 0.0
        %1354 = vmatpush1.msra.mxu0 %v1346
        %1355 = vmatprep.subr.mxu0 0.0
        %1356 = vmatpush1.msra.mxu0 0.0
        %1357 = vmatprep.subr.mxu0 0.0
        %1358 = vmatpush1.msra.mxu0 0.0
        %1359 = vmatprep.subr.mxu0 0.0
        %1360 = vmatpush1.msra.mxu0 0.0
        %1361 = vmatprep.subr.mxu0 0.0
        %1362 = vmatpush1.msra.mxu0 0.0
        %1363 = vmatprep.subr.mxu0 0.0
        %1364 = vmatpush1.msra.mxu0 0.0
        %1365 = vmatprep.subr.mxu0 0.0
        %1366 = vmatpush1.msra.mxu0 0.0
        %1367 = vmatprep.subr.mxu0 0.0
        %1368 = vmatpush1.msra.mxu0 0.0
        %1369 = vmatprep.subr.mxu0 0.0
        %1370 = vmatpush1.msra.mxu0 0.0
        %1371 = vmatprep.subr.mxu0 0.0
        %1372 = vmatpush1.msra.mxu0 0.0
        %1373 = vmatprep.subr.mxu0 0.0
        %1374 = vmatpush1.msra.mxu0 0.0
        %1375 = vmatprep.subr.mxu0 0.0
        %1376 = vmatpush1.msra.mxu0 0.0
        %1377 = vmatprep.subr.mxu0 0.0
        %1378 = vmatpush1.msra.mxu0 0.0
        %1379 = vmatprep.subr.mxu0 0.0
        %1380 = vmatpush1.msra.mxu0 0.0
        %1381 = vmatprep.subr.mxu0 0.0
        %1382 = vmatpush1.msra.mxu0 0.0
        %1383 = vmatprep.subr.mxu0 0.0
        %1384 = vmatpush1.msra.mxu0 0.0
        %1385 = vmatprep.subr.mxu0 0.0
        %1386 = vmatpush1.msra.mxu0 0.0
        %1387 = vmatprep.subr.mxu0 0.0
        %1388 = vmatpush1.msra.mxu0 0.0
        %1389 = vmatprep.subr.mxu0 0.0
        %1390 = vmatpush1.msra.mxu0 0.0
        %1391 = vmatprep.subr.mxu0 0.0
        %1392 = vmatpush1.msra.mxu0 0.0
        %1393 = vmatprep.subr.mxu0 0.0
        %1394 = vmatpush1.msra.mxu0 0.0
        %1395 = vmatprep.subr.mxu0 0.0
        %1396 = vmatpush1.msra.mxu0 0.0
        %1397 = vmatprep.subr.mxu0 0.0
        %1398 = vmatpush1.msra.mxu0 0.0
        %1399 = vmatprep.subr.mxu0 0.0
        %1400 = vmatpush1.msra.mxu0 0.0
        %1401 = vmatprep.subr.mxu0 0.0
        %1402 = vmatpush1.msra.mxu0 0.0
        %1403 = vmatprep.subr.mxu0 0.0
        %1404 = vmatpush1.msra.mxu0 0.0
        %1405 = vmatprep.subr.mxu0 0.0
        %1406 = vmatpush1.msra.mxu0 0.0
        %1407 = vmatprep.subr.mxu0 0.0
        %1408 = vmatpush1.msra.mxu0 0.0
        %1409 = vmatprep.subr.mxu0 0.0
        %1410 = vmatpush1.msra.mxu0 0.0
        %1411 = vmatprep.subr.mxu0 0.0
        %1412 = vmatpush1.msra.mxu0 0.0
        %1413 = vmatprep.subr.mxu0 0.0
        %1414 = vmatpush1.msra.mxu0 0.0
        %1415 = vmatprep.mubr.f32.mxu0 0.0
        %1416 = vmatmul.mubr.f32.gmra.mrb[0].mxu0 %v1349
        %v1417 = vpop.f32.mrb[0].mxu0
        %v1418 = vadd.f32 %v360, %v1417
        %v1419 = vpop.f32.mrb[0].mxu0
        %1420 = vdwg.mxu0
        %v1421 = vmax.f32 %v1418, 0.0
        %v1422 = vld [vmem:[%s3] sm:$0xff]
        %v1424 = vsel %vm459, %v1422, 0
        %1426 = vmatprep.subr.mxu0 0.0
        %1427 = vmatpush1.msra.mxu0 %v1421
        %1428 = vmatprep.subr.mxu0 0.0
        %1429 = vmatpush1.msra.mxu0 0.0
        %1430 = vmatprep.subr.mxu0 0.0
        %1431 = vmatpush1.msra.mxu0 0.0
        %1432 = vmatprep.subr.mxu0 0.0
        %1433 = vmatpush1.msra.mxu0 0.0
        %1434 = vmatprep.subr.mxu0 0.0
        %1435 = vmatpush1.msra.mxu0 0.0
        %1436 = vmatprep.subr.mxu0 0.0
        %1437 = vmatpush1.msra.mxu0 0.0
        %1438 = vmatprep.subr.mxu0 0.0
        %1439 = vmatpush1.msra.mxu0 0.0
        %1440 = vmatprep.subr.mxu0 0.0
        %1441 = vmatpush1.msra.mxu0 0.0
        %1442 = vmatprep.subr.mxu0 0.0
        %1443 = vmatpush1.msra.mxu0 0.0
        %1444 = vmatprep.subr.mxu0 0.0
        %1445 = vmatpush1.msra.mxu0 0.0
        %1446 = vmatprep.subr.mxu0 0.0
        %1447 = vmatpush1.msra.mxu0 0.0
        %1448 = vmatprep.subr.mxu0 0.0
        %1449 = vmatpush1.msra.mxu0 0.0
        %1450 = vmatprep.subr.mxu0 0.0
        %1451 = vmatpush1.msra.mxu0 0.0
        %1452 = vmatprep.subr.mxu0 0.0
        %1453 = vmatpush1.msra.mxu0 0.0
        %1454 = vmatprep.subr.mxu0 0.0
        %1455 = vmatpush1.msra.mxu0 0.0
        %1456 = vmatprep.subr.mxu0 0.0
        %1457 = vmatpush1.msra.mxu0 0.0
        %1458 = vmatprep.subr.mxu0 0.0
        %1459 = vmatpush1.msra.mxu0 0.0
        %1460 = vmatprep.subr.mxu0 0.0
        %1461 = vmatpush1.msra.mxu0 0.0
        %1462 = vmatprep.subr.mxu0 0.0
        %1463 = vmatpush1.msra.mxu0 0.0
        %1464 = vmatprep.subr.mxu0 0.0
        %1465 = vmatpush1.msra.mxu0 0.0
        %1466 = vmatprep.subr.mxu0 0.0
        %1467 = vmatpush1.msra.mxu0 0.0
        %1468 = vmatprep.subr.mxu0 0.0
        %1469 = vmatpush1.msra.mxu0 0.0
        %1470 = vmatprep.subr.mxu0 0.0
        %1471 = vmatpush1.msra.mxu0 0.0
        %1472 = vmatprep.subr.mxu0 0.0
        %1473 = vmatpush1.msra.mxu0 0.0
        %1474 = vmatprep.subr.mxu0 0.0
        %1475 = vmatpush1.msra.mxu0 0.0
        %1476 = vmatprep.subr.mxu0 0.0
        %1477 = vmatpush1.msra.mxu0 0.0
        %1478 = vmatprep.subr.mxu0 0.0
        %1479 = vmatpush1.msra.mxu0 0.0
        %1480 = vmatprep.subr.mxu0 0.0
        %1481 = vmatpush1.msra.mxu0 0.0
        %1482 = vmatprep.subr.mxu0 0.0
        %1483 = vmatpush1.msra.mxu0 0.0
        %1484 = vmatprep.subr.mxu0 0.0
        %1485 = vmatpush1.msra.mxu0 0.0
        %1486 = vmatprep.subr.mxu0 0.0
        %1487 = vmatpush1.msra.mxu0 0.0
        %1488 = vmatprep.subr.mxu0 0.0
        %1489 = vmatpush1.msra.mxu0 0.0
        %1490 = vmatprep.mubr.f32.mxu0 0.0
        %1491 = vmatmul.mubr.f32.gmra.mrb[0].mxu0 %v1424
        %v1492 = vpop.f32.mrb[0].mxu0
        %v1493 = vadd.f32 %v366, %v1492
        %v1494 = vpop.f32.mrb[0].mxu0
        %1495 = vdwg.mxu0
        %v1496 = vmax.f32 %v1493, 0.0
        %v1497 = vld [vmem:[%s5] sm:$0xff]
        %v1498 = vld [vmem:[%s5 + $0x8] sm:$0xff]
        %v1500 = vsel %vm459, %v1497, 0
        %v1503 = vsel %vm459, %v1498, 0
        %1505 = vmatprep.subr.mxu0 0.0
        %1506 = vmatpush1.msra.mxu0 %v1496
        %1507 = vmatprep.subr.mxu0 0.0
        %1508 = vmatpush1.msra.mxu0 0.0
        %1509 = vmatprep.subr.mxu0 0.0
        %1510 = vmatpush1.msra.mxu0 0.0
        %1511 = vmatprep.subr.mxu0 0.0
        %1512 = vmatpush1.msra.mxu0 0.0
        %1513 = vmatprep.subr.mxu0 0.0
        %1514 = vmatpush1.msra.mxu0 0.0
        %1515 = vmatprep.subr.mxu0 0.0
        %1516 = vmatpush1.msra.mxu0 0.0
        %1517 = vmatprep.subr.mxu0 0.0
        %1518 = vmatpush1.msra.mxu0 0.0
        %1519 = vmatprep.subr.mxu0 0.0
        %1520 = vmatpush1.msra.mxu0 0.0
        %1521 = vmatprep.subr.mxu0 0.0
        %1522 = vmatpush1.msra.mxu0 0.0
        %1523 = vmatprep.subr.mxu0 0.0
        %1524 = vmatpush1.msra.mxu0 0.0
        %1525 = vmatprep.subr.mxu0 0.0
        %1526 = vmatpush1.msra.mxu0 0.0
        %1527 = vmatprep.subr.mxu0 0.0
        %1528 = vmatpush1.msra.mxu0 0.0
        %1529 = vmatprep.subr.mxu0 0.0
        %1530 = vmatpush1.msra.mxu0 0.0
        %1531 = vmatprep.subr.mxu0 0.0
        %1532 = vmatpush1.msra.mxu0 0.0
        %1533 = vmatprep.subr.mxu0 0.0
        %1534 = vmatpush1.msra.mxu0 0.0
        %1535 = vmatprep.subr.mxu0 0.0
        %1536 = vmatpush1.msra.mxu0 0.0
        %1537 = vmatprep.subr.mxu0 0.0
        %1538 = vmatpush1.msra.mxu0 0.0
        %1539 = vmatprep.subr.mxu0 0.0
        %1540 = vmatpush1.msra.mxu0 0.0
        %1541 = vmatprep.subr.mxu0 0.0
        %1542 = vmatpush1.msra.mxu0 0.0
        %1543 = vmatprep.subr.mxu0 0.0
        %1544 = vmatpush1.msra.mxu0 0.0
        %1545 = vmatprep.subr.mxu0 0.0
        %1546 = vmatpush1.msra.mxu0 0.0
        %1547 = vmatprep.subr.mxu0 0.0
        %1548 = vmatpush1.msra.mxu0 0.0
        %1549 = vmatprep.subr.mxu0 0.0
        %1550 = vmatpush1.msra.mxu0 0.0
        %1551 = vmatprep.subr.mxu0 0.0
        %1552 = vmatpush1.msra.mxu0 0.0
        %1553 = vmatprep.subr.mxu0 0.0
        %1554 = vmatpush1.msra.mxu0 0.0
        %1555 = vmatprep.subr.mxu0 0.0
        %1556 = vmatpush1.msra.mxu0 0.0
        %1557 = vmatprep.subr.mxu0 0.0
        %1558 = vmatpush1.msra.mxu0 0.0
        %1559 = vmatprep.subr.mxu0 0.0
        %1560 = vmatpush1.msra.mxu0 0.0
        %1561 = vmatprep.subr.mxu0 0.0
        %1562 = vmatpush1.msra.mxu0 0.0
        %1563 = vmatprep.subr.mxu0 0.0
        %1564 = vmatpush1.msra.mxu0 0.0
        %1565 = vmatprep.subr.mxu0 0.0
        %1566 = vmatpush1.msra.mxu0 0.0
        %1567 = vmatprep.subr.mxu0 0.0
        %1568 = vmatpush1.msra.mxu0 0.0
        %1569 = vmatprep.mubr.f32.mxu0 0.0
        %1570 = vmatmul.mubr.f32.gmra.mrb[0].mxu0 %v1500
        %v1571 = vpop.f32.mrb[0].mxu0
        %v1572 = vadd.f32 %v373, %v1571
        %v1573 = vpop.f32.mrb[0].mxu0
        %1574 = vmatprep.mubr.f32.mxu0 0.0
        %1575 = vmatmul.mubr.f32.gmra.mrb[0].mxu0 %v1503
        %v1576 = vpop.f32.mrb[0].mxu0
        %v1577 = vadd.f32 %v378, %v1576
        %v1578 = vpop.f32.mrb[0].mxu0
        %1579 = vdwg.mxu0
        %v1580 = vmax.f32 %v1572, 0.0
        %v1581 = vmax.f32 %v1577, 0.0
        %s1582 = scalar_lea.vmem [#allocation2], 64
        %1583 = vst [vmem:[%s1582] sm:$0xff] %v1580
        %1584 = vst [vmem:[%s1582 + $0x8] sm:$0xff] %v1581
        %s1585 = scalar_lea.vmem %s355, 80
        %v1586 = vld [vmem:[%s1585] sm:$0xff]
        %v1587 = vld [vmem:[%s1585 + $0x8] sm:$0xff]
        %v1588 = vld [vmem:[%s1] sm:$0xff]
        %v1590 = vsel %vm383, %v1588, 0
        %1592 = vmatprep.subr.mxu0 0.0
        %1593 = vmatpush1.msra.mxu0 %v1586
        %1594 = vmatprep.subr.mxu0 0.0
        %1595 = vmatpush1.msra.mxu0 %v1587
        %1596 = vmatprep.subr.mxu0 0.0
        %1597 = vmatpush1.msra.mxu0 0.0
        %1598 = vmatprep.subr.mxu0 0.0
        %1599 = vmatpush1.msra.mxu0 0.0
        %1600 = vmatprep.subr.mxu0 0.0
        %1601 = vmatpush1.msra.mxu0 0.0
        %1602 = vmatprep.subr.mxu0 0.0
        %1603 = vmatpush1.msra.mxu0 0.0
        %1604 = vmatprep.subr.mxu0 0.0
        %1605 = vmatpush1.msra.mxu0 0.0
        %1606 = vmatprep.subr.mxu0 0.0
        %1607 = vmatpush1.msra.mxu0 0.0
        %1608 = vmatprep.subr.mxu0 0.0
        %1609 = vmatpush1.msra.mxu0 0.0
        %1610 = vmatprep.subr.mxu0 0.0
        %1611 = vmatpush1.msra.mxu0 0.0
        %1612 = vmatprep.subr.mxu0 0.0
        %1613 = vmatpush1.msra.mxu0 0.0
        %1614 = vmatprep.subr.mxu0 0.0
        %1615 = vmatpush1.msra.mxu0 0.0
        %1616 = vmatprep.subr.mxu0 0.0
        %1617 = vmatpush1.msra.mxu0 0.0
        %1618 = vmatprep.subr.mxu0 0.0
        %1619 = vmatpush1.msra.mxu0 0.0
        %1620 = vmatprep.subr.mxu0 0.0
        %1621 = vmatpush1.msra.mxu0 0.0
        %1622 = vmatprep.subr.mxu0 0.0
        %1623 = vmatpush1.msra.mxu0 0.0
        %1624 = vmatprep.subr.mxu0 0.0
        %1625 = vmatpush1.msra.mxu0 0.0
        %1626 = vmatprep.subr.mxu0 0.0
        %1627 = vmatpush1.msra.mxu0 0.0
        %1628 = vmatprep.subr.mxu0 0.0
        %1629 = vmatpush1.msra.mxu0 0.0
        %1630 = vmatprep.subr.mxu0 0.0
        %1631 = vmatpush1.msra.mxu0 0.0
        %1632 = vmatprep.subr.mxu0 0.0
        %1633 = vmatpush1.msra.mxu0 0.0
        %1634 = vmatprep.subr.mxu0 0.0
        %1635 = vmatpush1.msra.mxu0 0.0
        %1636 = vmatprep.subr.mxu0 0.0
        %1637 = vmatpush1.msra.mxu0 0.0
        %1638 = vmatprep.subr.mxu0 0.0
        %1639 = vmatpush1.msra.mxu0 0.0
        %1640 = vmatprep.subr.mxu0 0.0
        %1641 = vmatpush1.msra.mxu0 0.0
        %1642 = vmatprep.subr.mxu0 0.0
        %1643 = vmatpush1.msra.mxu0 0.0
        %1644 = vmatprep.subr.mxu0 0.0
        %1645 = vmatpush1.msra.mxu0 0.0
        %1646 = vmatprep.subr.mxu0 0.0
        %1647 = vmatpush1.msra.mxu0 0.0
        %1648 = vmatprep.subr.mxu0 0.0
        %1649 = vmatpush1.msra.mxu0 0.0
        %1650 = vmatprep.subr.mxu0 0.0
        %1651 = vmatpush1.msra.mxu0 0.0
        %1652 = vmatprep.subr.mxu0 0.0
        %1653 = vmatpush1.msra.mxu0 0.0
        %1654 = vmatprep.subr.mxu0 0.0
        %1655 = vmatpush1.msra.mxu0 0.0
        %1656 = vmatprep.mubr.f32.mxu0 0.0
        %1657 = vmatmul.mubr.f32.gmra.mrb[0].mxu0 %v1590
        %v1658 = vpop.f32.mrb[0].mxu0
        %v1659 = vadd.f32 %v360, %v1658
        %v1660 = vpop.f32.mrb[0].mxu0
        %1661 = vdwg.mxu0
        %v1662 = vmax.f32 %v1659, 0.0
        %v1663 = vld [vmem:[%s3] sm:$0xff]
        %v1665 = vsel %vm459, %v1663, 0
        %1667 = vmatprep.subr.mxu0 0.0
        %1668 = vmatpush1.msra.mxu0 %v1662
        %1669 = vmatprep.subr.mxu0 0.0
        %1670 = vmatpush1.msra.mxu0 0.0
        %1671 = vmatprep.subr.mxu0 0.0
        %1672 = vmatpush1.msra.mxu0 0.0
        %1673 = vmatprep.subr.mxu0 0.0
        %1674 = vmatpush1.msra.mxu0 0.0
        %1675 = vmatprep.subr.mxu0 0.0
        %1676 = vmatpush1.msra.mxu0 0.0
        %1677 = vmatprep.subr.mxu0 0.0
        %1678 = vmatpush1.msra.mxu0 0.0
        %1679 = vmatprep.subr.mxu0 0.0
        %1680 = vmatpush1.msra.mxu0 0.0
        %1681 = vmatprep.subr.mxu0 0.0
        %1682 = vmatpush1.msra.mxu0 0.0
        %1683 = vmatprep.subr.mxu0 0.0
        %1684 = vmatpush1.msra.mxu0 0.0
        %1685 = vmatprep.subr.mxu0 0.0
        %1686 = vmatpush1.msra.mxu0 0.0
        %1687 = vmatprep.subr.mxu0 0.0
        %1688 = vmatpush1.msra.mxu0 0.0
        %1689 = vmatprep.subr.mxu0 0.0
        %1690 = vmatpush1.msra.mxu0 0.0
        %1691 = vmatprep.subr.mxu0 0.0
        %1692 = vmatpush1.msra.mxu0 0.0
        %1693 = vmatprep.subr.mxu0 0.0
        %1694 = vmatpush1.msra.mxu0 0.0
        %1695 = vmatprep.subr.mxu0 0.0
        %1696 = vmatpush1.msra.mxu0 0.0
        %1697 = vmatprep.subr.mxu0 0.0
        %1698 = vmatpush1.msra.mxu0 0.0
        %1699 = vmatprep.subr.mxu0 0.0
        %1700 = vmatpush1.msra.mxu0 0.0
        %1701 = vmatprep.subr.mxu0 0.0
        %1702 = vmatpush1.msra.mxu0 0.0
        %1703 = vmatprep.subr.mxu0 0.0
        %1704 = vmatpush1.msra.mxu0 0.0
        %1705 = vmatprep.subr.mxu0 0.0
        %1706 = vmatpush1.msra.mxu0 0.0
        %1707 = vmatprep.subr.mxu0 0.0
        %1708 = vmatpush1.msra.mxu0 0.0
        %1709 = vmatprep.subr.mxu0 0.0
        %1710 = vmatpush1.msra.mxu0 0.0
        %1711 = vmatprep.subr.mxu0 0.0
        %1712 = vmatpush1.msra.mxu0 0.0
        %1713 = vmatprep.subr.mxu0 0.0
        %1714 = vmatpush1.msra.mxu0 0.0
        %1715 = vmatprep.subr.mxu0 0.0
        %1716 = vmatpush1.msra.mxu0 0.0
        %1717 = vmatprep.subr.mxu0 0.0
        %1718 = vmatpush1.msra.mxu0 0.0
        %1719 = vmatprep.subr.mxu0 0.0
        %1720 = vmatpush1.msra.mxu0 0.0
        %1721 = vmatprep.subr.mxu0 0.0
        %1722 = vmatpush1.msra.mxu0 0.0
        %1723 = vmatprep.subr.mxu0 0.0
        %1724 = vmatpush1.msra.mxu0 0.0
        %1725 = vmatprep.subr.mxu0 0.0
        %1726 = vmatpush1.msra.mxu0 0.0
        %1727 = vmatprep.subr.mxu0 0.0
        %1728 = vmatpush1.msra.mxu0 0.0
        %1729 = vmatprep.subr.mxu0 0.0
        %1730 = vmatpush1.msra.mxu0 0.0
        %1731 = vmatprep.mubr.f32.mxu0 0.0
        %1732 = vmatmul.mubr.f32.gmra.mrb[0].mxu0 %v1665
        %v1733 = vpop.f32.mrb[0].mxu0
        %v1734 = vadd.f32 %v366, %v1733
        %v1735 = vpop.f32.mrb[0].mxu0
        %1736 = vdwg.mxu0
        %v1737 = vmax.f32 %v1734, 0.0
        %v1738 = vld [vmem:[%s5] sm:$0xff]
        %v1739 = vld [vmem:[%s5 + $0x8] sm:$0xff]
        %v1741 = vsel %vm459, %v1738, 0
        %v1744 = vsel %vm459, %v1739, 0
        %1746 = vmatprep.subr.mxu0 0.0
        %1747 = vmatpush1.msra.mxu0 %v1737
        %1748 = vmatprep.subr.mxu0 0.0
        %1749 = vmatpush1.msra.mxu0 0.0
        %1750 = vmatprep.subr.mxu0 0.0
        %1751 = vmatpush1.msra.mxu0 0.0
        %1752 = vmatprep.subr.mxu0 0.0
        %1753 = vmatpush1.msra.mxu0 0.0
        %1754 = vmatprep.subr.mxu0 0.0
        %1755 = vmatpush1.msra.mxu0 0.0
        %1756 = vmatprep.subr.mxu0 0.0
        %1757 = vmatpush1.msra.mxu0 0.0
        %1758 = vmatprep.subr.mxu0 0.0
        %1759 = vmatpush1.msra.mxu0 0.0
        %1760 = vmatprep.subr.mxu0 0.0
        %1761 = vmatpush1.msra.mxu0 0.0
        %1762 = vmatprep.subr.mxu0 0.0
        %1763 = vmatpush1.msra.mxu0 0.0
        %1764 = vmatprep.subr.mxu0 0.0
        %1765 = vmatpush1.msra.mxu0 0.0
        %1766 = vmatprep.subr.mxu0 0.0
        %1767 = vmatpush1.msra.mxu0 0.0
        %1768 = vmatprep.subr.mxu0 0.0
        %1769 = vmatpush1.msra.mxu0 0.0
        %1770 = vmatprep.subr.mxu0 0.0
        %1771 = vmatpush1.msra.mxu0 0.0
        %1772 = vmatprep.subr.mxu0 0.0
        %1773 = vmatpush1.msra.mxu0 0.0
        %1774 = vmatprep.subr.mxu0 0.0
        %1775 = vmatpush1.msra.mxu0 0.0
        %1776 = vmatprep.subr.mxu0 0.0
        %1777 = vmatpush1.msra.mxu0 0.0
        %1778 = vmatprep.subr.mxu0 0.0
        %1779 = vmatpush1.msra.mxu0 0.0
        %1780 = vmatprep.subr.mxu0 0.0
        %1781 = vmatpush1.msra.mxu0 0.0
        %1782 = vmatprep.subr.mxu0 0.0
        %1783 = vmatpush1.msra.mxu0 0.0
        %1784 = vmatprep.subr.mxu0 0.0
        %1785 = vmatpush1.msra.mxu0 0.0
        %1786 = vmatprep.subr.mxu0 0.0
        %1787 = vmatpush1.msra.mxu0 0.0
        %1788 = vmatprep.subr.mxu0 0.0
        %1789 = vmatpush1.msra.mxu0 0.0
        %1790 = vmatprep.subr.mxu0 0.0
        %1791 = vmatpush1.msra.mxu0 0.0
        %1792 = vmatprep.subr.mxu0 0.0
        %1793 = vmatpush1.msra.mxu0 0.0
        %1794 = vmatprep.subr.mxu0 0.0
        %1795 = vmatpush1.msra.mxu0 0.0
        %1796 = vmatprep.subr.mxu0 0.0
        %1797 = vmatpush1.msra.mxu0 0.0
        %1798 = vmatprep.subr.mxu0 0.0
        %1799 = vmatpush1.msra.mxu0 0.0
        %1800 = vmatprep.subr.mxu0 0.0
        %1801 = vmatpush1.msra.mxu0 0.0
        %1802 = vmatprep.subr.mxu0 0.0
        %1803 = vmatpush1.msra.mxu0 0.0
        %1804 = vmatprep.subr.mxu0 0.0
        %1805 = vmatpush1.msra.mxu0 0.0
        %1806 = vmatprep.subr.mxu0 0.0
        %1807 = vmatpush1.msra.mxu0 0.0
        %1808 = vmatprep.subr.mxu0 0.0
        %1809 = vmatpush1.msra.mxu0 0.0
        %1810 = vmatprep.mubr.f32.mxu0 0.0
        %1811 = vmatmul.mubr.f32.gmra.mrb[0].mxu0 %v1741
        %v1812 = vpop.f32.mrb[0].mxu0
        %v1813 = vadd.f32 %v373, %v1812
        %v1814 = vpop.f32.mrb[0].mxu0
        %1815 = vmatprep.mubr.f32.mxu0 0.0
        %1816 = vmatmul.mubr.f32.gmra.mrb[0].mxu0 %v1744
        %v1817 = vpop.f32.mrb[0].mxu0
        %v1818 = vadd.f32 %v378, %v1817
        %v1819 = vpop.f32.mrb[0].mxu0
        %1820 = vdwg.mxu0
        %v1821 = vmax.f32 %v1813, 0.0
        %v1822 = vmax.f32 %v1818, 0.0
        %s1823 = scalar_lea.vmem [#allocation2], 80
        %1824 = vst [vmem:[%s1823] sm:$0xff] %v1821
        %1825 = vst [vmem:[%s1823 + $0x8] sm:$0xff] %v1822
        %s1826 = scalar_lea.vmem %s355, 96
        %v1827 = vld [vmem:[%s1826] sm:$0xff]
        %v1828 = vld [vmem:[%s1826 + $0x8] sm:$0xff]
        %v1829 = vld [vmem:[%s1] sm:$0xff]
        %v1831 = vsel %vm383, %v1829, 0
        %1833 = vmatprep.subr.mxu0 0.0
        %1834 = vmatpush1.msra.mxu0 %v1827
        %1835 = vmatprep.subr.mxu0 0.0
        %1836 = vmatpush1.msra.mxu0 %v1828
        %1837 = vmatprep.subr.mxu0 0.0
        %1838 = vmatpush1.msra.mxu0 0.0
        %1839 = vmatprep.subr.mxu0 0.0
        %1840 = vmatpush1.msra.mxu0 0.0
        %1841 = vmatprep.subr.mxu0 0.0
        %1842 = vmatpush1.msra.mxu0 0.0
        %1843 = vmatprep.subr.mxu0 0.0
        %1844 = vmatpush1.msra.mxu0 0.0
        %1845 = vmatprep.subr.mxu0 0.0
        %1846 = vmatpush1.msra.mxu0 0.0
        %1847 = vmatprep.subr.mxu0 0.0
        %1848 = vmatpush1.msra.mxu0 0.0
        %1849 = vmatprep.subr.mxu0 0.0
        %1850 = vmatpush1.msra.mxu0 0.0
        %1851 = vmatprep.subr.mxu0 0.0
        %1852 = vmatpush1.msra.mxu0 0.0
        %1853 = vmatprep.subr.mxu0 0.0
        %1854 = vmatpush1.msra.mxu0 0.0
        %1855 = vmatprep.subr.mxu0 0.0
        %1856 = vmatpush1.msra.mxu0 0.0
        %1857 = vmatprep.subr.mxu0 0.0
        %1858 = vmatpush1.msra.mxu0 0.0
        %1859 = vmatprep.subr.mxu0 0.0
        %1860 = vmatpush1.msra.mxu0 0.0
        %1861 = vmatprep.subr.mxu0 0.0
        %1862 = vmatpush1.msra.mxu0 0.0
        %1863 = vmatprep.subr.mxu0 0.0
        %1864 = vmatpush1.msra.mxu0 0.0
        %1865 = vmatprep.subr.mxu0 0.0
        %1866 = vmatpush1.msra.mxu0 0.0
        %1867 = vmatprep.subr.mxu0 0.0
        %1868 = vmatpush1.msra.mxu0 0.0
        %1869 = vmatprep.subr.mxu0 0.0
        %1870 = vmatpush1.msra.mxu0 0.0
        %1871 = vmatprep.subr.mxu0 0.0
        %1872 = vmatpush1.msra.mxu0 0.0
        %1873 = vmatprep.subr.mxu0 0.0
        %1874 = vmatpush1.msra.mxu0 0.0
        %1875 = vmatprep.subr.mxu0 0.0
        %1876 = vmatpush1.msra.mxu0 0.0
        %1877 = vmatprep.subr.mxu0 0.0
        %1878 = vmatpush1.msra.mxu0 0.0
        %1879 = vmatprep.subr.mxu0 0.0
        %1880 = vmatpush1.msra.mxu0 0.0
        %1881 = vmatprep.subr.mxu0 0.0
        %1882 = vmatpush1.msra.mxu0 0.0
        %1883 = vmatprep.subr.mxu0 0.0
        %1884 = vmatpush1.msra.mxu0 0.0
        %1885 = vmatprep.subr.mxu0 0.0
        %1886 = vmatpush1.msra.mxu0 0.0
        %1887 = vmatprep.subr.mxu0 0.0
        %1888 = vmatpush1.msra.mxu0 0.0
        %1889 = vmatprep.subr.mxu0 0.0
        %1890 = vmatpush1.msra.mxu0 0.0
        %1891 = vmatprep.subr.mxu0 0.0
        %1892 = vmatpush1.msra.mxu0 0.0
        %1893 = vmatprep.subr.mxu0 0.0
        %1894 = vmatpush1.msra.mxu0 0.0
        %1895 = vmatprep.subr.mxu0 0.0
        %1896 = vmatpush1.msra.mxu0 0.0
        %1897 = vmatprep.mubr.f32.mxu0 0.0
        %1898 = vmatmul.mubr.f32.gmra.mrb[0].mxu0 %v1831
        %v1899 = vpop.f32.mrb[0].mxu0
        %v1900 = vadd.f32 %v360, %v1899
        %v1901 = vpop.f32.mrb[0].mxu0
        %1902 = vdwg.mxu0
        %v1903 = vmax.f32 %v1900, 0.0
        %v1904 = vld [vmem:[%s3] sm:$0xff]
        %v1906 = vsel %vm459, %v1904, 0
        %1908 = vmatprep.subr.mxu0 0.0
        %1909 = vmatpush1.msra.mxu0 %v1903
        %1910 = vmatprep.subr.mxu0 0.0
        %1911 = vmatpush1.msra.mxu0 0.0
        %1912 = vmatprep.subr.mxu0 0.0
        %1913 = vmatpush1.msra.mxu0 0.0
        %1914 = vmatprep.subr.mxu0 0.0
        %1915 = vmatpush1.msra.mxu0 0.0
        %1916 = vmatprep.subr.mxu0 0.0
        %1917 = vmatpush1.msra.mxu0 0.0
        %1918 = vmatprep.subr.mxu0 0.0
        %1919 = vmatpush1.msra.mxu0 0.0
        %1920 = vmatprep.subr.mxu0 0.0
        %1921 = vmatpush1.msra.mxu0 0.0
        %1922 = vmatprep.subr.mxu0 0.0
        %1923 = vmatpush1.msra.mxu0 0.0
        %1924 = vmatprep.subr.mxu0 0.0
        %1925 = vmatpush1.msra.mxu0 0.0
        %1926 = vmatprep.subr.mxu0 0.0
        %1927 = vmatpush1.msra.mxu0 0.0
        %1928 = vmatprep.subr.mxu0 0.0
        %1929 = vmatpush1.msra.mxu0 0.0
        %1930 = vmatprep.subr.mxu0 0.0
        %1931 = vmatpush1.msra.mxu0 0.0
        %1932 = vmatprep.subr.mxu0 0.0
        %1933 = vmatpush1.msra.mxu0 0.0
        %1934 = vmatprep.subr.mxu0 0.0
        %1935 = vmatpush1.msra.mxu0 0.0
        %1936 = vmatprep.subr.mxu0 0.0
        %1937 = vmatpush1.msra.mxu0 0.0
        %1938 = vmatprep.subr.mxu0 0.0
        %1939 = vmatpush1.msra.mxu0 0.0
        %1940 = vmatprep.subr.mxu0 0.0
        %1941 = vmatpush1.msra.mxu0 0.0
        %1942 = vmatprep.subr.mxu0 0.0
        %1943 = vmatpush1.msra.mxu0 0.0
        %1944 = vmatprep.subr.mxu0 0.0
        %1945 = vmatpush1.msra.mxu0 0.0
        %1946 = vmatprep.subr.mxu0 0.0
        %1947 = vmatpush1.msra.mxu0 0.0
        %1948 = vmatprep.subr.mxu0 0.0
        %1949 = vmatpush1.msra.mxu0 0.0
        %1950 = vmatprep.subr.mxu0 0.0
        %1951 = vmatpush1.msra.mxu0 0.0
        %1952 = vmatprep.subr.mxu0 0.0
        %1953 = vmatpush1.msra.mxu0 0.0
        %1954 = vmatprep.subr.mxu0 0.0
        %1955 = vmatpush1.msra.mxu0 0.0
        %1956 = vmatprep.subr.mxu0 0.0
        %1957 = vmatpush1.msra.mxu0 0.0
        %1958 = vmatprep.subr.mxu0 0.0
        %1959 = vmatpush1.msra.mxu0 0.0
        %1960 = vmatprep.subr.mxu0 0.0
        %1961 = vmatpush1.msra.mxu0 0.0
        %1962 = vmatprep.subr.mxu0 0.0
        %1963 = vmatpush1.msra.mxu0 0.0
        %1964 = vmatprep.subr.mxu0 0.0
        %1965 = vmatpush1.msra.mxu0 0.0
        %1966 = vmatprep.subr.mxu0 0.0
        %1967 = vmatpush1.msra.mxu0 0.0
        %1968 = vmatprep.subr.mxu0 0.0
        %1969 = vmatpush1.msra.mxu0 0.0
        %1970 = vmatprep.subr.mxu0 0.0
        %1971 = vmatpush1.msra.mxu0 0.0
        %1972 = vmatprep.mubr.f32.mxu0 0.0
        %1973 = vmatmul.mubr.f32.gmra.mrb[0].mxu0 %v1906
        %v1974 = vpop.f32.mrb[0].mxu0
        %v1975 = vadd.f32 %v366, %v1974
        %v1976 = vpop.f32.mrb[0].mxu0
        %1977 = vdwg.mxu0
        %v1978 = vmax.f32 %v1975, 0.0
        %v1979 = vld [vmem:[%s5] sm:$0xff]
        %v1980 = vld [vmem:[%s5 + $0x8] sm:$0xff]
        %v1982 = vsel %vm459, %v1979, 0
        %v1985 = vsel %vm459, %v1980, 0
        %1987 = vmatprep.subr.mxu0 0.0
        %1988 = vmatpush1.msra.mxu0 %v1978
        %1989 = vmatprep.subr.mxu0 0.0
        %1990 = vmatpush1.msra.mxu0 0.0
        %1991 = vmatprep.subr.mxu0 0.0
        %1992 = vmatpush1.msra.mxu0 0.0
        %1993 = vmatprep.subr.mxu0 0.0
        %1994 = vmatpush1.msra.mxu0 0.0
        %1995 = vmatprep.subr.mxu0 0.0
        %1996 = vmatpush1.msra.mxu0 0.0
        %1997 = vmatprep.subr.mxu0 0.0
        %1998 = vmatpush1.msra.mxu0 0.0
        %1999 = vmatprep.subr.mxu0 0.0
        %2000 = vmatpush1.msra.mxu0 0.0
        %2001 = vmatprep.subr.mxu0 0.0
        %2002 = vmatpush1.msra.mxu0 0.0
        %2003 = vmatprep.subr.mxu0 0.0
        %2004 = vmatpush1.msra.mxu0 0.0
        %2005 = vmatprep.subr.mxu0 0.0
        %2006 = vmatpush1.msra.mxu0 0.0
        %2007 = vmatprep.subr.mxu0 0.0
        %2008 = vmatpush1.msra.mxu0 0.0
        %2009 = vmatprep.subr.mxu0 0.0
        %2010 = vmatpush1.msra.mxu0 0.0
        %2011 = vmatprep.subr.mxu0 0.0
        %2012 = vmatpush1.msra.mxu0 0.0
        %2013 = vmatprep.subr.mxu0 0.0
        %2014 = vmatpush1.msra.mxu0 0.0
        %2015 = vmatprep.subr.mxu0 0.0
        %2016 = vmatpush1.msra.mxu0 0.0
        %2017 = vmatprep.subr.mxu0 0.0
        %2018 = vmatpush1.msra.mxu0 0.0
        %2019 = vmatprep.subr.mxu0 0.0
        %2020 = vmatpush1.msra.mxu0 0.0
        %2021 = vmatprep.subr.mxu0 0.0
        %2022 = vmatpush1.msra.mxu0 0.0
        %2023 = vmatprep.subr.mxu0 0.0
        %2024 = vmatpush1.msra.mxu0 0.0
        %2025 = vmatprep.subr.mxu0 0.0
        %2026 = vmatpush1.msra.mxu0 0.0
        %2027 = vmatprep.subr.mxu0 0.0
        %2028 = vmatpush1.msra.mxu0 0.0
        %2029 = vmatprep.subr.mxu0 0.0
        %2030 = vmatpush1.msra.mxu0 0.0
        %2031 = vmatprep.subr.mxu0 0.0
        %2032 = vmatpush1.msra.mxu0 0.0
        %2033 = vmatprep.subr.mxu0 0.0
        %2034 = vmatpush1.msra.mxu0 0.0
        %2035 = vmatprep.subr.mxu0 0.0
        %2036 = vmatpush1.msra.mxu0 0.0
        %2037 = vmatprep.subr.mxu0 0.0
        %2038 = vmatpush1.msra.mxu0 0.0
        %2039 = vmatprep.subr.mxu0 0.0
        %2040 = vmatpush1.msra.mxu0 0.0
        %2041 = vmatprep.subr.mxu0 0.0
        %2042 = vmatpush1.msra.mxu0 0.0
        %2043 = vmatprep.subr.mxu0 0.0
        %2044 = vmatpush1.msra.mxu0 0.0
        %2045 = vmatprep.subr.mxu0 0.0
        %2046 = vmatpush1.msra.mxu0 0.0
        %2047 = vmatprep.subr.mxu0 0.0
        %2048 = vmatpush1.msra.mxu0 0.0
        %2049 = vmatprep.subr.mxu0 0.0
        %2050 = vmatpush1.msra.mxu0 0.0
        %2051 = vmatprep.mubr.f32.mxu0 0.0
        %2052 = vmatmul.mubr.f32.gmra.mrb[0].mxu0 %v1982
        %v2053 = vpop.f32.mrb[0].mxu0
        %v2054 = vadd.f32 %v373, %v2053
        %v2055 = vpop.f32.mrb[0].mxu0
        %2056 = vmatprep.mubr.f32.mxu0 0.0
        %2057 = vmatmul.mubr.f32.gmra.mrb[0].mxu0 %v1985
        %v2058 = vpop.f32.mrb[0].mxu0
        %v2059 = vadd.f32 %v378, %v2058
        %v2060 = vpop.f32.mrb[0].mxu0
        %2061 = vdwg.mxu0
        %v2062 = vmax.f32 %v2054, 0.0
        %v2063 = vmax.f32 %v2059, 0.0
        %s2064 = scalar_lea.vmem [#allocation2], 96
        %2065 = vst [vmem:[%s2064] sm:$0xff] %v2062
        %2066 = vst [vmem:[%s2064 + $0x8] sm:$0xff] %v2063
        %s2067 = scalar_lea.vmem %s355, 112
        %v2068 = vld [vmem:[%s2067] sm:$0xff]
        %v2069 = vld [vmem:[%s2067 + $0x8] sm:$0xff]
        %v2070 = vld [vmem:[%s1] sm:$0xff]
        %v2072 = vsel %vm383, %v2070, 0
        %2074 = vmatprep.subr.mxu0 0.0
        %2075 = vmatpush1.msra.mxu0 %v2068
        %2076 = vmatprep.subr.mxu0 0.0
        %2077 = vmatpush1.msra.mxu0 %v2069
        %2078 = vmatprep.subr.mxu0 0.0
        %2079 = vmatpush1.msra.mxu0 0.0
        %2080 = vmatprep.subr.mxu0 0.0
        %2081 = vmatpush1.msra.mxu0 0.0
        %2082 = vmatprep.subr.mxu0 0.0
        %2083 = vmatpush1.msra.mxu0 0.0
        %2084 = vmatprep.subr.mxu0 0.0
        %2085 = vmatpush1.msra.mxu0 0.0
        %2086 = vmatprep.subr.mxu0 0.0
        %2087 = vmatpush1.msra.mxu0 0.0
        %2088 = vmatprep.subr.mxu0 0.0
        %2089 = vmatpush1.msra.mxu0 0.0
        %2090 = vmatprep.subr.mxu0 0.0
        %2091 = vmatpush1.msra.mxu0 0.0
        %2092 = vmatprep.subr.mxu0 0.0
        %2093 = vmatpush1.msra.mxu0 0.0
        %2094 = vmatprep.subr.mxu0 0.0
        %2095 = vmatpush1.msra.mxu0 0.0
        %2096 = vmatprep.subr.mxu0 0.0
        %2097 = vmatpush1.msra.mxu0 0.0
        %2098 = vmatprep.subr.mxu0 0.0
        %2099 = vmatpush1.msra.mxu0 0.0
        %2100 = vmatprep.subr.mxu0 0.0
        %2101 = vmatpush1.msra.mxu0 0.0
        %2102 = vmatprep.subr.mxu0 0.0
        %2103 = vmatpush1.msra.mxu0 0.0
        %2104 = vmatprep.subr.mxu0 0.0
        %2105 = vmatpush1.msra.mxu0 0.0
        %2106 = vmatprep.subr.mxu0 0.0
        %2107 = vmatpush1.msra.mxu0 0.0
        %2108 = vmatprep.subr.mxu0 0.0
        %2109 = vmatpush1.msra.mxu0 0.0
        %2110 = vmatprep.subr.mxu0 0.0
        %2111 = vmatpush1.msra.mxu0 0.0
        %2112 = vmatprep.subr.mxu0 0.0
        %2113 = vmatpush1.msra.mxu0 0.0
        %2114 = vmatprep.subr.mxu0 0.0
        %2115 = vmatpush1.msra.mxu0 0.0
        %2116 = vmatprep.subr.mxu0 0.0
        %2117 = vmatpush1.msra.mxu0 0.0
        %2118 = vmatprep.subr.mxu0 0.0
        %2119 = vmatpush1.msra.mxu0 0.0
        %2120 = vmatprep.subr.mxu0 0.0
        %2121 = vmatpush1.msra.mxu0 0.0
        %2122 = vmatprep.subr.mxu0 0.0
        %2123 = vmatpush1.msra.mxu0 0.0
        %2124 = vmatprep.subr.mxu0 0.0
        %2125 = vmatpush1.msra.mxu0 0.0
        %2126 = vmatprep.subr.mxu0 0.0
        %2127 = vmatpush1.msra.mxu0 0.0
        %2128 = vmatprep.subr.mxu0 0.0
        %2129 = vmatpush1.msra.mxu0 0.0
        %2130 = vmatprep.subr.mxu0 0.0
        %2131 = vmatpush1.msra.mxu0 0.0
        %2132 = vmatprep.subr.mxu0 0.0
        %2133 = vmatpush1.msra.mxu0 0.0
        %2134 = vmatprep.subr.mxu0 0.0
        %2135 = vmatpush1.msra.mxu0 0.0
        %2136 = vmatprep.subr.mxu0 0.0
        %2137 = vmatpush1.msra.mxu0 0.0
        %2138 = vmatprep.mubr.f32.mxu0 0.0
        %2139 = vmatmul.mubr.f32.gmra.mrb[0].mxu0 %v2072
        %v2140 = vpop.f32.mrb[0].mxu0
        %v2141 = vadd.f32 %v360, %v2140
        %v2142 = vpop.f32.mrb[0].mxu0
        %2143 = vdwg.mxu0
        %v2144 = vmax.f32 %v2141, 0.0
        %v2145 = vld [vmem:[%s3] sm:$0xff]
        %v2147 = vsel %vm459, %v2145, 0
        %2149 = vmatprep.subr.mxu0 0.0
        %2150 = vmatpush1.msra.mxu0 %v2144
        %2151 = vmatprep.subr.mxu0 0.0
        %2152 = vmatpush1.msra.mxu0 0.0
        %2153 = vmatprep.subr.mxu0 0.0
        %2154 = vmatpush1.msra.mxu0 0.0
        %2155 = vmatprep.subr.mxu0 0.0
        %2156 = vmatpush1.msra.mxu0 0.0
        %2157 = vmatprep.subr.mxu0 0.0
        %2158 = vmatpush1.msra.mxu0 0.0
        %2159 = vmatprep.subr.mxu0 0.0
        %2160 = vmatpush1.msra.mxu0 0.0
        %2161 = vmatprep.subr.mxu0 0.0
        %2162 = vmatpush1.msra.mxu0 0.0
        %2163 = vmatprep.subr.mxu0 0.0
        %2164 = vmatpush1.msra.mxu0 0.0
        %2165 = vmatprep.subr.mxu0 0.0
        %2166 = vmatpush1.msra.mxu0 0.0
        %2167 = vmatprep.subr.mxu0 0.0
        %2168 = vmatpush1.msra.mxu0 0.0
        %2169 = vmatprep.subr.mxu0 0.0
        %2170 = vmatpush1.msra.mxu0 0.0
        %2171 = vmatprep.subr.mxu0 0.0
        %2172 = vmatpush1.msra.mxu0 0.0
        %2173 = vmatprep.subr.mxu0 0.0
        %2174 = vmatpush1.msra.mxu0 0.0
        %2175 = vmatprep.subr.mxu0 0.0
        %2176 = vmatpush1.msra.mxu0 0.0
        %2177 = vmatprep.subr.mxu0 0.0
        %2178 = vmatpush1.msra.mxu0 0.0
        %2179 = vmatprep.subr.mxu0 0.0
        %2180 = vmatpush1.msra.mxu0 0.0
        %2181 = vmatprep.subr.mxu0 0.0
        %2182 = vmatpush1.msra.mxu0 0.0
        %2183 = vmatprep.subr.mxu0 0.0
        %2184 = vmatpush1.msra.mxu0 0.0
        %2185 = vmatprep.subr.mxu0 0.0
        %2186 = vmatpush1.msra.mxu0 0.0
        %2187 = vmatprep.subr.mxu0 0.0
        %2188 = vmatpush1.msra.mxu0 0.0
        %2189 = vmatprep.subr.mxu0 0.0
        %2190 = vmatpush1.msra.mxu0 0.0
        %2191 = vmatprep.subr.mxu0 0.0
        %2192 = vmatpush1.msra.mxu0 0.0
        %2193 = vmatprep.subr.mxu0 0.0
        %2194 = vmatpush1.msra.mxu0 0.0
        %2195 = vmatprep.subr.mxu0 0.0
        %2196 = vmatpush1.msra.mxu0 0.0
        %2197 = vmatprep.subr.mxu0 0.0
        %2198 = vmatpush1.msra.mxu0 0.0
        %2199 = vmatprep.subr.mxu0 0.0
        %2200 = vmatpush1.msra.mxu0 0.0
        %2201 = vmatprep.subr.mxu0 0.0
        %2202 = vmatpush1.msra.mxu0 0.0
        %2203 = vmatprep.subr.mxu0 0.0
        %2204 = vmatpush1.msra.mxu0 0.0
        %2205 = vmatprep.subr.mxu0 0.0
        %2206 = vmatpush1.msra.mxu0 0.0
        %2207 = vmatprep.subr.mxu0 0.0
        %2208 = vmatpush1.msra.mxu0 0.0
        %2209 = vmatprep.subr.mxu0 0.0
        %2210 = vmatpush1.msra.mxu0 0.0
        %2211 = vmatprep.subr.mxu0 0.0
        %2212 = vmatpush1.msra.mxu0 0.0
        %2213 = vmatprep.mubr.f32.mxu0 0.0
        %2214 = vmatmul.mubr.f32.gmra.mrb[0].mxu0 %v2147
        %v2215 = vpop.f32.mrb[0].mxu0
        %v2216 = vadd.f32 %v366, %v2215
        %v2217 = vpop.f32.mrb[0].mxu0
        %2218 = vdwg.mxu0
        %v2219 = vmax.f32 %v2216, 0.0
        %v2220 = vld [vmem:[%s5] sm:$0xff]
        %v2221 = vld [vmem:[%s5 + $0x8] sm:$0xff]
        %v2223 = vsel %vm459, %v2220, 0
        %v2226 = vsel %vm459, %v2221, 0
        %2228 = vmatprep.subr.mxu0 0.0
        %2229 = vmatpush1.msra.mxu0 %v2219
        %2230 = vmatprep.subr.mxu0 0.0
        %2231 = vmatpush1.msra.mxu0 0.0
        %2232 = vmatprep.subr.mxu0 0.0
        %2233 = vmatpush1.msra.mxu0 0.0
        %2234 = vmatprep.subr.mxu0 0.0
        %2235 = vmatpush1.msra.mxu0 0.0
        %2236 = vmatprep.subr.mxu0 0.0
        %2237 = vmatpush1.msra.mxu0 0.0
        %2238 = vmatprep.subr.mxu0 0.0
        %2239 = vmatpush1.msra.mxu0 0.0
        %2240 = vmatprep.subr.mxu0 0.0
        %2241 = vmatpush1.msra.mxu0 0.0
        %2242 = vmatprep.subr.mxu0 0.0
        %2243 = vmatpush1.msra.mxu0 0.0
        %2244 = vmatprep.subr.mxu0 0.0
        %2245 = vmatpush1.msra.mxu0 0.0
        %2246 = vmatprep.subr.mxu0 0.0
        %2247 = vmatpush1.msra.mxu0 0.0
        %2248 = vmatprep.subr.mxu0 0.0
        %2249 = vmatpush1.msra.mxu0 0.0
        %2250 = vmatprep.subr.mxu0 0.0
        %2251 = vmatpush1.msra.mxu0 0.0
        %2252 = vmatprep.subr.mxu0 0.0
        %2253 = vmatpush1.msra.mxu0 0.0
        %2254 = vmatprep.subr.mxu0 0.0
        %2255 = vmatpush1.msra.mxu0 0.0
        %2256 = vmatprep.subr.mxu0 0.0
        %2257 = vmatpush1.msra.mxu0 0.0
        %2258 = vmatprep.subr.mxu0 0.0
        %2259 = vmatpush1.msra.mxu0 0.0
        %2260 = vmatprep.subr.mxu0 0.0
        %2261 = vmatpush1.msra.mxu0 0.0
        %2262 = vmatprep.subr.mxu0 0.0
        %2263 = vmatpush1.msra.mxu0 0.0
        %2264 = vmatprep.subr.mxu0 0.0
        %2265 = vmatpush1.msra.mxu0 0.0
        %2266 = vmatprep.subr.mxu0 0.0
        %2267 = vmatpush1.msra.mxu0 0.0
        %2268 = vmatprep.subr.mxu0 0.0
        %2269 = vmatpush1.msra.mxu0 0.0
        %2270 = vmatprep.subr.mxu0 0.0
        %2271 = vmatpush1.msra.mxu0 0.0
        %2272 = vmatprep.subr.mxu0 0.0
        %2273 = vmatpush1.msra.mxu0 0.0
        %2274 = vmatprep.subr.mxu0 0.0
        %2275 = vmatpush1.msra.mxu0 0.0
        %2276 = vmatprep.subr.mxu0 0.0
        %2277 = vmatpush1.msra.mxu0 0.0
        %2278 = vmatprep.subr.mxu0 0.0
        %2279 = vmatpush1.msra.mxu0 0.0
        %2280 = vmatprep.subr.mxu0 0.0
        %2281 = vmatpush1.msra.mxu0 0.0
        %2282 = vmatprep.subr.mxu0 0.0
        %2283 = vmatpush1.msra.mxu0 0.0
        %2284 = vmatprep.subr.mxu0 0.0
        %2285 = vmatpush1.msra.mxu0 0.0
        %2286 = vmatprep.subr.mxu0 0.0
        %2287 = vmatpush1.msra.mxu0 0.0
        %2288 = vmatprep.subr.mxu0 0.0
        %2289 = vmatpush1.msra.mxu0 0.0
        %2290 = vmatprep.subr.mxu0 0.0
        %2291 = vmatpush1.msra.mxu0 0.0
        %2292 = vmatprep.mubr.f32.mxu0 0.0
        %2293 = vmatmul.mubr.f32.gmra.mrb[0].mxu0 %v2223
        %v2294 = vpop.f32.mrb[0].mxu0
        %v2295 = vadd.f32 %v373, %v2294
        %v2296 = vpop.f32.mrb[0].mxu0
        %2297 = vmatprep.mubr.f32.mxu0 0.0
        %2298 = vmatmul.mubr.f32.gmra.mrb[0].mxu0 %v2226
        %v2299 = vpop.f32.mrb[0].mxu0
        %v2300 = vadd.f32 %v378, %v2299
        %v2301 = vpop.f32.mrb[0].mxu0
        %2302 = vdwg.mxu0
        %v2303 = vmax.f32 %v2295, 0.0
        %v2304 = vmax.f32 %v2300, 0.0
        %s2305 = scalar_lea.vmem [#allocation2], 112
        %2306 = vst [vmem:[%s2305] sm:$0xff] %v2303
        %2307 = vst [vmem:[%s2305 + $0x8] sm:$0xff] %v2304
        %v2308 = vld [vmem:[%s8] sm:$0xff]
        %v2309 = vld [vmem:[%s8 + $0x8] sm:$0xff]
        %v2310 = vld [vmem:[%s8 + $0x10] sm:$0xff]
        %v2311 = vld [vmem:[%s8 + $0x18] sm:$0xff]
        %2313 = vset.pattern.permute.xlu0 0
        %2314 = vperm.xlu0 %2313, %v2308
        %v2315 = vpop.permute.xlu0 %2314
        %2318 = vset.pattern.permute.xlu0 0
        %2319 = vperm.xlu0 %2318, %v2309
        %v2320 = vpop.permute.xlu0 %2319
        %2323 = vset.pattern.permute.xlu0 0
        %2324 = vperm.xlu0 %2323, %v2310
        %v2325 = vpop.permute.xlu0 %2324
        %2328 = vset.pattern.permute.xlu0 0
        %2329 = vperm.xlu0 %2328, %v2311
        %v2330 = vpop.permute.xlu0 %2329
        %v2332 = vld [vmem:[%s355] sm:$0x1]
        %v2333 = vld [vmem:[#allocation2] sm:$0xff]
        %v2334 = vld [vmem:[#allocation2 + $0x8] sm:$0xff]
        %v2335 = vlaneseq
        %v2336 = vshrl.u32 %v2335, 7
        %v2337 = vsub.s32 0, %v2336
        %v2338 = vrot.slane %v2332, %v2337
        %v2339 = vmul.f32 %v2338, %v2333
        %v2340 = vmul.f32 %v2338, %v2334
        %v2341 = vld [vmem:[%s621] sm:$0x1]
        %v2342 = vld [vmem:[%s859] sm:$0xff]
        %v2343 = vld [vmem:[%s859 + $0x8] sm:$0xff]
        %v2344 = vlaneseq
        %v2345 = vshrl.u32 %v2344, 7
        %v2346 = vsub.s32 0, %v2345
        %v2347 = vrot.slane %v2341, %v2346
        %v2348 = vmul.f32 %v2347, %v2342
        %v2349 = vmul.f32 %v2347, %v2343
        %v2350 = vadd.f32 %v2339, %v2348
        %v2351 = vadd.f32 %v2340, %v2349
        %v2352 = vld [vmem:[%s862] sm:$0x1]
        %v2353 = vld [vmem:[%s1100] sm:$0xff]
        %v2354 = vld [vmem:[%s1100 + $0x8] sm:$0xff]
        %v2355 = vlaneseq
        %v2356 = vshrl.u32 %v2355, 7
        %v2357 = vsub.s32 0, %v2356
        %v2358 = vrot.slane %v2352, %v2357
        %v2359 = vmul.f32 %v2358, %v2353
        %v2360 = vmul.f32 %v2358, %v2354
        %v2361 = vadd.f32 %v2350, %v2359
        %v2362 = vadd.f32 %v2351, %v2360
        %v2363 = vld [vmem:[%s1103] sm:$0x1]
        %v2364 = vld [vmem:[%s1341] sm:$0xff]
        %v2365 = vld [vmem:[%s1341 + $0x8] sm:$0xff]
        %v2366 = vlaneseq
        %v2367 = vshrl.u32 %v2366, 7
        %v2368 = vsub.s32 0, %v2367
        %v2369 = vrot.slane %v2363, %v2368
        %v2370 = vmul.f32 %v2369, %v2364
        %v2371 = vmul.f32 %v2369, %v2365
        %v2372 = vadd.f32 %v2361, %v2370
        %v2373 = vadd.f32 %v2362, %v2371
        %v2374 = vld [vmem:[%s1344] sm:$0x1]
        %v2375 = vld [vmem:[%s1582] sm:$0xff]
        %v2376 = vld [vmem:[%s1582 + $0x8] sm:$0xff]
        %v2377 = vlaneseq
        %v2378 = vshrl.u32 %v2377, 7
        %v2379 = vsub.s32 0, %v2378
        %v2380 = vrot.slane %v2374, %v2379
        %v2381 = vmul.f32 %v2380, %v2375
        %v2382 = vmul.f32 %v2380, %v2376
        %v2383 = vadd.f32 %v2372, %v2381
        %v2384 = vadd.f32 %v2373, %v2382
        %v2385 = vld [vmem:[%s1585] sm:$0x1]
        %v2386 = vld [vmem:[%s1823] sm:$0xff]
        %v2387 = vld [vmem:[%s1823 + $0x8] sm:$0xff]
        %v2388 = vlaneseq
        %v2389 = vshrl.u32 %v2388, 7
        %v2390 = vsub.s32 0, %v2389
        %v2391 = vrot.slane %v2385, %v2390
        %v2392 = vmul.f32 %v2391, %v2386
        %v2393 = vmul.f32 %v2391, %v2387
        %v2394 = vadd.f32 %v2383, %v2392
        %v2395 = vadd.f32 %v2384, %v2393
        %v2396 = vld [vmem:[%s1826] sm:$0x1]
        %v2397 = vld [vmem:[%s2064] sm:$0xff]
        %v2398 = vld [vmem:[%s2064 + $0x8] sm:$0xff]
        %v2399 = vlaneseq
        %v2400 = vshrl.u32 %v2399, 7
        %v2401 = vsub.s32 0, %v2400
        %v2402 = vrot.slane %v2396, %v2401
        %v2403 = vmul.f32 %v2402, %v2397
        %v2404 = vmul.f32 %v2402, %v2398
        %v2405 = vadd.f32 %v2394, %v2403
        %v2406 = vadd.f32 %v2395, %v2404
        %v2407 = vld [vmem:[%s2067] sm:$0x1]
        %v2408 = vld [vmem:[%s2305] sm:$0xff]
        %v2409 = vld [vmem:[%s2305 + $0x8] sm:$0xff]
        %v2410 = vlaneseq
        %v2411 = vshrl.u32 %v2410, 7
        %v2412 = vsub.s32 0, %v2411
        %v2413 = vrot.slane %v2407, %v2412
        %v2414 = vmul.f32 %v2413, %v2408
        %v2415 = vmul.f32 %v2413, %v2409
        %v2416 = vadd.f32 %v2405, %v2414
        %v2417 = vadd.f32 %v2406, %v2415
        %v2418 = vld [vmem:[%s7] sm:$0xff]
        %v2419 = vld [vmem:[%s7 + $0x8] sm:$0xff]
        %v2420 = vld [vmem:[%s7 + $0x10] sm:$0xff]
        %v2421 = vld [vmem:[%s7 + $0x18] sm:$0xff]
        %v2423 = vsel %vm383, %v2418, 0
        %v2426 = vsel %vm383, %v2419, 0
        %v2429 = vsel %vm383, %v2420, 0
        %v2432 = vsel %vm383, %v2421, 0
        %2434 = vmatprep.subr.mxu0 0.0
        %2435 = vmatpush1.msra.mxu0 %v2416
        %2436 = vmatprep.subr.mxu0 0.0
        %2437 = vmatpush1.msra.mxu0 %v2417
        %2438 = vmatprep.subr.mxu0 0.0
        %2439 = vmatpush1.msra.mxu0 0.0
        %2440 = vmatprep.subr.mxu0 0.0
        %2441 = vmatpush1.msra.mxu0 0.0
        %2442 = vmatprep.subr.mxu0 0.0
        %2443 = vmatpush1.msra.mxu0 0.0
        %2444 = vmatprep.subr.mxu0 0.0
        %2445 = vmatpush1.msra.mxu0 0.0
        %2446 = vmatprep.subr.mxu0 0.0
        %2447 = vmatpush1.msra.mxu0 0.0
        %2448 = vmatprep.subr.mxu0 0.0
        %2449 = vmatpush1.msra.mxu0 0.0
        %2450 = vmatprep.subr.mxu0 0.0
        %2451 = vmatpush1.msra.mxu0 0.0
        %2452 = vmatprep.subr.mxu0 0.0
        %2453 = vmatpush1.msra.mxu0 0.0
        %2454 = vmatprep.subr.mxu0 0.0
        %2455 = vmatpush1.msra.mxu0 0.0
        %2456 = vmatprep.subr.mxu0 0.0
        %2457 = vmatpush1.msra.mxu0 0.0
        %2458 = vmatprep.subr.mxu0 0.0
        %2459 = vmatpush1.msra.mxu0 0.0
        %2460 = vmatprep.subr.mxu0 0.0
        %2461 = vmatpush1.msra.mxu0 0.0
        %2462 = vmatprep.subr.mxu0 0.0
        %2463 = vmatpush1.msra.mxu0 0.0
        %2464 = vmatprep.subr.mxu0 0.0
        %2465 = vmatpush1.msra.mxu0 0.0
        %2466 = vmatprep.subr.mxu0 0.0
        %2467 = vmatpush1.msra.mxu0 0.0
        %2468 = vmatprep.subr.mxu0 0.0
        %2469 = vmatpush1.msra.mxu0 0.0
        %2470 = vmatprep.subr.mxu0 0.0
        %2471 = vmatpush1.msra.mxu0 0.0
        %2472 = vmatprep.subr.mxu0 0.0
        %2473 = vmatpush1.msra.mxu0 0.0
        %2474 = vmatprep.subr.mxu0 0.0
        %2475 = vmatpush1.msra.mxu0 0.0
        %2476 = vmatprep.subr.mxu0 0.0
        %2477 = vmatpush1.msra.mxu0 0.0
        %2478 = vmatprep.subr.mxu0 0.0
        %2479 = vmatpush1.msra.mxu0 0.0
        %2480 = vmatprep.subr.mxu0 0.0
        %2481 = vmatpush1.msra.mxu0 0.0
        %2482 = vmatprep.subr.mxu0 0.0
        %2483 = vmatpush1.msra.mxu0 0.0
        %2484 = vmatprep.subr.mxu0 0.0
        %2485 = vmatpush1.msra.mxu0 0.0
        %2486 = vmatprep.subr.mxu0 0.0
        %2487 = vmatpush1.msra.mxu0 0.0
        %2488 = vmatprep.subr.mxu0 0.0
        %2489 = vmatpush1.msra.mxu0 0.0
        %2490 = vmatprep.subr.mxu0 0.0
        %2491 = vmatpush1.msra.mxu0 0.0
        %2492 = vmatprep.subr.mxu0 0.0
        %2493 = vmatpush1.msra.mxu0 0.0
        %2494 = vmatprep.subr.mxu0 0.0
        %2495 = vmatpush1.msra.mxu0 0.0
        %2496 = vmatprep.subr.mxu0 0.0
        %2497 = vmatpush1.msra.mxu0 0.0
        %2498 = vmatprep.mubr.f32.mxu0 0.0
        %2499 = vmatmul.mubr.f32.gmra.mrb[0].mxu0 %v2423
        %v2500 = vpop.f32.mrb[0].mxu0
        %v2501 = vadd.f32 0.0, %v2500
        %v2502 = vpop.f32.mrb[0].mxu0
        %2503 = vmatprep.mubr.f32.mxu0 0.0
        %2504 = vmatmul.mubr.f32.gmra.mrb[0].mxu0 %v2426
        %v2505 = vpop.f32.mrb[0].mxu0
        %v2506 = vadd.f32 0.0, %v2505
        %v2507 = vpop.f32.mrb[0].mxu0
        %2508 = vmatprep.mubr.f32.mxu0 0.0
        %2509 = vmatmul.mubr.f32.gmra.mrb[0].mxu0 %v2429
        %v2510 = vpop.f32.mrb[0].mxu0
        %v2511 = vadd.f32 0.0, %v2510
        %v2512 = vpop.f32.mrb[0].mxu0
        %2513 = vmatprep.mubr.f32.mxu0 0.0
        %2514 = vmatmul.mubr.f32.gmra.mrb[0].mxu0 %v2432
        %v2515 = vpop.f32.mrb[0].mxu0
        %v2516 = vadd.f32 0.0, %v2515
        %v2517 = vpop.f32.mrb[0].mxu0
        %2518 = vdwg.mxu0
        %v2519 = vadd.f32 %v2315, %v2501
        %v2520 = vadd.f32 %v2320, %v2506
        %v2521 = vadd.f32 %v2325, %v2511
        %v2522 = vadd.f32 %v2330, %v2516
        %v2523 = vld [vmem:[%s355 + $0x1] sm:$0x1]
        %v2524 = vlaneseq
        %v2525 = vshrl.u32 %v2524, 7
        %v2526 = vsub.s32 0, %v2525
        %v2527 = vrot.slane %v2523, %v2526
        %v2528 = vmul.f32 %v2527, %v2333
        %v2529 = vmul.f32 %v2527, %v2334
        %v2530 = vld [vmem:[%s621 + $0x1] sm:$0x1]
        %v2531 = vlaneseq
        %v2532 = vshrl.u32 %v2531, 7
        %v2533 = vsub.s32 0, %v2532
        %v2534 = vrot.slane %v2530, %v2533
        %v2535 = vmul.f32 %v2534, %v2342
        %v2536 = vmul.f32 %v2534, %v2343
        %v2537 = vadd.f32 %v2528, %v2535
        %v2538 = vadd.f32 %v2529, %v2536
        %v2539 = vld [vmem:[%s862 + $0x1] sm:$0x1]
        %v2540 = vlaneseq
        %v2541 = vshrl.u32 %v2540, 7
        %v2542 = vsub.s32 0, %v2541
        %v2543 = vrot.slane %v2539, %v2542
        %v2544 = vmul.f32 %v2543, %v2353
        %v2545 = vmul.f32 %v2543, %v2354
        %v2546 = vadd.f32 %v2537, %v2544
        %v2547 = vadd.f32 %v2538, %v2545
        %v2548 = vld [vmem:[%s1103 + $0x1] sm:$0x1]
        %v2549 = vlaneseq
        %v2550 = vshrl.u32 %v2549, 7
        %v2551 = vsub.s32 0, %v2550
        %v2552 = vrot.slane %v2548, %v2551
        %v2553 = vmul.f32 %v2552, %v2364
        %v2554 = vmul.f32 %v2552, %v2365
        %v2555 = vadd.f32 %v2546, %v2553
        %v2556 = vadd.f32 %v2547, %v2554
        %v2557 = vld [vmem:[%s1344 + $0x1] sm:$0x1]
        %v2558 = vlaneseq
        %v2559 = vshrl.u32 %v2558, 7
        %v2560 = vsub.s32 0, %v2559
        %v2561 = vrot.slane %v2557, %v2560
        %v2562 = vmul.f32 %v2561, %v2375
        %v2563 = vmul.f32 %v2561, %v2376
        %v2564 = vadd.f32 %v2555, %v2562
        %v2565 = vadd.f32 %v2556, %v2563
        %v2566 = vld [vmem:[%s1585 + $0x1] sm:$0x1]
        %v2567 = vlaneseq
        %v2568 = vshrl.u32 %v2567, 7
        %v2569 = vsub.s32 0, %v2568
        %v2570 = vrot.slane %v2566, %v2569
        %v2571 = vmul.f32 %v2570, %v2386
        %v2572 = vmul.f32 %v2570, %v2387
        %v2573 = vadd.f32 %v2564, %v2571
        %v2574 = vadd.f32 %v2565, %v2572
        %v2575 = vld [vmem:[%s1826 + $0x1] sm:$0x1]
        %v2576 = vlaneseq
        %v2577 = vshrl.u32 %v2576, 7
        %v2578 = vsub.s32 0, %v2577
        %v2579 = vrot.slane %v2575, %v2578
        %v2580 = vmul.f32 %v2579, %v2397
        %v2581 = vmul.f32 %v2579, %v2398
        %v2582 = vadd.f32 %v2573, %v2580
        %v2583 = vadd.f32 %v2574, %v2581
        %v2584 = vld [vmem:[%s2067 + $0x1] sm:$0x1]
        %v2585 = vlaneseq
        %v2586 = vshrl.u32 %v2585, 7
        %v2587 = vsub.s32 0, %v2586
        %v2588 = vrot.slane %v2584, %v2587
        %v2589 = vmul.f32 %v2588, %v2408
        %v2590 = vmul.f32 %v2588, %v2409
        %v2591 = vadd.f32 %v2582, %v2589
        %v2592 = vadd.f32 %v2583, %v2590
        %s2593 = scalar_lea.vmem %s7, 32
        %v2594 = vld [vmem:[%s2593] sm:$0xff]
        %v2595 = vld [vmem:[%s2593 + $0x8] sm:$0xff]
        %v2596 = vld [vmem:[%s2593 + $0x10] sm:$0xff]
        %v2597 = vld [vmem:[%s2593 + $0x18] sm:$0xff]
        %v2599 = vsel %vm383, %v2594, 0
        %v2602 = vsel %vm383, %v2595, 0
        %v2605 = vsel %vm383, %v2596, 0
        %v2608 = vsel %vm383, %v2597, 0
        %2610 = vmatprep.subr.mxu0 0.0
        %2611 = vmatpush1.msra.mxu0 %v2591
        %2612 = vmatprep.subr.mxu0 0.0
        %2613 = vmatpush1.msra.mxu0 %v2592
        %2614 = vmatprep.subr.mxu0 0.0
        %2615 = vmatpush1.msra.mxu0 0.0
        %2616 = vmatprep.subr.mxu0 0.0
        %2617 = vmatpush1.msra.mxu0 0.0
        %2618 = vmatprep.subr.mxu0 0.0
        %2619 = vmatpush1.msra.mxu0 0.0
        %2620 = vmatprep.subr.mxu0 0.0
        %2621 = vmatpush1.msra.mxu0 0.0
        %2622 = vmatprep.subr.mxu0 0.0
        %2623 = vmatpush1.msra.mxu0 0.0
        %2624 = vmatprep.subr.mxu0 0.0
        %2625 = vmatpush1.msra.mxu0 0.0
        %2626 = vmatprep.subr.mxu0 0.0
        %2627 = vmatpush1.msra.mxu0 0.0
        %2628 = vmatprep.subr.mxu0 0.0
        %2629 = vmatpush1.msra.mxu0 0.0
        %2630 = vmatprep.subr.mxu0 0.0
        %2631 = vmatpush1.msra.mxu0 0.0
        %2632 = vmatprep.subr.mxu0 0.0
        %2633 = vmatpush1.msra.mxu0 0.0
        %2634 = vmatprep.subr.mxu0 0.0
        %2635 = vmatpush1.msra.mxu0 0.0
        %2636 = vmatprep.subr.mxu0 0.0
        %2637 = vmatpush1.msra.mxu0 0.0
        %2638 = vmatprep.subr.mxu0 0.0
        %2639 = vmatpush1.msra.mxu0 0.0
        %2640 = vmatprep.subr.mxu0 0.0
        %2641 = vmatpush1.msra.mxu0 0.0
        %2642 = vmatprep.subr.mxu0 0.0
        %2643 = vmatpush1.msra.mxu0 0.0
        %2644 = vmatprep.subr.mxu0 0.0
        %2645 = vmatpush1.msra.mxu0 0.0
        %2646 = vmatprep.subr.mxu0 0.0
        %2647 = vmatpush1.msra.mxu0 0.0
        %2648 = vmatprep.subr.mxu0 0.0
        %2649 = vmatpush1.msra.mxu0 0.0
        %2650 = vmatprep.subr.mxu0 0.0
        %2651 = vmatpush1.msra.mxu0 0.0
        %2652 = vmatprep.subr.mxu0 0.0
        %2653 = vmatpush1.msra.mxu0 0.0
        %2654 = vmatprep.subr.mxu0 0.0
        %2655 = vmatpush1.msra.mxu0 0.0
        %2656 = vmatprep.subr.mxu0 0.0
        %2657 = vmatpush1.msra.mxu0 0.0
        %2658 = vmatprep.subr.mxu0 0.0
        %2659 = vmatpush1.msra.mxu0 0.0
        %2660 = vmatprep.subr.mxu0 0.0
        %2661 = vmatpush1.msra.mxu0 0.0
        %2662 = vmatprep.subr.mxu0 0.0
        %2663 = vmatpush1.msra.mxu0 0.0
        %2664 = vmatprep.subr.mxu0 0.0
        %2665 = vmatpush1.msra.mxu0 0.0
        %2666 = vmatprep.subr.mxu0 0.0
        %2667 = vmatpush1.msra.mxu0 0.0
        %2668 = vmatprep.subr.mxu0 0.0
        %2669 = vmatpush1.msra.mxu0 0.0
        %2670 = vmatprep.subr.mxu0 0.0
        %2671 = vmatpush1.msra.mxu0 0.0
        %2672 = vmatprep.subr.mxu0 0.0
        %2673 = vmatpush1.msra.mxu0 0.0
        %2674 = vmatprep.mubr.f32.mxu0 0.0
        %2675 = vmatmul.mubr.f32.gmra.mrb[0].mxu0 %v2599
        %v2676 = vpop.f32.mrb[0].mxu0
        %v2677 = vadd.f32 0.0, %v2676
        %v2678 = vpop.f32.mrb[0].mxu0
        %2679 = vmatprep.mubr.f32.mxu0 0.0
        %2680 = vmatmul.mubr.f32.gmra.mrb[0].mxu0 %v2602
        %v2681 = vpop.f32.mrb[0].mxu0
        %v2682 = vadd.f32 0.0, %v2681
        %v2683 = vpop.f32.mrb[0].mxu0
        %2684 = vmatprep.mubr.f32.mxu0 0.0
        %2685 = vmatmul.mubr.f32.gmra.mrb[0].mxu0 %v2605
        %v2686 = vpop.f32.mrb[0].mxu0
        %v2687 = vadd.f32 0.0, %v2686
        %v2688 = vpop.f32.mrb[0].mxu0
        %2689 = vmatprep.mubr.f32.mxu0 0.0
        %2690 = vmatmul.mubr.f32.gmra.mrb[0].mxu0 %v2608
        %v2691 = vpop.f32.mrb[0].mxu0
        %v2692 = vadd.f32 0.0, %v2691
        %v2693 = vpop.f32.mrb[0].mxu0
        %2694 = vdwg.mxu0
        %v2695 = vadd.f32 %v2519, %v2677
        %v2696 = vadd.f32 %v2520, %v2682
        %v2697 = vadd.f32 %v2521, %v2687
        %v2698 = vadd.f32 %v2522, %v2692
        %v2699 = vld [vmem:[%s355 + $0x2] sm:$0x1]
        %v2700 = vlaneseq
        %v2701 = vshrl.u32 %v2700, 7
        %v2702 = vsub.s32 0, %v2701
        %v2703 = vrot.slane %v2699, %v2702
        %v2704 = vmul.f32 %v2703, %v2333
        %v2705 = vmul.f32 %v2703, %v2334
        %v2706 = vld [vmem:[%s621 + $0x2] sm:$0x1]
        %v2707 = vlaneseq
        %v2708 = vshrl.u32 %v2707, 7
        %v2709 = vsub.s32 0, %v2708
        %v2710 = vrot.slane %v2706, %v2709
        %v2711 = vmul.f32 %v2710, %v2342
        %v2712 = vmul.f32 %v2710, %v2343
        %v2713 = vadd.f32 %v2704, %v2711
        %v2714 = vadd.f32 %v2705, %v2712
        %v2715 = vld [vmem:[%s862 + $0x2] sm:$0x1]
        %v2716 = vlaneseq
        %v2717 = vshrl.u32 %v2716, 7
        %v2718 = vsub.s32 0, %v2717
        %v2719 = vrot.slane %v2715, %v2718
        %v2720 = vmul.f32 %v2719, %v2353
        %v2721 = vmul.f32 %v2719, %v2354
        %v2722 = vadd.f32 %v2713, %v2720
        %v2723 = vadd.f32 %v2714, %v2721
        %v2724 = vld [vmem:[%s1103 + $0x2] sm:$0x1]
        %v2725 = vlaneseq
        %v2726 = vshrl.u32 %v2725, 7
        %v2727 = vsub.s32 0, %v2726
        %v2728 = vrot.slane %v2724, %v2727
        %v2729 = vmul.f32 %v2728, %v2364
        %v2730 = vmul.f32 %v2728, %v2365
        %v2731 = vadd.f32 %v2722, %v2729
        %v2732 = vadd.f32 %v2723, %v2730
        %v2733 = vld [vmem:[%s1344 + $0x2] sm:$0x1]
        %v2734 = vlaneseq
        %v2735 = vshrl.u32 %v2734, 7
        %v2736 = vsub.s32 0, %v2735
        %v2737 = vrot.slane %v2733, %v2736
        %v2738 = vmul.f32 %v2737, %v2375
        %v2739 = vmul.f32 %v2737, %v2376
        %v2740 = vadd.f32 %v2731, %v2738
        %v2741 = vadd.f32 %v2732, %v2739
        %v2742 = vld [vmem:[%s1585 + $0x2] sm:$0x1]
        %v2743 = vlaneseq
        %v2744 = vshrl.u32 %v2743, 7
        %v2745 = vsub.s32 0, %v2744
        %v2746 = vrot.slane %v2742, %v2745
        %v2747 = vmul.f32 %v2746, %v2386
        %v2748 = vmul.f32 %v2746, %v2387
        %v2749 = vadd.f32 %v2740, %v2747
        %v2750 = vadd.f32 %v2741, %v2748
        %v2751 = vld [vmem:[%s1826 + $0x2] sm:$0x1]
        %v2752 = vlaneseq
        %v2753 = vshrl.u32 %v2752, 7
        %v2754 = vsub.s32 0, %v2753
        %v2755 = vrot.slane %v2751, %v2754
        %v2756 = vmul.f32 %v2755, %v2397
        %v2757 = vmul.f32 %v2755, %v2398
        %v2758 = vadd.f32 %v2749, %v2756
        %v2759 = vadd.f32 %v2750, %v2757
        %v2760 = vld [vmem:[%s2067 + $0x2] sm:$0x1]
        %v2761 = vlaneseq
        %v2762 = vshrl.u32 %v2761, 7
        %v2763 = vsub.s32 0, %v2762
        %v2764 = vrot.slane %v2760, %v2763
        %v2765 = vmul.f32 %v2764, %v2408
        %v2766 = vmul.f32 %v2764, %v2409
        %v2767 = vadd.f32 %v2758, %v2765
        %v2768 = vadd.f32 %v2759, %v2766
        %s2769 = scalar_lea.vmem %s7, 64
        %v2770 = vld [vmem:[%s2769] sm:$0xff]
        %v2771 = vld [vmem:[%s2769 + $0x8] sm:$0xff]
        %v2772 = vld [vmem:[%s2769 + $0x10] sm:$0xff]
        %v2773 = vld [vmem:[%s2769 + $0x18] sm:$0xff]
        %v2775 = vsel %vm383, %v2770, 0
        %v2778 = vsel %vm383, %v2771, 0
        %v2781 = vsel %vm383, %v2772, 0
        %v2784 = vsel %vm383, %v2773, 0
        %2786 = vmatprep.subr.mxu0 0.0
        %2787 = vmatpush1.msra.mxu0 %v2767
        %2788 = vmatprep.subr.mxu0 0.0
        %2789 = vmatpush1.msra.mxu0 %v2768
        %2790 = vmatprep.subr.mxu0 0.0
        %2791 = vmatpush1.msra.mxu0 0.0
        %2792 = vmatprep.subr.mxu0 0.0
        %2793 = vmatpush1.msra.mxu0 0.0
        %2794 = vmatprep.subr.mxu0 0.0
        %2795 = vmatpush1.msra.mxu0 0.0
        %2796 = vmatprep.subr.mxu0 0.0
        %2797 = vmatpush1.msra.mxu0 0.0
        %2798 = vmatprep.subr.mxu0 0.0
        %2799 = vmatpush1.msra.mxu0 0.0
        %2800 = vmatprep.subr.mxu0 0.0
        %2801 = vmatpush1.msra.mxu0 0.0
        %2802 = vmatprep.subr.mxu0 0.0
        %2803 = vmatpush1.msra.mxu0 0.0
        %2804 = vmatprep.subr.mxu0 0.0
        %2805 = vmatpush1.msra.mxu0 0.0
        %2806 = vmatprep.subr.mxu0 0.0
        %2807 = vmatpush1.msra.mxu0 0.0
        %2808 = vmatprep.subr.mxu0 0.0
        %2809 = vmatpush1.msra.mxu0 0.0
        %2810 = vmatprep.subr.mxu0 0.0
        %2811 = vmatpush1.msra.mxu0 0.0
        %2812 = vmatprep.subr.mxu0 0.0
        %2813 = vmatpush1.msra.mxu0 0.0
        %2814 = vmatprep.subr.mxu0 0.0
        %2815 = vmatpush1.msra.mxu0 0.0
        %2816 = vmatprep.subr.mxu0 0.0
        %2817 = vmatpush1.msra.mxu0 0.0
        %2818 = vmatprep.subr.mxu0 0.0
        %2819 = vmatpush1.msra.mxu0 0.0
        %2820 = vmatprep.subr.mxu0 0.0
        %2821 = vmatpush1.msra.mxu0 0.0
        %2822 = vmatprep.subr.mxu0 0.0
        %2823 = vmatpush1.msra.mxu0 0.0
        %2824 = vmatprep.subr.mxu0 0.0
        %2825 = vmatpush1.msra.mxu0 0.0
        %2826 = vmatprep.subr.mxu0 0.0
        %2827 = vmatpush1.msra.mxu0 0.0
        %2828 = vmatprep.subr.mxu0 0.0
        %2829 = vmatpush1.msra.mxu0 0.0
        %2830 = vmatprep.subr.mxu0 0.0
        %2831 = vmatpush1.msra.mxu0 0.0
        %2832 = vmatprep.subr.mxu0 0.0
        %2833 = vmatpush1.msra.mxu0 0.0
        %2834 = vmatprep.subr.mxu0 0.0
        %2835 = vmatpush1.msra.mxu0 0.0
        %2836 = vmatprep.subr.mxu0 0.0
        %2837 = vmatpush1.msra.mxu0 0.0
        %2838 = vmatprep.subr.mxu0 0.0
        %2839 = vmatpush1.msra.mxu0 0.0
        %2840 = vmatprep.subr.mxu0 0.0
        %2841 = vmatpush1.msra.mxu0 0.0
        %2842 = vmatprep.subr.mxu0 0.0
        %2843 = vmatpush1.msra.mxu0 0.0
        %2844 = vmatprep.subr.mxu0 0.0
        %2845 = vmatpush1.msra.mxu0 0.0
        %2846 = vmatprep.subr.mxu0 0.0
        %2847 = vmatpush1.msra.mxu0 0.0
        %2848 = vmatprep.subr.mxu0 0.0
        %2849 = vmatpush1.msra.mxu0 0.0
        %2850 = vmatprep.mubr.f32.mxu0 0.0
        %2851 = vmatmul.mubr.f32.gmra.mrb[0].mxu0 %v2775
        %v2852 = vpop.f32.mrb[0].mxu0
        %v2853 = vadd.f32 0.0, %v2852
        %v2854 = vpop.f32.mrb[0].mxu0
        %2855 = vmatprep.mubr.f32.mxu0 0.0
        %2856 = vmatmul.mubr.f32.gmra.mrb[0].mxu0 %v2778
        %v2857 = vpop.f32.mrb[0].mxu0
        %v2858 = vadd.f32 0.0, %v2857
        %v2859 = vpop.f32.mrb[0].mxu0
        %2860 = vmatprep.mubr.f32.mxu0 0.0
        %2861 = vmatmul.mubr.f32.gmra.mrb[0].mxu0 %v2781
        %v2862 = vpop.f32.mrb[0].mxu0
        %v2863 = vadd.f32 0.0, %v2862
        %v2864 = vpop.f32.mrb[0].mxu0
        %2865 = vmatprep.mubr.f32.mxu0 0.0
        %2866 = vmatmul.mubr.f32.gmra.mrb[0].mxu0 %v2784
        %v2867 = vpop.f32.mrb[0].mxu0
        %v2868 = vadd.f32 0.0, %v2867
        %v2869 = vpop.f32.mrb[0].mxu0
        %2870 = vdwg.mxu0
        %v2871 = vadd.f32 %v2695, %v2853
        %v2872 = vadd.f32 %v2696, %v2858
        %v2873 = vadd.f32 %v2697, %v2863
        %v2874 = vadd.f32 %v2698, %v2868
        %v2875 = vld [vmem:[%s355 + $0x3] sm:$0x1]
        %v2876 = vlaneseq
        %v2877 = vshrl.u32 %v2876, 7
        %v2878 = vsub.s32 0, %v2877
        %v2879 = vrot.slane %v2875, %v2878
        %v2880 = vmul.f32 %v2879, %v2333
        %v2881 = vmul.f32 %v2879, %v2334
        %v2882 = vld [vmem:[%s621 + $0x3] sm:$0x1]
        %v2883 = vlaneseq
        %v2884 = vshrl.u32 %v2883, 7
        %v2885 = vsub.s32 0, %v2884
        %v2886 = vrot.slane %v2882, %v2885
        %v2887 = vmul.f32 %v2886, %v2342
        %v2888 = vmul.f32 %v2886, %v2343
        %v2889 = vadd.f32 %v2880, %v2887
        %v2890 = vadd.f32 %v2881, %v2888
        %v2891 = vld [vmem:[%s862 + $0x3] sm:$0x1]
        %v2892 = vlaneseq
        %v2893 = vshrl.u32 %v2892, 7
        %v2894 = vsub.s32 0, %v2893
        %v2895 = vrot.slane %v2891, %v2894
        %v2896 = vmul.f32 %v2895, %v2353
        %v2897 = vmul.f32 %v2895, %v2354
        %v2898 = vadd.f32 %v2889, %v2896
        %v2899 = vadd.f32 %v2890, %v2897
        %v2900 = vld [vmem:[%s1103 + $0x3] sm:$0x1]
        %v2901 = vlaneseq
        %v2902 = vshrl.u32 %v2901, 7
        %v2903 = vsub.s32 0, %v2902
        %v2904 = vrot.slane %v2900, %v2903
        %v2905 = vmul.f32 %v2904, %v2364
        %v2906 = vmul.f32 %v2904, %v2365
        %v2907 = vadd.f32 %v2898, %v2905
        %v2908 = vadd.f32 %v2899, %v2906
        %v2909 = vld [vmem:[%s1344 + $0x3] sm:$0x1]
        %v2910 = vlaneseq
        %v2911 = vshrl.u32 %v2910, 7
        %v2912 = vsub.s32 0, %v2911
        %v2913 = vrot.slane %v2909, %v2912
        %v2914 = vmul.f32 %v2913, %v2375
        %v2915 = vmul.f32 %v2913, %v2376
        %v2916 = vadd.f32 %v2907, %v2914
        %v2917 = vadd.f32 %v2908, %v2915
        %v2918 = vld [vmem:[%s1585 + $0x3] sm:$0x1]
        %v2919 = vlaneseq
        %v2920 = vshrl.u32 %v2919, 7
        %v2921 = vsub.s32 0, %v2920
        %v2922 = vrot.slane %v2918, %v2921
        %v2923 = vmul.f32 %v2922, %v2386
        %v2924 = vmul.f32 %v2922, %v2387
        %v2925 = vadd.f32 %v2916, %v2923
        %v2926 = vadd.f32 %v2917, %v2924
        %v2927 = vld [vmem:[%s1826 + $0x3] sm:$0x1]
        %v2928 = vlaneseq
        %v2929 = vshrl.u32 %v2928, 7
        %v2930 = vsub.s32 0, %v2929
        %v2931 = vrot.slane %v2927, %v2930
        %v2932 = vmul.f32 %v2931, %v2397
        %v2933 = vmul.f32 %v2931, %v2398
        %v2934 = vadd.f32 %v2925, %v2932
        %v2935 = vadd.f32 %v2926, %v2933
        %v2936 = vld [vmem:[%s2067 + $0x3] sm:$0x1]
        %v2937 = vlaneseq
        %v2938 = vshrl.u32 %v2937, 7
        %v2939 = vsub.s32 0, %v2938
        %v2940 = vrot.slane %v2936, %v2939
        %v2941 = vmul.f32 %v2940, %v2408
        %v2942 = vmul.f32 %v2940, %v2409
        %v2943 = vadd.f32 %v2934, %v2941
        %v2944 = vadd.f32 %v2935, %v2942
        %s2945 = scalar_lea.vmem %s7, 96
        %v2946 = vld [vmem:[%s2945] sm:$0xff]
        %v2947 = vld [vmem:[%s2945 + $0x8] sm:$0xff]
        %v2948 = vld [vmem:[%s2945 + $0x10] sm:$0xff]
        %v2949 = vld [vmem:[%s2945 + $0x18] sm:$0xff]
        %v2951 = vsel %vm383, %v2946, 0
        %v2954 = vsel %vm383, %v2947, 0
        %v2957 = vsel %vm383, %v2948, 0
        %v2960 = vsel %vm383, %v2949, 0
        %2962 = vmatprep.subr.mxu0 0.0
        %2963 = vmatpush1.msra.mxu0 %v2943
        %2964 = vmatprep.subr.mxu0 0.0
        %2965 = vmatpush1.msra.mxu0 %v2944
        %2966 = vmatprep.subr.mxu0 0.0
        %2967 = vmatpush1.msra.mxu0 0.0
        %2968 = vmatprep.subr.mxu0 0.0
        %2969 = vmatpush1.msra.mxu0 0.0
        %2970 = vmatprep.subr.mxu0 0.0
        %2971 = vmatpush1.msra.mxu0 0.0
        %2972 = vmatprep.subr.mxu0 0.0
        %2973 = vmatpush1.msra.mxu0 0.0
        %2974 = vmatprep.subr.mxu0 0.0
        %2975 = vmatpush1.msra.mxu0 0.0
        %2976 = vmatprep.subr.mxu0 0.0
        %2977 = vmatpush1.msra.mxu0 0.0
        %2978 = vmatprep.subr.mxu0 0.0
        %2979 = vmatpush1.msra.mxu0 0.0
        %2980 = vmatprep.subr.mxu0 0.0
        %2981 = vmatpush1.msra.mxu0 0.0
        %2982 = vmatprep.subr.mxu0 0.0
        %2983 = vmatpush1.msra.mxu0 0.0
        %2984 = vmatprep.subr.mxu0 0.0
        %2985 = vmatpush1.msra.mxu0 0.0
        %2986 = vmatprep.subr.mxu0 0.0
        %2987 = vmatpush1.msra.mxu0 0.0
        %2988 = vmatprep.subr.mxu0 0.0
        %2989 = vmatpush1.msra.mxu0 0.0
        %2990 = vmatprep.subr.mxu0 0.0
        %2991 = vmatpush1.msra.mxu0 0.0
        %2992 = vmatprep.subr.mxu0 0.0
        %2993 = vmatpush1.msra.mxu0 0.0
        %2994 = vmatprep.subr.mxu0 0.0
        %2995 = vmatpush1.msra.mxu0 0.0
        %2996 = vmatprep.subr.mxu0 0.0
        %2997 = vmatpush1.msra.mxu0 0.0
        %2998 = vmatprep.subr.mxu0 0.0
        %2999 = vmatpush1.msra.mxu0 0.0
        %3000 = vmatprep.subr.mxu0 0.0
        %3001 = vmatpush1.msra.mxu0 0.0
        %3002 = vmatprep.subr.mxu0 0.0
        %3003 = vmatpush1.msra.mxu0 0.0
        %3004 = vmatprep.subr.mxu0 0.0
        %3005 = vmatpush1.msra.mxu0 0.0
        %3006 = vmatprep.subr.mxu0 0.0
        %3007 = vmatpush1.msra.mxu0 0.0
        %3008 = vmatprep.subr.mxu0 0.0
        %3009 = vmatpush1.msra.mxu0 0.0
        %3010 = vmatprep.subr.mxu0 0.0
        %3011 = vmatpush1.msra.mxu0 0.0
        %3012 = vmatprep.subr.mxu0 0.0
        %3013 = vmatpush1.msra.mxu0 0.0
        %3014 = vmatprep.subr.mxu0 0.0
        %3015 = vmatpush1.msra.mxu0 0.0
        %3016 = vmatprep.subr.mxu0 0.0
        %3017 = vmatpush1.msra.mxu0 0.0
        %3018 = vmatprep.subr.mxu0 0.0
        %3019 = vmatpush1.msra.mxu0 0.0
        %3020 = vmatprep.subr.mxu0 0.0
        %3021 = vmatpush1.msra.mxu0 0.0
        %3022 = vmatprep.subr.mxu0 0.0
        %3023 = vmatpush1.msra.mxu0 0.0
        %3024 = vmatprep.subr.mxu0 0.0
        %3025 = vmatpush1.msra.mxu0 0.0
        %3026 = vmatprep.mubr.f32.mxu0 0.0
        %3027 = vmatmul.mubr.f32.gmra.mrb[0].mxu0 %v2951
        %v3028 = vpop.f32.mrb[0].mxu0
        %v3029 = vadd.f32 0.0, %v3028
        %v3030 = vpop.f32.mrb[0].mxu0
        %3031 = vmatprep.mubr.f32.mxu0 0.0
        %3032 = vmatmul.mubr.f32.gmra.mrb[0].mxu0 %v2954
        %v3033 = vpop.f32.mrb[0].mxu0
        %v3034 = vadd.f32 0.0, %v3033
        %v3035 = vpop.f32.mrb[0].mxu0
        %3036 = vmatprep.mubr.f32.mxu0 0.0
        %3037 = vmatmul.mubr.f32.gmra.mrb[0].mxu0 %v2957
        %v3038 = vpop.f32.mrb[0].mxu0
        %v3039 = vadd.f32 0.0, %v3038
        %v3040 = vpop.f32.mrb[0].mxu0
        %3041 = vmatprep.mubr.f32.mxu0 0.0
        %3042 = vmatmul.mubr.f32.gmra.mrb[0].mxu0 %v2960
        %v3043 = vpop.f32.mrb[0].mxu0
        %v3044 = vadd.f32 0.0, %v3043
        %v3045 = vpop.f32.mrb[0].mxu0
        %3046 = vdwg.mxu0
        %v3047 = vadd.f32 %v2871, %v3029
        %v3048 = vadd.f32 %v2872, %v3034
        %v3049 = vadd.f32 %v2873, %v3039
        %v3050 = vadd.f32 %v2874, %v3044
        %v3051 = vld [vmem:[%s355 + $0x4] sm:$0x1]
        %v3052 = vlaneseq
        %v3053 = vshrl.u32 %v3052, 7
        %v3054 = vsub.s32 0, %v3053
        %v3055 = vrot.slane %v3051, %v3054
        %v3056 = vmul.f32 %v3055, %v2333
        %v3057 = vmul.f32 %v3055, %v2334
        %v3058 = vld [vmem:[%s621 + $0x4] sm:$0x1]
        %v3059 = vlaneseq
        %v3060 = vshrl.u32 %v3059, 7
        %v3061 = vsub.s32 0, %v3060
        %v3062 = vrot.slane %v3058, %v3061
        %v3063 = vmul.f32 %v3062, %v2342
        %v3064 = vmul.f32 %v3062, %v2343
        %v3065 = vadd.f32 %v3056, %v3063
        %v3066 = vadd.f32 %v3057, %v3064
        %v3067 = vld [vmem:[%s862 + $0x4] sm:$0x1]
        %v3068 = vlaneseq
        %v3069 = vshrl.u32 %v3068, 7
        %v3070 = vsub.s32 0, %v3069
        %v3071 = vrot.slane %v3067, %v3070
        %v3072 = vmul.f32 %v3071, %v2353
        %v3073 = vmul.f32 %v3071, %v2354
        %v3074 = vadd.f32 %v3065, %v3072
        %v3075 = vadd.f32 %v3066, %v3073
        %v3076 = vld [vmem:[%s1103 + $0x4] sm:$0x1]
        %v3077 = vlaneseq
        %v3078 = vshrl.u32 %v3077, 7
        %v3079 = vsub.s32 0, %v3078
        %v3080 = vrot.slane %v3076, %v3079
        %v3081 = vmul.f32 %v3080, %v2364
        %v3082 = vmul.f32 %v3080, %v2365
        %v3083 = vadd.f32 %v3074, %v3081
        %v3084 = vadd.f32 %v3075, %v3082
        %v3085 = vld [vmem:[%s1344 + $0x4] sm:$0x1]
        %v3086 = vlaneseq
        %v3087 = vshrl.u32 %v3086, 7
        %v3088 = vsub.s32 0, %v3087
        %v3089 = vrot.slane %v3085, %v3088
        %v3090 = vmul.f32 %v3089, %v2375
        %v3091 = vmul.f32 %v3089, %v2376
        %v3092 = vadd.f32 %v3083, %v3090
        %v3093 = vadd.f32 %v3084, %v3091
        %v3094 = vld [vmem:[%s1585 + $0x4] sm:$0x1]
        %v3095 = vlaneseq
        %v3096 = vshrl.u32 %v3095, 7
        %v3097 = vsub.s32 0, %v3096
        %v3098 = vrot.slane %v3094, %v3097
        %v3099 = vmul.f32 %v3098, %v2386
        %v3100 = vmul.f32 %v3098, %v2387
        %v3101 = vadd.f32 %v3092, %v3099
        %v3102 = vadd.f32 %v3093, %v3100
        %v3103 = vld [vmem:[%s1826 + $0x4] sm:$0x1]
        %v3104 = vlaneseq
        %v3105 = vshrl.u32 %v3104, 7
        %v3106 = vsub.s32 0, %v3105
        %v3107 = vrot.slane %v3103, %v3106
        %v3108 = vmul.f32 %v3107, %v2397
        %v3109 = vmul.f32 %v3107, %v2398
        %v3110 = vadd.f32 %v3101, %v3108
        %v3111 = vadd.f32 %v3102, %v3109
        %v3112 = vld [vmem:[%s2067 + $0x4] sm:$0x1]
        %v3113 = vlaneseq
        %v3114 = vshrl.u32 %v3113, 7
        %v3115 = vsub.s32 0, %v3114
        %v3116 = vrot.slane %v3112, %v3115
        %v3117 = vmul.f32 %v3116, %v2408
        %v3118 = vmul.f32 %v3116, %v2409
        %v3119 = vadd.f32 %v3110, %v3117
        %v3120 = vadd.f32 %v3111, %v3118
        %s3121 = scalar_lea.vmem %s7, 128
        %v3122 = vld [vmem:[%s3121] sm:$0xff]
        %v3123 = vld [vmem:[%s3121 + $0x8] sm:$0xff]
        %v3124 = vld [vmem:[%s3121 + $0x10] sm:$0xff]
        %v3125 = vld [vmem:[%s3121 + $0x18] sm:$0xff]
        %v3127 = vsel %vm383, %v3122, 0
        %v3130 = vsel %vm383, %v3123, 0
        %v3133 = vsel %vm383, %v3124, 0
        %v3136 = vsel %vm383, %v3125, 0
        %3138 = vmatprep.subr.mxu0 0.0
        %3139 = vmatpush1.msra.mxu0 %v3119
        %3140 = vmatprep.subr.mxu0 0.0
        %3141 = vmatpush1.msra.mxu0 %v3120
        %3142 = vmatprep.subr.mxu0 0.0
        %3143 = vmatpush1.msra.mxu0 0.0
        %3144 = vmatprep.subr.mxu0 0.0
        %3145 = vmatpush1.msra.mxu0 0.0
        %3146 = vmatprep.subr.mxu0 0.0
        %3147 = vmatpush1.msra.mxu0 0.0
        %3148 = vmatprep.subr.mxu0 0.0
        %3149 = vmatpush1.msra.mxu0 0.0
        %3150 = vmatprep.subr.mxu0 0.0
        %3151 = vmatpush1.msra.mxu0 0.0
        %3152 = vmatprep.subr.mxu0 0.0
        %3153 = vmatpush1.msra.mxu0 0.0
        %3154 = vmatprep.subr.mxu0 0.0
        %3155 = vmatpush1.msra.mxu0 0.0
        %3156 = vmatprep.subr.mxu0 0.0
        %3157 = vmatpush1.msra.mxu0 0.0
        %3158 = vmatprep.subr.mxu0 0.0
        %3159 = vmatpush1.msra.mxu0 0.0
        %3160 = vmatprep.subr.mxu0 0.0
        %3161 = vmatpush1.msra.mxu0 0.0
        %3162 = vmatprep.subr.mxu0 0.0
        %3163 = vmatpush1.msra.mxu0 0.0
        %3164 = vmatprep.subr.mxu0 0.0
        %3165 = vmatpush1.msra.mxu0 0.0
        %3166 = vmatprep.subr.mxu0 0.0
        %3167 = vmatpush1.msra.mxu0 0.0
        %3168 = vmatprep.subr.mxu0 0.0
        %3169 = vmatpush1.msra.mxu0 0.0
        %3170 = vmatprep.subr.mxu0 0.0
        %3171 = vmatpush1.msra.mxu0 0.0
        %3172 = vmatprep.subr.mxu0 0.0
        %3173 = vmatpush1.msra.mxu0 0.0
        %3174 = vmatprep.subr.mxu0 0.0
        %3175 = vmatpush1.msra.mxu0 0.0
        %3176 = vmatprep.subr.mxu0 0.0
        %3177 = vmatpush1.msra.mxu0 0.0
        %3178 = vmatprep.subr.mxu0 0.0
        %3179 = vmatpush1.msra.mxu0 0.0
        %3180 = vmatprep.subr.mxu0 0.0
        %3181 = vmatpush1.msra.mxu0 0.0
        %3182 = vmatprep.subr.mxu0 0.0
        %3183 = vmatpush1.msra.mxu0 0.0
        %3184 = vmatprep.subr.mxu0 0.0
        %3185 = vmatpush1.msra.mxu0 0.0
        %3186 = vmatprep.subr.mxu0 0.0
        %3187 = vmatpush1.msra.mxu0 0.0
        %3188 = vmatprep.subr.mxu0 0.0
        %3189 = vmatpush1.msra.mxu0 0.0
        %3190 = vmatprep.subr.mxu0 0.0
        %3191 = vmatpush1.msra.mxu0 0.0
        %3192 = vmatprep.subr.mxu0 0.0
        %3193 = vmatpush1.msra.mxu0 0.0
        %3194 = vmatprep.subr.mxu0 0.0
        %3195 = vmatpush1.msra.mxu0 0.0
        %3196 = vmatprep.subr.mxu0 0.0
        %3197 = vmatpush1.msra.mxu0 0.0
        %3198 = vmatprep.subr.mxu0 0.0
        %3199 = vmatpush1.msra.mxu0 0.0
        %3200 = vmatprep.subr.mxu0 0.0
        %3201 = vmatpush1.msra.mxu0 0.0
        %3202 = vmatprep.mubr.f32.mxu0 0.0
        %3203 = vmatmul.mubr.f32.gmra.mrb[0].mxu0 %v3127
        %v3204 = vpop.f32.mrb[0].mxu0
        %v3205 = vadd.f32 0.0, %v3204
        %v3206 = vpop.f32.mrb[0].mxu0
        %3207 = vmatprep.mubr.f32.mxu0 0.0
        %3208 = vmatmul.mubr.f32.gmra.mrb[0].mxu0 %v3130
        %v3209 = vpop.f32.mrb[0].mxu0
        %v3210 = vadd.f32 0.0, %v3209
        %v3211 = vpop.f32.mrb[0].mxu0
        %3212 = vmatprep.mubr.f32.mxu0 0.0
        %3213 = vmatmul.mubr.f32.gmra.mrb[0].mxu0 %v3133
        %v3214 = vpop.f32.mrb[0].mxu0
        %v3215 = vadd.f32 0.0, %v3214
        %v3216 = vpop.f32.mrb[0].mxu0
        %3217 = vmatprep.mubr.f32.mxu0 0.0
        %3218 = vmatmul.mubr.f32.gmra.mrb[0].mxu0 %v3136
        %v3219 = vpop.f32.mrb[0].mxu0
        %v3220 = vadd.f32 0.0, %v3219
        %v3221 = vpop.f32.mrb[0].mxu0
        %3222 = vdwg.mxu0
        %v3223 = vadd.f32 %v3047, %v3205
        %v3224 = vadd.f32 %v3048, %v3210
        %v3225 = vadd.f32 %v3049, %v3215
        %v3226 = vadd.f32 %v3050, %v3220
        %v3227 = vld [vmem:[%s355 + $0x5] sm:$0x1]
        %v3228 = vlaneseq
        %v3229 = vshrl.u32 %v3228, 7
        %v3230 = vsub.s32 0, %v3229
        %v3231 = vrot.slane %v3227, %v3230
        %v3232 = vmul.f32 %v3231, %v2333
        %v3233 = vmul.f32 %v3231, %v2334
        %v3234 = vld [vmem:[%s621 + $0x5] sm:$0x1]
        %v3235 = vlaneseq
        %v3236 = vshrl.u32 %v3235, 7
        %v3237 = vsub.s32 0, %v3236
        %v3238 = vrot.slane %v3234, %v3237
        %v3239 = vmul.f32 %v3238, %v2342
        %v3240 = vmul.f32 %v3238, %v2343
        %v3241 = vadd.f32 %v3232, %v3239
        %v3242 = vadd.f32 %v3233, %v3240
        %v3243 = vld [vmem:[%s862 + $0x5] sm:$0x1]
        %v3244 = vlaneseq
        %v3245 = vshrl.u32 %v3244, 7
        %v3246 = vsub.s32 0, %v3245
        %v3247 = vrot.slane %v3243, %v3246
        %v3248 = vmul.f32 %v3247, %v2353
        %v3249 = vmul.f32 %v3247, %v2354
        %v3250 = vadd.f32 %v3241, %v3248
        %v3251 = vadd.f32 %v3242, %v3249
        %v3252 = vld [vmem:[%s1103 + $0x5] sm:$0x1]
        %v3253 = vlaneseq
        %v3254 = vshrl.u32 %v3253, 7
        %v3255 = vsub.s32 0, %v3254
        %v3256 = vrot.slane %v3252, %v3255
        %v3257 = vmul.f32 %v3256, %v2364
        %v3258 = vmul.f32 %v3256, %v2365
        %v3259 = vadd.f32 %v3250, %v3257
        %v3260 = vadd.f32 %v3251, %v3258
        %v3261 = vld [vmem:[%s1344 + $0x5] sm:$0x1]
        %v3262 = vlaneseq
        %v3263 = vshrl.u32 %v3262, 7
        %v3264 = vsub.s32 0, %v3263
        %v3265 = vrot.slane %v3261, %v3264
        %v3266 = vmul.f32 %v3265, %v2375
        %v3267 = vmul.f32 %v3265, %v2376
        %v3268 = vadd.f32 %v3259, %v3266
        %v3269 = vadd.f32 %v3260, %v3267
        %v3270 = vld [vmem:[%s1585 + $0x5] sm:$0x1]
        %v3271 = vlaneseq
        %v3272 = vshrl.u32 %v3271, 7
        %v3273 = vsub.s32 0, %v3272
        %v3274 = vrot.slane %v3270, %v3273
        %v3275 = vmul.f32 %v3274, %v2386
        %v3276 = vmul.f32 %v3274, %v2387
        %v3277 = vadd.f32 %v3268, %v3275
        %v3278 = vadd.f32 %v3269, %v3276
        %v3279 = vld [vmem:[%s1826 + $0x5] sm:$0x1]
        %v3280 = vlaneseq
        %v3281 = vshrl.u32 %v3280, 7
        %v3282 = vsub.s32 0, %v3281
        %v3283 = vrot.slane %v3279, %v3282
        %v3284 = vmul.f32 %v3283, %v2397
        %v3285 = vmul.f32 %v3283, %v2398
        %v3286 = vadd.f32 %v3277, %v3284
        %v3287 = vadd.f32 %v3278, %v3285
        %v3288 = vld [vmem:[%s2067 + $0x5] sm:$0x1]
        %v3289 = vlaneseq
        %v3290 = vshrl.u32 %v3289, 7
        %v3291 = vsub.s32 0, %v3290
        %v3292 = vrot.slane %v3288, %v3291
        %v3293 = vmul.f32 %v3292, %v2408
        %v3294 = vmul.f32 %v3292, %v2409
        %v3295 = vadd.f32 %v3286, %v3293
        %v3296 = vadd.f32 %v3287, %v3294
        %s3297 = scalar_lea.vmem %s7, 160
        %v3298 = vld [vmem:[%s3297] sm:$0xff]
        %v3299 = vld [vmem:[%s3297 + $0x8] sm:$0xff]
        %v3300 = vld [vmem:[%s3297 + $0x10] sm:$0xff]
        %v3301 = vld [vmem:[%s3297 + $0x18] sm:$0xff]
        %v3303 = vsel %vm383, %v3298, 0
        %v3306 = vsel %vm383, %v3299, 0
        %v3309 = vsel %vm383, %v3300, 0
        %v3312 = vsel %vm383, %v3301, 0
        %3314 = vmatprep.subr.mxu0 0.0
        %3315 = vmatpush1.msra.mxu0 %v3295
        %3316 = vmatprep.subr.mxu0 0.0
        %3317 = vmatpush1.msra.mxu0 %v3296
        %3318 = vmatprep.subr.mxu0 0.0
        %3319 = vmatpush1.msra.mxu0 0.0
        %3320 = vmatprep.subr.mxu0 0.0
        %3321 = vmatpush1.msra.mxu0 0.0
        %3322 = vmatprep.subr.mxu0 0.0
        %3323 = vmatpush1.msra.mxu0 0.0
        %3324 = vmatprep.subr.mxu0 0.0
        %3325 = vmatpush1.msra.mxu0 0.0
        %3326 = vmatprep.subr.mxu0 0.0
        %3327 = vmatpush1.msra.mxu0 0.0
        %3328 = vmatprep.subr.mxu0 0.0
        %3329 = vmatpush1.msra.mxu0 0.0
        %3330 = vmatprep.subr.mxu0 0.0
        %3331 = vmatpush1.msra.mxu0 0.0
        %3332 = vmatprep.subr.mxu0 0.0
        %3333 = vmatpush1.msra.mxu0 0.0
        %3334 = vmatprep.subr.mxu0 0.0
        %3335 = vmatpush1.msra.mxu0 0.0
        %3336 = vmatprep.subr.mxu0 0.0
        %3337 = vmatpush1.msra.mxu0 0.0
        %3338 = vmatprep.subr.mxu0 0.0
        %3339 = vmatpush1.msra.mxu0 0.0
        %3340 = vmatprep.subr.mxu0 0.0
        %3341 = vmatpush1.msra.mxu0 0.0
        %3342 = vmatprep.subr.mxu0 0.0
        %3343 = vmatpush1.msra.mxu0 0.0
        %3344 = vmatprep.subr.mxu0 0.0
        %3345 = vmatpush1.msra.mxu0 0.0
        %3346 = vmatprep.subr.mxu0 0.0
        %3347 = vmatpush1.msra.mxu0 0.0
        %3348 = vmatprep.subr.mxu0 0.0
        %3349 = vmatpush1.msra.mxu0 0.0
        %3350 = vmatprep.subr.mxu0 0.0
        %3351 = vmatpush1.msra.mxu0 0.0
        %3352 = vmatprep.subr.mxu0 0.0
        %3353 = vmatpush1.msra.mxu0 0.0
        %3354 = vmatprep.subr.mxu0 0.0
        %3355 = vmatpush1.msra.mxu0 0.0
        %3356 = vmatprep.subr.mxu0 0.0
        %3357 = vmatpush1.msra.mxu0 0.0
        %3358 = vmatprep.subr.mxu0 0.0
        %3359 = vmatpush1.msra.mxu0 0.0
        %3360 = vmatprep.subr.mxu0 0.0
        %3361 = vmatpush1.msra.mxu0 0.0
        %3362 = vmatprep.subr.mxu0 0.0
        %3363 = vmatpush1.msra.mxu0 0.0
        %3364 = vmatprep.subr.mxu0 0.0
        %3365 = vmatpush1.msra.mxu0 0.0
        %3366 = vmatprep.subr.mxu0 0.0
        %3367 = vmatpush1.msra.mxu0 0.0
        %3368 = vmatprep.subr.mxu0 0.0
        %3369 = vmatpush1.msra.mxu0 0.0
        %3370 = vmatprep.subr.mxu0 0.0
        %3371 = vmatpush1.msra.mxu0 0.0
        %3372 = vmatprep.subr.mxu0 0.0
        %3373 = vmatpush1.msra.mxu0 0.0
        %3374 = vmatprep.subr.mxu0 0.0
        %3375 = vmatpush1.msra.mxu0 0.0
        %3376 = vmatprep.subr.mxu0 0.0
        %3377 = vmatpush1.msra.mxu0 0.0
        %3378 = vmatprep.mubr.f32.mxu0 0.0
        %3379 = vmatmul.mubr.f32.gmra.mrb[0].mxu0 %v3303
        %v3380 = vpop.f32.mrb[0].mxu0
        %v3381 = vadd.f32 0.0, %v3380
        %v3382 = vpop.f32.mrb[0].mxu0
        %3383 = vmatprep.mubr.f32.mxu0 0.0
        %3384 = vmatmul.mubr.f32.gmra.mrb[0].mxu0 %v3306
        %v3385 = vpop.f32.mrb[0].mxu0
        %v3386 = vadd.f32 0.0, %v3385
        %v3387 = vpop.f32.mrb[0].mxu0
        %3388 = vmatprep.mubr.f32.mxu0 0.0
        %3389 = vmatmul.mubr.f32.gmra.mrb[0].mxu0 %v3309
        %v3390 = vpop.f32.mrb[0].mxu0
        %v3391 = vadd.f32 0.0, %v3390
        %v3392 = vpop.f32.mrb[0].mxu0
        %3393 = vmatprep.mubr.f32.mxu0 0.0
        %3394 = vmatmul.mubr.f32.gmra.mrb[0].mxu0 %v3312
        %v3395 = vpop.f32.mrb[0].mxu0
        %v3396 = vadd.f32 0.0, %v3395
        %v3397 = vpop.f32.mrb[0].mxu0
        %3398 = vdwg.mxu0
        %v3399 = vadd.f32 %v3223, %v3381
        %v3400 = vadd.f32 %v3224, %v3386
        %v3401 = vadd.f32 %v3225, %v3391
        %v3402 = vadd.f32 %v3226, %v3396
        %v3403 = vld [vmem:[%s355 + $0x6] sm:$0x1]
        %v3404 = vlaneseq
        %v3405 = vshrl.u32 %v3404, 7
        %v3406 = vsub.s32 0, %v3405
        %v3407 = vrot.slane %v3403, %v3406
        %v3408 = vmul.f32 %v3407, %v2333
        %v3409 = vmul.f32 %v3407, %v2334
        %v3410 = vld [vmem:[%s621 + $0x6] sm:$0x1]
        %v3411 = vlaneseq
        %v3412 = vshrl.u32 %v3411, 7
        %v3413 = vsub.s32 0, %v3412
        %v3414 = vrot.slane %v3410, %v3413
        %v3415 = vmul.f32 %v3414, %v2342
        %v3416 = vmul.f32 %v3414, %v2343
        %v3417 = vadd.f32 %v3408, %v3415
        %v3418 = vadd.f32 %v3409, %v3416
        %v3419 = vld [vmem:[%s862 + $0x6] sm:$0x1]
        %v3420 = vlaneseq
        %v3421 = vshrl.u32 %v3420, 7
        %v3422 = vsub.s32 0, %v3421
        %v3423 = vrot.slane %v3419, %v3422
        %v3424 = vmul.f32 %v3423, %v2353
        %v3425 = vmul.f32 %v3423, %v2354
        %v3426 = vadd.f32 %v3417, %v3424
        %v3427 = vadd.f32 %v3418, %v3425
        %v3428 = vld [vmem:[%s1103 + $0x6] sm:$0x1]
        %v3429 = vlaneseq
        %v3430 = vshrl.u32 %v3429, 7
        %v3431 = vsub.s32 0, %v3430
        %v3432 = vrot.slane %v3428, %v3431
        %v3433 = vmul.f32 %v3432, %v2364
        %v3434 = vmul.f32 %v3432, %v2365
        %v3435 = vadd.f32 %v3426, %v3433
        %v3436 = vadd.f32 %v3427, %v3434
        %v3437 = vld [vmem:[%s1344 + $0x6] sm:$0x1]
        %v3438 = vlaneseq
        %v3439 = vshrl.u32 %v3438, 7
        %v3440 = vsub.s32 0, %v3439
        %v3441 = vrot.slane %v3437, %v3440
        %v3442 = vmul.f32 %v3441, %v2375
        %v3443 = vmul.f32 %v3441, %v2376
        %v3444 = vadd.f32 %v3435, %v3442
        %v3445 = vadd.f32 %v3436, %v3443
        %v3446 = vld [vmem:[%s1585 + $0x6] sm:$0x1]
        %v3447 = vlaneseq
        %v3448 = vshrl.u32 %v3447, 7
        %v3449 = vsub.s32 0, %v3448
        %v3450 = vrot.slane %v3446, %v3449
        %v3451 = vmul.f32 %v3450, %v2386
        %v3452 = vmul.f32 %v3450, %v2387
        %v3453 = vadd.f32 %v3444, %v3451
        %v3454 = vadd.f32 %v3445, %v3452
        %v3455 = vld [vmem:[%s1826 + $0x6] sm:$0x1]
        %v3456 = vlaneseq
        %v3457 = vshrl.u32 %v3456, 7
        %v3458 = vsub.s32 0, %v3457
        %v3459 = vrot.slane %v3455, %v3458
        %v3460 = vmul.f32 %v3459, %v2397
        %v3461 = vmul.f32 %v3459, %v2398
        %v3462 = vadd.f32 %v3453, %v3460
        %v3463 = vadd.f32 %v3454, %v3461
        %v3464 = vld [vmem:[%s2067 + $0x6] sm:$0x1]
        %v3465 = vlaneseq
        %v3466 = vshrl.u32 %v3465, 7
        %v3467 = vsub.s32 0, %v3466
        %v3468 = vrot.slane %v3464, %v3467
        %v3469 = vmul.f32 %v3468, %v2408
        %v3470 = vmul.f32 %v3468, %v2409
        %v3471 = vadd.f32 %v3462, %v3469
        %v3472 = vadd.f32 %v3463, %v3470
        %s3473 = scalar_lea.vmem %s7, 192
        %v3474 = vld [vmem:[%s3473] sm:$0xff]
        %v3475 = vld [vmem:[%s3473 + $0x8] sm:$0xff]
        %v3476 = vld [vmem:[%s3473 + $0x10] sm:$0xff]
        %v3477 = vld [vmem:[%s3473 + $0x18] sm:$0xff]
        %v3479 = vsel %vm383, %v3474, 0
        %v3482 = vsel %vm383, %v3475, 0
        %v3485 = vsel %vm383, %v3476, 0
        %v3488 = vsel %vm383, %v3477, 0
        %3490 = vmatprep.subr.mxu0 0.0
        %3491 = vmatpush1.msra.mxu0 %v3471
        %3492 = vmatprep.subr.mxu0 0.0
        %3493 = vmatpush1.msra.mxu0 %v3472
        %3494 = vmatprep.subr.mxu0 0.0
        %3495 = vmatpush1.msra.mxu0 0.0
        %3496 = vmatprep.subr.mxu0 0.0
        %3497 = vmatpush1.msra.mxu0 0.0
        %3498 = vmatprep.subr.mxu0 0.0
        %3499 = vmatpush1.msra.mxu0 0.0
        %3500 = vmatprep.subr.mxu0 0.0
        %3501 = vmatpush1.msra.mxu0 0.0
        %3502 = vmatprep.subr.mxu0 0.0
        %3503 = vmatpush1.msra.mxu0 0.0
        %3504 = vmatprep.subr.mxu0 0.0
        %3505 = vmatpush1.msra.mxu0 0.0
        %3506 = vmatprep.subr.mxu0 0.0
        %3507 = vmatpush1.msra.mxu0 0.0
        %3508 = vmatprep.subr.mxu0 0.0
        %3509 = vmatpush1.msra.mxu0 0.0
        %3510 = vmatprep.subr.mxu0 0.0
        %3511 = vmatpush1.msra.mxu0 0.0
        %3512 = vmatprep.subr.mxu0 0.0
        %3513 = vmatpush1.msra.mxu0 0.0
        %3514 = vmatprep.subr.mxu0 0.0
        %3515 = vmatpush1.msra.mxu0 0.0
        %3516 = vmatprep.subr.mxu0 0.0
        %3517 = vmatpush1.msra.mxu0 0.0
        %3518 = vmatprep.subr.mxu0 0.0
        %3519 = vmatpush1.msra.mxu0 0.0
        %3520 = vmatprep.subr.mxu0 0.0
        %3521 = vmatpush1.msra.mxu0 0.0
        %3522 = vmatprep.subr.mxu0 0.0
        %3523 = vmatpush1.msra.mxu0 0.0
        %3524 = vmatprep.subr.mxu0 0.0
        %3525 = vmatpush1.msra.mxu0 0.0
        %3526 = vmatprep.subr.mxu0 0.0
        %3527 = vmatpush1.msra.mxu0 0.0
        %3528 = vmatprep.subr.mxu0 0.0
        %3529 = vmatpush1.msra.mxu0 0.0
        %3530 = vmatprep.subr.mxu0 0.0
        %3531 = vmatpush1.msra.mxu0 0.0
        %3532 = vmatprep.subr.mxu0 0.0
        %3533 = vmatpush1.msra.mxu0 0.0
        %3534 = vmatprep.subr.mxu0 0.0
        %3535 = vmatpush1.msra.mxu0 0.0
        %3536 = vmatprep.subr.mxu0 0.0
        %3537 = vmatpush1.msra.mxu0 0.0
        %3538 = vmatprep.subr.mxu0 0.0
        %3539 = vmatpush1.msra.mxu0 0.0
        %3540 = vmatprep.subr.mxu0 0.0
        %3541 = vmatpush1.msra.mxu0 0.0
        %3542 = vmatprep.subr.mxu0 0.0
        %3543 = vmatpush1.msra.mxu0 0.0
        %3544 = vmatprep.subr.mxu0 0.0
        %3545 = vmatpush1.msra.mxu0 0.0
        %3546 = vmatprep.subr.mxu0 0.0
        %3547 = vmatpush1.msra.mxu0 0.0
        %3548 = vmatprep.subr.mxu0 0.0
        %3549 = vmatpush1.msra.mxu0 0.0
        %3550 = vmatprep.subr.mxu0 0.0
        %3551 = vmatpush1.msra.mxu0 0.0
        %3552 = vmatprep.subr.mxu0 0.0
        %3553 = vmatpush1.msra.mxu0 0.0
        %3554 = vmatprep.mubr.f32.mxu0 0.0
        %3555 = vmatmul.mubr.f32.gmra.mrb[0].mxu0 %v3479
        %v3556 = vpop.f32.mrb[0].mxu0
        %v3557 = vadd.f32 0.0, %v3556
        %v3558 = vpop.f32.mrb[0].mxu0
        %3559 = vmatprep.mubr.f32.mxu0 0.0
        %3560 = vmatmul.mubr.f32.gmra.mrb[0].mxu0 %v3482
        %v3561 = vpop.f32.mrb[0].mxu0
        %v3562 = vadd.f32 0.0, %v3561
        %v3563 = vpop.f32.mrb[0].mxu0
        %3564 = vmatprep.mubr.f32.mxu0 0.0
        %3565 = vmatmul.mubr.f32.gmra.mrb[0].mxu0 %v3485
        %v3566 = vpop.f32.mrb[0].mxu0
        %v3567 = vadd.f32 0.0, %v3566
        %v3568 = vpop.f32.mrb[0].mxu0
        %3569 = vmatprep.mubr.f32.mxu0 0.0
        %3570 = vmatmul.mubr.f32.gmra.mrb[0].mxu0 %v3488
        %v3571 = vpop.f32.mrb[0].mxu0
        %v3572 = vadd.f32 0.0, %v3571
        %v3573 = vpop.f32.mrb[0].mxu0
        %3574 = vdwg.mxu0
        %v3575 = vadd.f32 %v3399, %v3557
        %v3576 = vadd.f32 %v3400, %v3562
        %v3577 = vadd.f32 %v3401, %v3567
        %v3578 = vadd.f32 %v3402, %v3572
        %v3579 = vld [vmem:[%s355 + $0x7] sm:$0x1]
        %v3580 = vlaneseq
        %v3581 = vshrl.u32 %v3580, 7
        %v3582 = vsub.s32 0, %v3581
        %v3583 = vrot.slane %v3579, %v3582
        %v3584 = vmul.f32 %v3583, %v2333
        %v3585 = vmul.f32 %v3583, %v2334
        %v3586 = vld [vmem:[%s621 + $0x7] sm:$0x1]
        %v3587 = vlaneseq
        %v3588 = vshrl.u32 %v3587, 7
        %v3589 = vsub.s32 0, %v3588
        %v3590 = vrot.slane %v3586, %v3589
        %v3591 = vmul.f32 %v3590, %v2342
        %v3592 = vmul.f32 %v3590, %v2343
        %v3593 = vadd.f32 %v3584, %v3591
        %v3594 = vadd.f32 %v3585, %v3592
        %v3595 = vld [vmem:[%s862 + $0x7] sm:$0x1]
        %v3596 = vlaneseq
        %v3597 = vshrl.u32 %v3596, 7
        %v3598 = vsub.s32 0, %v3597
        %v3599 = vrot.slane %v3595, %v3598
        %v3600 = vmul.f32 %v3599, %v2353
        %v3601 = vmul.f32 %v3599, %v2354
        %v3602 = vadd.f32 %v3593, %v3600
        %v3603 = vadd.f32 %v3594, %v3601
        %v3604 = vld [vmem:[%s1103 + $0x7] sm:$0x1]
        %v3605 = vlaneseq
        %v3606 = vshrl.u32 %v3605, 7
        %v3607 = vsub.s32 0, %v3606
        %v3608 = vrot.slane %v3604, %v3607
        %v3609 = vmul.f32 %v3608, %v2364
        %v3610 = vmul.f32 %v3608, %v2365
        %v3611 = vadd.f32 %v3602, %v3609
        %v3612 = vadd.f32 %v3603, %v3610
        %v3613 = vld [vmem:[%s1344 + $0x7] sm:$0x1]
        %v3614 = vlaneseq
        %v3615 = vshrl.u32 %v3614, 7
        %v3616 = vsub.s32 0, %v3615
        %v3617 = vrot.slane %v3613, %v3616
        %v3618 = vmul.f32 %v3617, %v2375
        %v3619 = vmul.f32 %v3617, %v2376
        %v3620 = vadd.f32 %v3611, %v3618
        %v3621 = vadd.f32 %v3612, %v3619
        %v3622 = vld [vmem:[%s1585 + $0x7] sm:$0x1]
        %v3623 = vlaneseq
        %v3624 = vshrl.u32 %v3623, 7
        %v3625 = vsub.s32 0, %v3624
        %v3626 = vrot.slane %v3622, %v3625
        %v3627 = vmul.f32 %v3626, %v2386
        %v3628 = vmul.f32 %v3626, %v2387
        %v3629 = vadd.f32 %v3620, %v3627
        %v3630 = vadd.f32 %v3621, %v3628
        %v3631 = vld [vmem:[%s1826 + $0x7] sm:$0x1]
        %v3632 = vlaneseq
        %v3633 = vshrl.u32 %v3632, 7
        %v3634 = vsub.s32 0, %v3633
        %v3635 = vrot.slane %v3631, %v3634
        %v3636 = vmul.f32 %v3635, %v2397
        %v3637 = vmul.f32 %v3635, %v2398
        %v3638 = vadd.f32 %v3629, %v3636
        %v3639 = vadd.f32 %v3630, %v3637
        %v3640 = vld [vmem:[%s2067 + $0x7] sm:$0x1]
        %v3641 = vlaneseq
        %v3642 = vshrl.u32 %v3641, 7
        %v3643 = vsub.s32 0, %v3642
        %v3644 = vrot.slane %v3640, %v3643
        %v3645 = vmul.f32 %v3644, %v2408
        %v3646 = vmul.f32 %v3644, %v2409
        %v3647 = vadd.f32 %v3638, %v3645
        %v3648 = vadd.f32 %v3639, %v3646
        %s3649 = scalar_lea.vmem %s7, 224
        %v3650 = vld [vmem:[%s3649] sm:$0xff]
        %v3651 = vld [vmem:[%s3649 + $0x8] sm:$0xff]
        %v3652 = vld [vmem:[%s3649 + $0x10] sm:$0xff]
        %v3653 = vld [vmem:[%s3649 + $0x18] sm:$0xff]
        %v3655 = vsel %vm383, %v3650, 0
        %v3658 = vsel %vm383, %v3651, 0
        %v3661 = vsel %vm383, %v3652, 0
        %v3664 = vsel %vm383, %v3653, 0
        %3666 = vmatprep.subr.mxu0 0.0
        %3667 = vmatpush1.msra.mxu0 %v3647
        %3668 = vmatprep.subr.mxu0 0.0
        %3669 = vmatpush1.msra.mxu0 %v3648
        %3670 = vmatprep.subr.mxu0 0.0
        %3671 = vmatpush1.msra.mxu0 0.0
        %3672 = vmatprep.subr.mxu0 0.0
        %3673 = vmatpush1.msra.mxu0 0.0
        %3674 = vmatprep.subr.mxu0 0.0
        %3675 = vmatpush1.msra.mxu0 0.0
        %3676 = vmatprep.subr.mxu0 0.0
        %3677 = vmatpush1.msra.mxu0 0.0
        %3678 = vmatprep.subr.mxu0 0.0
        %3679 = vmatpush1.msra.mxu0 0.0
        %3680 = vmatprep.subr.mxu0 0.0
        %3681 = vmatpush1.msra.mxu0 0.0
        %3682 = vmatprep.subr.mxu0 0.0
        %3683 = vmatpush1.msra.mxu0 0.0
        %3684 = vmatprep.subr.mxu0 0.0
        %3685 = vmatpush1.msra.mxu0 0.0
        %3686 = vmatprep.subr.mxu0 0.0
        %3687 = vmatpush1.msra.mxu0 0.0
        %3688 = vmatprep.subr.mxu0 0.0
        %3689 = vmatpush1.msra.mxu0 0.0
        %3690 = vmatprep.subr.mxu0 0.0
        %3691 = vmatpush1.msra.mxu0 0.0
        %3692 = vmatprep.subr.mxu0 0.0
        %3693 = vmatpush1.msra.mxu0 0.0
        %3694 = vmatprep.subr.mxu0 0.0
        %3695 = vmatpush1.msra.mxu0 0.0
        %3696 = vmatprep.subr.mxu0 0.0
        %3697 = vmatpush1.msra.mxu0 0.0
        %3698 = vmatprep.subr.mxu0 0.0
        %3699 = vmatpush1.msra.mxu0 0.0
        %3700 = vmatprep.subr.mxu0 0.0
        %3701 = vmatpush1.msra.mxu0 0.0
        %3702 = vmatprep.subr.mxu0 0.0
        %3703 = vmatpush1.msra.mxu0 0.0
        %3704 = vmatprep.subr.mxu0 0.0
        %3705 = vmatpush1.msra.mxu0 0.0
        %3706 = vmatprep.subr.mxu0 0.0
        %3707 = vmatpush1.msra.mxu0 0.0
        %3708 = vmatprep.subr.mxu0 0.0
        %3709 = vmatpush1.msra.mxu0 0.0
        %3710 = vmatprep.subr.mxu0 0.0
        %3711 = vmatpush1.msra.mxu0 0.0
        %3712 = vmatprep.subr.mxu0 0.0
        %3713 = vmatpush1.msra.mxu0 0.0
        %3714 = vmatprep.subr.mxu0 0.0
        %3715 = vmatpush1.msra.mxu0 0.0
        %3716 = vmatprep.subr.mxu0 0.0
        %3717 = vmatpush1.msra.mxu0 0.0
        %3718 = vmatprep.subr.mxu0 0.0
        %3719 = vmatpush1.msra.mxu0 0.0
        %3720 = vmatprep.subr.mxu0 0.0
        %3721 = vmatpush1.msra.mxu0 0.0
        %3722 = vmatprep.subr.mxu0 0.0
        %3723 = vmatpush1.msra.mxu0 0.0
        %3724 = vmatprep.subr.mxu0 0.0
        %3725 = vmatpush1.msra.mxu0 0.0
        %3726 = vmatprep.subr.mxu0 0.0
        %3727 = vmatpush1.msra.mxu0 0.0
        %3728 = vmatprep.subr.mxu0 0.0
        %3729 = vmatpush1.msra.mxu0 0.0
        %3730 = vmatprep.mubr.f32.mxu0 0.0
        %3731 = vmatmul.mubr.f32.gmra.mrb[0].mxu0 %v3655
        %v3732 = vpop.f32.mrb[0].mxu0
        %v3733 = vadd.f32 0.0, %v3732
        %v3734 = vpop.f32.mrb[0].mxu0
        %3735 = vmatprep.mubr.f32.mxu0 0.0
        %3736 = vmatmul.mubr.f32.gmra.mrb[0].mxu0 %v3658
        %v3737 = vpop.f32.mrb[0].mxu0
        %v3738 = vadd.f32 0.0, %v3737
        %v3739 = vpop.f32.mrb[0].mxu0
        %3740 = vmatprep.mubr.f32.mxu0 0.0
        %3741 = vmatmul.mubr.f32.gmra.mrb[0].mxu0 %v3661
        %v3742 = vpop.f32.mrb[0].mxu0
        %v3743 = vadd.f32 0.0, %v3742
        %v3744 = vpop.f32.mrb[0].mxu0
        %3745 = vmatprep.mubr.f32.mxu0 0.0
        %3746 = vmatmul.mubr.f32.gmra.mrb[0].mxu0 %v3664
        %v3747 = vpop.f32.mrb[0].mxu0
        %v3748 = vadd.f32 0.0, %v3747
        %v3749 = vpop.f32.mrb[0].mxu0
        %3750 = vdwg.mxu0
        %v3751 = vadd.f32 %v3575, %v3733
        %v3752 = vadd.f32 %v3576, %v3738
        %v3753 = vadd.f32 %v3577, %v3743
        %v3754 = vadd.f32 %v3578, %v3748
        %v3755 = vld [vmem:[%s355 + $0x8] sm:$0x1]
        %v3756 = vlaneseq
        %v3757 = vshrl.u32 %v3756, 7
        %v3758 = vsub.s32 0, %v3757
        %v3759 = vrot.slane %v3755, %v3758
        %v3760 = vmul.f32 %v3759, %v2333
        %v3761 = vmul.f32 %v3759, %v2334
        %v3762 = vld [vmem:[%s621 + $0x8] sm:$0x1]
        %v3763 = vlaneseq
        %v3764 = vshrl.u32 %v3763, 7
        %v3765 = vsub.s32 0, %v3764
        %v3766 = vrot.slane %v3762, %v3765
        %v3767 = vmul.f32 %v3766, %v2342
        %v3768 = vmul.f32 %v3766, %v2343
        %v3769 = vadd.f32 %v3760, %v3767
        %v3770 = vadd.f32 %v3761, %v3768
        %v3771 = vld [vmem:[%s862 + $0x8] sm:$0x1]
        %v3772 = vlaneseq
        %v3773 = vshrl.u32 %v3772, 7
        %v3774 = vsub.s32 0, %v3773
        %v3775 = vrot.slane %v3771, %v3774
        %v3776 = vmul.f32 %v3775, %v2353
        %v3777 = vmul.f32 %v3775, %v2354
        %v3778 = vadd.f32 %v3769, %v3776
        %v3779 = vadd.f32 %v3770, %v3777
        %v3780 = vld [vmem:[%s1103 + $0x8] sm:$0x1]
        %v3781 = vlaneseq
        %v3782 = vshrl.u32 %v3781, 7
        %v3783 = vsub.s32 0, %v3782
        %v3784 = vrot.slane %v3780, %v3783
        %v3785 = vmul.f32 %v3784, %v2364
        %v3786 = vmul.f32 %v3784, %v2365
        %v3787 = vadd.f32 %v3778, %v3785
        %v3788 = vadd.f32 %v3779, %v3786
        %v3789 = vld [vmem:[%s1344 + $0x8] sm:$0x1]
        %v3790 = vlaneseq
        %v3791 = vshrl.u32 %v3790, 7
        %v3792 = vsub.s32 0, %v3791
        %v3793 = vrot.slane %v3789, %v3792
        %v3794 = vmul.f32 %v3793, %v2375
        %v3795 = vmul.f32 %v3793, %v2376
        %v3796 = vadd.f32 %v3787, %v3794
        %v3797 = vadd.f32 %v3788, %v3795
        %v3798 = vld [vmem:[%s1585 + $0x8] sm:$0x1]
        %v3799 = vlaneseq
        %v3800 = vshrl.u32 %v3799, 7
        %v3801 = vsub.s32 0, %v3800
        %v3802 = vrot.slane %v3798, %v3801
        %v3803 = vmul.f32 %v3802, %v2386
        %v3804 = vmul.f32 %v3802, %v2387
        %v3805 = vadd.f32 %v3796, %v3803
        %v3806 = vadd.f32 %v3797, %v3804
        %v3807 = vld [vmem:[%s1826 + $0x8] sm:$0x1]
        %v3808 = vlaneseq
        %v3809 = vshrl.u32 %v3808, 7
        %v3810 = vsub.s32 0, %v3809
        %v3811 = vrot.slane %v3807, %v3810
        %v3812 = vmul.f32 %v3811, %v2397
        %v3813 = vmul.f32 %v3811, %v2398
        %v3814 = vadd.f32 %v3805, %v3812
        %v3815 = vadd.f32 %v3806, %v3813
        %v3816 = vld [vmem:[%s2067 + $0x8] sm:$0x1]
        %v3817 = vlaneseq
        %v3818 = vshrl.u32 %v3817, 7
        %v3819 = vsub.s32 0, %v3818
        %v3820 = vrot.slane %v3816, %v3819
        %v3821 = vmul.f32 %v3820, %v2408
        %v3822 = vmul.f32 %v3820, %v2409
        %v3823 = vadd.f32 %v3814, %v3821
        %v3824 = vadd.f32 %v3815, %v3822
        %s3825 = scalar_lea.vmem %s7, 256
        %v3826 = vld [vmem:[%s3825] sm:$0xff]
        %v3827 = vld [vmem:[%s3825 + $0x8] sm:$0xff]
        %v3828 = vld [vmem:[%s3825 + $0x10] sm:$0xff]
        %v3829 = vld [vmem:[%s3825 + $0x18] sm:$0xff]
        %v3831 = vsel %vm383, %v3826, 0
        %v3834 = vsel %vm383, %v3827, 0
        %v3837 = vsel %vm383, %v3828, 0
        %v3840 = vsel %vm383, %v3829, 0
        %3842 = vmatprep.subr.mxu0 0.0
        %3843 = vmatpush1.msra.mxu0 %v3823
        %3844 = vmatprep.subr.mxu0 0.0
        %3845 = vmatpush1.msra.mxu0 %v3824
        %3846 = vmatprep.subr.mxu0 0.0
        %3847 = vmatpush1.msra.mxu0 0.0
        %3848 = vmatprep.subr.mxu0 0.0
        %3849 = vmatpush1.msra.mxu0 0.0
        %3850 = vmatprep.subr.mxu0 0.0
        %3851 = vmatpush1.msra.mxu0 0.0
        %3852 = vmatprep.subr.mxu0 0.0
        %3853 = vmatpush1.msra.mxu0 0.0
        %3854 = vmatprep.subr.mxu0 0.0
        %3855 = vmatpush1.msra.mxu0 0.0
        %3856 = vmatprep.subr.mxu0 0.0
        %3857 = vmatpush1.msra.mxu0 0.0
        %3858 = vmatprep.subr.mxu0 0.0
        %3859 = vmatpush1.msra.mxu0 0.0
        %3860 = vmatprep.subr.mxu0 0.0
        %3861 = vmatpush1.msra.mxu0 0.0
        %3862 = vmatprep.subr.mxu0 0.0
        %3863 = vmatpush1.msra.mxu0 0.0
        %3864 = vmatprep.subr.mxu0 0.0
        %3865 = vmatpush1.msra.mxu0 0.0
        %3866 = vmatprep.subr.mxu0 0.0
        %3867 = vmatpush1.msra.mxu0 0.0
        %3868 = vmatprep.subr.mxu0 0.0
        %3869 = vmatpush1.msra.mxu0 0.0
        %3870 = vmatprep.subr.mxu0 0.0
        %3871 = vmatpush1.msra.mxu0 0.0
        %3872 = vmatprep.subr.mxu0 0.0
        %3873 = vmatpush1.msra.mxu0 0.0
        %3874 = vmatprep.subr.mxu0 0.0
        %3875 = vmatpush1.msra.mxu0 0.0
        %3876 = vmatprep.subr.mxu0 0.0
        %3877 = vmatpush1.msra.mxu0 0.0
        %3878 = vmatprep.subr.mxu0 0.0
        %3879 = vmatpush1.msra.mxu0 0.0
        %3880 = vmatprep.subr.mxu0 0.0
        %3881 = vmatpush1.msra.mxu0 0.0
        %3882 = vmatprep.subr.mxu0 0.0
        %3883 = vmatpush1.msra.mxu0 0.0
        %3884 = vmatprep.subr.mxu0 0.0
        %3885 = vmatpush1.msra.mxu0 0.0
        %3886 = vmatprep.subr.mxu0 0.0
        %3887 = vmatpush1.msra.mxu0 0.0
        %3888 = vmatprep.subr.mxu0 0.0
        %3889 = vmatpush1.msra.mxu0 0.0
        %3890 = vmatprep.subr.mxu0 0.0
        %3891 = vmatpush1.msra.mxu0 0.0
        %3892 = vmatprep.subr.mxu0 0.0
        %3893 = vmatpush1.msra.mxu0 0.0
        %3894 = vmatprep.subr.mxu0 0.0
        %3895 = vmatpush1.msra.mxu0 0.0
        %3896 = vmatprep.subr.mxu0 0.0
        %3897 = vmatpush1.msra.mxu0 0.0
        %3898 = vmatprep.subr.mxu0 0.0
        %3899 = vmatpush1.msra.mxu0 0.0
        %3900 = vmatprep.subr.mxu0 0.0
        %3901 = vmatpush1.msra.mxu0 0.0
        %3902 = vmatprep.subr.mxu0 0.0
        %3903 = vmatpush1.msra.mxu0 0.0
        %3904 = vmatprep.subr.mxu0 0.0
        %3905 = vmatpush1.msra.mxu0 0.0
        %3906 = vmatprep.mubr.f32.mxu0 0.0
        %3907 = vmatmul.mubr.f32.gmra.mrb[0].mxu0 %v3831
        %v3908 = vpop.f32.mrb[0].mxu0
        %v3909 = vadd.f32 0.0, %v3908
        %v3910 = vpop.f32.mrb[0].mxu0
        %3911 = vmatprep.mubr.f32.mxu0 0.0
        %3912 = vmatmul.mubr.f32.gmra.mrb[0].mxu0 %v3834
        %v3913 = vpop.f32.mrb[0].mxu0
        %v3914 = vadd.f32 0.0, %v3913
        %v3915 = vpop.f32.mrb[0].mxu0
        %3916 = vmatprep.mubr.f32.mxu0 0.0
        %3917 = vmatmul.mubr.f32.gmra.mrb[0].mxu0 %v3837
        %v3918 = vpop.f32.mrb[0].mxu0
        %v3919 = vadd.f32 0.0, %v3918
        %v3920 = vpop.f32.mrb[0].mxu0
        %3921 = vmatprep.mubr.f32.mxu0 0.0
        %3922 = vmatmul.mubr.f32.gmra.mrb[0].mxu0 %v3840
        %v3923 = vpop.f32.mrb[0].mxu0
        %v3924 = vadd.f32 0.0, %v3923
        %v3925 = vpop.f32.mrb[0].mxu0
        %3926 = vdwg.mxu0
        %v3927 = vadd.f32 %v3751, %v3909
        %v3928 = vadd.f32 %v3752, %v3914
        %v3929 = vadd.f32 %v3753, %v3919
        %v3930 = vadd.f32 %v3754, %v3924
        %v3931 = vld [vmem:[%s355 + $0x9] sm:$0x1]
        %v3932 = vlaneseq
        %v3933 = vshrl.u32 %v3932, 7
        %v3934 = vsub.s32 0, %v3933
        %v3935 = vrot.slane %v3931, %v3934
        %v3936 = vmul.f32 %v3935, %v2333
        %v3937 = vmul.f32 %v3935, %v2334
        %v3938 = vld [vmem:[%s621 + $0x9] sm:$0x1]
        %v3939 = vlaneseq
        %v3940 = vshrl.u32 %v3939, 7
        %v3941 = vsub.s32 0, %v3940
        %v3942 = vrot.slane %v3938, %v3941
        %v3943 = vmul.f32 %v3942, %v2342
        %v3944 = vmul.f32 %v3942, %v2343
        %v3945 = vadd.f32 %v3936, %v3943
        %v3946 = vadd.f32 %v3937, %v3944
        %v3947 = vld [vmem:[%s862 + $0x9] sm:$0x1]
        %v3948 = vlaneseq
        %v3949 = vshrl.u32 %v3948, 7
        %v3950 = vsub.s32 0, %v3949
        %v3951 = vrot.slane %v3947, %v3950
        %v3952 = vmul.f32 %v3951, %v2353
        %v3953 = vmul.f32 %v3951, %v2354
        %v3954 = vadd.f32 %v3945, %v3952
        %v3955 = vadd.f32 %v3946, %v3953
        %v3956 = vld [vmem:[%s1103 + $0x9] sm:$0x1]
        %v3957 = vlaneseq
        %v3958 = vshrl.u32 %v3957, 7
        %v3959 = vsub.s32 0, %v3958
        %v3960 = vrot.slane %v3956, %v3959
        %v3961 = vmul.f32 %v3960, %v2364
        %v3962 = vmul.f32 %v3960, %v2365
        %v3963 = vadd.f32 %v3954, %v3961
        %v3964 = vadd.f32 %v3955, %v3962
        %v3965 = vld [vmem:[%s1344 + $0x9] sm:$0x1]
        %v3966 = vlaneseq
        %v3967 = vshrl.u32 %v3966, 7
        %v3968 = vsub.s32 0, %v3967
        %v3969 = vrot.slane %v3965, %v3968
        %v3970 = vmul.f32 %v3969, %v2375
        %v3971 = vmul.f32 %v3969, %v2376
        %v3972 = vadd.f32 %v3963, %v3970
        %v3973 = vadd.f32 %v3964, %v3971
        %v3974 = vld [vmem:[%s1585 + $0x9] sm:$0x1]
        %v3975 = vlaneseq
        %v3976 = vshrl.u32 %v3975, 7
        %v3977 = vsub.s32 0, %v3976
        %v3978 = vrot.slane %v3974, %v3977
        %v3979 = vmul.f32 %v3978, %v2386
        %v3980 = vmul.f32 %v3978, %v2387
        %v3981 = vadd.f32 %v3972, %v3979
        %v3982 = vadd.f32 %v3973, %v3980
        %v3983 = vld [vmem:[%s1826 + $0x9] sm:$0x1]
        %v3984 = vlaneseq
        %v3985 = vshrl.u32 %v3984, 7
        %v3986 = vsub.s32 0, %v3985
        %v3987 = vrot.slane %v3983, %v3986
        %v3988 = vmul.f32 %v3987, %v2397
        %v3989 = vmul.f32 %v3987, %v2398
        %v3990 = vadd.f32 %v3981, %v3988
        %v3991 = vadd.f32 %v3982, %v3989
        %v3992 = vld [vmem:[%s2067 + $0x9] sm:$0x1]
        %v3993 = vlaneseq
        %v3994 = vshrl.u32 %v3993, 7
        %v3995 = vsub.s32 0, %v3994
        %v3996 = vrot.slane %v3992, %v3995
        %v3997 = vmul.f32 %v3996, %v2408
        %v3998 = vmul.f32 %v3996, %v2409
        %v3999 = vadd.f32 %v3990, %v3997
        %v4000 = vadd.f32 %v3991, %v3998
        %s4001 = scalar_lea.vmem %s7, 288
        %v4002 = vld [vmem:[%s4001] sm:$0xff]
        %v4003 = vld [vmem:[%s4001 + $0x8] sm:$0xff]
        %v4004 = vld [vmem:[%s4001 + $0x10] sm:$0xff]
        %v4005 = vld [vmem:[%s4001 + $0x18] sm:$0xff]
        %v4007 = vsel %vm383, %v4002, 0
        %v4010 = vsel %vm383, %v4003, 0
        %v4013 = vsel %vm383, %v4004, 0
        %v4016 = vsel %vm383, %v4005, 0
        %4018 = vmatprep.subr.mxu0 0.0
        %4019 = vmatpush1.msra.mxu0 %v3999
        %4020 = vmatprep.subr.mxu0 0.0
        %4021 = vmatpush1.msra.mxu0 %v4000
        %4022 = vmatprep.subr.mxu0 0.0
        %4023 = vmatpush1.msra.mxu0 0.0
        %4024 = vmatprep.subr.mxu0 0.0
        %4025 = vmatpush1.msra.mxu0 0.0
        %4026 = vmatprep.subr.mxu0 0.0
        %4027 = vmatpush1.msra.mxu0 0.0
        %4028 = vmatprep.subr.mxu0 0.0
        %4029 = vmatpush1.msra.mxu0 0.0
        %4030 = vmatprep.subr.mxu0 0.0
        %4031 = vmatpush1.msra.mxu0 0.0
        %4032 = vmatprep.subr.mxu0 0.0
        %4033 = vmatpush1.msra.mxu0 0.0
        %4034 = vmatprep.subr.mxu0 0.0
        %4035 = vmatpush1.msra.mxu0 0.0
        %4036 = vmatprep.subr.mxu0 0.0
        %4037 = vmatpush1.msra.mxu0 0.0
        %4038 = vmatprep.subr.mxu0 0.0
        %4039 = vmatpush1.msra.mxu0 0.0
        %4040 = vmatprep.subr.mxu0 0.0
        %4041 = vmatpush1.msra.mxu0 0.0
        %4042 = vmatprep.subr.mxu0 0.0
        %4043 = vmatpush1.msra.mxu0 0.0
        %4044 = vmatprep.subr.mxu0 0.0
        %4045 = vmatpush1.msra.mxu0 0.0
        %4046 = vmatprep.subr.mxu0 0.0
        %4047 = vmatpush1.msra.mxu0 0.0
        %4048 = vmatprep.subr.mxu0 0.0
        %4049 = vmatpush1.msra.mxu0 0.0
        %4050 = vmatprep.subr.mxu0 0.0
        %4051 = vmatpush1.msra.mxu0 0.0
        %4052 = vmatprep.subr.mxu0 0.0
        %4053 = vmatpush1.msra.mxu0 0.0
        %4054 = vmatprep.subr.mxu0 0.0
        %4055 = vmatpush1.msra.mxu0 0.0
        %4056 = vmatprep.subr.mxu0 0.0
        %4057 = vmatpush1.msra.mxu0 0.0
        %4058 = vmatprep.subr.mxu0 0.0
        %4059 = vmatpush1.msra.mxu0 0.0
        %4060 = vmatprep.subr.mxu0 0.0
        %4061 = vmatpush1.msra.mxu0 0.0
        %4062 = vmatprep.subr.mxu0 0.0
        %4063 = vmatpush1.msra.mxu0 0.0
        %4064 = vmatprep.subr.mxu0 0.0
        %4065 = vmatpush1.msra.mxu0 0.0
        %4066 = vmatprep.subr.mxu0 0.0
        %4067 = vmatpush1.msra.mxu0 0.0
        %4068 = vmatprep.subr.mxu0 0.0
        %4069 = vmatpush1.msra.mxu0 0.0
        %4070 = vmatprep.subr.mxu0 0.0
        %4071 = vmatpush1.msra.mxu0 0.0
        %4072 = vmatprep.subr.mxu0 0.0
        %4073 = vmatpush1.msra.mxu0 0.0
        %4074 = vmatprep.subr.mxu0 0.0
        %4075 = vmatpush1.msra.mxu0 0.0
        %4076 = vmatprep.subr.mxu0 0.0
        %4077 = vmatpush1.msra.mxu0 0.0
        %4078 = vmatprep.subr.mxu0 0.0
        %4079 = vmatpush1.msra.mxu0 0.0
        %4080 = vmatprep.subr.mxu0 0.0
        %4081 = vmatpush1.msra.mxu0 0.0
        %4082 = vmatprep.mubr.f32.mxu0 0.0
        %4083 = vmatmul.mubr.f32.gmra.mrb[0].mxu0 %v4007
        %v4084 = vpop.f32.mrb[0].mxu0
        %v4085 = vadd.f32 0.0, %v4084
        %v4086 = vpop.f32.mrb[0].mxu0
        %4087 = vmatprep.mubr.f32.mxu0 0.0
        %4088 = vmatmul.mubr.f32.gmra.mrb[0].mxu0 %v4010
        %v4089 = vpop.f32.mrb[0].mxu0
        %v4090 = vadd.f32 0.0, %v4089
        %v4091 = vpop.f32.mrb[0].mxu0
        %4092 = vmatprep.mubr.f32.mxu0 0.0
        %4093 = vmatmul.mubr.f32.gmra.mrb[0].mxu0 %v4013
        %v4094 = vpop.f32.mrb[0].mxu0
        %v4095 = vadd.f32 0.0, %v4094
        %v4096 = vpop.f32.mrb[0].mxu0
        %4097 = vmatprep.mubr.f32.mxu0 0.0
        %4098 = vmatmul.mubr.f32.gmra.mrb[0].mxu0 %v4016
        %v4099 = vpop.f32.mrb[0].mxu0
        %v4100 = vadd.f32 0.0, %v4099
        %v4101 = vpop.f32.mrb[0].mxu0
        %4102 = vdwg.mxu0
        %v4103 = vadd.f32 %v3927, %v4085
        %v4104 = vadd.f32 %v3928, %v4090
        %v4105 = vadd.f32 %v3929, %v4095
        %v4106 = vadd.f32 %v3930, %v4100
        %v4107 = vld [vmem:[%s355 + $0xa] sm:$0x1]
        %v4108 = vlaneseq
        %v4109 = vshrl.u32 %v4108, 7
        %v4110 = vsub.s32 0, %v4109
        %v4111 = vrot.slane %v4107, %v4110
        %v4112 = vmul.f32 %v4111, %v2333
        %v4113 = vmul.f32 %v4111, %v2334
        %v4114 = vld [vmem:[%s621 + $0xa] sm:$0x1]
        %v4115 = vlaneseq
        %v4116 = vshrl.u32 %v4115, 7
        %v4117 = vsub.s32 0, %v4116
        %v4118 = vrot.slane %v4114, %v4117
        %v4119 = vmul.f32 %v4118, %v2342
        %v4120 = vmul.f32 %v4118, %v2343
        %v4121 = vadd.f32 %v4112, %v4119
        %v4122 = vadd.f32 %v4113, %v4120
        %v4123 = vld [vmem:[%s862 + $0xa] sm:$0x1]
        %v4124 = vlaneseq
        %v4125 = vshrl.u32 %v4124, 7
        %v4126 = vsub.s32 0, %v4125
        %v4127 = vrot.slane %v4123, %v4126
        %v4128 = vmul.f32 %v4127, %v2353
        %v4129 = vmul.f32 %v4127, %v2354
        %v4130 = vadd.f32 %v4121, %v4128
        %v4131 = vadd.f32 %v4122, %v4129
        %v4132 = vld [vmem:[%s1103 + $0xa] sm:$0x1]
        %v4133 = vlaneseq
        %v4134 = vshrl.u32 %v4133, 7
        %v4135 = vsub.s32 0, %v4134
        %v4136 = vrot.slane %v4132, %v4135
        %v4137 = vmul.f32 %v4136, %v2364
        %v4138 = vmul.f32 %v4136, %v2365
        %v4139 = vadd.f32 %v4130, %v4137
        %v4140 = vadd.f32 %v4131, %v4138
        %v4141 = vld [vmem:[%s1344 + $0xa] sm:$0x1]
        %v4142 = vlaneseq
        %v4143 = vshrl.u32 %v4142, 7
        %v4144 = vsub.s32 0, %v4143
        %v4145 = vrot.slane %v4141, %v4144
        %v4146 = vmul.f32 %v4145, %v2375
        %v4147 = vmul.f32 %v4145, %v2376
        %v4148 = vadd.f32 %v4139, %v4146
        %v4149 = vadd.f32 %v4140, %v4147
        %v4150 = vld [vmem:[%s1585 + $0xa] sm:$0x1]
        %v4151 = vlaneseq
        %v4152 = vshrl.u32 %v4151, 7
        %v4153 = vsub.s32 0, %v4152
        %v4154 = vrot.slane %v4150, %v4153
        %v4155 = vmul.f32 %v4154, %v2386
        %v4156 = vmul.f32 %v4154, %v2387
        %v4157 = vadd.f32 %v4148, %v4155
        %v4158 = vadd.f32 %v4149, %v4156
        %v4159 = vld [vmem:[%s1826 + $0xa] sm:$0x1]
        %v4160 = vlaneseq
        %v4161 = vshrl.u32 %v4160, 7
        %v4162 = vsub.s32 0, %v4161
        %v4163 = vrot.slane %v4159, %v4162
        %v4164 = vmul.f32 %v4163, %v2397
        %v4165 = vmul.f32 %v4163, %v2398
        %v4166 = vadd.f32 %v4157, %v4164
        %v4167 = vadd.f32 %v4158, %v4165
        %v4168 = vld [vmem:[%s2067 + $0xa] sm:$0x1]
        %v4169 = vlaneseq
        %v4170 = vshrl.u32 %v4169, 7
        %v4171 = vsub.s32 0, %v4170
        %v4172 = vrot.slane %v4168, %v4171
        %v4173 = vmul.f32 %v4172, %v2408
        %v4174 = vmul.f32 %v4172, %v2409
        %v4175 = vadd.f32 %v4166, %v4173
        %v4176 = vadd.f32 %v4167, %v4174
        %s4177 = scalar_lea.vmem %s7, 320
        %v4178 = vld [vmem:[%s4177] sm:$0xff]
        %v4179 = vld [vmem:[%s4177 + $0x8] sm:$0xff]
        %v4180 = vld [vmem:[%s4177 + $0x10] sm:$0xff]
        %v4181 = vld [vmem:[%s4177 + $0x18] sm:$0xff]
        %v4183 = vsel %vm383, %v4178, 0
        %v4186 = vsel %vm383, %v4179, 0
        %v4189 = vsel %vm383, %v4180, 0
        %v4192 = vsel %vm383, %v4181, 0
        %4194 = vmatprep.subr.mxu0 0.0
        %4195 = vmatpush1.msra.mxu0 %v4175
        %4196 = vmatprep.subr.mxu0 0.0
        %4197 = vmatpush1.msra.mxu0 %v4176
        %4198 = vmatprep.subr.mxu0 0.0
        %4199 = vmatpush1.msra.mxu0 0.0
        %4200 = vmatprep.subr.mxu0 0.0
        %4201 = vmatpush1.msra.mxu0 0.0
        %4202 = vmatprep.subr.mxu0 0.0
        %4203 = vmatpush1.msra.mxu0 0.0
        %4204 = vmatprep.subr.mxu0 0.0
        %4205 = vmatpush1.msra.mxu0 0.0
        %4206 = vmatprep.subr.mxu0 0.0
        %4207 = vmatpush1.msra.mxu0 0.0
        %4208 = vmatprep.subr.mxu0 0.0
        %4209 = vmatpush1.msra.mxu0 0.0
        %4210 = vmatprep.subr.mxu0 0.0
        %4211 = vmatpush1.msra.mxu0 0.0
        %4212 = vmatprep.subr.mxu0 0.0
        %4213 = vmatpush1.msra.mxu0 0.0
        %4214 = vmatprep.subr.mxu0 0.0
        %4215 = vmatpush1.msra.mxu0 0.0
        %4216 = vmatprep.subr.mxu0 0.0
        %4217 = vmatpush1.msra.mxu0 0.0
        %4218 = vmatprep.subr.mxu0 0.0
        %4219 = vmatpush1.msra.mxu0 0.0
        %4220 = vmatprep.subr.mxu0 0.0
        %4221 = vmatpush1.msra.mxu0 0.0
        %4222 = vmatprep.subr.mxu0 0.0
        %4223 = vmatpush1.msra.mxu0 0.0
        %4224 = vmatprep.subr.mxu0 0.0
        %4225 = vmatpush1.msra.mxu0 0.0
        %4226 = vmatprep.subr.mxu0 0.0
        %4227 = vmatpush1.msra.mxu0 0.0
        %4228 = vmatprep.subr.mxu0 0.0
        %4229 = vmatpush1.msra.mxu0 0.0
        %4230 = vmatprep.subr.mxu0 0.0
        %4231 = vmatpush1.msra.mxu0 0.0
        %4232 = vmatprep.subr.mxu0 0.0
        %4233 = vmatpush1.msra.mxu0 0.0
        %4234 = vmatprep.subr.mxu0 0.0
        %4235 = vmatpush1.msra.mxu0 0.0
        %4236 = vmatprep.subr.mxu0 0.0
        %4237 = vmatpush1.msra.mxu0 0.0
        %4238 = vmatprep.subr.mxu0 0.0
        %4239 = vmatpush1.msra.mxu0 0.0
        %4240 = vmatprep.subr.mxu0 0.0
        %4241 = vmatpush1.msra.mxu0 0.0
        %4242 = vmatprep.subr.mxu0 0.0
        %4243 = vmatpush1.msra.mxu0 0.0
        %4244 = vmatprep.subr.mxu0 0.0
        %4245 = vmatpush1.msra.mxu0 0.0
        %4246 = vmatprep.subr.mxu0 0.0
        %4247 = vmatpush1.msra.mxu0 0.0
        %4248 = vmatprep.subr.mxu0 0.0
        %4249 = vmatpush1.msra.mxu0 0.0
        %4250 = vmatprep.subr.mxu0 0.0
        %4251 = vmatpush1.msra.mxu0 0.0
        %4252 = vmatprep.subr.mxu0 0.0
        %4253 = vmatpush1.msra.mxu0 0.0
        %4254 = vmatprep.subr.mxu0 0.0
        %4255 = vmatpush1.msra.mxu0 0.0
        %4256 = vmatprep.subr.mxu0 0.0
        %4257 = vmatpush1.msra.mxu0 0.0
        %4258 = vmatprep.mubr.f32.mxu0 0.0
        %4259 = vmatmul.mubr.f32.gmra.mrb[0].mxu0 %v4183
        %v4260 = vpop.f32.mrb[0].mxu0
        %v4261 = vadd.f32 0.0, %v4260
        %v4262 = vpop.f32.mrb[0].mxu0
        %4263 = vmatprep.mubr.f32.mxu0 0.0
        %4264 = vmatmul.mubr.f32.gmra.mrb[0].mxu0 %v4186
        %v4265 = vpop.f32.mrb[0].mxu0
        %v4266 = vadd.f32 0.0, %v4265
        %v4267 = vpop.f32.mrb[0].mxu0
        %4268 = vmatprep.mubr.f32.mxu0 0.0
        %4269 = vmatmul.mubr.f32.gmra.mrb[0].mxu0 %v4189
        %v4270 = vpop.f32.mrb[0].mxu0
        %v4271 = vadd.f32 0.0, %v4270
        %v4272 = vpop.f32.mrb[0].mxu0
        %4273 = vmatprep.mubr.f32.mxu0 0.0
        %4274 = vmatmul.mubr.f32.gmra.mrb[0].mxu0 %v4192
        %v4275 = vpop.f32.mrb[0].mxu0
        %v4276 = vadd.f32 0.0, %v4275
        %v4277 = vpop.f32.mrb[0].mxu0
        %4278 = vdwg.mxu0
        %v4279 = vadd.f32 %v4103, %v4261
        %v4280 = vadd.f32 %v4104, %v4266
        %v4281 = vadd.f32 %v4105, %v4271
        %v4282 = vadd.f32 %v4106, %v4276
        %v4283 = vld [vmem:[%s355 + $0xb] sm:$0x1]
        %v4284 = vlaneseq
        %v4285 = vshrl.u32 %v4284, 7
        %v4286 = vsub.s32 0, %v4285
        %v4287 = vrot.slane %v4283, %v4286
        %v4288 = vmul.f32 %v4287, %v2333
        %v4289 = vmul.f32 %v4287, %v2334
        %v4290 = vld [vmem:[%s621 + $0xb] sm:$0x1]
        %v4291 = vlaneseq
        %v4292 = vshrl.u32 %v4291, 7
        %v4293 = vsub.s32 0, %v4292
        %v4294 = vrot.slane %v4290, %v4293
        %v4295 = vmul.f32 %v4294, %v2342
        %v4296 = vmul.f32 %v4294, %v2343
        %v4297 = vadd.f32 %v4288, %v4295
        %v4298 = vadd.f32 %v4289, %v4296
        %v4299 = vld [vmem:[%s862 + $0xb] sm:$0x1]
        %v4300 = vlaneseq
        %v4301 = vshrl.u32 %v4300, 7
        %v4302 = vsub.s32 0, %v4301
        %v4303 = vrot.slane %v4299, %v4302
        %v4304 = vmul.f32 %v4303, %v2353
        %v4305 = vmul.f32 %v4303, %v2354
        %v4306 = vadd.f32 %v4297, %v4304
        %v4307 = vadd.f32 %v4298, %v4305
        %v4308 = vld [vmem:[%s1103 + $0xb] sm:$0x1]
        %v4309 = vlaneseq
        %v4310 = vshrl.u32 %v4309, 7
        %v4311 = vsub.s32 0, %v4310
        %v4312 = vrot.slane %v4308, %v4311
        %v4313 = vmul.f32 %v4312, %v2364
        %v4314 = vmul.f32 %v4312, %v2365
        %v4315 = vadd.f32 %v4306, %v4313
        %v4316 = vadd.f32 %v4307, %v4314
        %v4317 = vld [vmem:[%s1344 + $0xb] sm:$0x1]
        %v4318 = vlaneseq
        %v4319 = vshrl.u32 %v4318, 7
        %v4320 = vsub.s32 0, %v4319
        %v4321 = vrot.slane %v4317, %v4320
        %v4322 = vmul.f32 %v4321, %v2375
        %v4323 = vmul.f32 %v4321, %v2376
        %v4324 = vadd.f32 %v4315, %v4322
        %v4325 = vadd.f32 %v4316, %v4323
        %v4326 = vld [vmem:[%s1585 + $0xb] sm:$0x1]
        %v4327 = vlaneseq
        %v4328 = vshrl.u32 %v4327, 7
        %v4329 = vsub.s32 0, %v4328
        %v4330 = vrot.slane %v4326, %v4329
        %v4331 = vmul.f32 %v4330, %v2386
        %v4332 = vmul.f32 %v4330, %v2387
        %v4333 = vadd.f32 %v4324, %v4331
        %v4334 = vadd.f32 %v4325, %v4332
        %v4335 = vld [vmem:[%s1826 + $0xb] sm:$0x1]
        %v4336 = vlaneseq
        %v4337 = vshrl.u32 %v4336, 7
        %v4338 = vsub.s32 0, %v4337
        %v4339 = vrot.slane %v4335, %v4338
        %v4340 = vmul.f32 %v4339, %v2397
        %v4341 = vmul.f32 %v4339, %v2398
        %v4342 = vadd.f32 %v4333, %v4340
        %v4343 = vadd.f32 %v4334, %v4341
        %v4344 = vld [vmem:[%s2067 + $0xb] sm:$0x1]
        %v4345 = vlaneseq
        %v4346 = vshrl.u32 %v4345, 7
        %v4347 = vsub.s32 0, %v4346
        %v4348 = vrot.slane %v4344, %v4347
        %v4349 = vmul.f32 %v4348, %v2408
        %v4350 = vmul.f32 %v4348, %v2409
        %v4351 = vadd.f32 %v4342, %v4349
        %v4352 = vadd.f32 %v4343, %v4350
        %s4353 = scalar_lea.vmem %s7, 352
        %v4354 = vld [vmem:[%s4353] sm:$0xff]
        %v4355 = vld [vmem:[%s4353 + $0x8] sm:$0xff]
        %v4356 = vld [vmem:[%s4353 + $0x10] sm:$0xff]
        %v4357 = vld [vmem:[%s4353 + $0x18] sm:$0xff]
        %v4359 = vsel %vm383, %v4354, 0
        %v4362 = vsel %vm383, %v4355, 0
        %v4365 = vsel %vm383, %v4356, 0
        %v4368 = vsel %vm383, %v4357, 0
        %4370 = vmatprep.subr.mxu0 0.0
        %4371 = vmatpush1.msra.mxu0 %v4351
        %4372 = vmatprep.subr.mxu0 0.0
        %4373 = vmatpush1.msra.mxu0 %v4352
        %4374 = vmatprep.subr.mxu0 0.0
        %4375 = vmatpush1.msra.mxu0 0.0
        %4376 = vmatprep.subr.mxu0 0.0
        %4377 = vmatpush1.msra.mxu0 0.0
        %4378 = vmatprep.subr.mxu0 0.0
        %4379 = vmatpush1.msra.mxu0 0.0
        %4380 = vmatprep.subr.mxu0 0.0
        %4381 = vmatpush1.msra.mxu0 0.0
        %4382 = vmatprep.subr.mxu0 0.0
        %4383 = vmatpush1.msra.mxu0 0.0
        %4384 = vmatprep.subr.mxu0 0.0
        %4385 = vmatpush1.msra.mxu0 0.0
        %4386 = vmatprep.subr.mxu0 0.0
        %4387 = vmatpush1.msra.mxu0 0.0
        %4388 = vmatprep.subr.mxu0 0.0
        %4389 = vmatpush1.msra.mxu0 0.0
        %4390 = vmatprep.subr.mxu0 0.0
        %4391 = vmatpush1.msra.mxu0 0.0
        %4392 = vmatprep.subr.mxu0 0.0
        %4393 = vmatpush1.msra.mxu0 0.0
        %4394 = vmatprep.subr.mxu0 0.0
        %4395 = vmatpush1.msra.mxu0 0.0
        %4396 = vmatprep.subr.mxu0 0.0
        %4397 = vmatpush1.msra.mxu0 0.0
        %4398 = vmatprep.subr.mxu0 0.0
        %4399 = vmatpush1.msra.mxu0 0.0
        %4400 = vmatprep.subr.mxu0 0.0
        %4401 = vmatpush1.msra.mxu0 0.0
        %4402 = vmatprep.subr.mxu0 0.0
        %4403 = vmatpush1.msra.mxu0 0.0
        %4404 = vmatprep.subr.mxu0 0.0
        %4405 = vmatpush1.msra.mxu0 0.0
        %4406 = vmatprep.subr.mxu0 0.0
        %4407 = vmatpush1.msra.mxu0 0.0
        %4408 = vmatprep.subr.mxu0 0.0
        %4409 = vmatpush1.msra.mxu0 0.0
        %4410 = vmatprep.subr.mxu0 0.0
        %4411 = vmatpush1.msra.mxu0 0.0
        %4412 = vmatprep.subr.mxu0 0.0
        %4413 = vmatpush1.msra.mxu0 0.0
        %4414 = vmatprep.subr.mxu0 0.0
        %4415 = vmatpush1.msra.mxu0 0.0
        %4416 = vmatprep.subr.mxu0 0.0
        %4417 = vmatpush1.msra.mxu0 0.0
        %4418 = vmatprep.subr.mxu0 0.0
        %4419 = vmatpush1.msra.mxu0 0.0
        %4420 = vmatprep.subr.mxu0 0.0
        %4421 = vmatpush1.msra.mxu0 0.0
        %4422 = vmatprep.subr.mxu0 0.0
        %4423 = vmatpush1.msra.mxu0 0.0
        %4424 = vmatprep.subr.mxu0 0.0
        %4425 = vmatpush1.msra.mxu0 0.0
        %4426 = vmatprep.subr.mxu0 0.0
        %4427 = vmatpush1.msra.mxu0 0.0
        %4428 = vmatprep.subr.mxu0 0.0
        %4429 = vmatpush1.msra.mxu0 0.0
        %4430 = vmatprep.subr.mxu0 0.0
        %4431 = vmatpush1.msra.mxu0 0.0
        %4432 = vmatprep.subr.mxu0 0.0
        %4433 = vmatpush1.msra.mxu0 0.0
        %4434 = vmatprep.mubr.f32.mxu0 0.0
        %4435 = vmatmul.mubr.f32.gmra.mrb[0].mxu0 %v4359
        %v4436 = vpop.f32.mrb[0].mxu0
        %v4437 = vadd.f32 0.0, %v4436
        %v4438 = vpop.f32.mrb[0].mxu0
        %4439 = vmatprep.mubr.f32.mxu0 0.0
        %4440 = vmatmul.mubr.f32.gmra.mrb[0].mxu0 %v4362
        %v4441 = vpop.f32.mrb[0].mxu0
        %v4442 = vadd.f32 0.0, %v4441
        %v4443 = vpop.f32.mrb[0].mxu0
        %4444 = vmatprep.mubr.f32.mxu0 0.0
        %4445 = vmatmul.mubr.f32.gmra.mrb[0].mxu0 %v4365
        %v4446 = vpop.f32.mrb[0].mxu0
        %v4447 = vadd.f32 0.0, %v4446
        %v4448 = vpop.f32.mrb[0].mxu0
        %4449 = vmatprep.mubr.f32.mxu0 0.0
        %4450 = vmatmul.mubr.f32.gmra.mrb[0].mxu0 %v4368
        %v4451 = vpop.f32.mrb[0].mxu0
        %v4452 = vadd.f32 0.0, %v4451
        %v4453 = vpop.f32.mrb[0].mxu0
        %4454 = vdwg.mxu0
        %v4455 = vadd.f32 %v4279, %v4437
        %v4456 = vadd.f32 %v4280, %v4442
        %v4457 = vadd.f32 %v4281, %v4447
        %v4458 = vadd.f32 %v4282, %v4452
        %v4459 = vld [vmem:[%s355 + $0xc] sm:$0x1]
        %v4460 = vlaneseq
        %v4461 = vshrl.u32 %v4460, 7
        %v4462 = vsub.s32 0, %v4461
        %v4463 = vrot.slane %v4459, %v4462
        %v4464 = vmul.f32 %v4463, %v2333
        %v4465 = vmul.f32 %v4463, %v2334
        %v4466 = vld [vmem:[%s621 + $0xc] sm:$0x1]
        %v4467 = vlaneseq
        %v4468 = vshrl.u32 %v4467, 7
        %v4469 = vsub.s32 0, %v4468
        %v4470 = vrot.slane %v4466, %v4469
        %v4471 = vmul.f32 %v4470, %v2342
        %v4472 = vmul.f32 %v4470, %v2343
        %v4473 = vadd.f32 %v4464, %v4471
        %v4474 = vadd.f32 %v4465, %v4472
        %v4475 = vld [vmem:[%s862 + $0xc] sm:$0x1]
        %v4476 = vlaneseq
        %v4477 = vshrl.u32 %v4476, 7
        %v4478 = vsub.s32 0, %v4477
        %v4479 = vrot.slane %v4475, %v4478
        %v4480 = vmul.f32 %v4479, %v2353
        %v4481 = vmul.f32 %v4479, %v2354
        %v4482 = vadd.f32 %v4473, %v4480
        %v4483 = vadd.f32 %v4474, %v4481
        %v4484 = vld [vmem:[%s1103 + $0xc] sm:$0x1]
        %v4485 = vlaneseq
        %v4486 = vshrl.u32 %v4485, 7
        %v4487 = vsub.s32 0, %v4486
        %v4488 = vrot.slane %v4484, %v4487
        %v4489 = vmul.f32 %v4488, %v2364
        %v4490 = vmul.f32 %v4488, %v2365
        %v4491 = vadd.f32 %v4482, %v4489
        %v4492 = vadd.f32 %v4483, %v4490
        %v4493 = vld [vmem:[%s1344 + $0xc] sm:$0x1]
        %v4494 = vlaneseq
        %v4495 = vshrl.u32 %v4494, 7
        %v4496 = vsub.s32 0, %v4495
        %v4497 = vrot.slane %v4493, %v4496
        %v4498 = vmul.f32 %v4497, %v2375
        %v4499 = vmul.f32 %v4497, %v2376
        %v4500 = vadd.f32 %v4491, %v4498
        %v4501 = vadd.f32 %v4492, %v4499
        %v4502 = vld [vmem:[%s1585 + $0xc] sm:$0x1]
        %v4503 = vlaneseq
        %v4504 = vshrl.u32 %v4503, 7
        %v4505 = vsub.s32 0, %v4504
        %v4506 = vrot.slane %v4502, %v4505
        %v4507 = vmul.f32 %v4506, %v2386
        %v4508 = vmul.f32 %v4506, %v2387
        %v4509 = vadd.f32 %v4500, %v4507
        %v4510 = vadd.f32 %v4501, %v4508
        %v4511 = vld [vmem:[%s1826 + $0xc] sm:$0x1]
        %v4512 = vlaneseq
        %v4513 = vshrl.u32 %v4512, 7
        %v4514 = vsub.s32 0, %v4513
        %v4515 = vrot.slane %v4511, %v4514
        %v4516 = vmul.f32 %v4515, %v2397
        %v4517 = vmul.f32 %v4515, %v2398
        %v4518 = vadd.f32 %v4509, %v4516
        %v4519 = vadd.f32 %v4510, %v4517
        %v4520 = vld [vmem:[%s2067 + $0xc] sm:$0x1]
        %v4521 = vlaneseq
        %v4522 = vshrl.u32 %v4521, 7
        %v4523 = vsub.s32 0, %v4522
        %v4524 = vrot.slane %v4520, %v4523
        %v4525 = vmul.f32 %v4524, %v2408
        %v4526 = vmul.f32 %v4524, %v2409
        %v4527 = vadd.f32 %v4518, %v4525
        %v4528 = vadd.f32 %v4519, %v4526
        %s4529 = scalar_lea.vmem %s7, 384
        %v4530 = vld [vmem:[%s4529] sm:$0xff]
        %v4531 = vld [vmem:[%s4529 + $0x8] sm:$0xff]
        %v4532 = vld [vmem:[%s4529 + $0x10] sm:$0xff]
        %v4533 = vld [vmem:[%s4529 + $0x18] sm:$0xff]
        %v4535 = vsel %vm383, %v4530, 0
        %v4538 = vsel %vm383, %v4531, 0
        %v4541 = vsel %vm383, %v4532, 0
        %v4544 = vsel %vm383, %v4533, 0
        %4546 = vmatprep.subr.mxu0 0.0
        %4547 = vmatpush1.msra.mxu0 %v4527
        %4548 = vmatprep.subr.mxu0 0.0
        %4549 = vmatpush1.msra.mxu0 %v4528
        %4550 = vmatprep.subr.mxu0 0.0
        %4551 = vmatpush1.msra.mxu0 0.0
        %4552 = vmatprep.subr.mxu0 0.0
        %4553 = vmatpush1.msra.mxu0 0.0
        %4554 = vmatprep.subr.mxu0 0.0
        %4555 = vmatpush1.msra.mxu0 0.0
        %4556 = vmatprep.subr.mxu0 0.0
        %4557 = vmatpush1.msra.mxu0 0.0
        %4558 = vmatprep.subr.mxu0 0.0
        %4559 = vmatpush1.msra.mxu0 0.0
        %4560 = vmatprep.subr.mxu0 0.0
        %4561 = vmatpush1.msra.mxu0 0.0
        %4562 = vmatprep.subr.mxu0 0.0
        %4563 = vmatpush1.msra.mxu0 0.0
        %4564 = vmatprep.subr.mxu0 0.0
        %4565 = vmatpush1.msra.mxu0 0.0
        %4566 = vmatprep.subr.mxu0 0.0
        %4567 = vmatpush1.msra.mxu0 0.0
        %4568 = vmatprep.subr.mxu0 0.0
        %4569 = vmatpush1.msra.mxu0 0.0
        %4570 = vmatprep.subr.mxu0 0.0
        %4571 = vmatpush1.msra.mxu0 0.0
        %4572 = vmatprep.subr.mxu0 0.0
        %4573 = vmatpush1.msra.mxu0 0.0
        %4574 = vmatprep.subr.mxu0 0.0
        %4575 = vmatpush1.msra.mxu0 0.0
        %4576 = vmatprep.subr.mxu0 0.0
        %4577 = vmatpush1.msra.mxu0 0.0
        %4578 = vmatprep.subr.mxu0 0.0
        %4579 = vmatpush1.msra.mxu0 0.0
        %4580 = vmatprep.subr.mxu0 0.0
        %4581 = vmatpush1.msra.mxu0 0.0
        %4582 = vmatprep.subr.mxu0 0.0
        %4583 = vmatpush1.msra.mxu0 0.0
        %4584 = vmatprep.subr.mxu0 0.0
        %4585 = vmatpush1.msra.mxu0 0.0
        %4586 = vmatprep.subr.mxu0 0.0
        %4587 = vmatpush1.msra.mxu0 0.0
        %4588 = vmatprep.subr.mxu0 0.0
        %4589 = vmatpush1.msra.mxu0 0.0
        %4590 = vmatprep.subr.mxu0 0.0
        %4591 = vmatpush1.msra.mxu0 0.0
        %4592 = vmatprep.subr.mxu0 0.0
        %4593 = vmatpush1.msra.mxu0 0.0
        %4594 = vmatprep.subr.mxu0 0.0
        %4595 = vmatpush1.msra.mxu0 0.0
        %4596 = vmatprep.subr.mxu0 0.0
        %4597 = vmatpush1.msra.mxu0 0.0
        %4598 = vmatprep.subr.mxu0 0.0
        %4599 = vmatpush1.msra.mxu0 0.0
        %4600 = vmatprep.subr.mxu0 0.0
        %4601 = vmatpush1.msra.mxu0 0.0
        %4602 = vmatprep.subr.mxu0 0.0
        %4603 = vmatpush1.msra.mxu0 0.0
        %4604 = vmatprep.subr.mxu0 0.0
        %4605 = vmatpush1.msra.mxu0 0.0
        %4606 = vmatprep.subr.mxu0 0.0
        %4607 = vmatpush1.msra.mxu0 0.0
        %4608 = vmatprep.subr.mxu0 0.0
        %4609 = vmatpush1.msra.mxu0 0.0
        %4610 = vmatprep.mubr.f32.mxu0 0.0
        %4611 = vmatmul.mubr.f32.gmra.mrb[0].mxu0 %v4535
        %v4612 = vpop.f32.mrb[0].mxu0
        %v4613 = vadd.f32 0.0, %v4612
        %v4614 = vpop.f32.mrb[0].mxu0
        %4615 = vmatprep.mubr.f32.mxu0 0.0
        %4616 = vmatmul.mubr.f32.gmra.mrb[0].mxu0 %v4538
        %v4617 = vpop.f32.mrb[0].mxu0
        %v4618 = vadd.f32 0.0, %v4617
        %v4619 = vpop.f32.mrb[0].mxu0
        %4620 = vmatprep.mubr.f32.mxu0 0.0
        %4621 = vmatmul.mubr.f32.gmra.mrb[0].mxu0 %v4541
        %v4622 = vpop.f32.mrb[0].mxu0
        %v4623 = vadd.f32 0.0, %v4622
        %v4624 = vpop.f32.mrb[0].mxu0
        %4625 = vmatprep.mubr.f32.mxu0 0.0
        %4626 = vmatmul.mubr.f32.gmra.mrb[0].mxu0 %v4544
        %v4627 = vpop.f32.mrb[0].mxu0
        %v4628 = vadd.f32 0.0, %v4627
        %v4629 = vpop.f32.mrb[0].mxu0
        %4630 = vdwg.mxu0
        %v4631 = vadd.f32 %v4455, %v4613
        %v4632 = vadd.f32 %v4456, %v4618
        %v4633 = vadd.f32 %v4457, %v4623
        %v4634 = vadd.f32 %v4458, %v4628
        %v4635 = vld [vmem:[%s355 + $0xd] sm:$0x1]
        %v4636 = vlaneseq
        %v4637 = vshrl.u32 %v4636, 7
        %v4638 = vsub.s32 0, %v4637
        %v4639 = vrot.slane %v4635, %v4638
        %v4640 = vmul.f32 %v4639, %v2333
        %v4641 = vmul.f32 %v4639, %v2334
        %v4642 = vld [vmem:[%s621 + $0xd] sm:$0x1]
        %v4643 = vlaneseq
        %v4644 = vshrl.u32 %v4643, 7
        %v4645 = vsub.s32 0, %v4644
        %v4646 = vrot.slane %v4642, %v4645
        %v4647 = vmul.f32 %v4646, %v2342
        %v4648 = vmul.f32 %v4646, %v2343
        %v4649 = vadd.f32 %v4640, %v4647
        %v4650 = vadd.f32 %v4641, %v4648
        %v4651 = vld [vmem:[%s862 + $0xd] sm:$0x1]
        %v4652 = vlaneseq
        %v4653 = vshrl.u32 %v4652, 7
        %v4654 = vsub.s32 0, %v4653
        %v4655 = vrot.slane %v4651, %v4654
        %v4656 = vmul.f32 %v4655, %v2353
        %v4657 = vmul.f32 %v4655, %v2354
        %v4658 = vadd.f32 %v4649, %v4656
        %v4659 = vadd.f32 %v4650, %v4657
        %v4660 = vld [vmem:[%s1103 + $0xd] sm:$0x1]
        %v4661 = vlaneseq
        %v4662 = vshrl.u32 %v4661, 7
        %v4663 = vsub.s32 0, %v4662
        %v4664 = vrot.slane %v4660, %v4663
        %v4665 = vmul.f32 %v4664, %v2364
        %v4666 = vmul.f32 %v4664, %v2365
        %v4667 = vadd.f32 %v4658, %v4665
        %v4668 = vadd.f32 %v4659, %v4666
        %v4669 = vld [vmem:[%s1344 + $0xd] sm:$0x1]
        %v4670 = vlaneseq
        %v4671 = vshrl.u32 %v4670, 7
        %v4672 = vsub.s32 0, %v4671
        %v4673 = vrot.slane %v4669, %v4672
        %v4674 = vmul.f32 %v4673, %v2375
        %v4675 = vmul.f32 %v4673, %v2376
        %v4676 = vadd.f32 %v4667, %v4674
        %v4677 = vadd.f32 %v4668, %v4675
        %v4678 = vld [vmem:[%s1585 + $0xd] sm:$0x1]
        %v4679 = vlaneseq
        %v4680 = vshrl.u32 %v4679, 7
        %v4681 = vsub.s32 0, %v4680
        %v4682 = vrot.slane %v4678, %v4681
        %v4683 = vmul.f32 %v4682, %v2386
        %v4684 = vmul.f32 %v4682, %v2387
        %v4685 = vadd.f32 %v4676, %v4683
        %v4686 = vadd.f32 %v4677, %v4684
        %v4687 = vld [vmem:[%s1826 + $0xd] sm:$0x1]
        %v4688 = vlaneseq
        %v4689 = vshrl.u32 %v4688, 7
        %v4690 = vsub.s32 0, %v4689
        %v4691 = vrot.slane %v4687, %v4690
        %v4692 = vmul.f32 %v4691, %v2397
        %v4693 = vmul.f32 %v4691, %v2398
        %v4694 = vadd.f32 %v4685, %v4692
        %v4695 = vadd.f32 %v4686, %v4693
        %v4696 = vld [vmem:[%s2067 + $0xd] sm:$0x1]
        %v4697 = vlaneseq
        %v4698 = vshrl.u32 %v4697, 7
        %v4699 = vsub.s32 0, %v4698
        %v4700 = vrot.slane %v4696, %v4699
        %v4701 = vmul.f32 %v4700, %v2408
        %v4702 = vmul.f32 %v4700, %v2409
        %v4703 = vadd.f32 %v4694, %v4701
        %v4704 = vadd.f32 %v4695, %v4702
        %s4705 = scalar_lea.vmem %s7, 416
        %v4706 = vld [vmem:[%s4705] sm:$0xff]
        %v4707 = vld [vmem:[%s4705 + $0x8] sm:$0xff]
        %v4708 = vld [vmem:[%s4705 + $0x10] sm:$0xff]
        %v4709 = vld [vmem:[%s4705 + $0x18] sm:$0xff]
        %v4711 = vsel %vm383, %v4706, 0
        %v4714 = vsel %vm383, %v4707, 0
        %v4717 = vsel %vm383, %v4708, 0
        %v4720 = vsel %vm383, %v4709, 0
        %4722 = vmatprep.subr.mxu0 0.0
        %4723 = vmatpush1.msra.mxu0 %v4703
        %4724 = vmatprep.subr.mxu0 0.0
        %4725 = vmatpush1.msra.mxu0 %v4704
        %4726 = vmatprep.subr.mxu0 0.0
        %4727 = vmatpush1.msra.mxu0 0.0
        %4728 = vmatprep.subr.mxu0 0.0
        %4729 = vmatpush1.msra.mxu0 0.0
        %4730 = vmatprep.subr.mxu0 0.0
        %4731 = vmatpush1.msra.mxu0 0.0
        %4732 = vmatprep.subr.mxu0 0.0
        %4733 = vmatpush1.msra.mxu0 0.0
        %4734 = vmatprep.subr.mxu0 0.0
        %4735 = vmatpush1.msra.mxu0 0.0
        %4736 = vmatprep.subr.mxu0 0.0
        %4737 = vmatpush1.msra.mxu0 0.0
        %4738 = vmatprep.subr.mxu0 0.0
        %4739 = vmatpush1.msra.mxu0 0.0
        %4740 = vmatprep.subr.mxu0 0.0
        %4741 = vmatpush1.msra.mxu0 0.0
        %4742 = vmatprep.subr.mxu0 0.0
        %4743 = vmatpush1.msra.mxu0 0.0
        %4744 = vmatprep.subr.mxu0 0.0
        %4745 = vmatpush1.msra.mxu0 0.0
        %4746 = vmatprep.subr.mxu0 0.0
        %4747 = vmatpush1.msra.mxu0 0.0
        %4748 = vmatprep.subr.mxu0 0.0
        %4749 = vmatpush1.msra.mxu0 0.0
        %4750 = vmatprep.subr.mxu0 0.0
        %4751 = vmatpush1.msra.mxu0 0.0
        %4752 = vmatprep.subr.mxu0 0.0
        %4753 = vmatpush1.msra.mxu0 0.0
        %4754 = vmatprep.subr.mxu0 0.0
        %4755 = vmatpush1.msra.mxu0 0.0
        %4756 = vmatprep.subr.mxu0 0.0
        %4757 = vmatpush1.msra.mxu0 0.0
        %4758 = vmatprep.subr.mxu0 0.0
        %4759 = vmatpush1.msra.mxu0 0.0
        %4760 = vmatprep.subr.mxu0 0.0
        %4761 = vmatpush1.msra.mxu0 0.0
        %4762 = vmatprep.subr.mxu0 0.0
        %4763 = vmatpush1.msra.mxu0 0.0
        %4764 = vmatprep.subr.mxu0 0.0
        %4765 = vmatpush1.msra.mxu0 0.0
        %4766 = vmatprep.subr.mxu0 0.0
        %4767 = vmatpush1.msra.mxu0 0.0
        %4768 = vmatprep.subr.mxu0 0.0
        %4769 = vmatpush1.msra.mxu0 0.0
        %4770 = vmatprep.subr.mxu0 0.0
        %4771 = vmatpush1.msra.mxu0 0.0
        %4772 = vmatprep.subr.mxu0 0.0
        %4773 = vmatpush1.msra.mxu0 0.0
        %4774 = vmatprep.subr.mxu0 0.0
        %4775 = vmatpush1.msra.mxu0 0.0
        %4776 = vmatprep.subr.mxu0 0.0
        %4777 = vmatpush1.msra.mxu0 0.0
        %4778 = vmatprep.subr.mxu0 0.0
        %4779 = vmatpush1.msra.mxu0 0.0
        %4780 = vmatprep.subr.mxu0 0.0
        %4781 = vmatpush1.msra.mxu0 0.0
        %4782 = vmatprep.subr.mxu0 0.0
        %4783 = vmatpush1.msra.mxu0 0.0
        %4784 = vmatprep.subr.mxu0 0.0
        %4785 = vmatpush1.msra.mxu0 0.0
        %4786 = vmatprep.mubr.f32.mxu0 0.0
        %4787 = vmatmul.mubr.f32.gmra.mrb[0].mxu0 %v4711
        %v4788 = vpop.f32.mrb[0].mxu0
        %v4789 = vadd.f32 0.0, %v4788
        %v4790 = vpop.f32.mrb[0].mxu0
        %4791 = vmatprep.mubr.f32.mxu0 0.0
        %4792 = vmatmul.mubr.f32.gmra.mrb[0].mxu0 %v4714
        %v4793 = vpop.f32.mrb[0].mxu0
        %v4794 = vadd.f32 0.0, %v4793
        %v4795 = vpop.f32.mrb[0].mxu0
        %4796 = vmatprep.mubr.f32.mxu0 0.0
        %4797 = vmatmul.mubr.f32.gmra.mrb[0].mxu0 %v4717
        %v4798 = vpop.f32.mrb[0].mxu0
        %v4799 = vadd.f32 0.0, %v4798
        %v4800 = vpop.f32.mrb[0].mxu0
        %4801 = vmatprep.mubr.f32.mxu0 0.0
        %4802 = vmatmul.mubr.f32.gmra.mrb[0].mxu0 %v4720
        %v4803 = vpop.f32.mrb[0].mxu0
        %v4804 = vadd.f32 0.0, %v4803
        %v4805 = vpop.f32.mrb[0].mxu0
        %4806 = vdwg.mxu0
        %v4807 = vadd.f32 %v4631, %v4789
        %v4808 = vadd.f32 %v4632, %v4794
        %v4809 = vadd.f32 %v4633, %v4799
        %v4810 = vadd.f32 %v4634, %v4804
        %v4811 = vld [vmem:[%s355 + $0xe] sm:$0x1]
        %v4812 = vlaneseq
        %v4813 = vshrl.u32 %v4812, 7
        %v4814 = vsub.s32 0, %v4813
        %v4815 = vrot.slane %v4811, %v4814
        %v4816 = vmul.f32 %v4815, %v2333
        %v4817 = vmul.f32 %v4815, %v2334
        %v4818 = vld [vmem:[%s621 + $0xe] sm:$0x1]
        %v4819 = vlaneseq
        %v4820 = vshrl.u32 %v4819, 7
        %v4821 = vsub.s32 0, %v4820
        %v4822 = vrot.slane %v4818, %v4821
        %v4823 = vmul.f32 %v4822, %v2342
        %v4824 = vmul.f32 %v4822, %v2343
        %v4825 = vadd.f32 %v4816, %v4823
        %v4826 = vadd.f32 %v4817, %v4824
        %v4827 = vld [vmem:[%s862 + $0xe] sm:$0x1]
        %v4828 = vlaneseq
        %v4829 = vshrl.u32 %v4828, 7
        %v4830 = vsub.s32 0, %v4829
        %v4831 = vrot.slane %v4827, %v4830
        %v4832 = vmul.f32 %v4831, %v2353
        %v4833 = vmul.f32 %v4831, %v2354
        %v4834 = vadd.f32 %v4825, %v4832
        %v4835 = vadd.f32 %v4826, %v4833
        %v4836 = vld [vmem:[%s1103 + $0xe] sm:$0x1]
        %v4837 = vlaneseq
        %v4838 = vshrl.u32 %v4837, 7
        %v4839 = vsub.s32 0, %v4838
        %v4840 = vrot.slane %v4836, %v4839
        %v4841 = vmul.f32 %v4840, %v2364
        %v4842 = vmul.f32 %v4840, %v2365
        %v4843 = vadd.f32 %v4834, %v4841
        %v4844 = vadd.f32 %v4835, %v4842
        %v4845 = vld [vmem:[%s1344 + $0xe] sm:$0x1]
        %v4846 = vlaneseq
        %v4847 = vshrl.u32 %v4846, 7
        %v4848 = vsub.s32 0, %v4847
        %v4849 = vrot.slane %v4845, %v4848
        %v4850 = vmul.f32 %v4849, %v2375
        %v4851 = vmul.f32 %v4849, %v2376
        %v4852 = vadd.f32 %v4843, %v4850
        %v4853 = vadd.f32 %v4844, %v4851
        %v4854 = vld [vmem:[%s1585 + $0xe] sm:$0x1]
        %v4855 = vlaneseq
        %v4856 = vshrl.u32 %v4855, 7
        %v4857 = vsub.s32 0, %v4856
        %v4858 = vrot.slane %v4854, %v4857
        %v4859 = vmul.f32 %v4858, %v2386
        %v4860 = vmul.f32 %v4858, %v2387
        %v4861 = vadd.f32 %v4852, %v4859
        %v4862 = vadd.f32 %v4853, %v4860
        %v4863 = vld [vmem:[%s1826 + $0xe] sm:$0x1]
        %v4864 = vlaneseq
        %v4865 = vshrl.u32 %v4864, 7
        %v4866 = vsub.s32 0, %v4865
        %v4867 = vrot.slane %v4863, %v4866
        %v4868 = vmul.f32 %v4867, %v2397
        %v4869 = vmul.f32 %v4867, %v2398
        %v4870 = vadd.f32 %v4861, %v4868
        %v4871 = vadd.f32 %v4862, %v4869
        %v4872 = vld [vmem:[%s2067 + $0xe] sm:$0x1]
        %v4873 = vlaneseq
        %v4874 = vshrl.u32 %v4873, 7
        %v4875 = vsub.s32 0, %v4874
        %v4876 = vrot.slane %v4872, %v4875
        %v4877 = vmul.f32 %v4876, %v2408
        %v4878 = vmul.f32 %v4876, %v2409
        %v4879 = vadd.f32 %v4870, %v4877
        %v4880 = vadd.f32 %v4871, %v4878
        %s4881 = scalar_lea.vmem %s7, 448
        %v4882 = vld [vmem:[%s4881] sm:$0xff]
        %v4883 = vld [vmem:[%s4881 + $0x8] sm:$0xff]
        %v4884 = vld [vmem:[%s4881 + $0x10] sm:$0xff]
        %v4885 = vld [vmem:[%s4881 + $0x18] sm:$0xff]
        %v4887 = vsel %vm383, %v4882, 0
        %v4890 = vsel %vm383, %v4883, 0
        %v4893 = vsel %vm383, %v4884, 0
        %v4896 = vsel %vm383, %v4885, 0
        %4898 = vmatprep.subr.mxu0 0.0
        %4899 = vmatpush1.msra.mxu0 %v4879
        %4900 = vmatprep.subr.mxu0 0.0
        %4901 = vmatpush1.msra.mxu0 %v4880
        %4902 = vmatprep.subr.mxu0 0.0
        %4903 = vmatpush1.msra.mxu0 0.0
        %4904 = vmatprep.subr.mxu0 0.0
        %4905 = vmatpush1.msra.mxu0 0.0
        %4906 = vmatprep.subr.mxu0 0.0
        %4907 = vmatpush1.msra.mxu0 0.0
        %4908 = vmatprep.subr.mxu0 0.0
        %4909 = vmatpush1.msra.mxu0 0.0
        %4910 = vmatprep.subr.mxu0 0.0
        %4911 = vmatpush1.msra.mxu0 0.0
        %4912 = vmatprep.subr.mxu0 0.0
        %4913 = vmatpush1.msra.mxu0 0.0
        %4914 = vmatprep.subr.mxu0 0.0
        %4915 = vmatpush1.msra.mxu0 0.0
        %4916 = vmatprep.subr.mxu0 0.0
        %4917 = vmatpush1.msra.mxu0 0.0
        %4918 = vmatprep.subr.mxu0 0.0
        %4919 = vmatpush1.msra.mxu0 0.0
        %4920 = vmatprep.subr.mxu0 0.0
        %4921 = vmatpush1.msra.mxu0 0.0
        %4922 = vmatprep.subr.mxu0 0.0
        %4923 = vmatpush1.msra.mxu0 0.0
        %4924 = vmatprep.subr.mxu0 0.0
        %4925 = vmatpush1.msra.mxu0 0.0
        %4926 = vmatprep.subr.mxu0 0.0
        %4927 = vmatpush1.msra.mxu0 0.0
        %4928 = vmatprep.subr.mxu0 0.0
        %4929 = vmatpush1.msra.mxu0 0.0
        %4930 = vmatprep.subr.mxu0 0.0
        %4931 = vmatpush1.msra.mxu0 0.0
        %4932 = vmatprep.subr.mxu0 0.0
        %4933 = vmatpush1.msra.mxu0 0.0
        %4934 = vmatprep.subr.mxu0 0.0
        %4935 = vmatpush1.msra.mxu0 0.0
        %4936 = vmatprep.subr.mxu0 0.0
        %4937 = vmatpush1.msra.mxu0 0.0
        %4938 = vmatprep.subr.mxu0 0.0
        %4939 = vmatpush1.msra.mxu0 0.0
        %4940 = vmatprep.subr.mxu0 0.0
        %4941 = vmatpush1.msra.mxu0 0.0
        %4942 = vmatprep.subr.mxu0 0.0
        %4943 = vmatpush1.msra.mxu0 0.0
        %4944 = vmatprep.subr.mxu0 0.0
        %4945 = vmatpush1.msra.mxu0 0.0
        %4946 = vmatprep.subr.mxu0 0.0
        %4947 = vmatpush1.msra.mxu0 0.0
        %4948 = vmatprep.subr.mxu0 0.0
        %4949 = vmatpush1.msra.mxu0 0.0
        %4950 = vmatprep.subr.mxu0 0.0
        %4951 = vmatpush1.msra.mxu0 0.0
        %4952 = vmatprep.subr.mxu0 0.0
        %4953 = vmatpush1.msra.mxu0 0.0
        %4954 = vmatprep.subr.mxu0 0.0
        %4955 = vmatpush1.msra.mxu0 0.0
        %4956 = vmatprep.subr.mxu0 0.0
        %4957 = vmatpush1.msra.mxu0 0.0
        %4958 = vmatprep.subr.mxu0 0.0
        %4959 = vmatpush1.msra.mxu0 0.0
        %4960 = vmatprep.subr.mxu0 0.0
        %4961 = vmatpush1.msra.mxu0 0.0
        %4962 = vmatprep.mubr.f32.mxu0 0.0
        %4963 = vmatmul.mubr.f32.gmra.mrb[0].mxu0 %v4887
        %v4964 = vpop.f32.mrb[0].mxu0
        %v4965 = vadd.f32 0.0, %v4964
        %v4966 = vpop.f32.mrb[0].mxu0
        %4967 = vmatprep.mubr.f32.mxu0 0.0
        %4968 = vmatmul.mubr.f32.gmra.mrb[0].mxu0 %v4890
        %v4969 = vpop.f32.mrb[0].mxu0
        %v4970 = vadd.f32 0.0, %v4969
        %v4971 = vpop.f32.mrb[0].mxu0
        %4972 = vmatprep.mubr.f32.mxu0 0.0
        %4973 = vmatmul.mubr.f32.gmra.mrb[0].mxu0 %v4893
        %v4974 = vpop.f32.mrb[0].mxu0
        %v4975 = vadd.f32 0.0, %v4974
        %v4976 = vpop.f32.mrb[0].mxu0
        %4977 = vmatprep.mubr.f32.mxu0 0.0
        %4978 = vmatmul.mubr.f32.gmra.mrb[0].mxu0 %v4896
        %v4979 = vpop.f32.mrb[0].mxu0
        %v4980 = vadd.f32 0.0, %v4979
        %v4981 = vpop.f32.mrb[0].mxu0
        %4982 = vdwg.mxu0
        %v4983 = vadd.f32 %v4807, %v4965
        %v4984 = vadd.f32 %v4808, %v4970
        %v4985 = vadd.f32 %v4809, %v4975
        %v4986 = vadd.f32 %v4810, %v4980
        %v4987 = vld [vmem:[%s355 + $0xf] sm:$0x1]
        %v4988 = vlaneseq
        %v4989 = vshrl.u32 %v4988, 7
        %v4990 = vsub.s32 0, %v4989
        %v4991 = vrot.slane %v4987, %v4990
        %v4992 = vmul.f32 %v4991, %v2333
        %v4993 = vmul.f32 %v4991, %v2334
        %v4994 = vld [vmem:[%s621 + $0xf] sm:$0x1]
        %v4995 = vlaneseq
        %v4996 = vshrl.u32 %v4995, 7
        %v4997 = vsub.s32 0, %v4996
        %v4998 = vrot.slane %v4994, %v4997
        %v4999 = vmul.f32 %v4998, %v2342
        %v5000 = vmul.f32 %v4998, %v2343
        %v5001 = vadd.f32 %v4992, %v4999
        %v5002 = vadd.f32 %v4993, %v5000
        %v5003 = vld [vmem:[%s862 + $0xf] sm:$0x1]
        %v5004 = vlaneseq
        %v5005 = vshrl.u32 %v5004, 7
        %v5006 = vsub.s32 0, %v5005
        %v5007 = vrot.slane %v5003, %v5006
        %v5008 = vmul.f32 %v5007, %v2353
        %v5009 = vmul.f32 %v5007, %v2354
        %v5010 = vadd.f32 %v5001, %v5008
        %v5011 = vadd.f32 %v5002, %v5009
        %v5012 = vld [vmem:[%s1103 + $0xf] sm:$0x1]
        %v5013 = vlaneseq
        %v5014 = vshrl.u32 %v5013, 7
        %v5015 = vsub.s32 0, %v5014
        %v5016 = vrot.slane %v5012, %v5015
        %v5017 = vmul.f32 %v5016, %v2364
        %v5018 = vmul.f32 %v5016, %v2365
        %v5019 = vadd.f32 %v5010, %v5017
        %v5020 = vadd.f32 %v5011, %v5018
        %v5021 = vld [vmem:[%s1344 + $0xf] sm:$0x1]
        %v5022 = vlaneseq
        %v5023 = vshrl.u32 %v5022, 7
        %v5024 = vsub.s32 0, %v5023
        %v5025 = vrot.slane %v5021, %v5024
        %v5026 = vmul.f32 %v5025, %v2375
        %v5027 = vmul.f32 %v5025, %v2376
        %v5028 = vadd.f32 %v5019, %v5026
        %v5029 = vadd.f32 %v5020, %v5027
        %v5030 = vld [vmem:[%s1585 + $0xf] sm:$0x1]
        %v5031 = vlaneseq
        %v5032 = vshrl.u32 %v5031, 7
        %v5033 = vsub.s32 0, %v5032
        %v5034 = vrot.slane %v5030, %v5033
        %v5035 = vmul.f32 %v5034, %v2386
        %v5036 = vmul.f32 %v5034, %v2387
        %v5037 = vadd.f32 %v5028, %v5035
        %v5038 = vadd.f32 %v5029, %v5036
        %v5039 = vld [vmem:[%s1826 + $0xf] sm:$0x1]
        %v5040 = vlaneseq
        %v5041 = vshrl.u32 %v5040, 7
        %v5042 = vsub.s32 0, %v5041
        %v5043 = vrot.slane %v5039, %v5042
        %v5044 = vmul.f32 %v5043, %v2397
        %v5045 = vmul.f32 %v5043, %v2398
        %v5046 = vadd.f32 %v5037, %v5044
        %v5047 = vadd.f32 %v5038, %v5045
        %v5048 = vld [vmem:[%s2067 + $0xf] sm:$0x1]
        %v5049 = vlaneseq
        %v5050 = vshrl.u32 %v5049, 7
        %v5051 = vsub.s32 0, %v5050
        %v5052 = vrot.slane %v5048, %v5051
        %v5053 = vmul.f32 %v5052, %v2408
        %v5054 = vmul.f32 %v5052, %v2409
        %v5055 = vadd.f32 %v5046, %v5053
        %v5056 = vadd.f32 %v5047, %v5054
        %s5057 = scalar_lea.vmem %s7, 480
        %v5058 = vld [vmem:[%s5057] sm:$0xff]
        %v5059 = vld [vmem:[%s5057 + $0x8] sm:$0xff]
        %v5060 = vld [vmem:[%s5057 + $0x10] sm:$0xff]
        %v5061 = vld [vmem:[%s5057 + $0x18] sm:$0xff]
        %v5063 = vsel %vm383, %v5058, 0
        %v5066 = vsel %vm383, %v5059, 0
        %v5069 = vsel %vm383, %v5060, 0
        %v5072 = vsel %vm383, %v5061, 0
        %5074 = vmatprep.subr.mxu0 0.0
        %5075 = vmatpush1.msra.mxu0 %v5055
        %5076 = vmatprep.subr.mxu0 0.0
        %5077 = vmatpush1.msra.mxu0 %v5056
        %5078 = vmatprep.subr.mxu0 0.0
        %5079 = vmatpush1.msra.mxu0 0.0
        %5080 = vmatprep.subr.mxu0 0.0
        %5081 = vmatpush1.msra.mxu0 0.0
        %5082 = vmatprep.subr.mxu0 0.0
        %5083 = vmatpush1.msra.mxu0 0.0
        %5084 = vmatprep.subr.mxu0 0.0
        %5085 = vmatpush1.msra.mxu0 0.0
        %5086 = vmatprep.subr.mxu0 0.0
        %5087 = vmatpush1.msra.mxu0 0.0
        %5088 = vmatprep.subr.mxu0 0.0
        %5089 = vmatpush1.msra.mxu0 0.0
        %5090 = vmatprep.subr.mxu0 0.0
        %5091 = vmatpush1.msra.mxu0 0.0
        %5092 = vmatprep.subr.mxu0 0.0
        %5093 = vmatpush1.msra.mxu0 0.0
        %5094 = vmatprep.subr.mxu0 0.0
        %5095 = vmatpush1.msra.mxu0 0.0
        %5096 = vmatprep.subr.mxu0 0.0
        %5097 = vmatpush1.msra.mxu0 0.0
        %5098 = vmatprep.subr.mxu0 0.0
        %5099 = vmatpush1.msra.mxu0 0.0
        %5100 = vmatprep.subr.mxu0 0.0
        %5101 = vmatpush1.msra.mxu0 0.0
        %5102 = vmatprep.subr.mxu0 0.0
        %5103 = vmatpush1.msra.mxu0 0.0
        %5104 = vmatprep.subr.mxu0 0.0
        %5105 = vmatpush1.msra.mxu0 0.0
        %5106 = vmatprep.subr.mxu0 0.0
        %5107 = vmatpush1.msra.mxu0 0.0
        %5108 = vmatprep.subr.mxu0 0.0
        %5109 = vmatpush1.msra.mxu0 0.0
        %5110 = vmatprep.subr.mxu0 0.0
        %5111 = vmatpush1.msra.mxu0 0.0
        %5112 = vmatprep.subr.mxu0 0.0
        %5113 = vmatpush1.msra.mxu0 0.0
        %5114 = vmatprep.subr.mxu0 0.0
        %5115 = vmatpush1.msra.mxu0 0.0
        %5116 = vmatprep.subr.mxu0 0.0
        %5117 = vmatpush1.msra.mxu0 0.0
        %5118 = vmatprep.subr.mxu0 0.0
        %5119 = vmatpush1.msra.mxu0 0.0
        %5120 = vmatprep.subr.mxu0 0.0
        %5121 = vmatpush1.msra.mxu0 0.0
        %5122 = vmatprep.subr.mxu0 0.0
        %5123 = vmatpush1.msra.mxu0 0.0
        %5124 = vmatprep.subr.mxu0 0.0
        %5125 = vmatpush1.msra.mxu0 0.0
        %5126 = vmatprep.subr.mxu0 0.0
        %5127 = vmatpush1.msra.mxu0 0.0
        %5128 = vmatprep.subr.mxu0 0.0
        %5129 = vmatpush1.msra.mxu0 0.0
        %5130 = vmatprep.subr.mxu0 0.0
        %5131 = vmatpush1.msra.mxu0 0.0
        %5132 = vmatprep.subr.mxu0 0.0
        %5133 = vmatpush1.msra.mxu0 0.0
        %5134 = vmatprep.subr.mxu0 0.0
        %5135 = vmatpush1.msra.mxu0 0.0
        %5136 = vmatprep.subr.mxu0 0.0
        %5137 = vmatpush1.msra.mxu0 0.0
        %5138 = vmatprep.mubr.f32.mxu0 0.0
        %5139 = vmatmul.mubr.f32.gmra.mrb[0].mxu0 %v5063
        %v5140 = vpop.f32.mrb[0].mxu0
        %v5141 = vadd.f32 0.0, %v5140
        %v5142 = vpop.f32.mrb[0].mxu0
        %5143 = vmatprep.mubr.f32.mxu0 0.0
        %5144 = vmatmul.mubr.f32.gmra.mrb[0].mxu0 %v5066
        %v5145 = vpop.f32.mrb[0].mxu0
        %v5146 = vadd.f32 0.0, %v5145
        %v5147 = vpop.f32.mrb[0].mxu0
        %5148 = vmatprep.mubr.f32.mxu0 0.0
        %5149 = vmatmul.mubr.f32.gmra.mrb[0].mxu0 %v5069
        %v5150 = vpop.f32.mrb[0].mxu0
        %v5151 = vadd.f32 0.0, %v5150
        %v5152 = vpop.f32.mrb[0].mxu0
        %5153 = vmatprep.mubr.f32.mxu0 0.0
        %5154 = vmatmul.mubr.f32.gmra.mrb[0].mxu0 %v5072
        %v5155 = vpop.f32.mrb[0].mxu0
        %v5156 = vadd.f32 0.0, %v5155
        %v5157 = vpop.f32.mrb[0].mxu0
        %5158 = vdwg.mxu0
        %v5159 = vadd.f32 %v4983, %v5141
        %v5160 = vadd.f32 %v4984, %v5146
        %v5161 = vadd.f32 %v4985, %v5151
        %v5162 = vadd.f32 %v4986, %v5156
        %vm5163 = vcmp.ge.f32.partialorder %v5159, 0.0
        %vm5164 = vcmp.ge.f32.partialorder %v5160, 0.0
        %vm5165 = vcmp.ge.f32.partialorder %v5161, 0.0
        %vm5166 = vcmp.ge.f32.partialorder %v5162, 0.0
        %v5167 = vmul.f32 %v5159, 0.1
        %v5168 = vmul.f32 %v5160, 0.1
        %v5169 = vmul.f32 %v5161, 0.1
        %v5170 = vmul.f32 %v5162, 0.1
        %v5171 = vsel %vm5163, %v5159, %v5167
        %v5172 = vsel %vm5164, %v5160, %v5168
        %v5173 = vsel %vm5165, %v5161, %v5169
        %v5174 = vsel %vm5166, %v5162, %v5170
        %5175 = vst [vmem:[%s347] sm:$0xff] %v5171
        %5176 = vst [vmem:[%s347 + $0x8] sm:$0xff] %v5172
        %5177 = vst [vmem:[%s347 + $0x10] sm:$0xff] %v5173
        %5178 = vst [vmem:[%s347 + $0x18] sm:$0xff] %v5174
        %s5179 = sand.u32 %s241, 1
        %s5180 = scalar_lea.sflag [#allocation4], %s5179
        %s5181 = sand.u32 %s241, 1
        %s5182 = smul.addr %s5181, 32
        %s5183 = scalar_lea.vmem [#allocation3], %s5182
        // Predicated region
        $region57: #{tpu_custom_call.1} parent=55 // pred_check
          %p5184 = pneg %p251
        $region58: #{tpu_custom_call.1} parent=55 // pred_check_branch
          %5186 = sbr.rel (%p5184) target = $region60
        $region59: #{tpu_custom_call.1} parent=55 // pred_region
          %s5188 = ssub.s32 512, 512
          %5189 = vsyncadd %s5180, %s5188
          %s5190 = smul.addr %s27, 4
          %s5191 = sadd.s32 %s28, %s5190
          %s5192 = smul.addr %s5191, 128
          %s5193 = scalar_lea.hbm %s9, %s5192
          %s5194 = sshll.u32 %s5183, 4
          %s5195 = int_to_ptr.vmem [resolvable:$true] %s5194
          %5200 = dma.vmem_to_hbm [thread:$0]  %s5195, 512, %s5193, %s5180, 128, 128, 8
        $region60: #{tpu_custom_call.1} parent=55 // pred_fallthru
          _
      $region56: #{tpu_custom_call.1} parent=5 // pred_fallthru
        _
      %p5201 = scmp.le.s32.totalorder 2, %s18
      // Predicated region
      $region61: #{tpu_custom_call.1} parent=5 // pred_check
        %p5202 = pneg %p5201
      $region62: #{tpu_custom_call.1} parent=5 // pred_check_branch
        %5204 = sbr.rel (%p5202) target = $region64
      $region63: #{tpu_custom_call.1} parent=5 // pred_region
        %s5205 = ssub.s32 %s18, 2
        // Predicated region
        $region65: #{tpu_custom_call.1} parent=63 // pred_check
          %p5206 = pneg %p257
        $region66: #{tpu_custom_call.1} parent=63 // pred_check_branch
          %5208 = sbr.rel (%p5206) target = $region68
        $region67: #{tpu_custom_call.1} parent=63 // pred_region
          %s5209 = sand.u32 %s242, 1
          %s5210 = scalar_lea.sflag [#allocation4], %s5209
          %s5211 = sand.u32 %s242, 1
          %s5212 = smul.addr %s5211, 32
          %s5213 = scalar_lea.vmem [#allocation3], %s5212
          %5214 = dma.done %s5210, 512
        $region68: #{tpu_custom_call.1} parent=63 // pred_fallthru
          _
      $region64: #{tpu_custom_call.1} parent=5 // pred_fallthru
        _
    $region6: #{tpu_custom_call.1} parent=1 // loop_footer
      %s22 = sadd.s32 1, %s18
    $region7: #{tpu_custom_call.1} parent=1 // loop_footer_branch
      %17 = sbr.rel target = $region3
    $region8: #{tpu_custom_call.1} parent=1 // loop_exit
      _
    %5215 = vsyncpa [#allocation4], 1
    %s5216 = scalar_lea.sflag [#allocation4], 1
    %5217 = vsyncpa %s5216, 1

</llo_original>
